<compile_context>
chip_gen: v7x
topology: tpu7x:2x2x1
jax: 0.10.0
libtpu: 0.0.40
codegen_flags: <defaults>
</compile_context>

<pallas_src>
import math
import functools
import numpy as np
import jax
import jax.numpy as jnp
from jax.experimental import pallas as pl
from jax.experimental.pallas import tpu as pltpu

# ----- synthetic small config (consistent with the module's __init__) -----
MORPHO_DIM = 16                      # args.morpho_dim_hidden
STEM_DIM = 64                        # args.stem_dim_hidden
HIDDEN = 4 * MORPHO_DIM + STEM_DIM   # 128 = morpho_dim*4 + stem_dim
NUM_HEADS = 4                        # args.main_sequence_encoder_num_heads
HEAD_DIM = HIDDEN // NUM_HEADS       # 32
FFN_DIM = 256                        # args.main_sequence_encoder_dim_ffn
NUM_LAYERS = 2                       # args.main_sequence_encoder_num_layers
NUM_CLASSES = 3
INNER_DIM = NUM_CLASSES * 8          # 24
MAX_SEQ_LEN = 8                      # args.main_sequence_encoder_max_seq_len
REL_POS_BINS = 32                    # args.main_sequence_encoder_rel_pos_bins
NUM_STEMS = 50                       # cfg.tot_num_stems
NUM_LM_MORPHS = 20
NUM_POS_TAGS = 12
NUM_AFFIXES = 30
LN_EPS = 1e-5
LANE = 128                           # lane-dense pad width for cls-head output


def _full_spec(a):
    nd = a.ndim
    return pl.BlockSpec(a.shape, lambda *_, nd=nd: (0,) * nd)


def _layer_norm(x, g, b):
    mu = jnp.mean(x, axis=-1, keepdims=True)
    var = jnp.mean((x - mu) ** 2, axis=-1, keepdims=True)
    return (x - mu) * jax.lax.rsqrt(var + LN_EPS) * g + b


# --------------------------- fused Pallas kernel --------------------------

def _fused_forward_kernel(B,
                          x_ref, maskf_ref, pos_ref, rel_ref,
                          wpq_ref, bpq_ref, wpk_ref, bpk_ref,
                          wq_ref, bq_ref, wk_ref, bk_ref, wv_ref, bv_ref,
                          wo_ref, bo_ref, ln1g_ref, ln1b_ref,
                          w1_ref, b1_ref, w2_ref, b2_ref,
                          ln2g_ref, ln2b_ref,
                          wd_ref, bd_ref, wp_ref, bp_ref,
                          o_ref):
    """Full forward: pos bias -> NUM_LAYERS encoder layers -> cls head."""
    f32 = jnp.float32
    bf16 = jnp.bfloat16
    L, NH, HD = MAX_SEQ_LEN, NUM_HEADS, HEAD_DIM
    scale_c = 1.0 / math.sqrt(HEAD_DIM)
    scale_p = 1.0 / math.sqrt(2.0 * HEAD_DIM)

    # ---- TUPE absolute position bias + relative bucket bias (once) ----
    pos = pos_ref[...].astype(bf16)                                  # (L, H)
    pq = jnp.dot(pos, wpq_ref[...], preferred_element_type=f32) + bpq_ref[...]
    pk = jnp.dot(pos, wpk_ref[...], preferred_element_type=f32) + bpk_ref[...]
    pqh = jnp.transpose(pq.reshape(L, NH, HD), (1, 0, 2)).astype(bf16)   # (NH, L, HD)
    pkh = jnp.transpose(pk.reshape(L, NH, HD), (1, 0, 2)).astype(bf16)
    pos_bias = jnp.einsum('hqd,hkd->hqk', pqh, pkh,
                          preferred_element_type=f32) * scale_p
    pos_bias = pos_bias + rel_ref[...]                               # (NH, L, L)

    # key-padding mask folded into the per-batch additive bias once
    maskf = maskf_ref[...][:, None, None, :]                         # (B,1,1,L)
    bias_b = [pos_bias + maskf[b] for b in range(B)]                 # each (NH,L,L)

    x = x_ref[...]                                                   # (B*L, H) f32

    for l in range(NUM_LAYERS):
        xb = x.astype(bf16)
        q = jnp.dot(xb, wq_ref[l], preferred_element_type=f32) + bq_ref[l]
        k = jnp.dot(xb, wk_ref[l], preferred_element_type=f32) + bk_ref[l]
        v = jnp.dot(xb, wv_ref[l], preferred_element_type=f32) + bv_ref[l]

        def split_heads(t):      # (B*L, H) f32 -> (B, NH, L, HD) bf16
            return jnp.transpose(t.reshape(B, L, NH, HD), (0, 2, 1, 3)).astype(bf16)

        qh, kh, vh = split_heads(q), split_heads(k), split_heads(v)

        outs = []
        for b in range(B):
            s = jnp.einsum('hqd,hkd->hqk', qh[b], kh[b],
                           preferred_element_type=f32) * scale_c
            s = s + bias_b[b]
            s = s - jnp.max(s, axis=-1, keepdims=True)
            e = jnp.exp(s)
            p = e * pl.reciprocal(jnp.sum(e, axis=-1, keepdims=True), approx=True)
            o = jnp.einsum('hqk,hkd->hqd', p.astype(bf16), vh[b],
                           preferred_element_type=f32)               # (NH, L, HD)
            outs.append(jnp.transpose(o, (1, 0, 2)).reshape(L, HIDDEN))
        attn = jnp.concatenate(outs, axis=0)                         # (B*L, H)
        attn = jnp.dot(attn.astype(bf16), wo_ref[l],
                       preferred_element_type=f32) + bo_ref[l]

        y = _layer_norm(x + attn, ln1g_ref[l], ln1b_ref[l])
        # TODO(synk): PyTorch F.gelu is exact-erf; tanh approximation used here.
        h1 = jax.nn.gelu(jnp.dot(y.astype(bf16), w1_ref[l],
                                 preferred_element_type=f32) + b1_ref[l],
                         approximate=True)
        ffn = jnp.dot(h1.astype(bf16), w2_ref[l],
                      preferred_element_type=f32) + b2_ref[l]
        x = _layer_norm(y + ffn, ln2g_ref[l], ln2b_ref[l])

    # ---- ClassificationHead on the first (<s>) token of each sequence ----
    cls = x.reshape(B, L, HIDDEN)[:, 0, :]                           # (B, H)
    h = jnp.tanh(jnp.dot(cls.astype(bf16), wd_ref[...],
                         preferred_element_type=f32) + bd_ref[...])
    o_ref[...] = jnp.dot(h.astype(bf16), wp_ref[...],
                         preferred_element_type=f32) + bp_ref[...]   # (B, LANE)


def _fused_forward(x_flat, maskf, pos_table, rel_bias, kp, B):
    kernel = functools.partial(_fused_forward_kernel, B)
    args = (x_flat, maskf, pos_table, rel_bias,
            kp["wpq"], kp["bpq"], kp["wpk"], kp["bpk"],
            kp["wq"], kp["bq"], kp["wk"], kp["bk"], kp["wv"], kp["bv"],
            kp["wo"], kp["bo"], kp["ln1g"], kp["ln1b"],
            kp["w1"], kp["b1"], kp["w2"], kp["b2"], kp["ln2g"], kp["ln2b"],
            kp["wd"], kp["bd"], kp["wp"], kp["bp"])
    out = pl.pallas_call(
        kernel,
        out_shape=jax.ShapeDtypeStruct((B, LANE), jnp.float32),
        grid=(1,),
        in_specs=[_full_spec(a) for a in args],
        out_specs=pl.BlockSpec((B, LANE), lambda i: (0, 0)),
        compiler_params=pltpu.CompilerParams(dimension_semantics=("arbitrary",)),
    )(*args)
    return out[:, :NUM_CLASSES]


# ---------------------------- parameter init ------------------------------

def init_params(key):
    ks = iter(jax.random.split(key, 64))

    def n(shape, std=0.02):
        return (std * jax.random.normal(next(ks), shape)).astype(jnp.float32)

    params = {}
    # embeddings (padding_idx=0 rows zeroed where applicable)
    params["stem_emb"] = n((NUM_STEMS, STEM_DIM)).at[0].set(0.0)
    params["m_lm"] = n((NUM_LM_MORPHS, MORPHO_DIM))
    params["m_pos"] = n((NUM_POS_TAGS, MORPHO_DIM))
    params["m_afx"] = n((NUM_AFFIXES, MORPHO_DIM)).at[0].set(0.0)
    params["m_stem"] = n((NUM_STEMS, MORPHO_DIM))
    # PositionEncoding
    params["pos_table"] = n((MAX_SEQ_LEN, HIDDEN))
    params["wpq"] = n((HIDDEN, HIDDEN)); params["bpq"] = jnp.zeros((1, HIDDEN), jnp.float32)
    params["wpk"] = n((HIDDEN, HIDDEN)); params["bpk"] = jnp.zeros((1, HIDDEN), jnp.float32)
    params["rel_table"] = n((REL_POS_BINS, NUM_HEADS))
    # TransformerEncoder layers
    layers = []
    for _ in range(NUM_LAYERS):
        layers.append(dict(
            wq=n((HIDDEN, HIDDEN)), bq=jnp.zeros((1, HIDDEN), jnp.float32),
            wk=n((HIDDEN, HIDDEN)), bk=jnp.zeros((1, HIDDEN), jnp.float32),
            wv=n((HIDDEN, HIDDEN)), bv=jnp.zeros((1, HIDDEN), jnp.float32),
            wo=n((HIDDEN, HIDDEN)), bo=jnp.zeros((1, HIDDEN), jnp.float32),
            ln1g=jnp.ones((1, HIDDEN), jnp.float32), ln1b=jnp.zeros((1, HIDDEN), jnp.float32),
            w1=n((HIDDEN, FFN_DIM)), b1=jnp.zeros((1, FFN_DIM), jnp.float32),
            w2=n((FFN_DIM, HIDDEN)), b2=jnp.zeros((1, HIDDEN), jnp.float32),
            ln2g=jnp.ones((1, HIDDEN), jnp.float32), ln2b=jnp.zeros((1, HIDDEN), jnp.float32),
        ))
    params["layers"] = layers
    # ClassificationHead
    params["wd"] = n((HIDDEN, INNER_DIM)); params["bd"] = jnp.zeros((1, INNER_DIM), jnp.float32)
    params["wp"] = n((INNER_DIM, NUM_CLASSES)); params["bp"] = jnp.zeros((1, NUM_CLASSES), jnp.float32)
    return params


def _prepare_kernel_params(params):
    """Stack per-layer weights, cast matmul operands to bf16, pad cls head lane-dense."""
    f32, bf16 = jnp.float32, jnp.bfloat16

    def stack(name, dtype):
        return jnp.stack([lp[name] for lp in params["layers"]], axis=0).astype(dtype)

    kp = dict(
        wpq=params["wpq"].astype(bf16), bpq=params["bpq"],
        wpk=params["wpk"].astype(bf16), bpk=params["bpk"],
        wq=stack("wq", bf16), bq=stack("bq", f32),
        wk=stack("wk", bf16), bk=stack("bk", f32),
        wv=stack("wv", bf16), bv=stack("bv", f32),
        wo=stack("wo", bf16), bo=stack("bo", f32),
        ln1g=stack("ln1g", f32), ln1b=stack("ln1b", f32),
        w1=stack("w1", bf16), b1=stack("b1", f32),
        w2=stack("w2", bf16), b2=stack("b2", f32),
        ln2g=stack("ln2g", f32), ln2b=stack("ln2b", f32),
    )
    # lane-dense (128-wide) classification head; zero padding keeps results exact
    wd = jnp.zeros((HIDDEN, LANE), f32).at[:, :INNER_DIM].set(params["wd"])
    bd = jnp.zeros((1, LANE), f32).at[:, :INNER_DIM].set(params["bd"])
    wp = jnp.zeros((LANE, LANE), f32).at[:INNER_DIM, :NUM_CLASSES].set(params["wp"])
    bp = jnp.zeros((1, LANE), f32).at[:, :NUM_CLASSES].set(params["bp"])
    kp.update(wd=wd.astype(bf16), bd=bd, wp=wp.astype(bf16), bp=bp)
    return kp


# ------------------------------- forward ----------------------------------

def mybert_sequence_classifier(params, lm_morphs, pos_tags, affixes,
                               tokens_lengths, stems, input_sequence_lengths):
    B = len(input_sequence_lengths)
    Lmax = MAX_SEQ_LEN
    T = stems.shape[0]
    f32 = jnp.float32

    # ---- MorphoEncoder (simplified): 4 morpho feature slots per token ----
    # TODO(synk): real MorphoEncoder is a nested transformer over
    # (afx_padded, m_masks_padded); replaced by embeddings + masked affix mean pool.
    lm_feat = params["m_lm"][lm_morphs]                        # (T, md)
    pos_feat = params["m_pos"][pos_tags]                       # (T, md)
    stem_feat = params["m_stem"][stems]                        # (T, md)

    tok_lens = np.asarray(tokens_lengths, dtype=np.int32)
    if int(tok_lens.sum()) > 0:
        seg_ids = jnp.asarray(np.repeat(np.arange(T, dtype=np.int32), tok_lens))
        afx_sum = jax.ops.segment_sum(params["m_afx"][affixes], seg_ids, num_segments=T)
    else:
        afx_sum = jnp.zeros((T, MORPHO_DIM), f32)
    denom = jnp.asarray(np.maximum(tok_lens, 1), dtype=np.float32)[:, None]
    afx_feat = afx_sum / denom                                 # (T, md)

    morpho_input = jnp.concatenate([lm_feat, pos_feat, afx_feat, stem_feat], axis=-1)
    stem_input = params["stem_emb"][stems]                     # (T, sd)
    input_sequences = jnp.concatenate([morpho_input, stem_input], axis=1)   # (T, H)

    # ---- split by input_sequence_lengths + pad (single scatter, batch-first) ----
    seq_lens = np.asarray(input_sequence_lengths, dtype=np.int32)
    batch_idx = jnp.asarray(np.repeat(np.arange(B, dtype=np.int32), seq_lens))
    pos_idx = jnp.asarray(np.concatenate([np.arange(l, dtype=np.int32) for l in seq_lens]))
    x = jnp.zeros((B, Lmax, HIDDEN), f32).at[batch_idx, pos_idx].set(input_sequences)
    x_flat = x.reshape(B * Lmax, HIDDEN)                       # (B*L, H)

    # additive key-padding mask (0 keep / -1e9 pad)
    maskf = jnp.where(jnp.arange(Lmax)[None, :] >= jnp.asarray(seq_lens)[:, None],
                      -1e9, 0.0).astype(f32)                   # (B, Lmax)

    # relative position bucket bias (NH, L, L); bucket table is static
    posn = np.arange(Lmax)
    bucket = np.clip(posn[:, None] - posn[None, :] + REL_POS_BINS // 2,
                     0, REL_POS_BINS - 1)
    rel_bias = jnp.transpose(params["rel_table"][jnp.asarray(bucket)], (2, 0, 1))

    # ---- fused Pallas forward (pos bias + encoder layers + cls head) ----
    kp = _prepare_kernel_params(params)
    scores = _fused_forward(x_flat, maskf, params["pos_table"][:Lmax],
                            rel_bias, kp, B)
    return scores                                              # (B, num_classes)


if __name__ == "__main__":
    key = jax.random.PRNGKey(0)
    pkey, k1, k2, k3, k4 = jax.random.split(key, 5)
    params = init_params(pkey)

    input_sequence_lengths = [8, 6]                     # batch of 2, padded to Lmax=8
    T = sum(input_sequence_lengths)                     # 14 tokens total (flat)
    tokens_lengths = [2, 1, 0, 3, 1, 2, 0, 1, 2, 1, 0, 2, 1, 1]   # per-token affix counts
    A = sum(tokens_lengths)                             # 17 affixes total (flat)

    stems = jax.random.randint(k1, (T,), 1, NUM_STEMS)
    lm_morphs = jax.random.randint(k2, (T,), 1, NUM_LM_MORPHS)
    pos_tags = jax.random.randint(k3, (T,), 1, NUM_POS_TAGS)
    affixes = jax.random.randint(k4, (A,), 1, NUM_AFFIXES)

    scores = mybert_sequence_classifier(params, lm_morphs, pos_tags, affixes,
                                        tokens_lengths, stems, input_sequence_lengths)
    scores = jax.block_until_ready(scores)
    assert scores.shape == (len(input_sequence_lengths), NUM_CLASSES)
    print("KERNEL_OK")
</pallas_src>

<mosaic_0001>
module attributes {stable_mosaic.version = 11 : i64} {
  func.func @_fused_forward_kernel(%arg0: i32, %arg1: memref<16x128xf32, #tpu.memory_space<vmem>>, %arg2: memref<2x8xf32, #tpu.memory_space<vmem>>, %arg3: memref<8x128xf32, #tpu.memory_space<vmem>>, %arg4: memref<4x8x8xf32, #tpu.memory_space<vmem>>, %arg5: memref<128x128xbf16, #tpu.memory_space<vmem>>, %arg6: memref<1x128xf32, #tpu.memory_space<vmem>>, %arg7: memref<128x128xbf16, #tpu.memory_space<vmem>>, %arg8: memref<1x128xf32, #tpu.memory_space<vmem>>, %arg9: memref<2x128x128xbf16, #tpu.memory_space<vmem>>, %arg10: memref<2x1x128xf32, #tpu.memory_space<vmem>>, %arg11: memref<2x128x128xbf16, #tpu.memory_space<vmem>>, %arg12: memref<2x1x128xf32, #tpu.memory_space<vmem>>, %arg13: memref<2x128x128xbf16, #tpu.memory_space<vmem>>, %arg14: memref<2x1x128xf32, #tpu.memory_space<vmem>>, %arg15: memref<2x128x128xbf16, #tpu.memory_space<vmem>>, %arg16: memref<2x1x128xf32, #tpu.memory_space<vmem>>, %arg17: memref<2x1x128xf32, #tpu.memory_space<vmem>>, %arg18: memref<2x1x128xf32, #tpu.memory_space<vmem>>, %arg19: memref<2x128x256xbf16, #tpu.memory_space<vmem>>, %arg20: memref<2x1x256xf32, #tpu.memory_space<vmem>>, %arg21: memref<2x256x128xbf16, #tpu.memory_space<vmem>>, %arg22: memref<2x1x128xf32, #tpu.memory_space<vmem>>, %arg23: memref<2x1x128xf32, #tpu.memory_space<vmem>>, %arg24: memref<2x1x128xf32, #tpu.memory_space<vmem>>, %arg25: memref<128x128xbf16, #tpu.memory_space<vmem>>, %arg26: memref<1x128xf32, #tpu.memory_space<vmem>>, %arg27: memref<128x128xbf16, #tpu.memory_space<vmem>>, %arg28: memref<1x128xf32, #tpu.memory_space<vmem>>, %arg29: memref<2x128xf32, #tpu.memory_space<vmem>>) attributes {dimension_semantics = [#tpu.dimension_semantics<arbitrary>], iteration_bounds = array<i64: 1>, scalar_prefetch = 0 : i64, scratch_operands = 0 : i64, tpu.core_type = #tpu.core_type<tc>, window_params = [{pipeline_mode = #tpu.pipeline_mode<synchronous>, transform_indices = @transform_0, window_bounds = array<i64: 16, 128>}, {pipeline_mode = #tpu.pipeline_mode<synchronous>, transform_indices = @transform_1, window_bounds = array<i64: 2, 8>}, {pipeline_mode = #tpu.pipeline_mode<synchronous>, transform_indices = @transform_2, window_bounds = array<i64: 8, 128>}, {pipeline_mode = #tpu.pipeline_mode<synchronous>, transform_indices = @transform_3, window_bounds = array<i64: 4, 8, 8>}, {pipeline_mode = #tpu.pipeline_mode<synchronous>, transform_indices = @transform_4, window_bounds = array<i64: 128, 128>}, {pipeline_mode = #tpu.pipeline_mode<synchronous>, transform_indices = @transform_5, window_bounds = array<i64: 1, 128>}, {pipeline_mode = #tpu.pipeline_mode<synchronous>, transform_indices = @transform_6, window_bounds = array<i64: 128, 128>}, {pipeline_mode = #tpu.pipeline_mode<synchronous>, transform_indices = @transform_7, window_bounds = array<i64: 1, 128>}, {pipeline_mode = #tpu.pipeline_mode<synchronous>, transform_indices = @transform_8, window_bounds = array<i64: 2, 128, 128>}, {pipeline_mode = #tpu.pipeline_mode<synchronous>, transform_indices = @transform_9, window_bounds = array<i64: 2, 1, 128>}, {pipeline_mode = #tpu.pipeline_mode<synchronous>, transform_indices = @transform_10, window_bounds = array<i64: 2, 128, 128>}, {pipeline_mode = #tpu.pipeline_mode<synchronous>, transform_indices = @transform_11, window_bounds = array<i64: 2, 1, 128>}, {pipeline_mode = #tpu.pipeline_mode<synchronous>, transform_indices = @transform_12, window_bounds = array<i64: 2, 128, 128>}, {pipeline_mode = #tpu.pipeline_mode<synchronous>, transform_indices = @transform_13, window_bounds = array<i64: 2, 1, 128>}, {pipeline_mode = #tpu.pipeline_mode<synchronous>, transform_indices = @transform_14, window_bounds = array<i64: 2, 128, 128>}, {pipeline_mode = #tpu.pipeline_mode<synchronous>, transform_indices = @transform_15, window_bounds = array<i64: 2, 1, 128>}, {pipeline_mode = #tpu.pipeline_mode<synchronous>, transform_indices = @transform_16, window_bounds = array<i64: 2, 1, 128>}, {pipeline_mode = #tpu.pipeline_mode<synchronous>, transform_indices = @transform_17, window_bounds = array<i64: 2, 1, 128>}, {pipeline_mode = #tpu.pipeline_mode<synchronous>, transform_indices = @transform_18, window_bounds = array<i64: 2, 128, 256>}, {pipeline_mode = #tpu.pipeline_mode<synchronous>, transform_indices = @transform_19, window_bounds = array<i64: 2, 1, 256>}, {pipeline_mode = #tpu.pipeline_mode<synchronous>, transform_indices = @transform_20, window_bounds = array<i64: 2, 256, 128>}, {pipeline_mode = #tpu.pipeline_mode<synchronous>, transform_indices = @transform_21, window_bounds = array<i64: 2, 1, 128>}, {pipeline_mode = #tpu.pipeline_mode<synchronous>, transform_indices = @transform_22, window_bounds = array<i64: 2, 1, 128>}, {pipeline_mode = #tpu.pipeline_mode<synchronous>, transform_indices = @transform_23, window_bounds = array<i64: 2, 1, 128>}, {pipeline_mode = #tpu.pipeline_mode<synchronous>, transform_indices = @transform_24, window_bounds = array<i64: 128, 128>}, {pipeline_mode = #tpu.pipeline_mode<synchronous>, transform_indices = @transform_25, window_bounds = array<i64: 1, 128>}, {pipeline_mode = #tpu.pipeline_mode<synchronous>, transform_indices = @transform_26, window_bounds = array<i64: 128, 128>}, {pipeline_mode = #tpu.pipeline_mode<synchronous>, transform_indices = @transform_27, window_bounds = array<i64: 1, 128>}, {pipeline_mode = #tpu.pipeline_mode<synchronous>, transform_indices = @transform_28, window_bounds = array<i64: 2, 128>}]} {
    %c0 = arith.constant 0 : index
    %c0_0 = arith.constant 0 : index
    %0 = vector.load %arg3[%c0, %c0_0] : memref<8x128xf32, #tpu.memory_space<vmem>>, vector<8x128xf32>
    %1 = arith.truncf %0 : vector<8x128xf32> to vector<8x128xbf16>
    %c0_1 = arith.constant 0 : index
    %c0_2 = arith.constant 0 : index
    %2 = vector.load %arg5[%c0_1, %c0_2] : memref<128x128xbf16, #tpu.memory_space<vmem>>, vector<128x128xbf16>
    %cst = arith.constant dense<0.000000e+00> : vector<8x128xf32>
    %3 = tpu.matmul %1, %2, %cst {dimension_numbers = #tpu.dot_dimension_numbers<[1], [0], [0], [1], [0, 0, 1, 1], [], []>} : vector<8x128xbf16>, vector<128x128xbf16>, vector<8x128xf32> -> vector<8x128xf32>
    %c0_3 = arith.constant 0 : index
    %c0_4 = arith.constant 0 : index
    %4 = vector.load %arg6[%c0_3, %c0_4] : memref<1x128xf32, #tpu.memory_space<vmem>>, vector<1x128xf32>
    %5 = vector.broadcast %4 : vector<1x128xf32> to vector<8x128xf32>
    %6 = arith.addf %3, %5 : vector<8x128xf32>
    %c0_5 = arith.constant 0 : index
    %c0_6 = arith.constant 0 : index
    %7 = vector.load %arg7[%c0_5, %c0_6] : memref<128x128xbf16, #tpu.memory_space<vmem>>, vector<128x128xbf16>
    %cst_7 = arith.constant dense<0.000000e+00> : vector<8x128xf32>
    %8 = tpu.matmul %1, %7, %cst_7 {dimension_numbers = #tpu.dot_dimension_numbers<[1], [0], [0], [1], [0, 0, 1, 1], [], []>} : vector<8x128xbf16>, vector<128x128xbf16>, vector<8x128xf32> -> vector<8x128xf32>
    %c0_8 = arith.constant 0 : index
    %c0_9 = arith.constant 0 : index
    %9 = vector.load %arg8[%c0_8, %c0_9] : memref<1x128xf32, #tpu.memory_space<vmem>>, vector<1x128xf32>
    %10 = vector.broadcast %9 : vector<1x128xf32> to vector<8x128xf32>
    %11 = arith.addf %8, %10 : vector<8x128xf32>
    %12 = vector.shape_cast %6 : vector<8x128xf32> to vector<8x4x32xf32>
    %13 = tpu.transpose %12, [1, 0, 2] : vector<8x4x32xf32> -> vector<4x8x32xf32>
    %14 = arith.truncf %13 : vector<4x8x32xf32> to vector<4x8x32xbf16>
    %15 = vector.shape_cast %11 : vector<8x128xf32> to vector<8x4x32xf32>
    %16 = tpu.transpose %15, [1, 0, 2] : vector<8x4x32xf32> -> vector<4x8x32xf32>
    %17 = arith.truncf %16 : vector<4x8x32xf32> to vector<4x8x32xbf16>
    "tpu.trace_start"() <{level = 10 : i32, message = "hqd,hkd->hqk"}> : () -> ()
    %cst_10 = arith.constant dense<0.000000e+00> : vector<4x8x8xf32>
    %18 = tpu.matmul %14, %17, %cst_10 {dimension_numbers = #tpu.dot_dimension_numbers<[2], [2], [1], [1], [0, 0, 0, 1, 1, 1], [0], [0]>} : vector<4x8x32xbf16>, vector<4x8x32xbf16>, vector<4x8x8xf32> -> vector<4x8x8xf32>
    "tpu.trace_stop"() : () -> ()
    %cst_11 = arith.constant 1.250000e-01 : f32
    %19 = vector.broadcast %cst_11 : f32 to vector<4x8x8xf32>
    %20 = arith.mulf %18, %19 : vector<4x8x8xf32>
    %c0_12 = arith.constant 0 : index
    %c0_13 = arith.constant 0 : index
    %c0_14 = arith.constant 0 : index
    %21 = vector.load %arg4[%c0_12, %c0_13, %c0_14] : memref<4x8x8xf32, #tpu.memory_space<vmem>>, vector<4x8x8xf32>
    %22 = arith.addf %20, %21 : vector<4x8x8xf32>
    %c0_15 = arith.constant 0 : index
    %c0_16 = arith.constant 0 : index
    %23 = vector.load %arg2[%c0_15, %c0_16] : memref<2x8xf32, #tpu.memory_space<vmem>>, vector<2x8xf32>
    %24 = vector.shape_cast %23 : vector<2x8xf32> to vector<2x1x1x8xf32>
    %25 = vector.extract_strided_slice %24 {offsets = [0, 0, 0, 0], sizes = [1, 1, 1, 8], strides = [1, 1, 1, 1]} : vector<2x1x1x8xf32> to vector<1x1x1x8xf32>
    %26 = vector.shape_cast %25 : vector<1x1x1x8xf32> to vector<1x1x8xf32>
    %27 = vector.broadcast %26 : vector<1x1x8xf32> to vector<4x8x8xf32>
    %28 = arith.addf %22, %27 : vector<4x8x8xf32>
    %29 = vector.extract_strided_slice %24 {offsets = [1, 0, 0, 0], sizes = [1, 1, 1, 8], strides = [1, 1, 1, 1]} : vector<2x1x1x8xf32> to vector<1x1x1x8xf32>
    %30 = vector.shape_cast %29 : vector<1x1x1x8xf32> to vector<1x1x8xf32>
    %31 = vector.broadcast %30 : vector<1x1x8xf32> to vector<4x8x8xf32>
    %32 = arith.addf %22, %31 : vector<4x8x8xf32>
    %c0_17 = arith.constant 0 : index
    %c0_18 = arith.constant 0 : index
    %33 = vector.load %arg1[%c0_17, %c0_18] : memref<16x128xf32, #tpu.memory_space<vmem>>, vector<16x128xf32>
    %34 = arith.truncf %33 : vector<16x128xf32> to vector<16x128xbf16>
    %c0_19 = arith.constant 0 : index
    %c0_20 = arith.constant 0 : index
    %c0_21 = arith.constant 0 : index
    %35 = vector.load %arg9[%c0_19, %c0_20, %c0_21] : memref<2x128x128xbf16, #tpu.memory_space<vmem>>, vector<1x128x128xbf16>
    %36 = vector.shape_cast %35 : vector<1x128x128xbf16> to vector<128x128xbf16>
    %cst_22 = arith.constant dense<0.000000e+00> : vector<16x128xf32>
    %37 = tpu.matmul %34, %36, %cst_22 {dimension_numbers = #tpu.dot_dimension_numbers<[1], [0], [0], [1], [0, 0, 1, 1], [], []>} : vector<16x128xbf16>, vector<128x128xbf16>, vector<16x128xf32> -> vector<16x128xf32>
    %c0_23 = arith.constant 0 : index
    %c0_24 = arith.constant 0 : index
    %c0_25 = arith.constant 0 : index
    %38 = vector.load %arg10[%c0_23, %c0_24, %c0_25] : memref<2x1x128xf32, #tpu.memory_space<vmem>>, vector<1x1x128xf32>
    %39 = vector.shape_cast %38 : vector<1x1x128xf32> to vector<1x128xf32>
    %40 = vector.broadcast %39 : vector<1x128xf32> to vector<16x128xf32>
    %41 = arith.addf %37, %40 : vector<16x128xf32>
    %c0_26 = arith.constant 0 : index
    %c0_27 = arith.constant 0 : index
    %c0_28 = arith.constant 0 : index
    %42 = vector.load %arg11[%c0_26, %c0_27, %c0_28] : memref<2x128x128xbf16, #tpu.memory_space<vmem>>, vector<1x128x128xbf16>
    %43 = vector.shape_cast %42 : vector<1x128x128xbf16> to vector<128x128xbf16>
    %cst_29 = arith.constant dense<0.000000e+00> : vector<16x128xf32>
    %44 = tpu.matmul %34, %43, %cst_29 {dimension_numbers = #tpu.dot_dimension_numbers<[1], [0], [0], [1], [0, 0, 1, 1], [], []>} : vector<16x128xbf16>, vector<128x128xbf16>, vector<16x128xf32> -> vector<16x128xf32>
    %c0_30 = arith.constant 0 : index
    %c0_31 = arith.constant 0 : index
    %c0_32 = arith.constant 0 : index
    %45 = vector.load %arg12[%c0_30, %c0_31, %c0_32] : memref<2x1x128xf32, #tpu.memory_space<vmem>>, vector<1x1x128xf32>
    %46 = vector.shape_cast %45 : vector<1x1x128xf32> to vector<1x128xf32>
    %47 = vector.broadcast %46 : vector<1x128xf32> to vector<16x128xf32>
    %48 = arith.addf %44, %47 : vector<16x128xf32>
    %c0_33 = arith.constant 0 : index
    %c0_34 = arith.constant 0 : index
    %c0_35 = arith.constant 0 : index
    %49 = vector.load %arg13[%c0_33, %c0_34, %c0_35] : memref<2x128x128xbf16, #tpu.memory_space<vmem>>, vector<1x128x128xbf16>
    %50 = vector.shape_cast %49 : vector<1x128x128xbf16> to vector<128x128xbf16>
    %cst_36 = arith.constant dense<0.000000e+00> : vector<16x128xf32>
    %51 = tpu.matmul %34, %50, %cst_36 {dimension_numbers = #tpu.dot_dimension_numbers<[1], [0], [0], [1], [0, 0, 1, 1], [], []>} : vector<16x128xbf16>, vector<128x128xbf16>, vector<16x128xf32> -> vector<16x128xf32>
    %c0_37 = arith.constant 0 : index
    %c0_38 = arith.constant 0 : index
    %c0_39 = arith.constant 0 : index
    %52 = vector.load %arg14[%c0_37, %c0_38, %c0_39] : memref<2x1x128xf32, #tpu.memory_space<vmem>>, vector<1x1x128xf32>
    %53 = vector.shape_cast %52 : vector<1x1x128xf32> to vector<1x128xf32>
    %54 = vector.broadcast %53 : vector<1x128xf32> to vector<16x128xf32>
    %55 = arith.addf %51, %54 : vector<16x128xf32>
    %56 = vector.shape_cast %41 : vector<16x128xf32> to vector<2x8x4x32xf32>
    %57 = tpu.transpose %56, [0, 2, 1, 3] : vector<2x8x4x32xf32> -> vector<2x4x8x32xf32>
    %58 = arith.truncf %57 : vector<2x4x8x32xf32> to vector<2x4x8x32xbf16>
    %59 = vector.shape_cast %48 : vector<16x128xf32> to vector<2x8x4x32xf32>
    %60 = tpu.transpose %59, [0, 2, 1, 3] : vector<2x8x4x32xf32> -> vector<2x4x8x32xf32>
    %61 = arith.truncf %60 : vector<2x4x8x32xf32> to vector<2x4x8x32xbf16>
    %62 = vector.shape_cast %55 : vector<16x128xf32> to vector<2x8x4x32xf32>
    %63 = tpu.transpose %62, [0, 2, 1, 3] : vector<2x8x4x32xf32> -> vector<2x4x8x32xf32>
    %64 = arith.truncf %63 : vector<2x4x8x32xf32> to vector<2x4x8x32xbf16>
    %65 = vector.extract_strided_slice %58 {offsets = [0, 0, 0, 0], sizes = [1, 4, 8, 32], strides = [1, 1, 1, 1]} : vector<2x4x8x32xbf16> to vector<1x4x8x32xbf16>
    %66 = vector.shape_cast %65 : vector<1x4x8x32xbf16> to vector<4x8x32xbf16>
    %67 = vector.extract_strided_slice %61 {offsets = [0, 0, 0, 0], sizes = [1, 4, 8, 32], strides = [1, 1, 1, 1]} : vector<2x4x8x32xbf16> to vector<1x4x8x32xbf16>
    %68 = vector.shape_cast %67 : vector<1x4x8x32xbf16> to vector<4x8x32xbf16>
    "tpu.trace_start"() <{level = 10 : i32, message = "hqd,hkd->hqk"}> : () -> ()
    %cst_40 = arith.constant dense<0.000000e+00> : vector<4x8x8xf32>
    %69 = tpu.matmul %66, %68, %cst_40 {dimension_numbers = #tpu.dot_dimension_numbers<[2], [2], [1], [1], [0, 0, 0, 1, 1, 1], [0], [0]>} : vector<4x8x32xbf16>, vector<4x8x32xbf16>, vector<4x8x8xf32> -> vector<4x8x8xf32>
    "tpu.trace_stop"() : () -> ()
    %cst_41 = arith.constant 0.176776692 : f32
    %70 = vector.broadcast %cst_41 : f32 to vector<4x8x8xf32>
    %71 = arith.mulf %69, %70 : vector<4x8x8xf32>
    %72 = arith.addf %71, %28 : vector<4x8x8xf32>
    %cst_42 = arith.constant dense<0xFF800000> : vector<4x8xf32>
    %73 = vector.multi_reduction <maximumf>, %72, %cst_42 [2] : vector<4x8x8xf32> to vector<4x8xf32>
    %74 = vector.shape_cast %73 : vector<4x8xf32> to vector<4x8x1xf32>
    %75 = vector.broadcast %74 : vector<4x8x1xf32> to vector<4x8x8xf32>
    %76 = arith.subf %72, %75 : vector<4x8x8xf32>
    %77 = math.exp %76 : vector<4x8x8xf32>
    %cst_43 = arith.constant dense<0.000000e+00> : vector<4x8xf32>
    %78 = vector.multi_reduction <add>, %77, %cst_43 [2] : vector<4x8x8xf32> to vector<4x8xf32>
    %79 = vector.shape_cast %78 : vector<4x8xf32> to vector<4x8x1xf32>
    %80 = tpu.reciprocal %79 {approx = true} : vector<4x8x1xf32> -> vector<4x8x1xf32>
    %81 = vector.broadcast %80 : vector<4x8x1xf32> to vector<4x8x8xf32>
    %82 = arith.mulf %77, %81 : vector<4x8x8xf32>
    %83 = arith.truncf %82 : vector<4x8x8xf32> to vector<4x8x8xbf16>
    %84 = vector.extract_strided_slice %64 {offsets = [0, 0, 0, 0], sizes = [1, 4, 8, 32], strides = [1, 1, 1, 1]} : vector<2x4x8x32xbf16> to vector<1x4x8x32xbf16>
    %85 = vector.shape_cast %84 : vector<1x4x8x32xbf16> to vector<4x8x32xbf16>
    "tpu.trace_start"() <{level = 10 : i32, message = "hqk,hkd->hqd"}> : () -> ()
    %cst_44 = arith.constant dense<0.000000e+00> : vector<4x8x32xf32>
    %86 = tpu.matmul %83, %85, %cst_44 {dimension_numbers = #tpu.dot_dimension_numbers<[2], [1], [1], [2], [0, 0, 0, 1, 1, 2], [0], [0]>} : vector<4x8x8xbf16>, vector<4x8x32xbf16>, vector<4x8x32xf32> -> vector<4x8x32xf32>
    "tpu.trace_stop"() : () -> ()
    %87 = tpu.transpose %86, [1, 0, 2] : vector<4x8x32xf32> -> vector<8x4x32xf32>
    %88 = vector.shape_cast %87 : vector<8x4x32xf32> to vector<8x128xf32>
    %89 = vector.extract_strided_slice %58 {offsets = [1, 0, 0, 0], sizes = [1, 4, 8, 32], strides = [1, 1, 1, 1]} : vector<2x4x8x32xbf16> to vector<1x4x8x32xbf16>
    %90 = vector.shape_cast %89 : vector<1x4x8x32xbf16> to vector<4x8x32xbf16>
    %91 = vector.extract_strided_slice %61 {offsets = [1, 0, 0, 0], sizes = [1, 4, 8, 32], strides = [1, 1, 1, 1]} : vector<2x4x8x32xbf16> to vector<1x4x8x32xbf16>
    %92 = vector.shape_cast %91 : vector<1x4x8x32xbf16> to vector<4x8x32xbf16>
    "tpu.trace_start"() <{level = 10 : i32, message = "hqd,hkd->hqk"}> : () -> ()
    %cst_45 = arith.constant dense<0.000000e+00> : vector<4x8x8xf32>
    %93 = tpu.matmul %90, %92, %cst_45 {dimension_numbers = #tpu.dot_dimension_numbers<[2], [2], [1], [1], [0, 0, 0, 1, 1, 1], [0], [0]>} : vector<4x8x32xbf16>, vector<4x8x32xbf16>, vector<4x8x8xf32> -> vector<4x8x8xf32>
    "tpu.trace_stop"() : () -> ()
    %cst_46 = arith.constant 0.176776692 : f32
    %94 = vector.broadcast %cst_46 : f32 to vector<4x8x8xf32>
    %95 = arith.mulf %93, %94 : vector<4x8x8xf32>
    %96 = arith.addf %95, %32 : vector<4x8x8xf32>
    %cst_47 = arith.constant dense<0xFF800000> : vector<4x8xf32>
    %97 = vector.multi_reduction <maximumf>, %96, %cst_47 [2] : vector<4x8x8xf32> to vector<4x8xf32>
    %98 = vector.shape_cast %97 : vector<4x8xf32> to vector<4x8x1xf32>
    %99 = vector.broadcast %98 : vector<4x8x1xf32> to vector<4x8x8xf32>
    %100 = arith.subf %96, %99 : vector<4x8x8xf32>
    %101 = math.exp %100 : vector<4x8x8xf32>
    %cst_48 = arith.constant dense<0.000000e+00> : vector<4x8xf32>
    %102 = vector.multi_reduction <add>, %101, %cst_48 [2] : vector<4x8x8xf32> to vector<4x8xf32>
    %103 = vector.shape_cast %102 : vector<4x8xf32> to vector<4x8x1xf32>
    %104 = tpu.reciprocal %103 {approx = true} : vector<4x8x1xf32> -> vector<4x8x1xf32>
    %105 = vector.broadcast %104 : vector<4x8x1xf32> to vector<4x8x8xf32>
    %106 = arith.mulf %101, %105 : vector<4x8x8xf32>
    %107 = arith.truncf %106 : vector<4x8x8xf32> to vector<4x8x8xbf16>
    %108 = vector.extract_strided_slice %64 {offsets = [1, 0, 0, 0], sizes = [1, 4, 8, 32], strides = [1, 1, 1, 1]} : vector<2x4x8x32xbf16> to vector<1x4x8x32xbf16>
    %109 = vector.shape_cast %108 : vector<1x4x8x32xbf16> to vector<4x8x32xbf16>
    "tpu.trace_start"() <{level = 10 : i32, message = "hqk,hkd->hqd"}> : () -> ()
    %cst_49 = arith.constant dense<0.000000e+00> : vector<4x8x32xf32>
    %110 = tpu.matmul %107, %109, %cst_49 {dimension_numbers = #tpu.dot_dimension_numbers<[2], [1], [1], [2], [0, 0, 0, 1, 1, 2], [0], [0]>} : vector<4x8x8xbf16>, vector<4x8x32xbf16>, vector<4x8x32xf32> -> vector<4x8x32xf32>
    "tpu.trace_stop"() : () -> ()
    %111 = tpu.transpose %110, [1, 0, 2] : vector<4x8x32xf32> -> vector<8x4x32xf32>
    %112 = vector.shape_cast %111 : vector<8x4x32xf32> to vector<8x128xf32>
    %113 = tpu.concatenate %88, %112 in 0 : vector<8x128xf32>, vector<8x128xf32> -> vector<16x128xf32>
    %114 = arith.truncf %113 : vector<16x128xf32> to vector<16x128xbf16>
    %c0_50 = arith.constant 0 : index
    %c0_51 = arith.constant 0 : index
    %c0_52 = arith.constant 0 : index
    %115 = vector.load %arg15[%c0_50, %c0_51, %c0_52] : memref<2x128x128xbf16, #tpu.memory_space<vmem>>, vector<1x128x128xbf16>
    %116 = vector.shape_cast %115 : vector<1x128x128xbf16> to vector<128x128xbf16>
    %cst_53 = arith.constant dense<0.000000e+00> : vector<16x128xf32>
    %117 = tpu.matmul %114, %116, %cst_53 {dimension_numbers = #tpu.dot_dimension_numbers<[1], [0], [0], [1], [0, 0, 1, 1], [], []>} : vector<16x128xbf16>, vector<128x128xbf16>, vector<16x128xf32> -> vector<16x128xf32>
    %c0_54 = arith.constant 0 : index
    %c0_55 = arith.constant 0 : index
    %c0_56 = arith.constant 0 : index
    %118 = vector.load %arg16[%c0_54, %c0_55, %c0_56] : memref<2x1x128xf32, #tpu.memory_space<vmem>>, vector<1x1x128xf32>
    %119 = vector.shape_cast %118 : vector<1x1x128xf32> to vector<1x128xf32>
    %120 = vector.broadcast %119 : vector<1x128xf32> to vector<16x128xf32>
    %121 = arith.addf %117, %120 : vector<16x128xf32>
    %122 = arith.addf %33, %121 : vector<16x128xf32>
    %c0_57 = arith.constant 0 : index
    %c0_58 = arith.constant 0 : index
    %c0_59 = arith.constant 0 : index
    %123 = vector.load %arg17[%c0_57, %c0_58, %c0_59] : memref<2x1x128xf32, #tpu.memory_space<vmem>>, vector<1x1x128xf32>
    %124 = vector.shape_cast %123 : vector<1x1x128xf32> to vector<1x128xf32>
    %c0_60 = arith.constant 0 : index
    %c0_61 = arith.constant 0 : index
    %c0_62 = arith.constant 0 : index
    %125 = vector.load %arg18[%c0_60, %c0_61, %c0_62] : memref<2x1x128xf32, #tpu.memory_space<vmem>>, vector<1x1x128xf32>
    %126 = vector.shape_cast %125 : vector<1x1x128xf32> to vector<1x128xf32>
    %cst_63 = arith.constant dense<0.000000e+00> : vector<16xf32>
    %127 = vector.multi_reduction <add>, %122, %cst_63 [1] : vector<16x128xf32> to vector<16xf32>
    %128 = vector.shape_cast %127 : vector<16xf32> to vector<16x1xf32>
    %cst_64 = arith.constant 1.280000e+02 : f32
    %129 = vector.broadcast %cst_64 : f32 to vector<16x1xf32>
    %130 = arith.divf %128, %129 : vector<16x1xf32>
    %131 = vector.broadcast %130 : vector<16x1xf32> to vector<16x128xf32>
    %132 = arith.subf %122, %131 : vector<16x128xf32>
    %133 = arith.mulf %132, %132 : vector<16x128xf32>
    %cst_65 = arith.constant dense<0.000000e+00> : vector<16xf32>
    %134 = vector.multi_reduction <add>, %133, %cst_65 [1] : vector<16x128xf32> to vector<16xf32>
    %135 = vector.shape_cast %134 : vector<16xf32> to vector<16x1xf32>
    %cst_66 = arith.constant 1.280000e+02 : f32
    %136 = vector.broadcast %cst_66 : f32 to vector<16x1xf32>
    %137 = arith.divf %135, %136 : vector<16x1xf32>
    %138 = vector.broadcast %130 : vector<16x1xf32> to vector<16x128xf32>
    %139 = arith.subf %122, %138 : vector<16x128xf32>
    %cst_67 = arith.constant 9.99999974E-6 : f32
    %140 = vector.broadcast %cst_67 : f32 to vector<16x1xf32>
    %141 = arith.addf %137, %140 : vector<16x1xf32>
    %142 = math.rsqrt %141 : vector<16x1xf32>
    %143 = vector.broadcast %142 : vector<16x1xf32> to vector<16x128xf32>
    %144 = arith.mulf %139, %143 : vector<16x128xf32>
    %145 = vector.broadcast %124 : vector<1x128xf32> to vector<16x128xf32>
    %146 = arith.mulf %144, %145 : vector<16x128xf32>
    %147 = vector.broadcast %126 : vector<1x128xf32> to vector<16x128xf32>
    %148 = arith.addf %146, %147 : vector<16x128xf32>
    %149 = arith.truncf %148 : vector<16x128xf32> to vector<16x128xbf16>
    %c0_68 = arith.constant 0 : index
    %c0_69 = arith.constant 0 : index
    %c0_70 = arith.constant 0 : index
    %150 = vector.load %arg19[%c0_68, %c0_69, %c0_70] : memref<2x128x256xbf16, #tpu.memory_space<vmem>>, vector<1x128x256xbf16>
    %151 = vector.shape_cast %150 : vector<1x128x256xbf16> to vector<128x256xbf16>
    %cst_71 = arith.constant dense<0.000000e+00> : vector<16x256xf32>
    %152 = tpu.matmul %149, %151, %cst_71 {dimension_numbers = #tpu.dot_dimension_numbers<[1], [0], [0], [1], [0, 0, 1, 1], [], []>} : vector<16x128xbf16>, vector<128x256xbf16>, vector<16x256xf32> -> vector<16x256xf32>
    %c0_72 = arith.constant 0 : index
    %c0_73 = arith.constant 0 : index
    %c0_74 = arith.constant 0 : index
    %153 = vector.load %arg20[%c0_72, %c0_73, %c0_74] : memref<2x1x256xf32, #tpu.memory_space<vmem>>, vector<1x1x256xf32>
    %154 = vector.shape_cast %153 : vector<1x1x256xf32> to vector<1x256xf32>
    %155 = vector.broadcast %154 : vector<1x256xf32> to vector<16x256xf32>
    %156 = arith.addf %152, %155 : vector<16x256xf32>
    %157 = arith.mulf %156, %156 : vector<16x256xf32>
    %158 = arith.mulf %156, %157 : vector<16x256xf32>
    %cst_75 = arith.constant 4.471500e-02 : f32
    %159 = vector.broadcast %cst_75 : f32 to vector<16x256xf32>
    %160 = arith.mulf %159, %158 : vector<16x256xf32>
    %161 = arith.addf %156, %160 : vector<16x256xf32>
    %cst_76 = arith.constant 0.797884583 : f32
    %162 = vector.broadcast %cst_76 : f32 to vector<16x256xf32>
    %163 = arith.mulf %162, %161 : vector<16x256xf32>
    %164 = math.tanh %163 : vector<16x256xf32>
    %cst_77 = arith.constant 1.000000e+00 : f32
    %165 = vector.broadcast %cst_77 : f32 to vector<16x256xf32>
    %166 = arith.addf %165, %164 : vector<16x256xf32>
    %cst_78 = arith.constant 5.000000e-01 : f32
    %167 = vector.broadcast %cst_78 : f32 to vector<16x256xf32>
    %168 = arith.mulf %167, %166 : vector<16x256xf32>
    %169 = arith.mulf %156, %168 : vector<16x256xf32>
    %170 = arith.truncf %169 : vector<16x256xf32> to vector<16x256xbf16>
    %c0_79 = arith.constant 0 : index
    %c0_80 = arith.constant 0 : index
    %c0_81 = arith.constant 0 : index
    %171 = vector.load %arg21[%c0_79, %c0_80, %c0_81] : memref<2x256x128xbf16, #tpu.memory_space<vmem>>, vector<1x256x128xbf16>
    %172 = vector.shape_cast %171 : vector<1x256x128xbf16> to vector<256x128xbf16>
    %cst_82 = arith.constant dense<0.000000e+00> : vector<16x128xf32>
    %173 = tpu.matmul %170, %172, %cst_82 {dimension_numbers = #tpu.dot_dimension_numbers<[1], [0], [0], [1], [0, 0, 1, 1], [], []>} : vector<16x256xbf16>, vector<256x128xbf16>, vector<16x128xf32> -> vector<16x128xf32>
    %c0_83 = arith.constant 0 : index
    %c0_84 = arith.constant 0 : index
    %c0_85 = arith.constant 0 : index
    %174 = vector.load %arg22[%c0_83, %c0_84, %c0_85] : memref<2x1x128xf32, #tpu.memory_space<vmem>>, vector<1x1x128xf32>
    %175 = vector.shape_cast %174 : vector<1x1x128xf32> to vector<1x128xf32>
    %176 = vector.broadcast %175 : vector<1x128xf32> to vector<16x128xf32>
    %177 = arith.addf %173, %176 : vector<16x128xf32>
    %178 = arith.addf %148, %177 : vector<16x128xf32>
    %c0_86 = arith.constant 0 : index
    %c0_87 = arith.constant 0 : index
    %c0_88 = arith.constant 0 : index
    %179 = vector.load %arg23[%c0_86, %c0_87, %c0_88] : memref<2x1x128xf32, #tpu.memory_space<vmem>>, vector<1x1x128xf32>
    %180 = vector.shape_cast %179 : vector<1x1x128xf32> to vector<1x128xf32>
    %c0_89 = arith.constant 0 : index
    %c0_90 = arith.constant 0 : index
    %c0_91 = arith.constant 0 : index
    %181 = vector.load %arg24[%c0_89, %c0_90, %c0_91] : memref<2x1x128xf32, #tpu.memory_space<vmem>>, vector<1x1x128xf32>
    %182 = vector.shape_cast %181 : vector<1x1x128xf32> to vector<1x128xf32>
    %cst_92 = arith.constant dense<0.000000e+00> : vector<16xf32>
    %183 = vector.multi_reduction <add>, %178, %cst_92 [1] : vector<16x128xf32> to vector<16xf32>
    %184 = vector.shape_cast %183 : vector<16xf32> to vector<16x1xf32>
    %cst_93 = arith.constant 1.280000e+02 : f32
    %185 = vector.broadcast %cst_93 : f32 to vector<16x1xf32>
    %186 = arith.divf %184, %185 : vector<16x1xf32>
    %187 = vector.broadcast %186 : vector<16x1xf32> to vector<16x128xf32>
    %188 = arith.subf %178, %187 : vector<16x128xf32>
    %189 = arith.mulf %188, %188 : vector<16x128xf32>
    %cst_94 = arith.constant dense<0.000000e+00> : vector<16xf32>
    %190 = vector.multi_reduction <add>, %189, %cst_94 [1] : vector<16x128xf32> to vector<16xf32>
    %191 = vector.shape_cast %190 : vector<16xf32> to vector<16x1xf32>
    %cst_95 = arith.constant 1.280000e+02 : f32
    %192 = vector.broadcast %cst_95 : f32 to vector<16x1xf32>
    %193 = arith.divf %191, %192 : vector<16x1xf32>
    %194 = vector.broadcast %186 : vector<16x1xf32> to vector<16x128xf32>
    %195 = arith.subf %178, %194 : vector<16x128xf32>
    %cst_96 = arith.constant 9.99999974E-6 : f32
    %196 = vector.broadcast %cst_96 : f32 to vector<16x1xf32>
    %197 = arith.addf %193, %196 : vector<16x1xf32>
    %198 = math.rsqrt %197 : vector<16x1xf32>
    %199 = vector.broadcast %198 : vector<16x1xf32> to vector<16x128xf32>
    %200 = arith.mulf %195, %199 : vector<16x128xf32>
    %201 = vector.broadcast %180 : vector<1x128xf32> to vector<16x128xf32>
    %202 = arith.mulf %200, %201 : vector<16x128xf32>
    %203 = vector.broadcast %182 : vector<1x128xf32> to vector<16x128xf32>
    %204 = arith.addf %202, %203 : vector<16x128xf32>
    %205 = arith.truncf %204 : vector<16x128xf32> to vector<16x128xbf16>
    %c1 = arith.constant 1 : index
    %c0_97 = arith.constant 0 : index
    %c0_98 = arith.constant 0 : index
    %206 = vector.load %arg9[%c1, %c0_97, %c0_98] : memref<2x128x128xbf16, #tpu.memory_space<vmem>>, vector<1x128x128xbf16>
    %207 = vector.shape_cast %206 : vector<1x128x128xbf16> to vector<128x128xbf16>
    %cst_99 = arith.constant dense<0.000000e+00> : vector<16x128xf32>
    %208 = tpu.matmul %205, %207, %cst_99 {dimension_numbers = #tpu.dot_dimension_numbers<[1], [0], [0], [1], [0, 0, 1, 1], [], []>} : vector<16x128xbf16>, vector<128x128xbf16>, vector<16x128xf32> -> vector<16x128xf32>
    %c1_100 = arith.constant 1 : index
    %c0_101 = arith.constant 0 : index
    %c0_102 = arith.constant 0 : index
    %209 = vector.load %arg10[%c1_100, %c0_101, %c0_102] : memref<2x1x128xf32, #tpu.memory_space<vmem>>, vector<1x1x128xf32>
    %210 = vector.shape_cast %209 : vector<1x1x128xf32> to vector<1x128xf32>
    %211 = vector.broadcast %210 : vector<1x128xf32> to vector<16x128xf32>
    %212 = arith.addf %208, %211 : vector<16x128xf32>
    %c1_103 = arith.constant 1 : index
    %c0_104 = arith.constant 0 : index
    %c0_105 = arith.constant 0 : index
    %213 = vector.load %arg11[%c1_103, %c0_104, %c0_105] : memref<2x128x128xbf16, #tpu.memory_space<vmem>>, vector<1x128x128xbf16>
    %214 = vector.shape_cast %213 : vector<1x128x128xbf16> to vector<128x128xbf16>
    %cst_106 = arith.constant dense<0.000000e+00> : vector<16x128xf32>
    %215 = tpu.matmul %205, %214, %cst_106 {dimension_numbers = #tpu.dot_dimension_numbers<[1], [0], [0], [1], [0, 0, 1, 1], [], []>} : vector<16x128xbf16>, vector<128x128xbf16>, vector<16x128xf32> -> vector<16x128xf32>
    %c1_107 = arith.constant 1 : index
    %c0_108 = arith.constant 0 : index
    %c0_109 = arith.constant 0 : index
    %216 = vector.load %arg12[%c1_107, %c0_108, %c0_109] : memref<2x1x128xf32, #tpu.memory_space<vmem>>, vector<1x1x128xf32>
    %217 = vector.shape_cast %216 : vector<1x1x128xf32> to vector<1x128xf32>
    %218 = vector.broadcast %217 : vector<1x128xf32> to vector<16x128xf32>
    %219 = arith.addf %215, %218 : vector<16x128xf32>
    %c1_110 = arith.constant 1 : index
    %c0_111 = arith.constant 0 : index
    %c0_112 = arith.constant 0 : index
    %220 = vector.load %arg13[%c1_110, %c0_111, %c0_112] : memref<2x128x128xbf16, #tpu.memory_space<vmem>>, vector<1x128x128xbf16>
    %221 = vector.shape_cast %220 : vector<1x128x128xbf16> to vector<128x128xbf16>
    %cst_113 = arith.constant dense<0.000000e+00> : vector<16x128xf32>
    %222 = tpu.matmul %205, %221, %cst_113 {dimension_numbers = #tpu.dot_dimension_numbers<[1], [0], [0], [1], [0, 0, 1, 1], [], []>} : vector<16x128xbf16>, vector<128x128xbf16>, vector<16x128xf32> -> vector<16x128xf32>
    %c1_114 = arith.constant 1 : index
    %c0_115 = arith.constant 0 : index
    %c0_116 = arith.constant 0 : index
    %223 = vector.load %arg14[%c1_114, %c0_115, %c0_116] : memref<2x1x128xf32, #tpu.memory_space<vmem>>, vector<1x1x128xf32>
    %224 = vector.shape_cast %223 : vector<1x1x128xf32> to vector<1x128xf32>
    %225 = vector.broadcast %224 : vector<1x128xf32> to vector<16x128xf32>
    %226 = arith.addf %222, %225 : vector<16x128xf32>
    %227 = vector.shape_cast %212 : vector<16x128xf32> to vector<2x8x4x32xf32>
    %228 = tpu.transpose %227, [0, 2, 1, 3] : vector<2x8x4x32xf32> -> vector<2x4x8x32xf32>
    %229 = arith.truncf %228 : vector<2x4x8x32xf32> to vector<2x4x8x32xbf16>
    %230 = vector.shape_cast %219 : vector<16x128xf32> to vector<2x8x4x32xf32>
    %231 = tpu.transpose %230, [0, 2, 1, 3] : vector<2x8x4x32xf32> -> vector<2x4x8x32xf32>
    %232 = arith.truncf %231 : vector<2x4x8x32xf32> to vector<2x4x8x32xbf16>
    %233 = vector.shape_cast %226 : vector<16x128xf32> to vector<2x8x4x32xf32>
    %234 = tpu.transpose %233, [0, 2, 1, 3] : vector<2x8x4x32xf32> -> vector<2x4x8x32xf32>
    %235 = arith.truncf %234 : vector<2x4x8x32xf32> to vector<2x4x8x32xbf16>
    %236 = vector.extract_strided_slice %229 {offsets = [0, 0, 0, 0], sizes = [1, 4, 8, 32], strides = [1, 1, 1, 1]} : vector<2x4x8x32xbf16> to vector<1x4x8x32xbf16>
    %237 = vector.shape_cast %236 : vector<1x4x8x32xbf16> to vector<4x8x32xbf16>
    %238 = vector.extract_strided_slice %232 {offsets = [0, 0, 0, 0], sizes = [1, 4, 8, 32], strides = [1, 1, 1, 1]} : vector<2x4x8x32xbf16> to vector<1x4x8x32xbf16>
    %239 = vector.shape_cast %238 : vector<1x4x8x32xbf16> to vector<4x8x32xbf16>
    "tpu.trace_start"() <{level = 10 : i32, message = "hqd,hkd->hqk"}> : () -> ()
    %cst_117 = arith.constant dense<0.000000e+00> : vector<4x8x8xf32>
    %240 = tpu.matmul %237, %239, %cst_117 {dimension_numbers = #tpu.dot_dimension_numbers<[2], [2], [1], [1], [0, 0, 0, 1, 1, 1], [0], [0]>} : vector<4x8x32xbf16>, vector<4x8x32xbf16>, vector<4x8x8xf32> -> vector<4x8x8xf32>
    "tpu.trace_stop"() : () -> ()
    %cst_118 = arith.constant 0.176776692 : f32
    %241 = vector.broadcast %cst_118 : f32 to vector<4x8x8xf32>
    %242 = arith.mulf %240, %241 : vector<4x8x8xf32>
    %243 = arith.addf %242, %28 : vector<4x8x8xf32>
    %cst_119 = arith.constant dense<0xFF800000> : vector<4x8xf32>
    %244 = vector.multi_reduction <maximumf>, %243, %cst_119 [2] : vector<4x8x8xf32> to vector<4x8xf32>
    %245 = vector.shape_cast %244 : vector<4x8xf32> to vector<4x8x1xf32>
    %246 = vector.broadcast %245 : vector<4x8x1xf32> to vector<4x8x8xf32>
    %247 = arith.subf %243, %246 : vector<4x8x8xf32>
    %248 = math.exp %247 : vector<4x8x8xf32>
    %cst_120 = arith.constant dense<0.000000e+00> : vector<4x8xf32>
    %249 = vector.multi_reduction <add>, %248, %cst_120 [2] : vector<4x8x8xf32> to vector<4x8xf32>
    %250 = vector.shape_cast %249 : vector<4x8xf32> to vector<4x8x1xf32>
    %251 = tpu.reciprocal %250 {approx = true} : vector<4x8x1xf32> -> vector<4x8x1xf32>
    %252 = vector.broadcast %251 : vector<4x8x1xf32> to vector<4x8x8xf32>
    %253 = arith.mulf %248, %252 : vector<4x8x8xf32>
    %254 = arith.truncf %253 : vector<4x8x8xf32> to vector<4x8x8xbf16>
    %255 = vector.extract_strided_slice %235 {offsets = [0, 0, 0, 0], sizes = [1, 4, 8, 32], strides = [1, 1, 1, 1]} : vector<2x4x8x32xbf16> to vector<1x4x8x32xbf16>
    %256 = vector.shape_cast %255 : vector<1x4x8x32xbf16> to vector<4x8x32xbf16>
    "tpu.trace_start"() <{level = 10 : i32, message = "hqk,hkd->hqd"}> : () -> ()
    %cst_121 = arith.constant dense<0.000000e+00> : vector<4x8x32xf32>
    %257 = tpu.matmul %254, %256, %cst_121 {dimension_numbers = #tpu.dot_dimension_numbers<[2], [1], [1], [2], [0, 0, 0, 1, 1, 2], [0], [0]>} : vector<4x8x8xbf16>, vector<4x8x32xbf16>, vector<4x8x32xf32> -> vector<4x8x32xf32>
    "tpu.trace_stop"() : () -> ()
    %258 = tpu.transpose %257, [1, 0, 2] : vector<4x8x32xf32> -> vector<8x4x32xf32>
    %259 = vector.shape_cast %258 : vector<8x4x32xf32> to vector<8x128xf32>
    %260 = vector.extract_strided_slice %229 {offsets = [1, 0, 0, 0], sizes = [1, 4, 8, 32], strides = [1, 1, 1, 1]} : vector<2x4x8x32xbf16> to vector<1x4x8x32xbf16>
    %261 = vector.shape_cast %260 : vector<1x4x8x32xbf16> to vector<4x8x32xbf16>
    %262 = vector.extract_strided_slice %232 {offsets = [1, 0, 0, 0], sizes = [1, 4, 8, 32], strides = [1, 1, 1, 1]} : vector<2x4x8x32xbf16> to vector<1x4x8x32xbf16>
    %263 = vector.shape_cast %262 : vector<1x4x8x32xbf16> to vector<4x8x32xbf16>
    "tpu.trace_start"() <{level = 10 : i32, message = "hqd,hkd->hqk"}> : () -> ()
    %cst_122 = arith.constant dense<0.000000e+00> : vector<4x8x8xf32>
    %264 = tpu.matmul %261, %263, %cst_122 {dimension_numbers = #tpu.dot_dimension_numbers<[2], [2], [1], [1], [0, 0, 0, 1, 1, 1], [0], [0]>} : vector<4x8x32xbf16>, vector<4x8x32xbf16>, vector<4x8x8xf32> -> vector<4x8x8xf32>
    "tpu.trace_stop"() : () -> ()
    %cst_123 = arith.constant 0.176776692 : f32
    %265 = vector.broadcast %cst_123 : f32 to vector<4x8x8xf32>
    %266 = arith.mulf %264, %265 : vector<4x8x8xf32>
    %267 = arith.addf %266, %32 : vector<4x8x8xf32>
    %cst_124 = arith.constant dense<0xFF800000> : vector<4x8xf32>
    %268 = vector.multi_reduction <maximumf>, %267, %cst_124 [2] : vector<4x8x8xf32> to vector<4x8xf32>
    %269 = vector.shape_cast %268 : vector<4x8xf32> to vector<4x8x1xf32>
    %270 = vector.broadcast %269 : vector<4x8x1xf32> to vector<4x8x8xf32>
    %271 = arith.subf %267, %270 : vector<4x8x8xf32>
    %272 = math.exp %271 : vector<4x8x8xf32>
    %cst_125 = arith.constant dense<0.000000e+00> : vector<4x8xf32>
    %273 = vector.multi_reduction <add>, %272, %cst_125 [2] : vector<4x8x8xf32> to vector<4x8xf32>
    %274 = vector.shape_cast %273 : vector<4x8xf32> to vector<4x8x1xf32>
    %275 = tpu.reciprocal %274 {approx = true} : vector<4x8x1xf32> -> vector<4x8x1xf32>
    %276 = vector.broadcast %275 : vector<4x8x1xf32> to vector<4x8x8xf32>
    %277 = arith.mulf %272, %276 : vector<4x8x8xf32>
    %278 = arith.truncf %277 : vector<4x8x8xf32> to vector<4x8x8xbf16>
    %279 = vector.extract_strided_slice %235 {offsets = [1, 0, 0, 0], sizes = [1, 4, 8, 32], strides = [1, 1, 1, 1]} : vector<2x4x8x32xbf16> to vector<1x4x8x32xbf16>
    %280 = vector.shape_cast %279 : vector<1x4x8x32xbf16> to vector<4x8x32xbf16>
    "tpu.trace_start"() <{level = 10 : i32, message = "hqk,hkd->hqd"}> : () -> ()
    %cst_126 = arith.constant dense<0.000000e+00> : vector<4x8x32xf32>
    %281 = tpu.matmul %278, %280, %cst_126 {dimension_numbers = #tpu.dot_dimension_numbers<[2], [1], [1], [2], [0, 0, 0, 1, 1, 2], [0], [0]>} : vector<4x8x8xbf16>, vector<4x8x32xbf16>, vector<4x8x32xf32> -> vector<4x8x32xf32>
    "tpu.trace_stop"() : () -> ()
    %282 = tpu.transpose %281, [1, 0, 2] : vector<4x8x32xf32> -> vector<8x4x32xf32>
    %283 = vector.shape_cast %282 : vector<8x4x32xf32> to vector<8x128xf32>
    %284 = tpu.concatenate %259, %283 in 0 : vector<8x128xf32>, vector<8x128xf32> -> vector<16x128xf32>
    %285 = arith.truncf %284 : vector<16x128xf32> to vector<16x128xbf16>
    %c1_127 = arith.constant 1 : index
    %c0_128 = arith.constant 0 : index
    %c0_129 = arith.constant 0 : index
    %286 = vector.load %arg15[%c1_127, %c0_128, %c0_129] : memref<2x128x128xbf16, #tpu.memory_space<vmem>>, vector<1x128x128xbf16>
    %287 = vector.shape_cast %286 : vector<1x128x128xbf16> to vector<128x128xbf16>
    %cst_130 = arith.constant dense<0.000000e+00> : vector<16x128xf32>
    %288 = tpu.matmul %285, %287, %cst_130 {dimension_numbers = #tpu.dot_dimension_numbers<[1], [0], [0], [1], [0, 0, 1, 1], [], []>} : vector<16x128xbf16>, vector<128x128xbf16>, vector<16x128xf32> -> vector<16x128xf32>
    %c1_131 = arith.constant 1 : index
    %c0_132 = arith.constant 0 : index
    %c0_133 = arith.constant 0 : index
    %289 = vector.load %arg16[%c1_131, %c0_132, %c0_133] : memref<2x1x128xf32, #tpu.memory_space<vmem>>, vector<1x1x128xf32>
    %290 = vector.shape_cast %289 : vector<1x1x128xf32> to vector<1x128xf32>
    %291 = vector.broadcast %290 : vector<1x128xf32> to vector<16x128xf32>
    %292 = arith.addf %288, %291 : vector<16x128xf32>
    %293 = arith.addf %204, %292 : vector<16x128xf32>
    %c1_134 = arith.constant 1 : index
    %c0_135 = arith.constant 0 : index
    %c0_136 = arith.constant 0 : index
    %294 = vector.load %arg17[%c1_134, %c0_135, %c0_136] : memref<2x1x128xf32, #tpu.memory_space<vmem>>, vector<1x1x128xf32>
    %295 = vector.shape_cast %294 : vector<1x1x128xf32> to vector<1x128xf32>
    %c1_137 = arith.constant 1 : index
    %c0_138 = arith.constant 0 : index
    %c0_139 = arith.constant 0 : index
    %296 = vector.load %arg18[%c1_137, %c0_138, %c0_139] : memref<2x1x128xf32, #tpu.memory_space<vmem>>, vector<1x1x128xf32>
    %297 = vector.shape_cast %296 : vector<1x1x128xf32> to vector<1x128xf32>
    %cst_140 = arith.constant dense<0.000000e+00> : vector<16xf32>
    %298 = vector.multi_reduction <add>, %293, %cst_140 [1] : vector<16x128xf32> to vector<16xf32>
    %299 = vector.shape_cast %298 : vector<16xf32> to vector<16x1xf32>
    %cst_141 = arith.constant 1.280000e+02 : f32
    %300 = vector.broadcast %cst_141 : f32 to vector<16x1xf32>
    %301 = arith.divf %299, %300 : vector<16x1xf32>
    %302 = vector.broadcast %301 : vector<16x1xf32> to vector<16x128xf32>
    %303 = arith.subf %293, %302 : vector<16x128xf32>
    %304 = arith.mulf %303, %303 : vector<16x128xf32>
    %cst_142 = arith.constant dense<0.000000e+00> : vector<16xf32>
    %305 = vector.multi_reduction <add>, %304, %cst_142 [1] : vector<16x128xf32> to vector<16xf32>
    %306 = vector.shape_cast %305 : vector<16xf32> to vector<16x1xf32>
    %cst_143 = arith.constant 1.280000e+02 : f32
    %307 = vector.broadcast %cst_143 : f32 to vector<16x1xf32>
    %308 = arith.divf %306, %307 : vector<16x1xf32>
    %309 = vector.broadcast %301 : vector<16x1xf32> to vector<16x128xf32>
    %310 = arith.subf %293, %309 : vector<16x128xf32>
    %cst_144 = arith.constant 9.99999974E-6 : f32
    %311 = vector.broadcast %cst_144 : f32 to vector<16x1xf32>
    %312 = arith.addf %308, %311 : vector<16x1xf32>
    %313 = math.rsqrt %312 : vector<16x1xf32>
    %314 = vector.broadcast %313 : vector<16x1xf32> to vector<16x128xf32>
    %315 = arith.mulf %310, %314 : vector<16x128xf32>
    %316 = vector.broadcast %295 : vector<1x128xf32> to vector<16x128xf32>
    %317 = arith.mulf %315, %316 : vector<16x128xf32>
    %318 = vector.broadcast %297 : vector<1x128xf32> to vector<16x128xf32>
    %319 = arith.addf %317, %318 : vector<16x128xf32>
    %320 = arith.truncf %319 : vector<16x128xf32> to vector<16x128xbf16>
    %c1_145 = arith.constant 1 : index
    %c0_146 = arith.constant 0 : index
    %c0_147 = arith.constant 0 : index
    %321 = vector.load %arg19[%c1_145, %c0_146, %c0_147] : memref<2x128x256xbf16, #tpu.memory_space<vmem>>, vector<1x128x256xbf16>
    %322 = vector.shape_cast %321 : vector<1x128x256xbf16> to vector<128x256xbf16>
    %cst_148 = arith.constant dense<0.000000e+00> : vector<16x256xf32>
    %323 = tpu.matmul %320, %322, %cst_148 {dimension_numbers = #tpu.dot_dimension_numbers<[1], [0], [0], [1], [0, 0, 1, 1], [], []>} : vector<16x128xbf16>, vector<128x256xbf16>, vector<16x256xf32> -> vector<16x256xf32>
    %c1_149 = arith.constant 1 : index
    %c0_150 = arith.constant 0 : index
    %c0_151 = arith.constant 0 : index
    %324 = vector.load %arg20[%c1_149, %c0_150, %c0_151] : memref<2x1x256xf32, #tpu.memory_space<vmem>>, vector<1x1x256xf32>
    %325 = vector.shape_cast %324 : vector<1x1x256xf32> to vector<1x256xf32>
    %326 = vector.broadcast %325 : vector<1x256xf32> to vector<16x256xf32>
    %327 = arith.addf %323, %326 : vector<16x256xf32>
    %328 = arith.mulf %327, %327 : vector<16x256xf32>
    %329 = arith.mulf %327, %328 : vector<16x256xf32>
    %cst_152 = arith.constant 4.471500e-02 : f32
    %330 = vector.broadcast %cst_152 : f32 to vector<16x256xf32>
    %331 = arith.mulf %330, %329 : vector<16x256xf32>
    %332 = arith.addf %327, %331 : vector<16x256xf32>
    %cst_153 = arith.constant 0.797884583 : f32
    %333 = vector.broadcast %cst_153 : f32 to vector<16x256xf32>
    %334 = arith.mulf %333, %332 : vector<16x256xf32>
    %335 = math.tanh %334 : vector<16x256xf32>
    %cst_154 = arith.constant 1.000000e+00 : f32
    %336 = vector.broadcast %cst_154 : f32 to vector<16x256xf32>
    %337 = arith.addf %336, %335 : vector<16x256xf32>
    %cst_155 = arith.constant 5.000000e-01 : f32
    %338 = vector.broadcast %cst_155 : f32 to vector<16x256xf32>
    %339 = arith.mulf %338, %337 : vector<16x256xf32>
    %340 = arith.mulf %327, %339 : vector<16x256xf32>
    %341 = arith.truncf %340 : vector<16x256xf32> to vector<16x256xbf16>
    %c1_156 = arith.constant 1 : index
    %c0_157 = arith.constant 0 : index
    %c0_158 = arith.constant 0 : index
    %342 = vector.load %arg21[%c1_156, %c0_157, %c0_158] : memref<2x256x128xbf16, #tpu.memory_space<vmem>>, vector<1x256x128xbf16>
    %343 = vector.shape_cast %342 : vector<1x256x128xbf16> to vector<256x128xbf16>
    %cst_159 = arith.constant dense<0.000000e+00> : vector<16x128xf32>
    %344 = tpu.matmul %341, %343, %cst_159 {dimension_numbers = #tpu.dot_dimension_numbers<[1], [0], [0], [1], [0, 0, 1, 1], [], []>} : vector<16x256xbf16>, vector<256x128xbf16>, vector<16x128xf32> -> vector<16x128xf32>
    %c1_160 = arith.constant 1 : index
    %c0_161 = arith.constant 0 : index
    %c0_162 = arith.constant 0 : index
    %345 = vector.load %arg22[%c1_160, %c0_161, %c0_162] : memref<2x1x128xf32, #tpu.memory_space<vmem>>, vector<1x1x128xf32>
    %346 = vector.shape_cast %345 : vector<1x1x128xf32> to vector<1x128xf32>
    %347 = vector.broadcast %346 : vector<1x128xf32> to vector<16x128xf32>
    %348 = arith.addf %344, %347 : vector<16x128xf32>
    %349 = arith.addf %319, %348 : vector<16x128xf32>
    %c1_163 = arith.constant 1 : index
    %c0_164 = arith.constant 0 : index
    %c0_165 = arith.constant 0 : index
    %350 = vector.load %arg23[%c1_163, %c0_164, %c0_165] : memref<2x1x128xf32, #tpu.memory_space<vmem>>, vector<1x1x128xf32>
    %351 = vector.shape_cast %350 : vector<1x1x128xf32> to vector<1x128xf32>
    %c1_166 = arith.constant 1 : index
    %c0_167 = arith.constant 0 : index
    %c0_168 = arith.constant 0 : index
    %352 = vector.load %arg24[%c1_166, %c0_167, %c0_168] : memref<2x1x128xf32, #tpu.memory_space<vmem>>, vector<1x1x128xf32>
    %353 = vector.shape_cast %352 : vector<1x1x128xf32> to vector<1x128xf32>
    %cst_169 = arith.constant dense<0.000000e+00> : vector<16xf32>
    %354 = vector.multi_reduction <add>, %349, %cst_169 [1] : vector<16x128xf32> to vector<16xf32>
    %355 = vector.shape_cast %354 : vector<16xf32> to vector<16x1xf32>
    %cst_170 = arith.constant 1.280000e+02 : f32
    %356 = vector.broadcast %cst_170 : f32 to vector<16x1xf32>
    %357 = arith.divf %355, %356 : vector<16x1xf32>
    %358 = vector.broadcast %357 : vector<16x1xf32> to vector<16x128xf32>
    %359 = arith.subf %349, %358 : vector<16x128xf32>
    %360 = arith.mulf %359, %359 : vector<16x128xf32>
    %cst_171 = arith.constant dense<0.000000e+00> : vector<16xf32>
    %361 = vector.multi_reduction <add>, %360, %cst_171 [1] : vector<16x128xf32> to vector<16xf32>
    %362 = vector.shape_cast %361 : vector<16xf32> to vector<16x1xf32>
    %cst_172 = arith.constant 1.280000e+02 : f32
    %363 = vector.broadcast %cst_172 : f32 to vector<16x1xf32>
    %364 = arith.divf %362, %363 : vector<16x1xf32>
    %365 = vector.broadcast %357 : vector<16x1xf32> to vector<16x128xf32>
    %366 = arith.subf %349, %365 : vector<16x128xf32>
    %cst_173 = arith.constant 9.99999974E-6 : f32
    %367 = vector.broadcast %cst_173 : f32 to vector<16x1xf32>
    %368 = arith.addf %364, %367 : vector<16x1xf32>
    %369 = math.rsqrt %368 : vector<16x1xf32>
    %370 = vector.broadcast %369 : vector<16x1xf32> to vector<16x128xf32>
    %371 = arith.mulf %366, %370 : vector<16x128xf32>
    %372 = vector.broadcast %351 : vector<1x128xf32> to vector<16x128xf32>
    %373 = arith.mulf %371, %372 : vector<16x128xf32>
    %374 = vector.broadcast %353 : vector<1x128xf32> to vector<16x128xf32>
    %375 = arith.addf %373, %374 : vector<16x128xf32>
    %376 = vector.shape_cast %375 : vector<16x128xf32> to vector<2x8x128xf32>
    %377 = vector.extract_strided_slice %376 {offsets = [0, 0, 0], sizes = [2, 1, 128], strides = [1, 1, 1]} : vector<2x8x128xf32> to vector<2x1x128xf32>
    %378 = vector.shape_cast %377 : vector<2x1x128xf32> to vector<2x128xf32>
    %379 = arith.truncf %378 : vector<2x128xf32> to vector<2x128xbf16>
    %c0_174 = arith.constant 0 : index
    %c0_175 = arith.constant 0 : index
    %380 = vector.load %arg25[%c0_174, %c0_175] : memref<128x128xbf16, #tpu.memory_space<vmem>>, vector<128x128xbf16>
    %cst_176 = arith.constant dense<0.000000e+00> : vector<2x128xf32>
    %381 = tpu.matmul %379, %380, %cst_176 {dimension_numbers = #tpu.dot_dimension_numbers<[1], [0], [0], [1], [0, 0, 1, 1], [], []>} : vector<2x128xbf16>, vector<128x128xbf16>, vector<2x128xf32> -> vector<2x128xf32>
    %c0_177 = arith.constant 0 : index
    %c0_178 = arith.constant 0 : index
    %382 = vector.load %arg26[%c0_177, %c0_178] : memref<1x128xf32, #tpu.memory_space<vmem>>, vector<1x128xf32>
    %383 = vector.broadcast %382 : vector<1x128xf32> to vector<2x128xf32>
    %384 = arith.addf %381, %383 : vector<2x128xf32>
    %385 = math.tanh %384 : vector<2x128xf32>
    %386 = arith.truncf %385 : vector<2x128xf32> to vector<2x128xbf16>
    %c0_179 = arith.constant 0 : index
    %c0_180 = arith.constant 0 : index
    %387 = vector.load %arg27[%c0_179, %c0_180] : memref<128x128xbf16, #tpu.memory_space<vmem>>, vector<128x128xbf16>
    %cst_181 = arith.constant dense<0.000000e+00> : vector<2x128xf32>
    %388 = tpu.matmul %386, %387, %cst_181 {dimension_numbers = #tpu.dot_dimension_numbers<[1], [0], [0], [1], [0, 0, 1, 1], [], []>} : vector<2x128xbf16>, vector<128x128xbf16>, vector<2x128xf32> -> vector<2x128xf32>
    %c0_182 = arith.constant 0 : index
    %c0_183 = arith.constant 0 : index
    %389 = vector.load %arg28[%c0_182, %c0_183] : memref<1x128xf32, #tpu.memory_space<vmem>>, vector<1x128xf32>
    %390 = vector.broadcast %389 : vector<1x128xf32> to vector<2x128xf32>
    %391 = arith.addf %388, %390 : vector<2x128xf32>
    %c0_184 = arith.constant 0 : index
    %c0_185 = arith.constant 0 : index
    %392 = vector.load %arg29[%c0_184, %c0_185] : memref<2x128xf32, #tpu.memory_space<vmem>>, vector<2x128xf32>
    tpu.vector_store %arg29[%c0_184, %c0_185], %391 {strides = array<i32>} : memref<2x128xf32, #tpu.memory_space<vmem>>, vector<2x128xf32>,
    return
  }
  func.func @transform_0(%arg0: i32) -> (i32, i32) {
    %c0_i32 = arith.constant 0 : i32
    %c0_i32_0 = arith.constant 0 : i32
    %c0_i32_1 = arith.constant 0 : i32
    return %c0_i32, %c0_i32_0 : i32, i32
  }
  func.func @transform_1(%arg0: i32) -> (i32, i32) {
    %c0_i32 = arith.constant 0 : i32
    %c0_i32_0 = arith.constant 0 : i32
    %c0_i32_1 = arith.constant 0 : i32
    return %c0_i32, %c0_i32_0 : i32, i32
  }
  func.func @transform_2(%arg0: i32) -> (i32, i32) {
    %c0_i32 = arith.constant 0 : i32
    %c0_i32_0 = arith.constant 0 : i32
    %c0_i32_1 = arith.constant 0 : i32
    return %c0_i32, %c0_i32_0 : i32, i32
  }
  func.func @transform_3(%arg0: i32) -> (i32, i32, i32) {
    %c0_i32 = arith.constant 0 : i32
    %c0_i32_0 = arith.constant 0 : i32
    %c0_i32_1 = arith.constant 0 : i32
    %c0_i32_2 = arith.constant 0 : i32
    return %c0_i32, %c0_i32_0, %c0_i32_1 : i32, i32, i32
  }
  func.func @transform_4(%arg0: i32) -> (i32, i32) {
    %c0_i32 = arith.constant 0 : i32
    %c0_i32_0 = arith.constant 0 : i32
    %c0_i32_1 = arith.constant 0 : i32
    return %c0_i32, %c0_i32_0 : i32, i32
  }
  func.func @transform_5(%arg0: i32) -> (i32, i32) {
    %c0_i32 = arith.constant 0 : i32
    %c0_i32_0 = arith.constant 0 : i32
    %c0_i32_1 = arith.constant 0 : i32
    return %c0_i32, %c0_i32_0 : i32, i32
  }
  func.func @transform_6(%arg0: i32) -> (i32, i32) {
    %c0_i32 = arith.constant 0 : i32
    %c0_i32_0 = arith.constant 0 : i32
    %c0_i32_1 = arith.constant 0 : i32
    return %c0_i32, %c0_i32_0 : i32, i32
  }
  func.func @transform_7(%arg0: i32) -> (i32, i32) {
    %c0_i32 = arith.constant 0 : i32
    %c0_i32_0 = arith.constant 0 : i32
    %c0_i32_1 = arith.constant 0 : i32
    return %c0_i32, %c0_i32_0 : i32, i32
  }
  func.func @transform_8(%arg0: i32) -> (i32, i32, i32) {
    %c0_i32 = arith.constant 0 : i32
    %c0_i32_0 = arith.constant 0 : i32
    %c0_i32_1 = arith.constant 0 : i32
    %c0_i32_2 = arith.constant 0 : i32
    return %c0_i32, %c0_i32_0, %c0_i32_1 : i32, i32, i32
  }
  func.func @transform_9(%arg0: i32) -> (i32, i32, i32) {
    %c0_i32 = arith.constant 0 : i32
    %c0_i32_0 = arith.constant 0 : i32
    %c0_i32_1 = arith.constant 0 : i32
    %c0_i32_2 = arith.constant 0 : i32
    return %c0_i32, %c0_i32_0, %c0_i32_1 : i32, i32, i32
  }
  func.func @transform_10(%arg0: i32) -> (i32, i32, i32) {
    %c0_i32 = arith.constant 0 : i32
    %c0_i32_0 = arith.constant 0 : i32
    %c0_i32_1 = arith.constant 0 : i32
    %c0_i32_2 = arith.constant 0 : i32
    return %c0_i32, %c0_i32_0, %c0_i32_1 : i32, i32, i32
  }
  func.func @transform_11(%arg0: i32) -> (i32, i32, i32) {
    %c0_i32 = arith.constant 0 : i32
    %c0_i32_0 = arith.constant 0 : i32
    %c0_i32_1 = arith.constant 0 : i32
    %c0_i32_2 = arith.constant 0 : i32
    return %c0_i32, %c0_i32_0, %c0_i32_1 : i32, i32, i32
  }
  func.func @transform_12(%arg0: i32) -> (i32, i32, i32) {
    %c0_i32 = arith.constant 0 : i32
    %c0_i32_0 = arith.constant 0 : i32
    %c0_i32_1 = arith.constant 0 : i32
    %c0_i32_2 = arith.constant 0 : i32
    return %c0_i32, %c0_i32_0, %c0_i32_1 : i32, i32, i32
  }
  func.func @transform_13(%arg0: i32) -> (i32, i32, i32) {
    %c0_i32 = arith.constant 0 : i32
    %c0_i32_0 = arith.constant 0 : i32
    %c0_i32_1 = arith.constant 0 : i32
    %c0_i32_2 = arith.constant 0 : i32
    return %c0_i32, %c0_i32_0, %c0_i32_1 : i32, i32, i32
  }
  func.func @transform_14(%arg0: i32) -> (i32, i32, i32) {
    %c0_i32 = arith.constant 0 : i32
    %c0_i32_0 = arith.constant 0 : i32
    %c0_i32_1 = arith.constant 0 : i32
    %c0_i32_2 = arith.constant 0 : i32
    return %c0_i32, %c0_i32_0, %c0_i32_1 : i32, i32, i32
  }
  func.func @transform_15(%arg0: i32) -> (i32, i32, i32) {
    %c0_i32 = arith.constant 0 : i32
    %c0_i32_0 = arith.constant 0 : i32
    %c0_i32_1 = arith.constant 0 : i32
    %c0_i32_2 = arith.constant 0 : i32
    return %c0_i32, %c0_i32_0, %c0_i32_1 : i32, i32, i32
  }
  func.func @transform_16(%arg0: i32) -> (i32, i32, i32) {
    %c0_i32 = arith.constant 0 : i32
    %c0_i32_0 = arith.constant 0 : i32
    %c0_i32_1 = arith.constant 0 : i32
    %c0_i32_2 = arith.constant 0 : i32
    return %c0_i32, %c0_i32_0, %c0_i32_1 : i32, i32, i32
  }
  func.func @transform_17(%arg0: i32) -> (i32, i32, i32) {
    %c0_i32 = arith.constant 0 : i32
    %c0_i32_0 = arith.constant 0 : i32
    %c0_i32_1 = arith.constant 0 : i32
    %c0_i32_2 = arith.constant 0 : i32
    return %c0_i32, %c0_i32_0, %c0_i32_1 : i32, i32, i32
  }
  func.func @transform_18(%arg0: i32) -> (i32, i32, i32) {
    %c0_i32 = arith.constant 0 : i32
    %c0_i32_0 = arith.constant 0 : i32
    %c0_i32_1 = arith.constant 0 : i32
    %c0_i32_2 = arith.constant 0 : i32
    return %c0_i32, %c0_i32_0, %c0_i32_1 : i32, i32, i32
  }
  func.func @transform_19(%arg0: i32) -> (i32, i32, i32) {
    %c0_i32 = arith.constant 0 : i32
    %c0_i32_0 = arith.constant 0 : i32
    %c0_i32_1 = arith.constant 0 : i32
    %c0_i32_2 = arith.constant 0 : i32
    return %c0_i32, %c0_i32_0, %c0_i32_1 : i32, i32, i32
  }
  func.func @transform_20(%arg0: i32) -> (i32, i32, i32) {
    %c0_i32 = arith.constant 0 : i32
    %c0_i32_0 = arith.constant 0 : i32
    %c0_i32_1 = arith.constant 0 : i32
    %c0_i32_2 = arith.constant 0 : i32
    return %c0_i32, %c0_i32_0, %c0_i32_1 : i32, i32, i32
  }
  func.func @transform_21(%arg0: i32) -> (i32, i32, i32) {
    %c0_i32 = arith.constant 0 : i32
    %c0_i32_0 = arith.constant 0 : i32
    %c0_i32_1 = arith.constant 0 : i32
    %c0_i32_2 = arith.constant 0 : i32
    return %c0_i32, %c0_i32_0, %c0_i32_1 : i32, i32, i32
  }
  func.func @transform_22(%arg0: i32) -> (i32, i32, i32) {
    %c0_i32 = arith.constant 0 : i32
    %c0_i32_0 = arith.constant 0 : i32
    %c0_i32_1 = arith.constant 0 : i32
    %c0_i32_2 = arith.constant 0 : i32
    return %c0_i32, %c0_i32_0, %c0_i32_1 : i32, i32, i32
  }
  func.func @transform_23(%arg0: i32) -> (i32, i32, i32) {
    %c0_i32 = arith.constant 0 : i32
    %c0_i32_0 = arith.constant 0 : i32
    %c0_i32_1 = arith.constant 0 : i32
    %c0_i32_2 = arith.constant 0 : i32
    return %c0_i32, %c0_i32_0, %c0_i32_1 : i32, i32, i32
  }
  func.func @transform_24(%arg0: i32) -> (i32, i32) {
    %c0_i32 = arith.constant 0 : i32
    %c0_i32_0 = arith.constant 0 : i32
    %c0_i32_1 = arith.constant 0 : i32
    return %c0_i32, %c0_i32_0 : i32, i32
  }
  func.func @transform_25(%arg0: i32) -> (i32, i32) {
    %c0_i32 = arith.constant 0 : i32
    %c0_i32_0 = arith.constant 0 : i32
    %c0_i32_1 = arith.constant 0 : i32
    return %c0_i32, %c0_i32_0 : i32, i32
  }
  func.func @transform_26(%arg0: i32) -> (i32, i32) {
    %c0_i32 = arith.constant 0 : i32
    %c0_i32_0 = arith.constant 0 : i32
    %c0_i32_1 = arith.constant 0 : i32
    return %c0_i32, %c0_i32_0 : i32, i32
  }
  func.func @transform_27(%arg0: i32) -> (i32, i32) {
    %c0_i32 = arith.constant 0 : i32
    %c0_i32_0 = arith.constant 0 : i32
    %c0_i32_1 = arith.constant 0 : i32
    return %c0_i32, %c0_i32_0 : i32, i32
  }
  func.func @transform_28(%arg0: i32) -> (i32, i32) {
    %c0_i32 = arith.constant 0 : i32
    %c0_i32_0 = arith.constant 0 : i32
    %c0_i32_1 = arith.constant 0 : i32
    return %c0_i32, %c0_i32_0 : i32, i32
  }
}

</mosaic_0001>

<llo_original>
// kernel: tpu_custom_call.1
$region0: #{tpu_custom_call.1}
  #allocation0 [shape = 'u32[]', space=smem, size = 0x4, offset = 0x4, fixed_abs, tag = 'smem constant byte address 0x4 - core index']
  #allocation1 [shape = 'u32[144,128]{1,0:T(1,128)}', space=vmem, size = 0x12000, scoped, tag = 'internal scratch']
  %s0 = inlined_call_operand.hbm [shape: f32[16,128], index: 0, kind: input, shape index: {}]
  %s1 = inlined_call_operand.vmem [shape: f32[2,8], index: 1, kind: input, shape index: {}]
  %s2 = inlined_call_operand.hbm [shape: f32[8,128], index: 2, kind: input, shape index: {}]
  %s3 = inlined_call_operand.hbm [shape: f32[4,8,8], index: 3, kind: input, shape index: {}]
  %s4 = inlined_call_operand.hbm [shape: bf16[128,128], index: 4, kind: input, shape index: {}]
  %s5 = inlined_call_operand.hbm [shape: f32[1,128], index: 5, kind: input, shape index: {}]
  %s6 = inlined_call_operand.hbm [shape: bf16[128,128], index: 6, kind: input, shape index: {}]
  %s7 = inlined_call_operand.vmem [shape: f32[1,128], index: 7, kind: input, shape index: {}]
  %s8 = inlined_call_operand.hbm [shape: bf16[2,128,128], index: 8, kind: input, shape index: {}]
  %s9 = inlined_call_operand.vmem [shape: f32[2,1,128], index: 9, kind: input, shape index: {}]
  %s10 = inlined_call_operand.hbm [shape: bf16[2,128,128], index: 10, kind: input, shape index: {}]
  %s11 = inlined_call_operand.vmem [shape: f32[2,1,128], index: 11, kind: input, shape index: {}]
  %s12 = inlined_call_operand.hbm [shape: bf16[2,128,128], index: 12, kind: input, shape index: {}]
  %s13 = inlined_call_operand.vmem [shape: f32[2,1,128], index: 13, kind: input, shape index: {}]
  %s14 = inlined_call_operand.hbm [shape: bf16[2,128,128], index: 14, kind: input, shape index: {}]
  %s15 = inlined_call_operand.vmem [shape: f32[2,1,128], index: 15, kind: input, shape index: {}]
  %s16 = inlined_call_operand.vmem [shape: f32[2,1,128], index: 16, kind: input, shape index: {}]
  %s17 = inlined_call_operand.vmem [shape: f32[2,1,128], index: 17, kind: input, shape index: {}]
  %s18 = inlined_call_operand.hbm [shape: bf16[2,128,256], index: 18, kind: input, shape index: {}]
  %s19 = inlined_call_operand.vmem [shape: f32[2,1,256], index: 19, kind: input, shape index: {}]
  %s20 = inlined_call_operand.hbm [shape: bf16[2,256,128], index: 20, kind: input, shape index: {}]
  %s21 = inlined_call_operand.vmem [shape: f32[2,1,128], index: 21, kind: input, shape index: {}]
  %s22 = inlined_call_operand.vmem [shape: f32[2,1,128], index: 22, kind: input, shape index: {}]
  %s23 = inlined_call_operand.vmem [shape: f32[2,1,128], index: 23, kind: input, shape index: {}]
  %s24 = inlined_call_operand.vmem [shape: bf16[128,128], index: 24, kind: input, shape index: {}]
  %s25 = inlined_call_operand.vmem [shape: f32[1,128], index: 25, kind: input, shape index: {}]
  %s26 = inlined_call_operand.hbm [shape: bf16[128,128], index: 26, kind: input, shape index: {}]
  %s27 = inlined_call_operand.vmem [shape: f32[1,128], index: 27, kind: input, shape index: {}]
  %s28 = inlined_call_operand.hbm [shape: f32[2,128], index: 28, kind: output, shape index: {}]
  %s29 = sld [smem:[#allocation0]]
  $region174: #{tpu_custom_call.1} parent=0
    _
  %s31 = ssub.s32 1, %s29
  %s32 = scalar_select 0, %s31, %s29
  $region1: #{tpu_custom_call.1} parent=0
    #allocation2 [shape = 'u8[8192]{0}', space=vmem, size = 0x2000, scoped, tag = 'input window, operand 0, single buffered']
    #allocation3 [shape = 's32[1]{0}', space=sflag, size = 0x4, scoped, tag = 'scoped memory for tpu_custom_call.1']
    #allocation4 [shape = 's32[1]{0}', space=sflag, size = 0x4, scoped, tag = 'scoped memory for tpu_custom_call.1']
    #allocation5 [shape = 'u8[4096]{0}', space=vmem, size = 0x1000, scoped, tag = 'input window, operand 2, single buffered']
    #allocation6 [shape = 's32[1]{0}', space=sflag, size = 0x4, scoped, tag = 'scoped memory for tpu_custom_call.1']
    #allocation7 [shape = 'u8[16384]{0}', space=vmem, size = 0x4000, scoped, tag = 'input window, operand 3, single buffered']
    #allocation8 [shape = 'u8[32768]{0}', space=vmem, size = 0x8000, scoped, tag = 'input window, operand 4, single buffered']
    #allocation9 [shape = 's32[1]{0}', space=sflag, size = 0x4, scoped, tag = 'scoped memory for tpu_custom_call.1']
    #allocation10 [shape = 'u8[512]{0}', space=vmem, size = 0x400, scoped, tag = 'input window, operand 5, single buffered']
    #allocation11 [shape = 'u8[32768]{0}', space=vmem, size = 0x8000, scoped, tag = 'input window, operand 6, single buffered']
    #allocation12 [shape = 's32[1]{0}', space=sflag, size = 0x4, scoped, tag = 'scoped memory for tpu_custom_call.1']
    #allocation13 [shape = 'u8[65536]{0}', space=vmem, size = 0x10000, scoped, tag = 'input window, operand 8, single buffered']
    #allocation14 [shape = 'u8[65536]{0}', space=vmem, size = 0x10000, scoped, tag = 'input window, operand 10, single buffered']
    #allocation15 [shape = 's32[1]{0}', space=sflag, size = 0x4, scoped, tag = 'scoped memory for tpu_custom_call.1']
    #allocation16 [shape = 'u8[65536]{0}', space=vmem, size = 0x10000, scoped, tag = 'input window, operand 12, single buffered']
    #allocation17 [shape = 'u8[65536]{0}', space=vmem, size = 0x10000, scoped, tag = 'input window, operand 14, single buffered']
    #allocation18 [shape = 's32[1]{0}', space=sflag, size = 0x4, scoped, tag = 'scoped memory for tpu_custom_call.1']
    #allocation19 [shape = 'u8[131072]{0}', space=vmem, size = 0x20000, scoped, tag = 'input window, operand 18, single buffered']
    #allocation20 [shape = 'u8[131072]{0}', space=vmem, size = 0x20000, scoped, tag = 'input window, operand 20, single buffered']
    #allocation21 [shape = 's32[1]{0}', space=sflag, size = 0x4, scoped, tag = 'scoped memory for tpu_custom_call.1']
    #allocation22 [shape = 'u8[32768]{0}', space=vmem, size = 0x8000, scoped, tag = 'input window, operand 26, single buffered']
    #allocation23 [shape = 'u8[1024]{0}', space=vmem, size = 0x400, scoped, tag = 'output window, operand 0, single buffered']
    %33 = vsyncpa [#allocation3], 0
    %34 = vsyncpa [#allocation6], 0
    %35 = vsyncpa [#allocation9], 0
    %36 = vsyncpa [#allocation12], 0
    %37 = vsyncpa [#allocation15], 0
    %38 = vsyncpa [#allocation18], 0
    %39 = vsyncpa [#allocation21], 0
    %40 = vsyncpa [#allocation4], 0
    // Predicated region
    $region2: #{tpu_custom_call.1} parent=1 // pred_check
      _
    $region3: #{tpu_custom_call.1} parent=1 // pred_check_branch
      %42 = sbr.rel (0) target = $region5
    $region4: #{tpu_custom_call.1} parent=1 // pred_region
      %s44 = ssub.s32 256, 256
      %45 = vsyncadd [#allocation3], %s44
      %s46 = sshll.u32 [#allocation2], 4
      %s47 = int_to_ptr.vmem [resolvable:$true] %s46
      %52 = dma.hbm_to_vmem [thread:$0]  %s0, 256, %s47, [#allocation3], 128, 128, 8
    $region5: #{tpu_custom_call.1} parent=1 // pred_fallthru
      _
    // Predicated region
    $region6: #{tpu_custom_call.1} parent=1 // pred_check
      _
    $region7: #{tpu_custom_call.1} parent=1 // pred_check_branch
      %54 = sbr.rel (0) target = $region9
    $region8: #{tpu_custom_call.1} parent=1 // pred_region
      _
    $region9: #{tpu_custom_call.1} parent=1 // pred_fallthru
      _
    // Predicated region
    $region10: #{tpu_custom_call.1} parent=1 // pred_check
      _
    $region11: #{tpu_custom_call.1} parent=1 // pred_check_branch
      %56 = sbr.rel (0) target = $region13
    $region12: #{tpu_custom_call.1} parent=1 // pred_region
      %s58 = ssub.s32 128, 128
      %59 = vsyncadd [#allocation6], %s58
      %s61 = sshll.u32 [#allocation5], 4
      %s62 = int_to_ptr.vmem [resolvable:$true] %s61
      %64 = dma.hbm_to_vmem [thread:$0]  %s2, 128, %s62, [#allocation6]
    $region13: #{tpu_custom_call.1} parent=1 // pred_fallthru
      _
    // Predicated region
    $region14: #{tpu_custom_call.1} parent=1 // pred_check
      _
    $region15: #{tpu_custom_call.1} parent=1 // pred_check_branch
      %66 = sbr.rel (0) target = $region17
    $region16: #{tpu_custom_call.1} parent=1 // pred_region
      %s68 = ssub.s32 512, 512
      %69 = vsyncadd [#allocation6], %s68
      %s70 = sshll.u32 [#allocation7], 4
      %s71 = int_to_ptr.vmem [resolvable:$true] %s70
      %76 = dma.hbm_to_vmem [thread:$0]  %s3, 512, %s71, [#allocation6], 128, 128, 8
    $region17: #{tpu_custom_call.1} parent=1 // pred_fallthru
      _
    // Predicated region
    $region18: #{tpu_custom_call.1} parent=1 // pred_check
      _
    $region19: #{tpu_custom_call.1} parent=1 // pred_check_branch
      %78 = sbr.rel (0) target = $region21
    $region20: #{tpu_custom_call.1} parent=1 // pred_region
      %s80 = ssub.s32 1024, 1024
      %81 = vsyncadd [#allocation9], %s80
      %s82 = sshll.u32 [#allocation8], 4
      %s83 = int_to_ptr.vmem [resolvable:$true] %s82
      %88 = dma.hbm_to_vmem [thread:$0]  %s4, 1024, %s83, [#allocation9], 64, 64, 4
    $region21: #{tpu_custom_call.1} parent=1 // pred_fallthru
      _
    // Predicated region
    $region22: #{tpu_custom_call.1} parent=1 // pred_check
      _
    $region23: #{tpu_custom_call.1} parent=1 // pred_check_branch
      %90 = sbr.rel (0) target = $region25
    $region24: #{tpu_custom_call.1} parent=1 // pred_region
      %s92 = ssub.s32 16, 16
      %93 = vsyncadd [#allocation9], %s92
      %s95 = sshll.u32 [#allocation10], 4
      %s96 = int_to_ptr.vmem [resolvable:$true] %s95
      %98 = dma.hbm_to_vmem [thread:$0]  %s5, 16, %s96, [#allocation9]
    $region25: #{tpu_custom_call.1} parent=1 // pred_fallthru
      _
    // Predicated region
    $region26: #{tpu_custom_call.1} parent=1 // pred_check
      _
    $region27: #{tpu_custom_call.1} parent=1 // pred_check_branch
      %100 = sbr.rel (0) target = $region29
    $region28: #{tpu_custom_call.1} parent=1 // pred_region
      %s102 = ssub.s32 1024, 1024
      %103 = vsyncadd [#allocation12], %s102
      %s104 = sshll.u32 [#allocation11], 4
      %s105 = int_to_ptr.vmem [resolvable:$true] %s104
      %110 = dma.hbm_to_vmem [thread:$0]  %s6, 1024, %s105, [#allocation12], 64, 64, 4
    $region29: #{tpu_custom_call.1} parent=1 // pred_fallthru
      _
    // Predicated region
    $region30: #{tpu_custom_call.1} parent=1 // pred_check
      _
    $region31: #{tpu_custom_call.1} parent=1 // pred_check_branch
      %112 = sbr.rel (0) target = $region33
    $region32: #{tpu_custom_call.1} parent=1 // pred_region
      _
    $region33: #{tpu_custom_call.1} parent=1 // pred_fallthru
      _
    // Predicated region
    $region34: #{tpu_custom_call.1} parent=1 // pred_check
      _
    $region35: #{tpu_custom_call.1} parent=1 // pred_check_branch
      %114 = sbr.rel (0) target = $region37
    $region36: #{tpu_custom_call.1} parent=1 // pred_region
      %s116 = ssub.s32 2048, 2048
      %117 = vsyncadd [#allocation12], %s116
      %s118 = sshll.u32 [#allocation13], 4
      %s119 = int_to_ptr.vmem [resolvable:$true] %s118
      %124 = dma.hbm_to_vmem [thread:$0]  %s8, 2048, %s119, [#allocation12], 64, 64, 4
    $region37: #{tpu_custom_call.1} parent=1 // pred_fallthru
      _
    // Predicated region
    $region38: #{tpu_custom_call.1} parent=1 // pred_check
      _
    $region39: #{tpu_custom_call.1} parent=1 // pred_check_branch
      %126 = sbr.rel (0) target = $region41
    $region40: #{tpu_custom_call.1} parent=1 // pred_region
      _
    $region41: #{tpu_custom_call.1} parent=1 // pred_fallthru
      _
    // Predicated region
    $region42: #{tpu_custom_call.1} parent=1 // pred_check
      _
    $region43: #{tpu_custom_call.1} parent=1 // pred_check_branch
      %128 = sbr.rel (0) target = $region45
    $region44: #{tpu_custom_call.1} parent=1 // pred_region
      %s130 = ssub.s32 2048, 2048
      %131 = vsyncadd [#allocation15], %s130
      %s132 = sshll.u32 [#allocation14], 4
      %s133 = int_to_ptr.vmem [resolvable:$true] %s132
      %138 = dma.hbm_to_vmem [thread:$0]  %s10, 2048, %s133, [#allocation15], 64, 64, 4
    $region45: #{tpu_custom_call.1} parent=1 // pred_fallthru
      _
    // Predicated region
    $region46: #{tpu_custom_call.1} parent=1 // pred_check
      _
    $region47: #{tpu_custom_call.1} parent=1 // pred_check_branch
      %140 = sbr.rel (0) target = $region49
    $region48: #{tpu_custom_call.1} parent=1 // pred_region
      _
    $region49: #{tpu_custom_call.1} parent=1 // pred_fallthru
      _
    // Predicated region
    $region50: #{tpu_custom_call.1} parent=1 // pred_check
      _
    $region51: #{tpu_custom_call.1} parent=1 // pred_check_branch
      %142 = sbr.rel (0) target = $region53
    $region52: #{tpu_custom_call.1} parent=1 // pred_region
      %s144 = ssub.s32 2048, 2048
      %145 = vsyncadd [#allocation15], %s144
      %s146 = sshll.u32 [#allocation16], 4
      %s147 = int_to_ptr.vmem [resolvable:$true] %s146
      %152 = dma.hbm_to_vmem [thread:$0]  %s12, 2048, %s147, [#allocation15], 64, 64, 4
    $region53: #{tpu_custom_call.1} parent=1 // pred_fallthru
      _
    // Predicated region
    $region54: #{tpu_custom_call.1} parent=1 // pred_check
      _
    $region55: #{tpu_custom_call.1} parent=1 // pred_check_branch
      %154 = sbr.rel (0) target = $region57
    $region56: #{tpu_custom_call.1} parent=1 // pred_region
      _
    $region57: #{tpu_custom_call.1} parent=1 // pred_fallthru
      _
    // Predicated region
    $region58: #{tpu_custom_call.1} parent=1 // pred_check
      _
    $region59: #{tpu_custom_call.1} parent=1 // pred_check_branch
      %156 = sbr.rel (0) target = $region61
    $region60: #{tpu_custom_call.1} parent=1 // pred_region
      %s158 = ssub.s32 2048, 2048
      %159 = vsyncadd [#allocation18], %s158
      %s160 = sshll.u32 [#allocation17], 4
      %s161 = int_to_ptr.vmem [resolvable:$true] %s160
      %166 = dma.hbm_to_vmem [thread:$0]  %s14, 2048, %s161, [#allocation18], 64, 64, 4
    $region61: #{tpu_custom_call.1} parent=1 // pred_fallthru
      _
    // Predicated region
    $region62: #{tpu_custom_call.1} parent=1 // pred_check
      _
    $region63: #{tpu_custom_call.1} parent=1 // pred_check_branch
      %168 = sbr.rel (0) target = $region65
    $region64: #{tpu_custom_call.1} parent=1 // pred_region
      _
    $region65: #{tpu_custom_call.1} parent=1 // pred_fallthru
      _
    // Predicated region
    $region66: #{tpu_custom_call.1} parent=1 // pred_check
      _
    $region67: #{tpu_custom_call.1} parent=1 // pred_check_branch
      %170 = sbr.rel (0) target = $region69
    $region68: #{tpu_custom_call.1} parent=1 // pred_region
      _
    $region69: #{tpu_custom_call.1} parent=1 // pred_fallthru
      _
    // Predicated region
    $region70: #{tpu_custom_call.1} parent=1 // pred_check
      _
    $region71: #{tpu_custom_call.1} parent=1 // pred_check_branch
      %172 = sbr.rel (0) target = $region73
    $region72: #{tpu_custom_call.1} parent=1 // pred_region
      _
    $region73: #{tpu_custom_call.1} parent=1 // pred_fallthru
      _
    // Predicated region
    $region74: #{tpu_custom_call.1} parent=1 // pred_check
      _
    $region75: #{tpu_custom_call.1} parent=1 // pred_check_branch
      %174 = sbr.rel (0) target = $region77
    $region76: #{tpu_custom_call.1} parent=1 // pred_region
      %s176 = ssub.s32 4096, 4096
      %177 = vsyncadd [#allocation18], %s176
      %s178 = sshll.u32 [#allocation19], 4
      %s179 = int_to_ptr.vmem [resolvable:$true] %s178
      %184 = dma.hbm_to_vmem [thread:$0]  %s18, 4096, %s179, [#allocation18], 128, 128, 8
    $region77: #{tpu_custom_call.1} parent=1 // pred_fallthru
      _
    // Predicated region
    $region78: #{tpu_custom_call.1} parent=1 // pred_check
      _
    $region79: #{tpu_custom_call.1} parent=1 // pred_check_branch
      %186 = sbr.rel (0) target = $region81
    $region80: #{tpu_custom_call.1} parent=1 // pred_region
      _
    $region81: #{tpu_custom_call.1} parent=1 // pred_fallthru
      _
    // Predicated region
    $region82: #{tpu_custom_call.1} parent=1 // pred_check
      _
    $region83: #{tpu_custom_call.1} parent=1 // pred_check_branch
      %188 = sbr.rel (0) target = $region85
    $region84: #{tpu_custom_call.1} parent=1 // pred_region
      %s190 = ssub.s32 4096, 4096
      %191 = vsyncadd [#allocation21], %s190
      %s192 = sshll.u32 [#allocation20], 4
      %s193 = int_to_ptr.vmem [resolvable:$true] %s192
      %198 = dma.hbm_to_vmem [thread:$0]  %s20, 4096, %s193, [#allocation21], 64, 64, 4
    $region85: #{tpu_custom_call.1} parent=1 // pred_fallthru
      _
    // Predicated region
    $region86: #{tpu_custom_call.1} parent=1 // pred_check
      _
    $region87: #{tpu_custom_call.1} parent=1 // pred_check_branch
      %200 = sbr.rel (0) target = $region89
    $region88: #{tpu_custom_call.1} parent=1 // pred_region
      _
    $region89: #{tpu_custom_call.1} parent=1 // pred_fallthru
      _
    // Predicated region
    $region90: #{tpu_custom_call.1} parent=1 // pred_check
      _
    $region91: #{tpu_custom_call.1} parent=1 // pred_check_branch
      %202 = sbr.rel (0) target = $region93
    $region92: #{tpu_custom_call.1} parent=1 // pred_region
      _
    $region93: #{tpu_custom_call.1} parent=1 // pred_fallthru
      _
    // Predicated region
    $region94: #{tpu_custom_call.1} parent=1 // pred_check
      _
    $region95: #{tpu_custom_call.1} parent=1 // pred_check_branch
      %204 = sbr.rel (0) target = $region97
    $region96: #{tpu_custom_call.1} parent=1 // pred_region
      _
    $region97: #{tpu_custom_call.1} parent=1 // pred_fallthru
      _
    // Predicated region
    $region98: #{tpu_custom_call.1} parent=1 // pred_check
      _
    $region99: #{tpu_custom_call.1} parent=1 // pred_check_branch
      %206 = sbr.rel (0) target = $region101
    $region100: #{tpu_custom_call.1} parent=1 // pred_region
      _
    $region101: #{tpu_custom_call.1} parent=1 // pred_fallthru
      _
    // Predicated region
    $region102: #{tpu_custom_call.1} parent=1 // pred_check
      _
    $region103: #{tpu_custom_call.1} parent=1 // pred_check_branch
      %208 = sbr.rel (0) target = $region105
    $region104: #{tpu_custom_call.1} parent=1 // pred_region
      _
    $region105: #{tpu_custom_call.1} parent=1 // pred_fallthru
      _
    // Predicated region
    $region106: #{tpu_custom_call.1} parent=1 // pred_check
      _
    $region107: #{tpu_custom_call.1} parent=1 // pred_check_branch
      %210 = sbr.rel (0) target = $region109
    $region108: #{tpu_custom_call.1} parent=1 // pred_region
      %s212 = ssub.s32 1024, 1024
      %213 = vsyncadd [#allocation21], %s212
      %s214 = sshll.u32 [#allocation22], 4
      %s215 = int_to_ptr.vmem [resolvable:$true] %s214
      %220 = dma.hbm_to_vmem [thread:$0]  %s26, 1024, %s215, [#allocation21], 64, 64, 4
    $region109: #{tpu_custom_call.1} parent=1 // pred_fallthru
      _
    // Predicated region
    $region110: #{tpu_custom_call.1} parent=1 // pred_check
      _
    $region111: #{tpu_custom_call.1} parent=1 // pred_check_branch
      %222 = sbr.rel (0) target = $region113
    $region112: #{tpu_custom_call.1} parent=1 // pred_region
      _
    $region113: #{tpu_custom_call.1} parent=1 // pred_fallthru
      _
    // Predicated region
    $region114: #{tpu_custom_call.1} parent=1 // pred_check
      _
    $region115: #{tpu_custom_call.1} parent=1 // pred_check_branch
      %224 = sbr.rel (0) target = $region117
    $region116: #{tpu_custom_call.1} parent=1 // pred_region
      %225 = dma.done [#allocation3], 256
    $region117: #{tpu_custom_call.1} parent=1 // pred_fallthru
      _
    // Predicated region
    $region118: #{tpu_custom_call.1} parent=1 // pred_check
      _
    $region119: #{tpu_custom_call.1} parent=1 // pred_check_branch
      %227 = sbr.rel (0) target = $region121
    $region120: #{tpu_custom_call.1} parent=1 // pred_region
      %228 = dma.done [#allocation6], 128
    $region121: #{tpu_custom_call.1} parent=1 // pred_fallthru
      _
    // Predicated region
    $region122: #{tpu_custom_call.1} parent=1 // pred_check
      _
    $region123: #{tpu_custom_call.1} parent=1 // pred_check_branch
      %230 = sbr.rel (0) target = $region125
    $region124: #{tpu_custom_call.1} parent=1 // pred_region
      %231 = dma.done [#allocation6], 512
    $region125: #{tpu_custom_call.1} parent=1 // pred_fallthru
      _
    // Predicated region
    $region126: #{tpu_custom_call.1} parent=1 // pred_check
      _
    $region127: #{tpu_custom_call.1} parent=1 // pred_check_branch
      %233 = sbr.rel (0) target = $region129
    $region128: #{tpu_custom_call.1} parent=1 // pred_region
      %234 = dma.done [#allocation9], 1024
    $region129: #{tpu_custom_call.1} parent=1 // pred_fallthru
      _
    // Predicated region
    $region130: #{tpu_custom_call.1} parent=1 // pred_check
      _
    $region131: #{tpu_custom_call.1} parent=1 // pred_check_branch
      %236 = sbr.rel (0) target = $region133
    $region132: #{tpu_custom_call.1} parent=1 // pred_region
      %237 = dma.done [#allocation9], 16
    $region133: #{tpu_custom_call.1} parent=1 // pred_fallthru
      _
    // Predicated region
    $region134: #{tpu_custom_call.1} parent=1 // pred_check
      _
    $region135: #{tpu_custom_call.1} parent=1 // pred_check_branch
      %239 = sbr.rel (0) target = $region137
    $region136: #{tpu_custom_call.1} parent=1 // pred_region
      %240 = dma.done [#allocation12], 1024
    $region137: #{tpu_custom_call.1} parent=1 // pred_fallthru
      _
    // Predicated region
    $region138: #{tpu_custom_call.1} parent=1 // pred_check
      _
    $region139: #{tpu_custom_call.1} parent=1 // pred_check_branch
      %242 = sbr.rel (0) target = $region141
    $region140: #{tpu_custom_call.1} parent=1 // pred_region
      %243 = dma.done [#allocation12], 2048
    $region141: #{tpu_custom_call.1} parent=1 // pred_fallthru
      _
    // Predicated region
    $region142: #{tpu_custom_call.1} parent=1 // pred_check
      _
    $region143: #{tpu_custom_call.1} parent=1 // pred_check_branch
      %245 = sbr.rel (0) target = $region145
    $region144: #{tpu_custom_call.1} parent=1 // pred_region
      %246 = dma.done [#allocation15], 2048
    $region145: #{tpu_custom_call.1} parent=1 // pred_fallthru
      _
    // Predicated region
    $region146: #{tpu_custom_call.1} parent=1 // pred_check
      _
    $region147: #{tpu_custom_call.1} parent=1 // pred_check_branch
      %248 = sbr.rel (0) target = $region149
    $region148: #{tpu_custom_call.1} parent=1 // pred_region
      %249 = dma.done [#allocation15], 2048
    $region149: #{tpu_custom_call.1} parent=1 // pred_fallthru
      _
    // Predicated region
    $region150: #{tpu_custom_call.1} parent=1 // pred_check
      _
    $region151: #{tpu_custom_call.1} parent=1 // pred_check_branch
      %251 = sbr.rel (0) target = $region153
    $region152: #{tpu_custom_call.1} parent=1 // pred_region
      %252 = dma.done [#allocation18], 2048
    $region153: #{tpu_custom_call.1} parent=1 // pred_fallthru
      _
    // Predicated region
    $region154: #{tpu_custom_call.1} parent=1 // pred_check
      _
    $region155: #{tpu_custom_call.1} parent=1 // pred_check_branch
      %254 = sbr.rel (0) target = $region157
    $region156: #{tpu_custom_call.1} parent=1 // pred_region
      %255 = dma.done [#allocation18], 4096
    $region157: #{tpu_custom_call.1} parent=1 // pred_fallthru
      _
    // Predicated region
    $region158: #{tpu_custom_call.1} parent=1 // pred_check
      _
    $region159: #{tpu_custom_call.1} parent=1 // pred_check_branch
      %257 = sbr.rel (0) target = $region161
    $region160: #{tpu_custom_call.1} parent=1 // pred_region
      %258 = dma.done [#allocation21], 4096
    $region161: #{tpu_custom_call.1} parent=1 // pred_fallthru
      _
    // Predicated region
    $region162: #{tpu_custom_call.1} parent=1 // pred_check
      _
    $region163: #{tpu_custom_call.1} parent=1 // pred_check_branch
      %260 = sbr.rel (0) target = $region165
    $region164: #{tpu_custom_call.1} parent=1 // pred_region
      %261 = dma.done [#allocation21], 1024
    $region165: #{tpu_custom_call.1} parent=1 // pred_fallthru
      _
    %v263 = vld [vmem:[#allocation5] sm:$0xff]
    %v264 = vpack.c.bf16 %v263, %v263
    %v265 = vld [vmem:[#allocation8] sm:$0xf]
    %v266 = vld [vmem:[#allocation8 + $0x4] sm:$0xf]
    %v267 = vld [vmem:[#allocation8 + $0x8] sm:$0xf]
    %v268 = vld [vmem:[#allocation8 + $0xc] sm:$0xf]
    %v269 = vld [vmem:[#allocation8 + $0x10] sm:$0xf]
    %v270 = vld [vmem:[#allocation8 + $0x14] sm:$0xf]
    %v271 = vld [vmem:[#allocation8 + $0x18] sm:$0xf]
    %v272 = vld [vmem:[#allocation8 + $0x1c] sm:$0xf]
    %v273 = vld [vmem:[#allocation8 + $0x20] sm:$0xf]
    %v274 = vld [vmem:[#allocation8 + $0x24] sm:$0xf]
    %v275 = vld [vmem:[#allocation8 + $0x28] sm:$0xf]
    %v276 = vld [vmem:[#allocation8 + $0x2c] sm:$0xf]
    %v277 = vld [vmem:[#allocation8 + $0x30] sm:$0xf]
    %v278 = vld [vmem:[#allocation8 + $0x34] sm:$0xf]
    %v279 = vld [vmem:[#allocation8 + $0x38] sm:$0xf]
    %v280 = vld [vmem:[#allocation8 + $0x3c] sm:$0xf]
    %v281 = vld [vmem:[#allocation10] sm:$0x1]
    %v283 = vlaneseq
    %v284 = vshrl.u32 %v283, 7
    %v285 = vsub.s32 0, %v284
    %v286 = vrot.slane %v281, %v285
    %v304 = vunpack.c.l.b16 %v265
    %v305 = vunpack.c.l.b16 %v266
    %v306 = vunpack.c.l.b16 %v267
    %v307 = vunpack.c.l.b16 %v268
    %v308 = vunpack.c.l.b16 %v269
    %v309 = vunpack.c.l.b16 %v270
    %v310 = vunpack.c.l.b16 %v271
    %v311 = vunpack.c.l.b16 %v272
    %v312 = vunpack.c.l.b16 %v273
    %v313 = vunpack.c.l.b16 %v274
    %v314 = vunpack.c.l.b16 %v275
    %v315 = vunpack.c.l.b16 %v276
    %v316 = vunpack.c.l.b16 %v277
    %v317 = vunpack.c.l.b16 %v278
    %v318 = vunpack.c.l.b16 %v279
    %v319 = vunpack.c.l.b16 %v280
    %v320 = vpack.c.b16 %v305, %v304
    %v321 = vpack.c.b16 %v307, %v306
    %v322 = vpack.c.b16 %v309, %v308
    %v323 = vpack.c.b16 %v311, %v310
    %v324 = vpack.c.b16 %v313, %v312
    %v325 = vpack.c.b16 %v315, %v314
    %v326 = vpack.c.b16 %v317, %v316
    %v327 = vpack.c.b16 %v319, %v318
    %336 = vmatprep.subr.bf16.mxu0 0
    %337 = vmatpush1.bf16.msra.mxu0 %v320
    %338 = vmatprep.subr.bf16.mxu0 0
    %339 = vmatpush1.bf16.msra.mxu0 %v321
    %340 = vmatprep.subr.bf16.mxu0 0
    %341 = vmatpush1.bf16.msra.mxu0 %v322
    %342 = vmatprep.subr.bf16.mxu0 0
    %343 = vmatpush1.bf16.msra.mxu0 %v323
    %344 = vmatprep.subr.bf16.mxu0 0
    %345 = vmatpush1.bf16.msra.mxu0 %v324
    %346 = vmatprep.subr.bf16.mxu0 0
    %347 = vmatpush1.bf16.msra.mxu0 %v325
    %348 = vmatprep.subr.bf16.mxu0 0
    %349 = vmatpush1.bf16.msra.mxu0 %v326
    %350 = vmatprep.subr.bf16.mxu0 0
    %351 = vmatpush1.bf16.msra.mxu0 %v327
    %352 = vmatprep.subr.bf16.mxu0 0
    %353 = vmatpush1.bf16.msra.mxu0 0
    %354 = vmatprep.subr.bf16.mxu0 0
    %355 = vmatpush1.bf16.msra.mxu0 0
    %356 = vmatprep.subr.bf16.mxu0 0
    %357 = vmatpush1.bf16.msra.mxu0 0
    %358 = vmatprep.subr.bf16.mxu0 0
    %359 = vmatpush1.bf16.msra.mxu0 0
    %360 = vmatprep.subr.bf16.mxu0 0
    %361 = vmatpush1.bf16.msra.mxu0 0
    %362 = vmatprep.subr.bf16.mxu0 0
    %363 = vmatpush1.bf16.msra.mxu0 0
    %364 = vmatprep.subr.bf16.mxu0 0
    %365 = vmatpush1.bf16.msra.mxu0 0
    %366 = vmatprep.subr.bf16.mxu0 0
    %367 = vmatpush1.bf16.msra.mxu0 0
    %368 = vmatprep.mubr.bf16.mxu0 0
    %369 = vmatmul.mubr.bf16.gmra.mrb[0].mxu0 %v264
    %v370 = vpop.f32.mrb[0].mxu0
    %v371 = vadd.f32 %v286, %v370
    %v372 = vpop.f32.mrb[0].mxu0
    %v373 = vpop.f32.mrb[0].mxu0
    %v374 = vpop.f32.mrb[0].mxu0
    %375 = vdwg.mxu0
    %v376 = vld [vmem:[#allocation11] sm:$0xf]
    %v377 = vld [vmem:[#allocation11 + $0x4] sm:$0xf]
    %v378 = vld [vmem:[#allocation11 + $0x8] sm:$0xf]
    %v379 = vld [vmem:[#allocation11 + $0xc] sm:$0xf]
    %v380 = vld [vmem:[#allocation11 + $0x10] sm:$0xf]
    %v381 = vld [vmem:[#allocation11 + $0x14] sm:$0xf]
    %v382 = vld [vmem:[#allocation11 + $0x18] sm:$0xf]
    %v383 = vld [vmem:[#allocation11 + $0x1c] sm:$0xf]
    %v384 = vld [vmem:[#allocation11 + $0x20] sm:$0xf]
    %v385 = vld [vmem:[#allocation11 + $0x24] sm:$0xf]
    %v386 = vld [vmem:[#allocation11 + $0x28] sm:$0xf]
    %v387 = vld [vmem:[#allocation11 + $0x2c] sm:$0xf]
    %v388 = vld [vmem:[#allocation11 + $0x30] sm:$0xf]
    %v389 = vld [vmem:[#allocation11 + $0x34] sm:$0xf]
    %v390 = vld [vmem:[#allocation11 + $0x38] sm:$0xf]
    %v391 = vld [vmem:[#allocation11 + $0x3c] sm:$0xf]
    %v392 = vld [vmem:[%s7] sm:$0x1]
    %v394 = vlaneseq
    %v395 = vshrl.u32 %v394, 7
    %v396 = vsub.s32 0, %v395
    %v397 = vrot.slane %v392, %v396
    %v415 = vunpack.c.l.b16 %v376
    %v416 = vunpack.c.l.b16 %v377
    %v417 = vunpack.c.l.b16 %v378
    %v418 = vunpack.c.l.b16 %v379
    %v419 = vunpack.c.l.b16 %v380
    %v420 = vunpack.c.l.b16 %v381
    %v421 = vunpack.c.l.b16 %v382
    %v422 = vunpack.c.l.b16 %v383
    %v423 = vunpack.c.l.b16 %v384
    %v424 = vunpack.c.l.b16 %v385
    %v425 = vunpack.c.l.b16 %v386
    %v426 = vunpack.c.l.b16 %v387
    %v427 = vunpack.c.l.b16 %v388
    %v428 = vunpack.c.l.b16 %v389
    %v429 = vunpack.c.l.b16 %v390
    %v430 = vunpack.c.l.b16 %v391
    %v431 = vpack.c.b16 %v416, %v415
    %v432 = vpack.c.b16 %v418, %v417
    %v433 = vpack.c.b16 %v420, %v419
    %v434 = vpack.c.b16 %v422, %v421
    %v435 = vpack.c.b16 %v424, %v423
    %v436 = vpack.c.b16 %v426, %v425
    %v437 = vpack.c.b16 %v428, %v427
    %v438 = vpack.c.b16 %v430, %v429
    %447 = vmatprep.subr.bf16.mxu0 0
    %448 = vmatpush1.bf16.msra.mxu0 %v431
    %449 = vmatprep.subr.bf16.mxu0 0
    %450 = vmatpush1.bf16.msra.mxu0 %v432
    %451 = vmatprep.subr.bf16.mxu0 0
    %452 = vmatpush1.bf16.msra.mxu0 %v433
    %453 = vmatprep.subr.bf16.mxu0 0
    %454 = vmatpush1.bf16.msra.mxu0 %v434
    %455 = vmatprep.subr.bf16.mxu0 0
    %456 = vmatpush1.bf16.msra.mxu0 %v435
    %457 = vmatprep.subr.bf16.mxu0 0
    %458 = vmatpush1.bf16.msra.mxu0 %v436
    %459 = vmatprep.subr.bf16.mxu0 0
    %460 = vmatpush1.bf16.msra.mxu0 %v437
    %461 = vmatprep.subr.bf16.mxu0 0
    %462 = vmatpush1.bf16.msra.mxu0 %v438
    %463 = vmatprep.subr.bf16.mxu0 0
    %464 = vmatpush1.bf16.msra.mxu0 0
    %465 = vmatprep.subr.bf16.mxu0 0
    %466 = vmatpush1.bf16.msra.mxu0 0
    %467 = vmatprep.subr.bf16.mxu0 0
    %468 = vmatpush1.bf16.msra.mxu0 0
    %469 = vmatprep.subr.bf16.mxu0 0
    %470 = vmatpush1.bf16.msra.mxu0 0
    %471 = vmatprep.subr.bf16.mxu0 0
    %472 = vmatpush1.bf16.msra.mxu0 0
    %473 = vmatprep.subr.bf16.mxu0 0
    %474 = vmatpush1.bf16.msra.mxu0 0
    %475 = vmatprep.subr.bf16.mxu0 0
    %476 = vmatpush1.bf16.msra.mxu0 0
    %477 = vmatprep.subr.bf16.mxu0 0
    %478 = vmatpush1.bf16.msra.mxu0 0
    %479 = vmatprep.mubr.bf16.mxu0 0
    %480 = vmatmul.mubr.bf16.gmra.mrb[0].mxu0 %v264
    %v481 = vpop.f32.mrb[0].mxu0
    %v482 = vadd.f32 %v397, %v481
    %v483 = vpop.f32.mrb[0].mxu0
    %v484 = vpop.f32.mrb[0].mxu0
    %v485 = vpop.f32.mrb[0].mxu0
    %486 = vdwg.mxu0
    %488 = vrot.lane.b32.xlu0 %v371, 96
    %v489 = vpop.permute.xlu0 %488
    %491 = vrot.lane.b32.xlu0 %v371, 64
    %v492 = vpop.permute.xlu0 %491
    %494 = vrot.lane.b32.xlu0 %v371, 32
    %v495 = vpop.permute.xlu0 %494
    %v497 = vcombine.low %v371, %v492
    %v498 = vcombine.high %v371, %v492
    %v500 = vunpack.c.l.s4 1983009808
    %v501 = vunpack.c.0.s8 %v500
    %v502 = vlaneseq
    %v503 = vshrl.u32 %v502, 7
    %v504 = vsub.s32 %v501, %v503
    %v505 = vrot.slane %v497, %v504
    %v507 = vunpack.c.l.s4 1983009808
    %v508 = vunpack.c.0.s8 %v507
    %v509 = vlaneseq
    %v510 = vshrl.u32 %v509, 7
    %v511 = vsub.s32 %v508, %v510
    %v512 = vrot.slane %v498, %v511
    %v513 = vcombine.low %v489, %v495
    %v514 = vcombine.high %v489, %v495
    %v516 = vunpack.c.l.s4 1983009808
    %v517 = vunpack.c.0.s8 %v516
    %v518 = vlaneseq
    %v519 = vshrl.u32 %v518, 7
    %v520 = vsub.s32 %v517, %v519
    %v521 = vrot.slane %v513, %v520
    %v523 = vunpack.c.l.s4 1983009808
    %v524 = vunpack.c.0.s8 %v523
    %v525 = vlaneseq
    %v526 = vshrl.u32 %v525, 7
    %v527 = vsub.s32 %v524, %v526
    %v528 = vrot.slane %v514, %v527
    %v529 = vcombine.low %v505, %v521
    %v530 = vcombine.high %v505, %v521
    %v532 = vunpack.c.l.s4 1934713408
    %v533 = vunpack.c.0.s8 %v532
    %v534 = vlaneseq
    %v535 = vshrl.u32 %v534, 7
    %v536 = vsub.s32 %v533, %v535
    %v537 = vrot.slane %v529, %v536
    %v539 = vunpack.c.l.s4 1934713408
    %v540 = vunpack.c.0.s8 %v539
    %v541 = vlaneseq
    %v542 = vshrl.u32 %v541, 7
    %v543 = vsub.s32 %v540, %v542
    %v544 = vrot.slane %v530, %v543
    %v545 = vcombine.low %v512, %v528
    %v546 = vcombine.high %v512, %v528
    %v548 = vunpack.c.l.s4 1934713408
    %v549 = vunpack.c.0.s8 %v548
    %v550 = vlaneseq
    %v551 = vshrl.u32 %v550, 7
    %v552 = vsub.s32 %v549, %v551
    %v553 = vrot.slane %v545, %v552
    %v555 = vunpack.c.l.s4 1934713408
    %v556 = vunpack.c.0.s8 %v555
    %v557 = vlaneseq
    %v558 = vshrl.u32 %v557, 7
    %v559 = vsub.s32 %v556, %v558
    %v560 = vrot.slane %v546, %v559
    %v561 = vcombine.high %v537, 0.0
    %v562 = vcombine.high %v544, 0.0
    %v563 = vcombine.high %v553, 0.0
    %v564 = vcombine.high %v560, 0.0
    %v565 = vcombine.low %v537, %v544
    %v567 = vunpack.c.l.s4 1983009808
    %v568 = vunpack.c.0.s8 %v567
    %v569 = vlaneseq
    %v570 = vshrl.u32 %v569, 7
    %v571 = vsub.s32 %v568, %v570
    %v572 = vrot.slane %v565, %v571
    %v573 = vcombine.low %v561, %v562
    %v575 = vunpack.c.l.s4 1983009808
    %v576 = vunpack.c.0.s8 %v575
    %v577 = vlaneseq
    %v578 = vshrl.u32 %v577, 7
    %v579 = vsub.s32 %v576, %v578
    %v580 = vrot.slane %v573, %v579
    %v581 = vcombine.low %v553, %v560
    %v583 = vunpack.c.l.s4 1983009808
    %v584 = vunpack.c.0.s8 %v583
    %v585 = vlaneseq
    %v586 = vshrl.u32 %v585, 7
    %v587 = vsub.s32 %v584, %v586
    %v588 = vrot.slane %v581, %v587
    %v589 = vcombine.low %v563, %v564
    %v591 = vunpack.c.l.s4 1983009808
    %v592 = vunpack.c.0.s8 %v591
    %v593 = vlaneseq
    %v594 = vshrl.u32 %v593, 7
    %v595 = vsub.s32 %v592, %v594
    %v596 = vrot.slane %v589, %v595
    %v597 = vcombine.low %v572, %v580
    %v598 = vcombine.high %v572, %v580
    %v600 = vunpack.c.l.s4 1934713408
    %v601 = vunpack.c.0.s8 %v600
    %v602 = vlaneseq
    %v603 = vshrl.u32 %v602, 7
    %v604 = vsub.s32 %v601, %v603
    %v605 = vrot.slane %v597, %v604
    %v607 = vunpack.c.l.s4 1934713408
    %v608 = vunpack.c.0.s8 %v607
    %v609 = vlaneseq
    %v610 = vshrl.u32 %v609, 7
    %v611 = vsub.s32 %v608, %v610
    %v612 = vrot.slane %v598, %v611
    %v613 = vcombine.low %v588, %v596
    %v614 = vcombine.high %v588, %v596
    %v616 = vunpack.c.l.s4 1934713408
    %v617 = vunpack.c.0.s8 %v616
    %v618 = vlaneseq
    %v619 = vshrl.u32 %v618, 7
    %v620 = vsub.s32 %v617, %v619
    %v621 = vrot.slane %v613, %v620
    %v623 = vunpack.c.l.s4 1934713408
    %v624 = vunpack.c.0.s8 %v623
    %v625 = vlaneseq
    %v626 = vshrl.u32 %v625, 7
    %v627 = vsub.s32 %v624, %v626
    %v628 = vrot.slane %v614, %v627
    %v629 = vcombine.low %v605, %v621
    %v630 = vcombine.high %v605, %v621
    %v631 = vcombine.low %v612, %v628
    %v632 = vcombine.high %v612, %v628
    %v633 = vpack.c.bf16 %v629, %v629
    %v634 = vpack.c.bf16 %v630, %v630
    %v635 = vpack.c.bf16 %v631, %v631
    %v636 = vpack.c.bf16 %v632, %v632
    %638 = vrot.lane.b32.xlu0 %v482, 96
    %v639 = vpop.permute.xlu0 %638
    %641 = vrot.lane.b32.xlu0 %v482, 64
    %v642 = vpop.permute.xlu0 %641
    %644 = vrot.lane.b32.xlu0 %v482, 32
    %v645 = vpop.permute.xlu0 %644
    %v647 = vcombine.low %v482, %v642
    %v648 = vcombine.high %v482, %v642
    %v650 = vunpack.c.l.s4 1983009808
    %v651 = vunpack.c.0.s8 %v650
    %v652 = vlaneseq
    %v653 = vshrl.u32 %v652, 7
    %v654 = vsub.s32 %v651, %v653
    %v655 = vrot.slane %v647, %v654
    %v657 = vunpack.c.l.s4 1983009808
    %v658 = vunpack.c.0.s8 %v657
    %v659 = vlaneseq
    %v660 = vshrl.u32 %v659, 7
    %v661 = vsub.s32 %v658, %v660
    %v662 = vrot.slane %v648, %v661
    %v663 = vcombine.low %v639, %v645
    %v664 = vcombine.high %v639, %v645
    %v666 = vunpack.c.l.s4 1983009808
    %v667 = vunpack.c.0.s8 %v666
    %v668 = vlaneseq
    %v669 = vshrl.u32 %v668, 7
    %v670 = vsub.s32 %v667, %v669
    %v671 = vrot.slane %v663, %v670
    %v673 = vunpack.c.l.s4 1983009808
    %v674 = vunpack.c.0.s8 %v673
    %v675 = vlaneseq
    %v676 = vshrl.u32 %v675, 7
    %v677 = vsub.s32 %v674, %v676
    %v678 = vrot.slane %v664, %v677
    %v679 = vcombine.low %v655, %v671
    %v680 = vcombine.high %v655, %v671
    %v682 = vunpack.c.l.s4 1934713408
    %v683 = vunpack.c.0.s8 %v682
    %v684 = vlaneseq
    %v685 = vshrl.u32 %v684, 7
    %v686 = vsub.s32 %v683, %v685
    %v687 = vrot.slane %v679, %v686
    %v689 = vunpack.c.l.s4 1934713408
    %v690 = vunpack.c.0.s8 %v689
    %v691 = vlaneseq
    %v692 = vshrl.u32 %v691, 7
    %v693 = vsub.s32 %v690, %v692
    %v694 = vrot.slane %v680, %v693
    %v695 = vcombine.low %v662, %v678
    %v696 = vcombine.high %v662, %v678
    %v698 = vunpack.c.l.s4 1934713408
    %v699 = vunpack.c.0.s8 %v698
    %v700 = vlaneseq
    %v701 = vshrl.u32 %v700, 7
    %v702 = vsub.s32 %v699, %v701
    %v703 = vrot.slane %v695, %v702
    %v705 = vunpack.c.l.s4 1934713408
    %v706 = vunpack.c.0.s8 %v705
    %v707 = vlaneseq
    %v708 = vshrl.u32 %v707, 7
    %v709 = vsub.s32 %v706, %v708
    %v710 = vrot.slane %v696, %v709
    %v711 = vcombine.high %v687, 0.0
    %v712 = vcombine.high %v694, 0.0
    %v713 = vcombine.high %v703, 0.0
    %v714 = vcombine.high %v710, 0.0
    %v715 = vcombine.low %v687, %v694
    %v717 = vunpack.c.l.s4 1983009808
    %v718 = vunpack.c.0.s8 %v717
    %v719 = vlaneseq
    %v720 = vshrl.u32 %v719, 7
    %v721 = vsub.s32 %v718, %v720
    %v722 = vrot.slane %v715, %v721
    %v723 = vcombine.low %v711, %v712
    %v725 = vunpack.c.l.s4 1983009808
    %v726 = vunpack.c.0.s8 %v725
    %v727 = vlaneseq
    %v728 = vshrl.u32 %v727, 7
    %v729 = vsub.s32 %v726, %v728
    %v730 = vrot.slane %v723, %v729
    %v731 = vcombine.low %v703, %v710
    %v733 = vunpack.c.l.s4 1983009808
    %v734 = vunpack.c.0.s8 %v733
    %v735 = vlaneseq
    %v736 = vshrl.u32 %v735, 7
    %v737 = vsub.s32 %v734, %v736
    %v738 = vrot.slane %v731, %v737
    %v739 = vcombine.low %v713, %v714
    %v741 = vunpack.c.l.s4 1983009808
    %v742 = vunpack.c.0.s8 %v741
    %v743 = vlaneseq
    %v744 = vshrl.u32 %v743, 7
    %v745 = vsub.s32 %v742, %v744
    %v746 = vrot.slane %v739, %v745
    %v747 = vcombine.low %v722, %v730
    %v748 = vcombine.high %v722, %v730
    %v750 = vunpack.c.l.s4 1934713408
    %v751 = vunpack.c.0.s8 %v750
    %v752 = vlaneseq
    %v753 = vshrl.u32 %v752, 7
    %v754 = vsub.s32 %v751, %v753
    %v755 = vrot.slane %v747, %v754
    %v757 = vunpack.c.l.s4 1934713408
    %v758 = vunpack.c.0.s8 %v757
    %v759 = vlaneseq
    %v760 = vshrl.u32 %v759, 7
    %v761 = vsub.s32 %v758, %v760
    %v762 = vrot.slane %v748, %v761
    %v763 = vcombine.low %v738, %v746
    %v764 = vcombine.high %v738, %v746
    %v766 = vunpack.c.l.s4 1934713408
    %v767 = vunpack.c.0.s8 %v766
    %v768 = vlaneseq
    %v769 = vshrl.u32 %v768, 7
    %v770 = vsub.s32 %v767, %v769
    %v771 = vrot.slane %v763, %v770
    %v773 = vunpack.c.l.s4 1934713408
    %v774 = vunpack.c.0.s8 %v773
    %v775 = vlaneseq
    %v776 = vshrl.u32 %v775, 7
    %v777 = vsub.s32 %v774, %v776
    %v778 = vrot.slane %v764, %v777
    %v779 = vcombine.low %v755, %v771
    %v780 = vcombine.high %v755, %v771
    %v781 = vcombine.low %v762, %v778
    %v782 = vcombine.high %v762, %v778
    %v783 = vpack.c.bf16 %v779, %v779
    %v784 = vpack.c.bf16 %v780, %v780
    %v785 = vpack.c.bf16 %v781, %v781
    %v786 = vpack.c.bf16 %v782, %v782
    %vm787 = vcmask 261120
    %v789 = vsel %vm787, %v633, 0
    %v792 = vsel %vm787, %v783, 0
    %794 = vmatprep.subr.bf16.mxu0 0
    %795 = vmatpush1.bf16.xpose.msra.mxu0 %v792
    %796 = vmatprep.subr.bf16.mxu0 0
    %797 = vmatpush1.bf16.xpose.msra.mxu0 0
    %798 = vmatprep.subr.bf16.mxu0 0
    %799 = vmatpush1.bf16.xpose.msra.mxu0 0
    %800 = vmatprep.subr.bf16.mxu0 0
    %801 = vmatpush1.bf16.xpose.msra.mxu0 0
    %802 = vmatprep.subr.bf16.mxu0 0
    %803 = vmatpush1.bf16.xpose.msra.mxu0 0
    %804 = vmatprep.subr.bf16.mxu0 0
    %805 = vmatpush1.bf16.xpose.msra.mxu0 0
    %806 = vmatprep.subr.bf16.mxu0 0
    %807 = vmatpush1.bf16.xpose.msra.mxu0 0
    %808 = vmatprep.subr.bf16.mxu0 0
    %809 = vmatpush1.bf16.xpose.msra.mxu0 0
    %810 = vmatprep.subr.bf16.mxu0 0
    %811 = vmatpush1.bf16.xpose.msra.mxu0 0
    %812 = vmatprep.subr.bf16.mxu0 0
    %813 = vmatpush1.bf16.xpose.msra.mxu0 0
    %814 = vmatprep.subr.bf16.mxu0 0
    %815 = vmatpush1.bf16.xpose.msra.mxu0 0
    %816 = vmatprep.subr.bf16.mxu0 0
    %817 = vmatpush1.bf16.xpose.msra.mxu0 0
    %818 = vmatprep.subr.bf16.mxu0 0
    %819 = vmatpush1.bf16.xpose.msra.mxu0 0
    %820 = vmatprep.subr.bf16.mxu0 0
    %821 = vmatpush1.bf16.xpose.msra.mxu0 0
    %822 = vmatprep.subr.bf16.mxu0 0
    %823 = vmatpush1.bf16.xpose.msra.mxu0 0
    %824 = vmatprep.subr.bf16.mxu0 0
    %825 = vmatpush1.bf16.xpose.msra.mxu0 0
    %826 = vmatprep.mubr.bf16.mxu0 0
    %827 = vmatmul.mubr.bf16.gmra.mrb[0].mxu0 %v789
    %v828 = vpop.f32.mrb[0].mxu0
    %v829 = vadd.f32 0.0, %v828
    %v830 = vpop.f32.mrb[0].mxu0
    %v831 = vpop.f32.mrb[0].mxu0
    %v832 = vpop.f32.mrb[0].mxu0
    %833 = vdwg.mxu0
    %v835 = vsel %vm787, %v634, 0
    %v838 = vsel %vm787, %v784, 0
    %840 = vmatprep.subr.bf16.mxu0 0
    %841 = vmatpush1.bf16.xpose.msra.mxu0 %v838
    %842 = vmatprep.subr.bf16.mxu0 0
    %843 = vmatpush1.bf16.xpose.msra.mxu0 0
    %844 = vmatprep.subr.bf16.mxu0 0
    %845 = vmatpush1.bf16.xpose.msra.mxu0 0
    %846 = vmatprep.subr.bf16.mxu0 0
    %847 = vmatpush1.bf16.xpose.msra.mxu0 0
    %848 = vmatprep.subr.bf16.mxu0 0
    %849 = vmatpush1.bf16.xpose.msra.mxu0 0
    %850 = vmatprep.subr.bf16.mxu0 0
    %851 = vmatpush1.bf16.xpose.msra.mxu0 0
    %852 = vmatprep.subr.bf16.mxu0 0
    %853 = vmatpush1.bf16.xpose.msra.mxu0 0
    %854 = vmatprep.subr.bf16.mxu0 0
    %855 = vmatpush1.bf16.xpose.msra.mxu0 0
    %856 = vmatprep.subr.bf16.mxu0 0
    %857 = vmatpush1.bf16.xpose.msra.mxu0 0
    %858 = vmatprep.subr.bf16.mxu0 0
    %859 = vmatpush1.bf16.xpose.msra.mxu0 0
    %860 = vmatprep.subr.bf16.mxu0 0
    %861 = vmatpush1.bf16.xpose.msra.mxu0 0
    %862 = vmatprep.subr.bf16.mxu0 0
    %863 = vmatpush1.bf16.xpose.msra.mxu0 0
    %864 = vmatprep.subr.bf16.mxu0 0
    %865 = vmatpush1.bf16.xpose.msra.mxu0 0
    %866 = vmatprep.subr.bf16.mxu0 0
    %867 = vmatpush1.bf16.xpose.msra.mxu0 0
    %868 = vmatprep.subr.bf16.mxu0 0
    %869 = vmatpush1.bf16.xpose.msra.mxu0 0
    %870 = vmatprep.subr.bf16.mxu0 0
    %871 = vmatpush1.bf16.xpose.msra.mxu0 0
    %872 = vmatprep.mubr.bf16.mxu0 0
    %873 = vmatmul.mubr.bf16.gmra.mrb[0].mxu0 %v835
    %v874 = vpop.f32.mrb[0].mxu0
    %v875 = vadd.f32 0.0, %v874
    %v876 = vpop.f32.mrb[0].mxu0
    %v877 = vpop.f32.mrb[0].mxu0
    %v878 = vpop.f32.mrb[0].mxu0
    %879 = vdwg.mxu0
    %v881 = vsel %vm787, %v635, 0
    %v884 = vsel %vm787, %v785, 0
    %886 = vmatprep.subr.bf16.mxu0 0
    %887 = vmatpush1.bf16.xpose.msra.mxu0 %v884
    %888 = vmatprep.subr.bf16.mxu0 0
    %889 = vmatpush1.bf16.xpose.msra.mxu0 0
    %890 = vmatprep.subr.bf16.mxu0 0
    %891 = vmatpush1.bf16.xpose.msra.mxu0 0
    %892 = vmatprep.subr.bf16.mxu0 0
    %893 = vmatpush1.bf16.xpose.msra.mxu0 0
    %894 = vmatprep.subr.bf16.mxu0 0
    %895 = vmatpush1.bf16.xpose.msra.mxu0 0
    %896 = vmatprep.subr.bf16.mxu0 0
    %897 = vmatpush1.bf16.xpose.msra.mxu0 0
    %898 = vmatprep.subr.bf16.mxu0 0
    %899 = vmatpush1.bf16.xpose.msra.mxu0 0
    %900 = vmatprep.subr.bf16.mxu0 0
    %901 = vmatpush1.bf16.xpose.msra.mxu0 0
    %902 = vmatprep.subr.bf16.mxu0 0
    %903 = vmatpush1.bf16.xpose.msra.mxu0 0
    %904 = vmatprep.subr.bf16.mxu0 0
    %905 = vmatpush1.bf16.xpose.msra.mxu0 0
    %906 = vmatprep.subr.bf16.mxu0 0
    %907 = vmatpush1.bf16.xpose.msra.mxu0 0
    %908 = vmatprep.subr.bf16.mxu0 0
    %909 = vmatpush1.bf16.xpose.msra.mxu0 0
    %910 = vmatprep.subr.bf16.mxu0 0
    %911 = vmatpush1.bf16.xpose.msra.mxu0 0
    %912 = vmatprep.subr.bf16.mxu0 0
    %913 = vmatpush1.bf16.xpose.msra.mxu0 0
    %914 = vmatprep.subr.bf16.mxu0 0
    %915 = vmatpush1.bf16.xpose.msra.mxu0 0
    %916 = vmatprep.subr.bf16.mxu0 0
    %917 = vmatpush1.bf16.xpose.msra.mxu0 0
    %918 = vmatprep.mubr.bf16.mxu0 0
    %919 = vmatmul.mubr.bf16.gmra.mrb[0].mxu0 %v881
    %v920 = vpop.f32.mrb[0].mxu0
    %v921 = vadd.f32 0.0, %v920
    %v922 = vpop.f32.mrb[0].mxu0
    %v923 = vpop.f32.mrb[0].mxu0
    %v924 = vpop.f32.mrb[0].mxu0
    %925 = vdwg.mxu0
    %v927 = vsel %vm787, %v636, 0
    %v930 = vsel %vm787, %v786, 0
    %932 = vmatprep.subr.bf16.mxu0 0
    %933 = vmatpush1.bf16.xpose.msra.mxu0 %v930
    %934 = vmatprep.subr.bf16.mxu0 0
    %935 = vmatpush1.bf16.xpose.msra.mxu0 0
    %936 = vmatprep.subr.bf16.mxu0 0
    %937 = vmatpush1.bf16.xpose.msra.mxu0 0
    %938 = vmatprep.subr.bf16.mxu0 0
    %939 = vmatpush1.bf16.xpose.msra.mxu0 0
    %940 = vmatprep.subr.bf16.mxu0 0
    %941 = vmatpush1.bf16.xpose.msra.mxu0 0
    %942 = vmatprep.subr.bf16.mxu0 0
    %943 = vmatpush1.bf16.xpose.msra.mxu0 0
    %944 = vmatprep.subr.bf16.mxu0 0
    %945 = vmatpush1.bf16.xpose.msra.mxu0 0
    %946 = vmatprep.subr.bf16.mxu0 0
    %947 = vmatpush1.bf16.xpose.msra.mxu0 0
    %948 = vmatprep.subr.bf16.mxu0 0
    %949 = vmatpush1.bf16.xpose.msra.mxu0 0
    %950 = vmatprep.subr.bf16.mxu0 0
    %951 = vmatpush1.bf16.xpose.msra.mxu0 0
    %952 = vmatprep.subr.bf16.mxu0 0
    %953 = vmatpush1.bf16.xpose.msra.mxu0 0
    %954 = vmatprep.subr.bf16.mxu0 0
    %955 = vmatpush1.bf16.xpose.msra.mxu0 0
    %956 = vmatprep.subr.bf16.mxu0 0
    %957 = vmatpush1.bf16.xpose.msra.mxu0 0
    %958 = vmatprep.subr.bf16.mxu0 0
    %959 = vmatpush1.bf16.xpose.msra.mxu0 0
    %960 = vmatprep.subr.bf16.mxu0 0
    %961 = vmatpush1.bf16.xpose.msra.mxu0 0
    %962 = vmatprep.subr.bf16.mxu0 0
    %963 = vmatpush1.bf16.xpose.msra.mxu0 0
    %964 = vmatprep.mubr.bf16.mxu0 0
    %965 = vmatmul.mubr.bf16.gmra.mrb[0].mxu0 %v927
    %v966 = vpop.f32.mrb[0].mxu0
    %v967 = vadd.f32 0.0, %v966
    %v968 = vpop.f32.mrb[0].mxu0
    %v969 = vpop.f32.mrb[0].mxu0
    %v970 = vpop.f32.mrb[0].mxu0
    %971 = vdwg.mxu0
    %v972 = vmul.f32 %v829, 0.125
    %v973 = vmul.f32 %v875, 0.125
    %v974 = vmul.f32 %v921, 0.125
    %v975 = vmul.f32 %v967, 0.125
    %v976 = vld [vmem:[#allocation7] sm:$0xff]
    %v977 = vld [vmem:[#allocation7 + $0x8] sm:$0xff]
    %v978 = vld [vmem:[#allocation7 + $0x10] sm:$0xff]
    %v979 = vld [vmem:[#allocation7 + $0x18] sm:$0xff]
    %v980 = vadd.f32 %v972, %v976
    %v981 = vadd.f32 %v973, %v977
    %v982 = vadd.f32 %v974, %v978
    %v983 = vadd.f32 %v975, %v979
    %v984 = vld [vmem:[%s1] sm:$0x3]
    %v985 = vlaneseq
    %v986 = vshrl.u32 %v985, 7
    %v987 = vsub.s32 0, %v986
    %v988 = vrot.slane %v984, %v987
    %v989 = vadd.f32 %v980, %v988
    %v990 = vadd.f32 %v981, %v988
    %v991 = vadd.f32 %v982, %v988
    %v992 = vadd.f32 %v983, %v988
    %v993 = vlaneseq
    %v994 = vshrl.u32 %v993, 7
    %v995 = vsub.s32 1, %v994
    %v996 = vrot.slane %v984, %v995
    %v997 = vadd.f32 %v980, %v996
    %v998 = vadd.f32 %v981, %v996
    %v999 = vadd.f32 %v982, %v996
    %v1000 = vadd.f32 %v983, %v996
    %v1001 = vld [vmem:[#allocation2] sm:$0xff]
    %v1002 = vld [vmem:[#allocation2 + $0x8] sm:$0xff]
    %v1003 = vpack.c.bf16 %v1002, %v1001
    %v1004 = vld [vmem:[#allocation13] sm:$0xf]
    %v1005 = vld [vmem:[#allocation13 + $0x4] sm:$0xf]
    %v1006 = vld [vmem:[#allocation13 + $0x8] sm:$0xf]
    %v1007 = vld [vmem:[#allocation13 + $0xc] sm:$0xf]
    %v1008 = vld [vmem:[#allocation13 + $0x10] sm:$0xf]
    %v1009 = vld [vmem:[#allocation13 + $0x14] sm:$0xf]
    %v1010 = vld [vmem:[#allocation13 + $0x18] sm:$0xf]
    %v1011 = vld [vmem:[#allocation13 + $0x1c] sm:$0xf]
    %v1012 = vld [vmem:[#allocation13 + $0x20] sm:$0xf]
    %v1013 = vld [vmem:[#allocation13 + $0x24] sm:$0xf]
    %v1014 = vld [vmem:[#allocation13 + $0x28] sm:$0xf]
    %v1015 = vld [vmem:[#allocation13 + $0x2c] sm:$0xf]
    %v1016 = vld [vmem:[#allocation13 + $0x30] sm:$0xf]
    %v1017 = vld [vmem:[#allocation13 + $0x34] sm:$0xf]
    %v1018 = vld [vmem:[#allocation13 + $0x38] sm:$0xf]
    %v1019 = vld [vmem:[#allocation13 + $0x3c] sm:$0xf]
    %v1020 = vld [vmem:[%s9] sm:$0x1]
    %v1022 = vlaneseq
    %v1023 = vshrl.u32 %v1022, 7
    %v1024 = vsub.s32 0, %v1023
    %v1025 = vrot.slane %v1020, %v1024
    %v1043 = vunpack.c.l.b16 %v1004
    %v1044 = vunpack.c.l.b16 %v1005
    %v1045 = vunpack.c.l.b16 %v1006
    %v1046 = vunpack.c.l.b16 %v1007
    %v1047 = vunpack.c.l.b16 %v1008
    %v1048 = vunpack.c.l.b16 %v1009
    %v1049 = vunpack.c.l.b16 %v1010
    %v1050 = vunpack.c.l.b16 %v1011
    %v1051 = vunpack.c.l.b16 %v1012
    %v1052 = vunpack.c.l.b16 %v1013
    %v1053 = vunpack.c.l.b16 %v1014
    %v1054 = vunpack.c.l.b16 %v1015
    %v1055 = vunpack.c.l.b16 %v1016
    %v1056 = vunpack.c.l.b16 %v1017
    %v1057 = vunpack.c.l.b16 %v1018
    %v1058 = vunpack.c.l.b16 %v1019
    %v1059 = vpack.c.b16 %v1044, %v1043
    %v1060 = vpack.c.b16 %v1046, %v1045
    %v1061 = vpack.c.b16 %v1048, %v1047
    %v1062 = vpack.c.b16 %v1050, %v1049
    %v1063 = vpack.c.b16 %v1052, %v1051
    %v1064 = vpack.c.b16 %v1054, %v1053
    %v1065 = vpack.c.b16 %v1056, %v1055
    %v1066 = vpack.c.b16 %v1058, %v1057
    %1075 = vmatprep.subr.bf16.mxu0 0
    %1076 = vmatpush1.bf16.msra.mxu0 %v1059
    %1077 = vmatprep.subr.bf16.mxu0 0
    %1078 = vmatpush1.bf16.msra.mxu0 %v1060
    %1079 = vmatprep.subr.bf16.mxu0 0
    %1080 = vmatpush1.bf16.msra.mxu0 %v1061
    %1081 = vmatprep.subr.bf16.mxu0 0
    %1082 = vmatpush1.bf16.msra.mxu0 %v1062
    %1083 = vmatprep.subr.bf16.mxu0 0
    %1084 = vmatpush1.bf16.msra.mxu0 %v1063
    %1085 = vmatprep.subr.bf16.mxu0 0
    %1086 = vmatpush1.bf16.msra.mxu0 %v1064
    %1087 = vmatprep.subr.bf16.mxu0 0
    %1088 = vmatpush1.bf16.msra.mxu0 %v1065
    %1089 = vmatprep.subr.bf16.mxu0 0
    %1090 = vmatpush1.bf16.msra.mxu0 %v1066
    %1091 = vmatprep.subr.bf16.mxu0 0
    %1092 = vmatpush1.bf16.msra.mxu0 0
    %1093 = vmatprep.subr.bf16.mxu0 0
    %1094 = vmatpush1.bf16.msra.mxu0 0
    %1095 = vmatprep.subr.bf16.mxu0 0
    %1096 = vmatpush1.bf16.msra.mxu0 0
    %1097 = vmatprep.subr.bf16.mxu0 0
    %1098 = vmatpush1.bf16.msra.mxu0 0
    %1099 = vmatprep.subr.bf16.mxu0 0
    %1100 = vmatpush1.bf16.msra.mxu0 0
    %1101 = vmatprep.subr.bf16.mxu0 0
    %1102 = vmatpush1.bf16.msra.mxu0 0
    %1103 = vmatprep.subr.bf16.mxu0 0
    %1104 = vmatpush1.bf16.msra.mxu0 0
    %1105 = vmatprep.subr.bf16.mxu0 0
    %1106 = vmatpush1.bf16.msra.mxu0 0
    %1107 = vmatprep.mubr.bf16.mxu0 0
    %1108 = vmatmul.mubr.bf16.gmra.mrb[0].mxu0 %v1003
    %v1109 = vpop.f32.mrb[0].mxu0
    %v1110 = vadd.f32 %v1025, %v1109
    %v1111 = vpop.f32.mrb[0].mxu0
    %v1112 = vpop.f32.mrb[0].mxu0
    %v1113 = vadd.f32 %v1025, %v1112
    %v1114 = vpop.f32.mrb[0].mxu0
    %1115 = vdwg.mxu0
    %v1116 = vld [vmem:[#allocation14] sm:$0xf]
    %v1117 = vld [vmem:[#allocation14 + $0x4] sm:$0xf]
    %v1118 = vld [vmem:[#allocation14 + $0x8] sm:$0xf]
    %v1119 = vld [vmem:[#allocation14 + $0xc] sm:$0xf]
    %v1120 = vld [vmem:[#allocation14 + $0x10] sm:$0xf]
    %v1121 = vld [vmem:[#allocation14 + $0x14] sm:$0xf]
    %v1122 = vld [vmem:[#allocation14 + $0x18] sm:$0xf]
    %v1123 = vld [vmem:[#allocation14 + $0x1c] sm:$0xf]
    %v1124 = vld [vmem:[#allocation14 + $0x20] sm:$0xf]
    %v1125 = vld [vmem:[#allocation14 + $0x24] sm:$0xf]
    %v1126 = vld [vmem:[#allocation14 + $0x28] sm:$0xf]
    %v1127 = vld [vmem:[#allocation14 + $0x2c] sm:$0xf]
    %v1128 = vld [vmem:[#allocation14 + $0x30] sm:$0xf]
    %v1129 = vld [vmem:[#allocation14 + $0x34] sm:$0xf]
    %v1130 = vld [vmem:[#allocation14 + $0x38] sm:$0xf]
    %v1131 = vld [vmem:[#allocation14 + $0x3c] sm:$0xf]
    %v1132 = vld [vmem:[%s11] sm:$0x1]
    %v1134 = vlaneseq
    %v1135 = vshrl.u32 %v1134, 7
    %v1136 = vsub.s32 0, %v1135
    %v1137 = vrot.slane %v1132, %v1136
    %v1155 = vunpack.c.l.b16 %v1116
    %v1156 = vunpack.c.l.b16 %v1117
    %v1157 = vunpack.c.l.b16 %v1118
    %v1158 = vunpack.c.l.b16 %v1119
    %v1159 = vunpack.c.l.b16 %v1120
    %v1160 = vunpack.c.l.b16 %v1121
    %v1161 = vunpack.c.l.b16 %v1122
    %v1162 = vunpack.c.l.b16 %v1123
    %v1163 = vunpack.c.l.b16 %v1124
    %v1164 = vunpack.c.l.b16 %v1125
    %v1165 = vunpack.c.l.b16 %v1126
    %v1166 = vunpack.c.l.b16 %v1127
    %v1167 = vunpack.c.l.b16 %v1128
    %v1168 = vunpack.c.l.b16 %v1129
    %v1169 = vunpack.c.l.b16 %v1130
    %v1170 = vunpack.c.l.b16 %v1131
    %v1171 = vpack.c.b16 %v1156, %v1155
    %v1172 = vpack.c.b16 %v1158, %v1157
    %v1173 = vpack.c.b16 %v1160, %v1159
    %v1174 = vpack.c.b16 %v1162, %v1161
    %v1175 = vpack.c.b16 %v1164, %v1163
    %v1176 = vpack.c.b16 %v1166, %v1165
    %v1177 = vpack.c.b16 %v1168, %v1167
    %v1178 = vpack.c.b16 %v1170, %v1169
    %1187 = vmatprep.subr.bf16.mxu0 0
    %1188 = vmatpush1.bf16.msra.mxu0 %v1171
    %1189 = vmatprep.subr.bf16.mxu0 0
    %1190 = vmatpush1.bf16.msra.mxu0 %v1172
    %1191 = vmatprep.subr.bf16.mxu0 0
    %1192 = vmatpush1.bf16.msra.mxu0 %v1173
    %1193 = vmatprep.subr.bf16.mxu0 0
    %1194 = vmatpush1.bf16.msra.mxu0 %v1174
    %1195 = vmatprep.subr.bf16.mxu0 0
    %1196 = vmatpush1.bf16.msra.mxu0 %v1175
    %1197 = vmatprep.subr.bf16.mxu0 0
    %1198 = vmatpush1.bf16.msra.mxu0 %v1176
    %1199 = vmatprep.subr.bf16.mxu0 0
    %1200 = vmatpush1.bf16.msra.mxu0 %v1177
    %1201 = vmatprep.subr.bf16.mxu0 0
    %1202 = vmatpush1.bf16.msra.mxu0 %v1178
    %1203 = vmatprep.subr.bf16.mxu0 0
    %1204 = vmatpush1.bf16.msra.mxu0 0
    %1205 = vmatprep.subr.bf16.mxu0 0
    %1206 = vmatpush1.bf16.msra.mxu0 0
    %1207 = vmatprep.subr.bf16.mxu0 0
    %1208 = vmatpush1.bf16.msra.mxu0 0
    %1209 = vmatprep.subr.bf16.mxu0 0
    %1210 = vmatpush1.bf16.msra.mxu0 0
    %1211 = vmatprep.subr.bf16.mxu0 0
    %1212 = vmatpush1.bf16.msra.mxu0 0
    %1213 = vmatprep.subr.bf16.mxu0 0
    %1214 = vmatpush1.bf16.msra.mxu0 0
    %1215 = vmatprep.subr.bf16.mxu0 0
    %1216 = vmatpush1.bf16.msra.mxu0 0
    %1217 = vmatprep.subr.bf16.mxu0 0
    %1218 = vmatpush1.bf16.msra.mxu0 0
    %1219 = vmatprep.mubr.bf16.mxu0 0
    %1220 = vmatmul.mubr.bf16.gmra.mrb[0].mxu0 %v1003
    %v1221 = vpop.f32.mrb[0].mxu0
    %v1222 = vadd.f32 %v1137, %v1221
    %v1223 = vpop.f32.mrb[0].mxu0
    %v1224 = vpop.f32.mrb[0].mxu0
    %v1225 = vadd.f32 %v1137, %v1224
    %v1226 = vpop.f32.mrb[0].mxu0
    %1227 = vdwg.mxu0
    %v1228 = vld [vmem:[#allocation16] sm:$0xf]
    %v1229 = vld [vmem:[#allocation16 + $0x4] sm:$0xf]
    %v1230 = vld [vmem:[#allocation16 + $0x8] sm:$0xf]
    %v1231 = vld [vmem:[#allocation16 + $0xc] sm:$0xf]
    %v1232 = vld [vmem:[#allocation16 + $0x10] sm:$0xf]
    %v1233 = vld [vmem:[#allocation16 + $0x14] sm:$0xf]
    %v1234 = vld [vmem:[#allocation16 + $0x18] sm:$0xf]
    %v1235 = vld [vmem:[#allocation16 + $0x1c] sm:$0xf]
    %v1236 = vld [vmem:[#allocation16 + $0x20] sm:$0xf]
    %v1237 = vld [vmem:[#allocation16 + $0x24] sm:$0xf]
    %v1238 = vld [vmem:[#allocation16 + $0x28] sm:$0xf]
    %v1239 = vld [vmem:[#allocation16 + $0x2c] sm:$0xf]
    %v1240 = vld [vmem:[#allocation16 + $0x30] sm:$0xf]
    %v1241 = vld [vmem:[#allocation16 + $0x34] sm:$0xf]
    %v1242 = vld [vmem:[#allocation16 + $0x38] sm:$0xf]
    %v1243 = vld [vmem:[#allocation16 + $0x3c] sm:$0xf]
    %v1244 = vld [vmem:[%s13] sm:$0x1]
    %v1246 = vlaneseq
    %v1247 = vshrl.u32 %v1246, 7
    %v1248 = vsub.s32 0, %v1247
    %v1249 = vrot.slane %v1244, %v1248
    %v1267 = vunpack.c.l.b16 %v1228
    %v1268 = vunpack.c.l.b16 %v1229
    %v1269 = vunpack.c.l.b16 %v1230
    %v1270 = vunpack.c.l.b16 %v1231
    %v1271 = vunpack.c.l.b16 %v1232
    %v1272 = vunpack.c.l.b16 %v1233
    %v1273 = vunpack.c.l.b16 %v1234
    %v1274 = vunpack.c.l.b16 %v1235
    %v1275 = vunpack.c.l.b16 %v1236
    %v1276 = vunpack.c.l.b16 %v1237
    %v1277 = vunpack.c.l.b16 %v1238
    %v1278 = vunpack.c.l.b16 %v1239
    %v1279 = vunpack.c.l.b16 %v1240
    %v1280 = vunpack.c.l.b16 %v1241
    %v1281 = vunpack.c.l.b16 %v1242
    %v1282 = vunpack.c.l.b16 %v1243
    %v1283 = vpack.c.b16 %v1268, %v1267
    %v1284 = vpack.c.b16 %v1270, %v1269
    %v1285 = vpack.c.b16 %v1272, %v1271
    %v1286 = vpack.c.b16 %v1274, %v1273
    %v1287 = vpack.c.b16 %v1276, %v1275
    %v1288 = vpack.c.b16 %v1278, %v1277
    %v1289 = vpack.c.b16 %v1280, %v1279
    %v1290 = vpack.c.b16 %v1282, %v1281
    %1299 = vmatprep.subr.bf16.mxu0 0
    %1300 = vmatpush1.bf16.msra.mxu0 %v1283
    %1301 = vmatprep.subr.bf16.mxu0 0
    %1302 = vmatpush1.bf16.msra.mxu0 %v1284
    %1303 = vmatprep.subr.bf16.mxu0 0
    %1304 = vmatpush1.bf16.msra.mxu0 %v1285
    %1305 = vmatprep.subr.bf16.mxu0 0
    %1306 = vmatpush1.bf16.msra.mxu0 %v1286
    %1307 = vmatprep.subr.bf16.mxu0 0
    %1308 = vmatpush1.bf16.msra.mxu0 %v1287
    %1309 = vmatprep.subr.bf16.mxu0 0
    %1310 = vmatpush1.bf16.msra.mxu0 %v1288
    %1311 = vmatprep.subr.bf16.mxu0 0
    %1312 = vmatpush1.bf16.msra.mxu0 %v1289
    %1313 = vmatprep.subr.bf16.mxu0 0
    %1314 = vmatpush1.bf16.msra.mxu0 %v1290
    %1315 = vmatprep.subr.bf16.mxu0 0
    %1316 = vmatpush1.bf16.msra.mxu0 0
    %1317 = vmatprep.subr.bf16.mxu0 0
    %1318 = vmatpush1.bf16.msra.mxu0 0
    %1319 = vmatprep.subr.bf16.mxu0 0
    %1320 = vmatpush1.bf16.msra.mxu0 0
    %1321 = vmatprep.subr.bf16.mxu0 0
    %1322 = vmatpush1.bf16.msra.mxu0 0
    %1323 = vmatprep.subr.bf16.mxu0 0
    %1324 = vmatpush1.bf16.msra.mxu0 0
    %1325 = vmatprep.subr.bf16.mxu0 0
    %1326 = vmatpush1.bf16.msra.mxu0 0
    %1327 = vmatprep.subr.bf16.mxu0 0
    %1328 = vmatpush1.bf16.msra.mxu0 0
    %1329 = vmatprep.subr.bf16.mxu0 0
    %1330 = vmatpush1.bf16.msra.mxu0 0
    %1331 = vmatprep.mubr.bf16.mxu0 0
    %1332 = vmatmul.mubr.bf16.gmra.mrb[0].mxu0 %v1003
    %v1333 = vpop.f32.mrb[0].mxu0
    %v1334 = vadd.f32 %v1249, %v1333
    %v1335 = vpop.f32.mrb[0].mxu0
    %v1336 = vpop.f32.mrb[0].mxu0
    %v1337 = vadd.f32 %v1249, %v1336
    %v1338 = vpop.f32.mrb[0].mxu0
    %1339 = vdwg.mxu0
    %1342 = vrot.lane.b32.xlu0 %v1110, 96
    %v1343 = vpop.permute.xlu0 %1342
    %1344 = vrot.lane.b32.xlu0 %v1113, 96
    %v1345 = vpop.permute.xlu0 %1344
    %1348 = vrot.lane.b32.xlu0 %v1110, 64
    %v1349 = vpop.permute.xlu0 %1348
    %1350 = vrot.lane.b32.xlu0 %v1113, 64
    %v1351 = vpop.permute.xlu0 %1350
    %1354 = vrot.lane.b32.xlu0 %v1110, 32
    %v1355 = vpop.permute.xlu0 %1354
    %1356 = vrot.lane.b32.xlu0 %v1113, 32
    %v1357 = vpop.permute.xlu0 %1356
    %v1360 = vcombine.low %v1110, %v1349
    %v1361 = vcombine.high %v1110, %v1349
    %v1363 = vunpack.c.l.s4 1983009808
    %v1364 = vunpack.c.0.s8 %v1363
    %v1365 = vlaneseq
    %v1366 = vshrl.u32 %v1365, 7
    %v1367 = vsub.s32 %v1364, %v1366
    %v1368 = vrot.slane %v1360, %v1367
    %v1370 = vunpack.c.l.s4 1983009808
    %v1371 = vunpack.c.0.s8 %v1370
    %v1372 = vlaneseq
    %v1373 = vshrl.u32 %v1372, 7
    %v1374 = vsub.s32 %v1371, %v1373
    %v1375 = vrot.slane %v1361, %v1374
    %v1376 = vcombine.low %v1343, %v1355
    %v1377 = vcombine.high %v1343, %v1355
    %v1379 = vunpack.c.l.s4 1983009808
    %v1380 = vunpack.c.0.s8 %v1379
    %v1381 = vlaneseq
    %v1382 = vshrl.u32 %v1381, 7
    %v1383 = vsub.s32 %v1380, %v1382
    %v1384 = vrot.slane %v1376, %v1383
    %v1386 = vunpack.c.l.s4 1983009808
    %v1387 = vunpack.c.0.s8 %v1386
    %v1388 = vlaneseq
    %v1389 = vshrl.u32 %v1388, 7
    %v1390 = vsub.s32 %v1387, %v1389
    %v1391 = vrot.slane %v1377, %v1390
    %v1392 = vcombine.low %v1368, %v1384
    %v1393 = vcombine.high %v1368, %v1384
    %v1395 = vunpack.c.l.s4 1934713408
    %v1396 = vunpack.c.0.s8 %v1395
    %v1397 = vlaneseq
    %v1398 = vshrl.u32 %v1397, 7
    %v1399 = vsub.s32 %v1396, %v1398
    %v1400 = vrot.slane %v1392, %v1399
    %v1402 = vunpack.c.l.s4 1934713408
    %v1403 = vunpack.c.0.s8 %v1402
    %v1404 = vlaneseq
    %v1405 = vshrl.u32 %v1404, 7
    %v1406 = vsub.s32 %v1403, %v1405
    %v1407 = vrot.slane %v1393, %v1406
    %v1408 = vcombine.low %v1375, %v1391
    %v1409 = vcombine.high %v1375, %v1391
    %v1411 = vunpack.c.l.s4 1934713408
    %v1412 = vunpack.c.0.s8 %v1411
    %v1413 = vlaneseq
    %v1414 = vshrl.u32 %v1413, 7
    %v1415 = vsub.s32 %v1412, %v1414
    %v1416 = vrot.slane %v1408, %v1415
    %v1418 = vunpack.c.l.s4 1934713408
    %v1419 = vunpack.c.0.s8 %v1418
    %v1420 = vlaneseq
    %v1421 = vshrl.u32 %v1420, 7
    %v1422 = vsub.s32 %v1419, %v1421
    %v1423 = vrot.slane %v1409, %v1422
    %v1424 = vcombine.high %v1400, 0.0
    %v1425 = vcombine.high %v1407, 0.0
    %v1426 = vcombine.high %v1416, 0.0
    %v1427 = vcombine.high %v1423, 0.0
    %v1428 = vcombine.low %v1113, %v1351
    %v1429 = vcombine.high %v1113, %v1351
    %v1431 = vunpack.c.l.s4 1983009808
    %v1432 = vunpack.c.0.s8 %v1431
    %v1433 = vlaneseq
    %v1434 = vshrl.u32 %v1433, 7
    %v1435 = vsub.s32 %v1432, %v1434
    %v1436 = vrot.slane %v1428, %v1435
    %v1438 = vunpack.c.l.s4 1983009808
    %v1439 = vunpack.c.0.s8 %v1438
    %v1440 = vlaneseq
    %v1441 = vshrl.u32 %v1440, 7
    %v1442 = vsub.s32 %v1439, %v1441
    %v1443 = vrot.slane %v1429, %v1442
    %v1444 = vcombine.low %v1345, %v1357
    %v1445 = vcombine.high %v1345, %v1357
    %v1447 = vunpack.c.l.s4 1983009808
    %v1448 = vunpack.c.0.s8 %v1447
    %v1449 = vlaneseq
    %v1450 = vshrl.u32 %v1449, 7
    %v1451 = vsub.s32 %v1448, %v1450
    %v1452 = vrot.slane %v1444, %v1451
    %v1454 = vunpack.c.l.s4 1983009808
    %v1455 = vunpack.c.0.s8 %v1454
    %v1456 = vlaneseq
    %v1457 = vshrl.u32 %v1456, 7
    %v1458 = vsub.s32 %v1455, %v1457
    %v1459 = vrot.slane %v1445, %v1458
    %v1460 = vcombine.low %v1436, %v1452
    %v1461 = vcombine.high %v1436, %v1452
    %v1463 = vunpack.c.l.s4 1934713408
    %v1464 = vunpack.c.0.s8 %v1463
    %v1465 = vlaneseq
    %v1466 = vshrl.u32 %v1465, 7
    %v1467 = vsub.s32 %v1464, %v1466
    %v1468 = vrot.slane %v1460, %v1467
    %v1470 = vunpack.c.l.s4 1934713408
    %v1471 = vunpack.c.0.s8 %v1470
    %v1472 = vlaneseq
    %v1473 = vshrl.u32 %v1472, 7
    %v1474 = vsub.s32 %v1471, %v1473
    %v1475 = vrot.slane %v1461, %v1474
    %v1476 = vcombine.low %v1443, %v1459
    %v1477 = vcombine.high %v1443, %v1459
    %v1479 = vunpack.c.l.s4 1934713408
    %v1480 = vunpack.c.0.s8 %v1479
    %v1481 = vlaneseq
    %v1482 = vshrl.u32 %v1481, 7
    %v1483 = vsub.s32 %v1480, %v1482
    %v1484 = vrot.slane %v1476, %v1483
    %v1486 = vunpack.c.l.s4 1934713408
    %v1487 = vunpack.c.0.s8 %v1486
    %v1488 = vlaneseq
    %v1489 = vshrl.u32 %v1488, 7
    %v1490 = vsub.s32 %v1487, %v1489
    %v1491 = vrot.slane %v1477, %v1490
    %v1492 = vcombine.high %v1468, 0.0
    %v1493 = vcombine.high %v1475, 0.0
    %v1494 = vcombine.high %v1484, 0.0
    %v1495 = vcombine.high %v1491, 0.0
    %v1496 = vcombine.low %v1400, %v1407
    %v1498 = vunpack.c.l.s4 1983009808
    %v1499 = vunpack.c.0.s8 %v1498
    %v1500 = vlaneseq
    %v1501 = vshrl.u32 %v1500, 7
    %v1502 = vsub.s32 %v1499, %v1501
    %v1503 = vrot.slane %v1496, %v1502
    %v1504 = vcombine.low %v1424, %v1425
    %v1506 = vunpack.c.l.s4 1983009808
    %v1507 = vunpack.c.0.s8 %v1506
    %v1508 = vlaneseq
    %v1509 = vshrl.u32 %v1508, 7
    %v1510 = vsub.s32 %v1507, %v1509
    %v1511 = vrot.slane %v1504, %v1510
    %v1512 = vcombine.low %v1416, %v1423
    %v1514 = vunpack.c.l.s4 1983009808
    %v1515 = vunpack.c.0.s8 %v1514
    %v1516 = vlaneseq
    %v1517 = vshrl.u32 %v1516, 7
    %v1518 = vsub.s32 %v1515, %v1517
    %v1519 = vrot.slane %v1512, %v1518
    %v1520 = vcombine.low %v1426, %v1427
    %v1522 = vunpack.c.l.s4 1983009808
    %v1523 = vunpack.c.0.s8 %v1522
    %v1524 = vlaneseq
    %v1525 = vshrl.u32 %v1524, 7
    %v1526 = vsub.s32 %v1523, %v1525
    %v1527 = vrot.slane %v1520, %v1526
    %v1528 = vcombine.low %v1503, %v1511
    %v1529 = vcombine.high %v1503, %v1511
    %v1531 = vunpack.c.l.s4 1934713408
    %v1532 = vunpack.c.0.s8 %v1531
    %v1533 = vlaneseq
    %v1534 = vshrl.u32 %v1533, 7
    %v1535 = vsub.s32 %v1532, %v1534
    %v1536 = vrot.slane %v1528, %v1535
    %v1538 = vunpack.c.l.s4 1934713408
    %v1539 = vunpack.c.0.s8 %v1538
    %v1540 = vlaneseq
    %v1541 = vshrl.u32 %v1540, 7
    %v1542 = vsub.s32 %v1539, %v1541
    %v1543 = vrot.slane %v1529, %v1542
    %v1544 = vcombine.low %v1519, %v1527
    %v1545 = vcombine.high %v1519, %v1527
    %v1547 = vunpack.c.l.s4 1934713408
    %v1548 = vunpack.c.0.s8 %v1547
    %v1549 = vlaneseq
    %v1550 = vshrl.u32 %v1549, 7
    %v1551 = vsub.s32 %v1548, %v1550
    %v1552 = vrot.slane %v1544, %v1551
    %v1554 = vunpack.c.l.s4 1934713408
    %v1555 = vunpack.c.0.s8 %v1554
    %v1556 = vlaneseq
    %v1557 = vshrl.u32 %v1556, 7
    %v1558 = vsub.s32 %v1555, %v1557
    %v1559 = vrot.slane %v1545, %v1558
    %v1560 = vcombine.low %v1536, %v1552
    %v1561 = vcombine.high %v1536, %v1552
    %v1562 = vcombine.low %v1543, %v1559
    %v1563 = vcombine.high %v1543, %v1559
    %v1564 = vcombine.low %v1468, %v1475
    %v1566 = vunpack.c.l.s4 1983009808
    %v1567 = vunpack.c.0.s8 %v1566
    %v1568 = vlaneseq
    %v1569 = vshrl.u32 %v1568, 7
    %v1570 = vsub.s32 %v1567, %v1569
    %v1571 = vrot.slane %v1564, %v1570
    %v1572 = vcombine.low %v1492, %v1493
    %v1574 = vunpack.c.l.s4 1983009808
    %v1575 = vunpack.c.0.s8 %v1574
    %v1576 = vlaneseq
    %v1577 = vshrl.u32 %v1576, 7
    %v1578 = vsub.s32 %v1575, %v1577
    %v1579 = vrot.slane %v1572, %v1578
    %v1580 = vcombine.low %v1484, %v1491
    %v1582 = vunpack.c.l.s4 1983009808
    %v1583 = vunpack.c.0.s8 %v1582
    %v1584 = vlaneseq
    %v1585 = vshrl.u32 %v1584, 7
    %v1586 = vsub.s32 %v1583, %v1585
    %v1587 = vrot.slane %v1580, %v1586
    %v1588 = vcombine.low %v1494, %v1495
    %v1590 = vunpack.c.l.s4 1983009808
    %v1591 = vunpack.c.0.s8 %v1590
    %v1592 = vlaneseq
    %v1593 = vshrl.u32 %v1592, 7
    %v1594 = vsub.s32 %v1591, %v1593
    %v1595 = vrot.slane %v1588, %v1594
    %v1596 = vcombine.low %v1571, %v1579
    %v1597 = vcombine.high %v1571, %v1579
    %v1599 = vunpack.c.l.s4 1934713408
    %v1600 = vunpack.c.0.s8 %v1599
    %v1601 = vlaneseq
    %v1602 = vshrl.u32 %v1601, 7
    %v1603 = vsub.s32 %v1600, %v1602
    %v1604 = vrot.slane %v1596, %v1603
    %v1606 = vunpack.c.l.s4 1934713408
    %v1607 = vunpack.c.0.s8 %v1606
    %v1608 = vlaneseq
    %v1609 = vshrl.u32 %v1608, 7
    %v1610 = vsub.s32 %v1607, %v1609
    %v1611 = vrot.slane %v1597, %v1610
    %v1612 = vcombine.low %v1587, %v1595
    %v1613 = vcombine.high %v1587, %v1595
    %v1615 = vunpack.c.l.s4 1934713408
    %v1616 = vunpack.c.0.s8 %v1615
    %v1617 = vlaneseq
    %v1618 = vshrl.u32 %v1617, 7
    %v1619 = vsub.s32 %v1616, %v1618
    %v1620 = vrot.slane %v1612, %v1619
    %v1622 = vunpack.c.l.s4 1934713408
    %v1623 = vunpack.c.0.s8 %v1622
    %v1624 = vlaneseq
    %v1625 = vshrl.u32 %v1624, 7
    %v1626 = vsub.s32 %v1623, %v1625
    %v1627 = vrot.slane %v1613, %v1626
    %v1628 = vcombine.low %v1604, %v1620
    %v1629 = vcombine.high %v1604, %v1620
    %v1630 = vcombine.low %v1611, %v1627
    %v1631 = vcombine.high %v1611, %v1627
    %v1632 = vpack.c.bf16 %v1560, %v1560
    %v1633 = vpack.c.bf16 %v1561, %v1561
    %v1634 = vpack.c.bf16 %v1562, %v1562
    %v1635 = vpack.c.bf16 %v1563, %v1563
    %v1636 = vpack.c.bf16 %v1628, %v1628
    %v1637 = vpack.c.bf16 %v1629, %v1629
    %v1638 = vpack.c.bf16 %v1630, %v1630
    %v1639 = vpack.c.bf16 %v1631, %v1631
    %1642 = vrot.lane.b32.xlu0 %v1222, 96
    %v1643 = vpop.permute.xlu0 %1642
    %1644 = vrot.lane.b32.xlu0 %v1225, 96
    %v1645 = vpop.permute.xlu0 %1644
    %1648 = vrot.lane.b32.xlu0 %v1222, 64
    %v1649 = vpop.permute.xlu0 %1648
    %1650 = vrot.lane.b32.xlu0 %v1225, 64
    %v1651 = vpop.permute.xlu0 %1650
    %1654 = vrot.lane.b32.xlu0 %v1222, 32
    %v1655 = vpop.permute.xlu0 %1654
    %1656 = vrot.lane.b32.xlu0 %v1225, 32
    %v1657 = vpop.permute.xlu0 %1656
    %v1660 = vcombine.low %v1222, %v1649
    %v1661 = vcombine.high %v1222, %v1649
    %v1663 = vunpack.c.l.s4 1983009808
    %v1664 = vunpack.c.0.s8 %v1663
    %v1665 = vlaneseq
    %v1666 = vshrl.u32 %v1665, 7
    %v1667 = vsub.s32 %v1664, %v1666
    %v1668 = vrot.slane %v1660, %v1667
    %v1670 = vunpack.c.l.s4 1983009808
    %v1671 = vunpack.c.0.s8 %v1670
    %v1672 = vlaneseq
    %v1673 = vshrl.u32 %v1672, 7
    %v1674 = vsub.s32 %v1671, %v1673
    %v1675 = vrot.slane %v1661, %v1674
    %v1676 = vcombine.low %v1643, %v1655
    %v1677 = vcombine.high %v1643, %v1655
    %v1679 = vunpack.c.l.s4 1983009808
    %v1680 = vunpack.c.0.s8 %v1679
    %v1681 = vlaneseq
    %v1682 = vshrl.u32 %v1681, 7
    %v1683 = vsub.s32 %v1680, %v1682
    %v1684 = vrot.slane %v1676, %v1683
    %v1686 = vunpack.c.l.s4 1983009808
    %v1687 = vunpack.c.0.s8 %v1686
    %v1688 = vlaneseq
    %v1689 = vshrl.u32 %v1688, 7
    %v1690 = vsub.s32 %v1687, %v1689
    %v1691 = vrot.slane %v1677, %v1690
    %v1692 = vcombine.low %v1668, %v1684
    %v1693 = vcombine.high %v1668, %v1684
    %v1695 = vunpack.c.l.s4 1934713408
    %v1696 = vunpack.c.0.s8 %v1695
    %v1697 = vlaneseq
    %v1698 = vshrl.u32 %v1697, 7
    %v1699 = vsub.s32 %v1696, %v1698
    %v1700 = vrot.slane %v1692, %v1699
    %v1702 = vunpack.c.l.s4 1934713408
    %v1703 = vunpack.c.0.s8 %v1702
    %v1704 = vlaneseq
    %v1705 = vshrl.u32 %v1704, 7
    %v1706 = vsub.s32 %v1703, %v1705
    %v1707 = vrot.slane %v1693, %v1706
    %v1708 = vcombine.low %v1675, %v1691
    %v1709 = vcombine.high %v1675, %v1691
    %v1711 = vunpack.c.l.s4 1934713408
    %v1712 = vunpack.c.0.s8 %v1711
    %v1713 = vlaneseq
    %v1714 = vshrl.u32 %v1713, 7
    %v1715 = vsub.s32 %v1712, %v1714
    %v1716 = vrot.slane %v1708, %v1715
    %v1718 = vunpack.c.l.s4 1934713408
    %v1719 = vunpack.c.0.s8 %v1718
    %v1720 = vlaneseq
    %v1721 = vshrl.u32 %v1720, 7
    %v1722 = vsub.s32 %v1719, %v1721
    %v1723 = vrot.slane %v1709, %v1722
    %v1724 = vcombine.high %v1700, 0.0
    %v1725 = vcombine.high %v1707, 0.0
    %v1726 = vcombine.high %v1716, 0.0
    %v1727 = vcombine.high %v1723, 0.0
    %v1728 = vcombine.low %v1225, %v1651
    %v1729 = vcombine.high %v1225, %v1651
    %v1731 = vunpack.c.l.s4 1983009808
    %v1732 = vunpack.c.0.s8 %v1731
    %v1733 = vlaneseq
    %v1734 = vshrl.u32 %v1733, 7
    %v1735 = vsub.s32 %v1732, %v1734
    %v1736 = vrot.slane %v1728, %v1735
    %v1738 = vunpack.c.l.s4 1983009808
    %v1739 = vunpack.c.0.s8 %v1738
    %v1740 = vlaneseq
    %v1741 = vshrl.u32 %v1740, 7
    %v1742 = vsub.s32 %v1739, %v1741
    %v1743 = vrot.slane %v1729, %v1742
    %v1744 = vcombine.low %v1645, %v1657
    %v1745 = vcombine.high %v1645, %v1657
    %v1747 = vunpack.c.l.s4 1983009808
    %v1748 = vunpack.c.0.s8 %v1747
    %v1749 = vlaneseq
    %v1750 = vshrl.u32 %v1749, 7
    %v1751 = vsub.s32 %v1748, %v1750
    %v1752 = vrot.slane %v1744, %v1751
    %v1754 = vunpack.c.l.s4 1983009808
    %v1755 = vunpack.c.0.s8 %v1754
    %v1756 = vlaneseq
    %v1757 = vshrl.u32 %v1756, 7
    %v1758 = vsub.s32 %v1755, %v1757
    %v1759 = vrot.slane %v1745, %v1758
    %v1760 = vcombine.low %v1736, %v1752
    %v1761 = vcombine.high %v1736, %v1752
    %v1763 = vunpack.c.l.s4 1934713408
    %v1764 = vunpack.c.0.s8 %v1763
    %v1765 = vlaneseq
    %v1766 = vshrl.u32 %v1765, 7
    %v1767 = vsub.s32 %v1764, %v1766
    %v1768 = vrot.slane %v1760, %v1767
    %v1770 = vunpack.c.l.s4 1934713408
    %v1771 = vunpack.c.0.s8 %v1770
    %v1772 = vlaneseq
    %v1773 = vshrl.u32 %v1772, 7
    %v1774 = vsub.s32 %v1771, %v1773
    %v1775 = vrot.slane %v1761, %v1774
    %v1776 = vcombine.low %v1743, %v1759
    %v1777 = vcombine.high %v1743, %v1759
    %v1779 = vunpack.c.l.s4 1934713408
    %v1780 = vunpack.c.0.s8 %v1779
    %v1781 = vlaneseq
    %v1782 = vshrl.u32 %v1781, 7
    %v1783 = vsub.s32 %v1780, %v1782
    %v1784 = vrot.slane %v1776, %v1783
    %v1786 = vunpack.c.l.s4 1934713408
    %v1787 = vunpack.c.0.s8 %v1786
    %v1788 = vlaneseq
    %v1789 = vshrl.u32 %v1788, 7
    %v1790 = vsub.s32 %v1787, %v1789
    %v1791 = vrot.slane %v1777, %v1790
    %v1792 = vcombine.high %v1768, 0.0
    %v1793 = vcombine.high %v1775, 0.0
    %v1794 = vcombine.high %v1784, 0.0
    %v1795 = vcombine.high %v1791, 0.0
    %v1796 = vcombine.low %v1700, %v1707
    %v1798 = vunpack.c.l.s4 1983009808
    %v1799 = vunpack.c.0.s8 %v1798
    %v1800 = vlaneseq
    %v1801 = vshrl.u32 %v1800, 7
    %v1802 = vsub.s32 %v1799, %v1801
    %v1803 = vrot.slane %v1796, %v1802
    %v1804 = vcombine.low %v1724, %v1725
    %v1806 = vunpack.c.l.s4 1983009808
    %v1807 = vunpack.c.0.s8 %v1806
    %v1808 = vlaneseq
    %v1809 = vshrl.u32 %v1808, 7
    %v1810 = vsub.s32 %v1807, %v1809
    %v1811 = vrot.slane %v1804, %v1810
    %v1812 = vcombine.low %v1716, %v1723
    %v1814 = vunpack.c.l.s4 1983009808
    %v1815 = vunpack.c.0.s8 %v1814
    %v1816 = vlaneseq
    %v1817 = vshrl.u32 %v1816, 7
    %v1818 = vsub.s32 %v1815, %v1817
    %v1819 = vrot.slane %v1812, %v1818
    %v1820 = vcombine.low %v1726, %v1727
    %v1822 = vunpack.c.l.s4 1983009808
    %v1823 = vunpack.c.0.s8 %v1822
    %v1824 = vlaneseq
    %v1825 = vshrl.u32 %v1824, 7
    %v1826 = vsub.s32 %v1823, %v1825
    %v1827 = vrot.slane %v1820, %v1826
    %v1828 = vcombine.low %v1803, %v1811
    %v1829 = vcombine.high %v1803, %v1811
    %v1831 = vunpack.c.l.s4 1934713408
    %v1832 = vunpack.c.0.s8 %v1831
    %v1833 = vlaneseq
    %v1834 = vshrl.u32 %v1833, 7
    %v1835 = vsub.s32 %v1832, %v1834
    %v1836 = vrot.slane %v1828, %v1835
    %v1838 = vunpack.c.l.s4 1934713408
    %v1839 = vunpack.c.0.s8 %v1838
    %v1840 = vlaneseq
    %v1841 = vshrl.u32 %v1840, 7
    %v1842 = vsub.s32 %v1839, %v1841
    %v1843 = vrot.slane %v1829, %v1842
    %v1844 = vcombine.low %v1819, %v1827
    %v1845 = vcombine.high %v1819, %v1827
    %v1847 = vunpack.c.l.s4 1934713408
    %v1848 = vunpack.c.0.s8 %v1847
    %v1849 = vlaneseq
    %v1850 = vshrl.u32 %v1849, 7
    %v1851 = vsub.s32 %v1848, %v1850
    %v1852 = vrot.slane %v1844, %v1851
    %v1854 = vunpack.c.l.s4 1934713408
    %v1855 = vunpack.c.0.s8 %v1854
    %v1856 = vlaneseq
    %v1857 = vshrl.u32 %v1856, 7
    %v1858 = vsub.s32 %v1855, %v1857
    %v1859 = vrot.slane %v1845, %v1858
    %v1860 = vcombine.low %v1836, %v1852
    %v1861 = vcombine.high %v1836, %v1852
    %v1862 = vcombine.low %v1843, %v1859
    %v1863 = vcombine.high %v1843, %v1859
    %v1864 = vcombine.low %v1768, %v1775
    %v1866 = vunpack.c.l.s4 1983009808
    %v1867 = vunpack.c.0.s8 %v1866
    %v1868 = vlaneseq
    %v1869 = vshrl.u32 %v1868, 7
    %v1870 = vsub.s32 %v1867, %v1869
    %v1871 = vrot.slane %v1864, %v1870
    %v1872 = vcombine.low %v1792, %v1793
    %v1874 = vunpack.c.l.s4 1983009808
    %v1875 = vunpack.c.0.s8 %v1874
    %v1876 = vlaneseq
    %v1877 = vshrl.u32 %v1876, 7
    %v1878 = vsub.s32 %v1875, %v1877
    %v1879 = vrot.slane %v1872, %v1878
    %v1880 = vcombine.low %v1784, %v1791
    %v1882 = vunpack.c.l.s4 1983009808
    %v1883 = vunpack.c.0.s8 %v1882
    %v1884 = vlaneseq
    %v1885 = vshrl.u32 %v1884, 7
    %v1886 = vsub.s32 %v1883, %v1885
    %v1887 = vrot.slane %v1880, %v1886
    %v1888 = vcombine.low %v1794, %v1795
    %v1890 = vunpack.c.l.s4 1983009808
    %v1891 = vunpack.c.0.s8 %v1890
    %v1892 = vlaneseq
    %v1893 = vshrl.u32 %v1892, 7
    %v1894 = vsub.s32 %v1891, %v1893
    %v1895 = vrot.slane %v1888, %v1894
    %v1896 = vcombine.low %v1871, %v1879
    %v1897 = vcombine.high %v1871, %v1879
    %v1899 = vunpack.c.l.s4 1934713408
    %v1900 = vunpack.c.0.s8 %v1899
    %v1901 = vlaneseq
    %v1902 = vshrl.u32 %v1901, 7
    %v1903 = vsub.s32 %v1900, %v1902
    %v1904 = vrot.slane %v1896, %v1903
    %v1906 = vunpack.c.l.s4 1934713408
    %v1907 = vunpack.c.0.s8 %v1906
    %v1908 = vlaneseq
    %v1909 = vshrl.u32 %v1908, 7
    %v1910 = vsub.s32 %v1907, %v1909
    %v1911 = vrot.slane %v1897, %v1910
    %v1912 = vcombine.low %v1887, %v1895
    %v1913 = vcombine.high %v1887, %v1895
    %v1915 = vunpack.c.l.s4 1934713408
    %v1916 = vunpack.c.0.s8 %v1915
    %v1917 = vlaneseq
    %v1918 = vshrl.u32 %v1917, 7
    %v1919 = vsub.s32 %v1916, %v1918
    %v1920 = vrot.slane %v1912, %v1919
    %v1922 = vunpack.c.l.s4 1934713408
    %v1923 = vunpack.c.0.s8 %v1922
    %v1924 = vlaneseq
    %v1925 = vshrl.u32 %v1924, 7
    %v1926 = vsub.s32 %v1923, %v1925
    %v1927 = vrot.slane %v1913, %v1926
    %v1928 = vcombine.low %v1904, %v1920
    %v1929 = vcombine.high %v1904, %v1920
    %v1930 = vcombine.low %v1911, %v1927
    %v1931 = vcombine.high %v1911, %v1927
    %v1932 = vpack.c.bf16 %v1860, %v1860
    %v1933 = vpack.c.bf16 %v1861, %v1861
    %v1934 = vpack.c.bf16 %v1862, %v1862
    %v1935 = vpack.c.bf16 %v1863, %v1863
    %v1936 = vpack.c.bf16 %v1928, %v1928
    %v1937 = vpack.c.bf16 %v1929, %v1929
    %v1938 = vpack.c.bf16 %v1930, %v1930
    %v1939 = vpack.c.bf16 %v1931, %v1931
    %1942 = vrot.lane.b32.xlu0 %v1334, 96
    %v1943 = vpop.permute.xlu0 %1942
    %1944 = vrot.lane.b32.xlu0 %v1337, 96
    %v1945 = vpop.permute.xlu0 %1944
    %1948 = vrot.lane.b32.xlu0 %v1334, 64
    %v1949 = vpop.permute.xlu0 %1948
    %1950 = vrot.lane.b32.xlu0 %v1337, 64
    %v1951 = vpop.permute.xlu0 %1950
    %1954 = vrot.lane.b32.xlu0 %v1334, 32
    %v1955 = vpop.permute.xlu0 %1954
    %1956 = vrot.lane.b32.xlu0 %v1337, 32
    %v1957 = vpop.permute.xlu0 %1956
    %v1960 = vcombine.low %v1334, %v1949
    %v1961 = vcombine.high %v1334, %v1949
    %v1963 = vunpack.c.l.s4 1983009808
    %v1964 = vunpack.c.0.s8 %v1963
    %v1965 = vlaneseq
    %v1966 = vshrl.u32 %v1965, 7
    %v1967 = vsub.s32 %v1964, %v1966
    %v1968 = vrot.slane %v1960, %v1967
    %v1970 = vunpack.c.l.s4 1983009808
    %v1971 = vunpack.c.0.s8 %v1970
    %v1972 = vlaneseq
    %v1973 = vshrl.u32 %v1972, 7
    %v1974 = vsub.s32 %v1971, %v1973
    %v1975 = vrot.slane %v1961, %v1974
    %v1976 = vcombine.low %v1943, %v1955
    %v1977 = vcombine.high %v1943, %v1955
    %v1979 = vunpack.c.l.s4 1983009808
    %v1980 = vunpack.c.0.s8 %v1979
    %v1981 = vlaneseq
    %v1982 = vshrl.u32 %v1981, 7
    %v1983 = vsub.s32 %v1980, %v1982
    %v1984 = vrot.slane %v1976, %v1983
    %v1986 = vunpack.c.l.s4 1983009808
    %v1987 = vunpack.c.0.s8 %v1986
    %v1988 = vlaneseq
    %v1989 = vshrl.u32 %v1988, 7
    %v1990 = vsub.s32 %v1987, %v1989
    %v1991 = vrot.slane %v1977, %v1990
    %v1992 = vcombine.low %v1968, %v1984
    %v1993 = vcombine.high %v1968, %v1984
    %v1995 = vunpack.c.l.s4 1934713408
    %v1996 = vunpack.c.0.s8 %v1995
    %v1997 = vlaneseq
    %v1998 = vshrl.u32 %v1997, 7
    %v1999 = vsub.s32 %v1996, %v1998
    %v2000 = vrot.slane %v1992, %v1999
    %v2002 = vunpack.c.l.s4 1934713408
    %v2003 = vunpack.c.0.s8 %v2002
    %v2004 = vlaneseq
    %v2005 = vshrl.u32 %v2004, 7
    %v2006 = vsub.s32 %v2003, %v2005
    %v2007 = vrot.slane %v1993, %v2006
    %v2008 = vcombine.low %v1975, %v1991
    %v2009 = vcombine.high %v1975, %v1991
    %v2011 = vunpack.c.l.s4 1934713408
    %v2012 = vunpack.c.0.s8 %v2011
    %v2013 = vlaneseq
    %v2014 = vshrl.u32 %v2013, 7
    %v2015 = vsub.s32 %v2012, %v2014
    %v2016 = vrot.slane %v2008, %v2015
    %v2018 = vunpack.c.l.s4 1934713408
    %v2019 = vunpack.c.0.s8 %v2018
    %v2020 = vlaneseq
    %v2021 = vshrl.u32 %v2020, 7
    %v2022 = vsub.s32 %v2019, %v2021
    %v2023 = vrot.slane %v2009, %v2022
    %v2024 = vcombine.high %v2000, 0.0
    %v2025 = vcombine.high %v2007, 0.0
    %v2026 = vcombine.high %v2016, 0.0
    %v2027 = vcombine.high %v2023, 0.0
    %v2028 = vcombine.low %v1337, %v1951
    %v2029 = vcombine.high %v1337, %v1951
    %v2031 = vunpack.c.l.s4 1983009808
    %v2032 = vunpack.c.0.s8 %v2031
    %v2033 = vlaneseq
    %v2034 = vshrl.u32 %v2033, 7
    %v2035 = vsub.s32 %v2032, %v2034
    %v2036 = vrot.slane %v2028, %v2035
    %v2038 = vunpack.c.l.s4 1983009808
    %v2039 = vunpack.c.0.s8 %v2038
    %v2040 = vlaneseq
    %v2041 = vshrl.u32 %v2040, 7
    %v2042 = vsub.s32 %v2039, %v2041
    %v2043 = vrot.slane %v2029, %v2042
    %v2044 = vcombine.low %v1945, %v1957
    %v2045 = vcombine.high %v1945, %v1957
    %v2047 = vunpack.c.l.s4 1983009808
    %v2048 = vunpack.c.0.s8 %v2047
    %v2049 = vlaneseq
    %v2050 = vshrl.u32 %v2049, 7
    %v2051 = vsub.s32 %v2048, %v2050
    %v2052 = vrot.slane %v2044, %v2051
    %v2054 = vunpack.c.l.s4 1983009808
    %v2055 = vunpack.c.0.s8 %v2054
    %v2056 = vlaneseq
    %v2057 = vshrl.u32 %v2056, 7
    %v2058 = vsub.s32 %v2055, %v2057
    %v2059 = vrot.slane %v2045, %v2058
    %v2060 = vcombine.low %v2036, %v2052
    %v2061 = vcombine.high %v2036, %v2052
    %v2063 = vunpack.c.l.s4 1934713408
    %v2064 = vunpack.c.0.s8 %v2063
    %v2065 = vlaneseq
    %v2066 = vshrl.u32 %v2065, 7
    %v2067 = vsub.s32 %v2064, %v2066
    %v2068 = vrot.slane %v2060, %v2067
    %v2070 = vunpack.c.l.s4 1934713408
    %v2071 = vunpack.c.0.s8 %v2070
    %v2072 = vlaneseq
    %v2073 = vshrl.u32 %v2072, 7
    %v2074 = vsub.s32 %v2071, %v2073
    %v2075 = vrot.slane %v2061, %v2074
    %v2076 = vcombine.low %v2043, %v2059
    %v2077 = vcombine.high %v2043, %v2059
    %v2079 = vunpack.c.l.s4 1934713408
    %v2080 = vunpack.c.0.s8 %v2079
    %v2081 = vlaneseq
    %v2082 = vshrl.u32 %v2081, 7
    %v2083 = vsub.s32 %v2080, %v2082
    %v2084 = vrot.slane %v2076, %v2083
    %v2086 = vunpack.c.l.s4 1934713408
    %v2087 = vunpack.c.0.s8 %v2086
    %v2088 = vlaneseq
    %v2089 = vshrl.u32 %v2088, 7
    %v2090 = vsub.s32 %v2087, %v2089
    %v2091 = vrot.slane %v2077, %v2090
    %v2092 = vcombine.high %v2068, 0.0
    %v2093 = vcombine.high %v2075, 0.0
    %v2094 = vcombine.high %v2084, 0.0
    %v2095 = vcombine.high %v2091, 0.0
    %v2096 = vcombine.low %v2000, %v2007
    %v2098 = vunpack.c.l.s4 1983009808
    %v2099 = vunpack.c.0.s8 %v2098
    %v2100 = vlaneseq
    %v2101 = vshrl.u32 %v2100, 7
    %v2102 = vsub.s32 %v2099, %v2101
    %v2103 = vrot.slane %v2096, %v2102
    %v2104 = vcombine.low %v2024, %v2025
    %v2106 = vunpack.c.l.s4 1983009808
    %v2107 = vunpack.c.0.s8 %v2106
    %v2108 = vlaneseq
    %v2109 = vshrl.u32 %v2108, 7
    %v2110 = vsub.s32 %v2107, %v2109
    %v2111 = vrot.slane %v2104, %v2110
    %v2112 = vcombine.low %v2016, %v2023
    %v2114 = vunpack.c.l.s4 1983009808
    %v2115 = vunpack.c.0.s8 %v2114
    %v2116 = vlaneseq
    %v2117 = vshrl.u32 %v2116, 7
    %v2118 = vsub.s32 %v2115, %v2117
    %v2119 = vrot.slane %v2112, %v2118
    %v2120 = vcombine.low %v2026, %v2027
    %v2122 = vunpack.c.l.s4 1983009808
    %v2123 = vunpack.c.0.s8 %v2122
    %v2124 = vlaneseq
    %v2125 = vshrl.u32 %v2124, 7
    %v2126 = vsub.s32 %v2123, %v2125
    %v2127 = vrot.slane %v2120, %v2126
    %v2128 = vcombine.low %v2103, %v2111
    %v2129 = vcombine.high %v2103, %v2111
    %v2131 = vunpack.c.l.s4 1934713408
    %v2132 = vunpack.c.0.s8 %v2131
    %v2133 = vlaneseq
    %v2134 = vshrl.u32 %v2133, 7
    %v2135 = vsub.s32 %v2132, %v2134
    %v2136 = vrot.slane %v2128, %v2135
    %v2138 = vunpack.c.l.s4 1934713408
    %v2139 = vunpack.c.0.s8 %v2138
    %v2140 = vlaneseq
    %v2141 = vshrl.u32 %v2140, 7
    %v2142 = vsub.s32 %v2139, %v2141
    %v2143 = vrot.slane %v2129, %v2142
    %v2144 = vcombine.low %v2119, %v2127
    %v2145 = vcombine.high %v2119, %v2127
    %v2147 = vunpack.c.l.s4 1934713408
    %v2148 = vunpack.c.0.s8 %v2147
    %v2149 = vlaneseq
    %v2150 = vshrl.u32 %v2149, 7
    %v2151 = vsub.s32 %v2148, %v2150
    %v2152 = vrot.slane %v2144, %v2151
    %v2154 = vunpack.c.l.s4 1934713408
    %v2155 = vunpack.c.0.s8 %v2154
    %v2156 = vlaneseq
    %v2157 = vshrl.u32 %v2156, 7
    %v2158 = vsub.s32 %v2155, %v2157
    %v2159 = vrot.slane %v2145, %v2158
    %v2160 = vcombine.low %v2136, %v2152
    %v2161 = vcombine.high %v2136, %v2152
    %v2162 = vcombine.low %v2143, %v2159
    %v2163 = vcombine.high %v2143, %v2159
    %v2164 = vcombine.low %v2068, %v2075
    %v2166 = vunpack.c.l.s4 1983009808
    %v2167 = vunpack.c.0.s8 %v2166
    %v2168 = vlaneseq
    %v2169 = vshrl.u32 %v2168, 7
    %v2170 = vsub.s32 %v2167, %v2169
    %v2171 = vrot.slane %v2164, %v2170
    %v2172 = vcombine.low %v2092, %v2093
    %v2174 = vunpack.c.l.s4 1983009808
    %v2175 = vunpack.c.0.s8 %v2174
    %v2176 = vlaneseq
    %v2177 = vshrl.u32 %v2176, 7
    %v2178 = vsub.s32 %v2175, %v2177
    %v2179 = vrot.slane %v2172, %v2178
    %v2180 = vcombine.low %v2084, %v2091
    %v2182 = vunpack.c.l.s4 1983009808
    %v2183 = vunpack.c.0.s8 %v2182
    %v2184 = vlaneseq
    %v2185 = vshrl.u32 %v2184, 7
    %v2186 = vsub.s32 %v2183, %v2185
    %v2187 = vrot.slane %v2180, %v2186
    %v2188 = vcombine.low %v2094, %v2095
    %v2190 = vunpack.c.l.s4 1983009808
    %v2191 = vunpack.c.0.s8 %v2190
    %v2192 = vlaneseq
    %v2193 = vshrl.u32 %v2192, 7
    %v2194 = vsub.s32 %v2191, %v2193
    %v2195 = vrot.slane %v2188, %v2194
    %v2196 = vcombine.low %v2171, %v2179
    %v2197 = vcombine.high %v2171, %v2179
    %v2199 = vunpack.c.l.s4 1934713408
    %v2200 = vunpack.c.0.s8 %v2199
    %v2201 = vlaneseq
    %v2202 = vshrl.u32 %v2201, 7
    %v2203 = vsub.s32 %v2200, %v2202
    %v2204 = vrot.slane %v2196, %v2203
    %v2206 = vunpack.c.l.s4 1934713408
    %v2207 = vunpack.c.0.s8 %v2206
    %v2208 = vlaneseq
    %v2209 = vshrl.u32 %v2208, 7
    %v2210 = vsub.s32 %v2207, %v2209
    %v2211 = vrot.slane %v2197, %v2210
    %v2212 = vcombine.low %v2187, %v2195
    %v2213 = vcombine.high %v2187, %v2195
    %v2215 = vunpack.c.l.s4 1934713408
    %v2216 = vunpack.c.0.s8 %v2215
    %v2217 = vlaneseq
    %v2218 = vshrl.u32 %v2217, 7
    %v2219 = vsub.s32 %v2216, %v2218
    %v2220 = vrot.slane %v2212, %v2219
    %v2222 = vunpack.c.l.s4 1934713408
    %v2223 = vunpack.c.0.s8 %v2222
    %v2224 = vlaneseq
    %v2225 = vshrl.u32 %v2224, 7
    %v2226 = vsub.s32 %v2223, %v2225
    %v2227 = vrot.slane %v2213, %v2226
    %v2228 = vcombine.low %v2204, %v2220
    %v2229 = vcombine.high %v2204, %v2220
    %v2230 = vcombine.low %v2211, %v2227
    %v2231 = vcombine.high %v2211, %v2227
    %v2232 = vpack.c.bf16 %v2160, %v2160
    %v2233 = vpack.c.bf16 %v2161, %v2161
    %v2234 = vpack.c.bf16 %v2162, %v2162
    %v2235 = vpack.c.bf16 %v2163, %v2163
    %v2236 = vpack.c.bf16 %v2228, %v2228
    %v2237 = vpack.c.bf16 %v2229, %v2229
    %v2238 = vpack.c.bf16 %v2230, %v2230
    %v2239 = vpack.c.bf16 %v2231, %v2231
    %v2241 = vsel %vm787, %v1632, 0
    %v2244 = vsel %vm787, %v1932, 0
    %2246 = vmatprep.subr.bf16.mxu0 0
    %2247 = vmatpush1.bf16.xpose.msra.mxu0 %v2244
    %2248 = vmatprep.subr.bf16.mxu0 0
    %2249 = vmatpush1.bf16.xpose.msra.mxu0 0
    %2250 = vmatprep.subr.bf16.mxu0 0
    %2251 = vmatpush1.bf16.xpose.msra.mxu0 0
    %2252 = vmatprep.subr.bf16.mxu0 0
    %2253 = vmatpush1.bf16.xpose.msra.mxu0 0
    %2254 = vmatprep.subr.bf16.mxu0 0
    %2255 = vmatpush1.bf16.xpose.msra.mxu0 0
    %2256 = vmatprep.subr.bf16.mxu0 0
    %2257 = vmatpush1.bf16.xpose.msra.mxu0 0
    %2258 = vmatprep.subr.bf16.mxu0 0
    %2259 = vmatpush1.bf16.xpose.msra.mxu0 0
    %2260 = vmatprep.subr.bf16.mxu0 0
    %2261 = vmatpush1.bf16.xpose.msra.mxu0 0
    %2262 = vmatprep.subr.bf16.mxu0 0
    %2263 = vmatpush1.bf16.xpose.msra.mxu0 0
    %2264 = vmatprep.subr.bf16.mxu0 0
    %2265 = vmatpush1.bf16.xpose.msra.mxu0 0
    %2266 = vmatprep.subr.bf16.mxu0 0
    %2267 = vmatpush1.bf16.xpose.msra.mxu0 0
    %2268 = vmatprep.subr.bf16.mxu0 0
    %2269 = vmatpush1.bf16.xpose.msra.mxu0 0
    %2270 = vmatprep.subr.bf16.mxu0 0
    %2271 = vmatpush1.bf16.xpose.msra.mxu0 0
    %2272 = vmatprep.subr.bf16.mxu0 0
    %2273 = vmatpush1.bf16.xpose.msra.mxu0 0
    %2274 = vmatprep.subr.bf16.mxu0 0
    %2275 = vmatpush1.bf16.xpose.msra.mxu0 0
    %2276 = vmatprep.subr.bf16.mxu0 0
    %2277 = vmatpush1.bf16.xpose.msra.mxu0 0
    %2278 = vmatprep.mubr.bf16.mxu0 0
    %2279 = vmatmul.mubr.bf16.gmra.mrb[0].mxu0 %v2241
    %v2280 = vpop.f32.mrb[0].mxu0
    %v2281 = vadd.f32 0.0, %v2280
    %v2282 = vpop.f32.mrb[0].mxu0
    %v2283 = vpop.f32.mrb[0].mxu0
    %v2284 = vpop.f32.mrb[0].mxu0
    %2285 = vdwg.mxu0
    %v2287 = vsel %vm787, %v1633, 0
    %v2290 = vsel %vm787, %v1933, 0
    %2292 = vmatprep.subr.bf16.mxu0 0
    %2293 = vmatpush1.bf16.xpose.msra.mxu0 %v2290
    %2294 = vmatprep.subr.bf16.mxu0 0
    %2295 = vmatpush1.bf16.xpose.msra.mxu0 0
    %2296 = vmatprep.subr.bf16.mxu0 0
    %2297 = vmatpush1.bf16.xpose.msra.mxu0 0
    %2298 = vmatprep.subr.bf16.mxu0 0
    %2299 = vmatpush1.bf16.xpose.msra.mxu0 0
    %2300 = vmatprep.subr.bf16.mxu0 0
    %2301 = vmatpush1.bf16.xpose.msra.mxu0 0
    %2302 = vmatprep.subr.bf16.mxu0 0
    %2303 = vmatpush1.bf16.xpose.msra.mxu0 0
    %2304 = vmatprep.subr.bf16.mxu0 0
    %2305 = vmatpush1.bf16.xpose.msra.mxu0 0
    %2306 = vmatprep.subr.bf16.mxu0 0
    %2307 = vmatpush1.bf16.xpose.msra.mxu0 0
    %2308 = vmatprep.subr.bf16.mxu0 0
    %2309 = vmatpush1.bf16.xpose.msra.mxu0 0
    %2310 = vmatprep.subr.bf16.mxu0 0
    %2311 = vmatpush1.bf16.xpose.msra.mxu0 0
    %2312 = vmatprep.subr.bf16.mxu0 0
    %2313 = vmatpush1.bf16.xpose.msra.mxu0 0
    %2314 = vmatprep.subr.bf16.mxu0 0
    %2315 = vmatpush1.bf16.xpose.msra.mxu0 0
    %2316 = vmatprep.subr.bf16.mxu0 0
    %2317 = vmatpush1.bf16.xpose.msra.mxu0 0
    %2318 = vmatprep.subr.bf16.mxu0 0
    %2319 = vmatpush1.bf16.xpose.msra.mxu0 0
    %2320 = vmatprep.subr.bf16.mxu0 0
    %2321 = vmatpush1.bf16.xpose.msra.mxu0 0
    %2322 = vmatprep.subr.bf16.mxu0 0
    %2323 = vmatpush1.bf16.xpose.msra.mxu0 0
    %2324 = vmatprep.mubr.bf16.mxu0 0
    %2325 = vmatmul.mubr.bf16.gmra.mrb[0].mxu0 %v2287
    %v2326 = vpop.f32.mrb[0].mxu0
    %v2327 = vadd.f32 0.0, %v2326
    %v2328 = vpop.f32.mrb[0].mxu0
    %v2329 = vpop.f32.mrb[0].mxu0
    %v2330 = vpop.f32.mrb[0].mxu0
    %2331 = vdwg.mxu0
    %v2333 = vsel %vm787, %v1634, 0
    %v2336 = vsel %vm787, %v1934, 0
    %2338 = vmatprep.subr.bf16.mxu0 0
    %2339 = vmatpush1.bf16.xpose.msra.mxu0 %v2336
    %2340 = vmatprep.subr.bf16.mxu0 0
    %2341 = vmatpush1.bf16.xpose.msra.mxu0 0
    %2342 = vmatprep.subr.bf16.mxu0 0
    %2343 = vmatpush1.bf16.xpose.msra.mxu0 0
    %2344 = vmatprep.subr.bf16.mxu0 0
    %2345 = vmatpush1.bf16.xpose.msra.mxu0 0
    %2346 = vmatprep.subr.bf16.mxu0 0
    %2347 = vmatpush1.bf16.xpose.msra.mxu0 0
    %2348 = vmatprep.subr.bf16.mxu0 0
    %2349 = vmatpush1.bf16.xpose.msra.mxu0 0
    %2350 = vmatprep.subr.bf16.mxu0 0
    %2351 = vmatpush1.bf16.xpose.msra.mxu0 0
    %2352 = vmatprep.subr.bf16.mxu0 0
    %2353 = vmatpush1.bf16.xpose.msra.mxu0 0
    %2354 = vmatprep.subr.bf16.mxu0 0
    %2355 = vmatpush1.bf16.xpose.msra.mxu0 0
    %2356 = vmatprep.subr.bf16.mxu0 0
    %2357 = vmatpush1.bf16.xpose.msra.mxu0 0
    %2358 = vmatprep.subr.bf16.mxu0 0
    %2359 = vmatpush1.bf16.xpose.msra.mxu0 0
    %2360 = vmatprep.subr.bf16.mxu0 0
    %2361 = vmatpush1.bf16.xpose.msra.mxu0 0
    %2362 = vmatprep.subr.bf16.mxu0 0
    %2363 = vmatpush1.bf16.xpose.msra.mxu0 0
    %2364 = vmatprep.subr.bf16.mxu0 0
    %2365 = vmatpush1.bf16.xpose.msra.mxu0 0
    %2366 = vmatprep.subr.bf16.mxu0 0
    %2367 = vmatpush1.bf16.xpose.msra.mxu0 0
    %2368 = vmatprep.subr.bf16.mxu0 0
    %2369 = vmatpush1.bf16.xpose.msra.mxu0 0
    %2370 = vmatprep.mubr.bf16.mxu0 0
    %2371 = vmatmul.mubr.bf16.gmra.mrb[0].mxu0 %v2333
    %v2372 = vpop.f32.mrb[0].mxu0
    %v2373 = vadd.f32 0.0, %v2372
    %v2374 = vpop.f32.mrb[0].mxu0
    %v2375 = vpop.f32.mrb[0].mxu0
    %v2376 = vpop.f32.mrb[0].mxu0
    %2377 = vdwg.mxu0
    %v2379 = vsel %vm787, %v1635, 0
    %v2382 = vsel %vm787, %v1935, 0
    %2384 = vmatprep.subr.bf16.mxu0 0
    %2385 = vmatpush1.bf16.xpose.msra.mxu0 %v2382
    %2386 = vmatprep.subr.bf16.mxu0 0
    %2387 = vmatpush1.bf16.xpose.msra.mxu0 0
    %2388 = vmatprep.subr.bf16.mxu0 0
    %2389 = vmatpush1.bf16.xpose.msra.mxu0 0
    %2390 = vmatprep.subr.bf16.mxu0 0
    %2391 = vmatpush1.bf16.xpose.msra.mxu0 0
    %2392 = vmatprep.subr.bf16.mxu0 0
    %2393 = vmatpush1.bf16.xpose.msra.mxu0 0
    %2394 = vmatprep.subr.bf16.mxu0 0
    %2395 = vmatpush1.bf16.xpose.msra.mxu0 0
    %2396 = vmatprep.subr.bf16.mxu0 0
    %2397 = vmatpush1.bf16.xpose.msra.mxu0 0
    %2398 = vmatprep.subr.bf16.mxu0 0
    %2399 = vmatpush1.bf16.xpose.msra.mxu0 0
    %2400 = vmatprep.subr.bf16.mxu0 0
    %2401 = vmatpush1.bf16.xpose.msra.mxu0 0
    %2402 = vmatprep.subr.bf16.mxu0 0
    %2403 = vmatpush1.bf16.xpose.msra.mxu0 0
    %2404 = vmatprep.subr.bf16.mxu0 0
    %2405 = vmatpush1.bf16.xpose.msra.mxu0 0
    %2406 = vmatprep.subr.bf16.mxu0 0
    %2407 = vmatpush1.bf16.xpose.msra.mxu0 0
    %2408 = vmatprep.subr.bf16.mxu0 0
    %2409 = vmatpush1.bf16.xpose.msra.mxu0 0
    %2410 = vmatprep.subr.bf16.mxu0 0
    %2411 = vmatpush1.bf16.xpose.msra.mxu0 0
    %2412 = vmatprep.subr.bf16.mxu0 0
    %2413 = vmatpush1.bf16.xpose.msra.mxu0 0
    %2414 = vmatprep.subr.bf16.mxu0 0
    %2415 = vmatpush1.bf16.xpose.msra.mxu0 0
    %2416 = vmatprep.mubr.bf16.mxu0 0
    %2417 = vmatmul.mubr.bf16.gmra.mrb[0].mxu0 %v2379
    %v2418 = vpop.f32.mrb[0].mxu0
    %v2419 = vadd.f32 0.0, %v2418
    %v2420 = vpop.f32.mrb[0].mxu0
    %v2421 = vpop.f32.mrb[0].mxu0
    %v2422 = vpop.f32.mrb[0].mxu0
    %2423 = vdwg.mxu0
    %v2424 = vmul.f32 %v2281, 0.17677669
    %v2425 = vmul.f32 %v2327, 0.17677669
    %v2426 = vmul.f32 %v2373, 0.17677669
    %v2427 = vmul.f32 %v2419, 0.17677669
    %v2428 = vadd.f32 %v2424, %v989
    %v2429 = vadd.f32 %v2425, %v990
    %v2430 = vadd.f32 %v2426, %v991
    %v2431 = vadd.f32 %v2427, %v992
    %vm2432 = vcmask 64512
    %v2433 = vsel %vm2432, %v2428, -inf
    %2434 = vmax.xlane.f32.xlu0 %v2433
    %v2435 = vpop.xlane.xlu0 %2434
    %v2436 = vsel %vm2432, %v2429, -inf
    %2437 = vmax.xlane.f32.xlu0 %v2436
    %v2438 = vpop.xlane.xlu0 %2437
    %v2439 = vsel %vm2432, %v2430, -inf
    %2440 = vmax.xlane.f32.xlu0 %v2439
    %v2441 = vpop.xlane.xlu0 %2440
    %v2442 = vsel %vm2432, %v2431, -inf
    %2443 = vmax.xlane.f32.xlu0 %v2442
    %v2444 = vpop.xlane.xlu0 %2443
    %v2445 = vsub.f32 %v2428, %v2435
    %v2446 = vsub.f32 %v2429, %v2438
    %v2447 = vsub.f32 %v2430, %v2441
    %v2448 = vsub.f32 %v2431, %v2444
    %v2449 = vmul.f32 %v2445, 1.442695
    %v2450 = vpow.pop %v2449
    %v2451 = vmul.f32 %v2446, 1.442695
    %v2452 = vpow.pop %v2451
    %v2453 = vmul.f32 %v2447, 1.442695
    %v2454 = vpow.pop %v2453
    %v2455 = vmul.f32 %v2448, 1.442695
    %v2456 = vpow.pop %v2455
    %v2457 = vsel %vm2432, %v2450, 0.0
    %2458 = vadd.xlane.f32.xlu0 %v2457
    %v2459 = vpop.xlane.xlu0 %2458
    %v2460 = vsel %vm2432, %v2452, 0.0
    %2461 = vadd.xlane.f32.xlu0 %v2460
    %v2462 = vpop.xlane.xlu0 %2461
    %v2463 = vsel %vm2432, %v2454, 0.0
    %2464 = vadd.xlane.f32.xlu0 %v2463
    %v2465 = vpop.xlane.xlu0 %2464
    %v2466 = vsel %vm2432, %v2456, 0.0
    %2467 = vadd.xlane.f32.xlu0 %v2466
    %v2468 = vpop.xlane.xlu0 %2467
    %v2469 = vrcp.pop %v2459
    %v2470 = vrcp.pop %v2462
    %v2471 = vrcp.pop %v2465
    %v2472 = vrcp.pop %v2468
    %v2473 = vmul.f32 %v2450, %v2469
    %v2474 = vmul.f32 %v2452, %v2470
    %v2475 = vmul.f32 %v2454, %v2471
    %v2476 = vmul.f32 %v2456, %v2472
    %v2477 = vpack.c.bf16 %v2473, %v2473
    %v2478 = vpack.c.bf16 %v2474, %v2474
    %v2479 = vpack.c.bf16 %v2475, %v2475
    %v2480 = vpack.c.bf16 %v2476, %v2476
    %v2482 = vsel %vm2432, %v2477, 0
    %vm2484 = vcmask 1043456
    %v2486 = vsel %vm2484, %v2232, 0
    %2488 = vmatprep.subr.bf16.mxu0 0
    %2489 = vmatpush1.bf16.msra.mxu0 %v2486
    %2490 = vmatprep.subr.bf16.mxu0 0
    %2491 = vmatpush1.bf16.msra.mxu0 0
    %2492 = vmatprep.subr.bf16.mxu0 0
    %2493 = vmatpush1.bf16.msra.mxu0 0
    %2494 = vmatprep.subr.bf16.mxu0 0
    %2495 = vmatpush1.bf16.msra.mxu0 0
    %2496 = vmatprep.subr.bf16.mxu0 0
    %2497 = vmatpush1.bf16.msra.mxu0 0
    %2498 = vmatprep.subr.bf16.mxu0 0
    %2499 = vmatpush1.bf16.msra.mxu0 0
    %2500 = vmatprep.subr.bf16.mxu0 0
    %2501 = vmatpush1.bf16.msra.mxu0 0
    %2502 = vmatprep.subr.bf16.mxu0 0
    %2503 = vmatpush1.bf16.msra.mxu0 0
    %2504 = vmatprep.subr.bf16.mxu0 0
    %2505 = vmatpush1.bf16.msra.mxu0 0
    %2506 = vmatprep.subr.bf16.mxu0 0
    %2507 = vmatpush1.bf16.msra.mxu0 0
    %2508 = vmatprep.subr.bf16.mxu0 0
    %2509 = vmatpush1.bf16.msra.mxu0 0
    %2510 = vmatprep.subr.bf16.mxu0 0
    %2511 = vmatpush1.bf16.msra.mxu0 0
    %2512 = vmatprep.subr.bf16.mxu0 0
    %2513 = vmatpush1.bf16.msra.mxu0 0
    %2514 = vmatprep.subr.bf16.mxu0 0
    %2515 = vmatpush1.bf16.msra.mxu0 0
    %2516 = vmatprep.subr.bf16.mxu0 0
    %2517 = vmatpush1.bf16.msra.mxu0 0
    %2518 = vmatprep.subr.bf16.mxu0 0
    %2519 = vmatpush1.bf16.msra.mxu0 0
    %2520 = vmatprep.mubr.bf16.mxu0 0
    %2521 = vmatmul.mubr.bf16.gmra.mrb[0].mxu0 %v2482
    %v2522 = vpop.f32.mrb[0].mxu0
    %v2523 = vadd.f32 0.0, %v2522
    %v2524 = vpop.f32.mrb[0].mxu0
    %v2525 = vpop.f32.mrb[0].mxu0
    %v2526 = vpop.f32.mrb[0].mxu0
    %2527 = vdwg.mxu0
    %v2529 = vsel %vm2432, %v2478, 0
    %v2532 = vsel %vm2484, %v2233, 0
    %2534 = vmatprep.subr.bf16.mxu0 0
    %2535 = vmatpush1.bf16.msra.mxu0 %v2532
    %2536 = vmatprep.subr.bf16.mxu0 0
    %2537 = vmatpush1.bf16.msra.mxu0 0
    %2538 = vmatprep.subr.bf16.mxu0 0
    %2539 = vmatpush1.bf16.msra.mxu0 0
    %2540 = vmatprep.subr.bf16.mxu0 0
    %2541 = vmatpush1.bf16.msra.mxu0 0
    %2542 = vmatprep.subr.bf16.mxu0 0
    %2543 = vmatpush1.bf16.msra.mxu0 0
    %2544 = vmatprep.subr.bf16.mxu0 0
    %2545 = vmatpush1.bf16.msra.mxu0 0
    %2546 = vmatprep.subr.bf16.mxu0 0
    %2547 = vmatpush1.bf16.msra.mxu0 0
    %2548 = vmatprep.subr.bf16.mxu0 0
    %2549 = vmatpush1.bf16.msra.mxu0 0
    %2550 = vmatprep.subr.bf16.mxu0 0
    %2551 = vmatpush1.bf16.msra.mxu0 0
    %2552 = vmatprep.subr.bf16.mxu0 0
    %2553 = vmatpush1.bf16.msra.mxu0 0
    %2554 = vmatprep.subr.bf16.mxu0 0
    %2555 = vmatpush1.bf16.msra.mxu0 0
    %2556 = vmatprep.subr.bf16.mxu0 0
    %2557 = vmatpush1.bf16.msra.mxu0 0
    %2558 = vmatprep.subr.bf16.mxu0 0
    %2559 = vmatpush1.bf16.msra.mxu0 0
    %2560 = vmatprep.subr.bf16.mxu0 0
    %2561 = vmatpush1.bf16.msra.mxu0 0
    %2562 = vmatprep.subr.bf16.mxu0 0
    %2563 = vmatpush1.bf16.msra.mxu0 0
    %2564 = vmatprep.subr.bf16.mxu0 0
    %2565 = vmatpush1.bf16.msra.mxu0 0
    %2566 = vmatprep.mubr.bf16.mxu0 0
    %2567 = vmatmul.mubr.bf16.gmra.mrb[0].mxu0 %v2529
    %v2568 = vpop.f32.mrb[0].mxu0
    %v2569 = vadd.f32 0.0, %v2568
    %v2570 = vpop.f32.mrb[0].mxu0
    %v2571 = vpop.f32.mrb[0].mxu0
    %v2572 = vpop.f32.mrb[0].mxu0
    %2573 = vdwg.mxu0
    %v2575 = vsel %vm2432, %v2479, 0
    %v2578 = vsel %vm2484, %v2234, 0
    %2580 = vmatprep.subr.bf16.mxu0 0
    %2581 = vmatpush1.bf16.msra.mxu0 %v2578
    %2582 = vmatprep.subr.bf16.mxu0 0
    %2583 = vmatpush1.bf16.msra.mxu0 0
    %2584 = vmatprep.subr.bf16.mxu0 0
    %2585 = vmatpush1.bf16.msra.mxu0 0
    %2586 = vmatprep.subr.bf16.mxu0 0
    %2587 = vmatpush1.bf16.msra.mxu0 0
    %2588 = vmatprep.subr.bf16.mxu0 0
    %2589 = vmatpush1.bf16.msra.mxu0 0
    %2590 = vmatprep.subr.bf16.mxu0 0
    %2591 = vmatpush1.bf16.msra.mxu0 0
    %2592 = vmatprep.subr.bf16.mxu0 0
    %2593 = vmatpush1.bf16.msra.mxu0 0
    %2594 = vmatprep.subr.bf16.mxu0 0
    %2595 = vmatpush1.bf16.msra.mxu0 0
    %2596 = vmatprep.subr.bf16.mxu0 0
    %2597 = vmatpush1.bf16.msra.mxu0 0
    %2598 = vmatprep.subr.bf16.mxu0 0
    %2599 = vmatpush1.bf16.msra.mxu0 0
    %2600 = vmatprep.subr.bf16.mxu0 0
    %2601 = vmatpush1.bf16.msra.mxu0 0
    %2602 = vmatprep.subr.bf16.mxu0 0
    %2603 = vmatpush1.bf16.msra.mxu0 0
    %2604 = vmatprep.subr.bf16.mxu0 0
    %2605 = vmatpush1.bf16.msra.mxu0 0
    %2606 = vmatprep.subr.bf16.mxu0 0
    %2607 = vmatpush1.bf16.msra.mxu0 0
    %2608 = vmatprep.subr.bf16.mxu0 0
    %2609 = vmatpush1.bf16.msra.mxu0 0
    %2610 = vmatprep.subr.bf16.mxu0 0
    %2611 = vmatpush1.bf16.msra.mxu0 0
    %2612 = vmatprep.mubr.bf16.mxu0 0
    %2613 = vmatmul.mubr.bf16.gmra.mrb[0].mxu0 %v2575
    %v2614 = vpop.f32.mrb[0].mxu0
    %v2615 = vadd.f32 0.0, %v2614
    %v2616 = vpop.f32.mrb[0].mxu0
    %v2617 = vpop.f32.mrb[0].mxu0
    %v2618 = vpop.f32.mrb[0].mxu0
    %2619 = vdwg.mxu0
    %v2621 = vsel %vm2432, %v2480, 0
    %v2624 = vsel %vm2484, %v2235, 0
    %2626 = vmatprep.subr.bf16.mxu0 0
    %2627 = vmatpush1.bf16.msra.mxu0 %v2624
    %2628 = vmatprep.subr.bf16.mxu0 0
    %2629 = vmatpush1.bf16.msra.mxu0 0
    %2630 = vmatprep.subr.bf16.mxu0 0
    %2631 = vmatpush1.bf16.msra.mxu0 0
    %2632 = vmatprep.subr.bf16.mxu0 0
    %2633 = vmatpush1.bf16.msra.mxu0 0
    %2634 = vmatprep.subr.bf16.mxu0 0
    %2635 = vmatpush1.bf16.msra.mxu0 0
    %2636 = vmatprep.subr.bf16.mxu0 0
    %2637 = vmatpush1.bf16.msra.mxu0 0
    %2638 = vmatprep.subr.bf16.mxu0 0
    %2639 = vmatpush1.bf16.msra.mxu0 0
    %2640 = vmatprep.subr.bf16.mxu0 0
    %2641 = vmatpush1.bf16.msra.mxu0 0
    %2642 = vmatprep.subr.bf16.mxu0 0
    %2643 = vmatpush1.bf16.msra.mxu0 0
    %2644 = vmatprep.subr.bf16.mxu0 0
    %2645 = vmatpush1.bf16.msra.mxu0 0
    %2646 = vmatprep.subr.bf16.mxu0 0
    %2647 = vmatpush1.bf16.msra.mxu0 0
    %2648 = vmatprep.subr.bf16.mxu0 0
    %2649 = vmatpush1.bf16.msra.mxu0 0
    %2650 = vmatprep.subr.bf16.mxu0 0
    %2651 = vmatpush1.bf16.msra.mxu0 0
    %2652 = vmatprep.subr.bf16.mxu0 0
    %2653 = vmatpush1.bf16.msra.mxu0 0
    %2654 = vmatprep.subr.bf16.mxu0 0
    %2655 = vmatpush1.bf16.msra.mxu0 0
    %2656 = vmatprep.subr.bf16.mxu0 0
    %2657 = vmatpush1.bf16.msra.mxu0 0
    %2658 = vmatprep.mubr.bf16.mxu0 0
    %2659 = vmatmul.mubr.bf16.gmra.mrb[0].mxu0 %v2621
    %v2660 = vpop.f32.mrb[0].mxu0
    %v2661 = vadd.f32 0.0, %v2660
    %v2662 = vpop.f32.mrb[0].mxu0
    %v2663 = vpop.f32.mrb[0].mxu0
    %v2664 = vpop.f32.mrb[0].mxu0
    %2665 = vdwg.mxu0
    %v2666 = vcombine.low %v2523, %v2615
    %v2667 = vcombine.high %v2523, %v2615
    %v2669 = vunpack.c.l.s4 1983009808
    %v2670 = vunpack.c.0.s8 %v2669
    %v2671 = vlaneseq
    %v2672 = vshrl.u32 %v2671, 7
    %v2673 = vsub.s32 %v2670, %v2672
    %v2674 = vrot.slane %v2666, %v2673
    %v2676 = vunpack.c.l.s4 1983009808
    %v2677 = vunpack.c.0.s8 %v2676
    %v2678 = vlaneseq
    %v2679 = vshrl.u32 %v2678, 7
    %v2680 = vsub.s32 %v2677, %v2679
    %v2681 = vrot.slane %v2667, %v2680
    %v2682 = vcombine.low %v2569, %v2661
    %v2683 = vcombine.high %v2569, %v2661
    %v2685 = vunpack.c.l.s4 1983009808
    %v2686 = vunpack.c.0.s8 %v2685
    %v2687 = vlaneseq
    %v2688 = vshrl.u32 %v2687, 7
    %v2689 = vsub.s32 %v2686, %v2688
    %v2690 = vrot.slane %v2682, %v2689
    %v2692 = vunpack.c.l.s4 1983009808
    %v2693 = vunpack.c.0.s8 %v2692
    %v2694 = vlaneseq
    %v2695 = vshrl.u32 %v2694, 7
    %v2696 = vsub.s32 %v2693, %v2695
    %v2697 = vrot.slane %v2683, %v2696
    %v2698 = vcombine.low %v2674, %v2690
    %v2699 = vcombine.high %v2674, %v2690
    %v2701 = vunpack.c.l.s4 1934713408
    %v2702 = vunpack.c.0.s8 %v2701
    %v2703 = vlaneseq
    %v2704 = vshrl.u32 %v2703, 7
    %v2705 = vsub.s32 %v2702, %v2704
    %v2706 = vrot.slane %v2698, %v2705
    %v2708 = vunpack.c.l.s4 1934713408
    %v2709 = vunpack.c.0.s8 %v2708
    %v2710 = vlaneseq
    %v2711 = vshrl.u32 %v2710, 7
    %v2712 = vsub.s32 %v2709, %v2711
    %v2713 = vrot.slane %v2699, %v2712
    %v2714 = vcombine.low %v2681, %v2697
    %v2715 = vcombine.high %v2681, %v2697
    %v2717 = vunpack.c.l.s4 1934713408
    %v2718 = vunpack.c.0.s8 %v2717
    %v2719 = vlaneseq
    %v2720 = vshrl.u32 %v2719, 7
    %v2721 = vsub.s32 %v2718, %v2720
    %v2722 = vrot.slane %v2714, %v2721
    %v2724 = vunpack.c.l.s4 1934713408
    %v2725 = vunpack.c.0.s8 %v2724
    %v2726 = vlaneseq
    %v2727 = vshrl.u32 %v2726, 7
    %v2728 = vsub.s32 %v2725, %v2727
    %v2729 = vrot.slane %v2715, %v2728
    %v2730 = vcombine.high %v2706, 0.0
    %v2731 = vcombine.high %v2713, 0.0
    %v2732 = vcombine.high %v2722, 0.0
    %v2733 = vcombine.high %v2729, 0.0
    %v2734 = vcombine.low %v2706, %v2713
    %v2736 = vunpack.c.l.s4 1983009808
    %v2737 = vunpack.c.0.s8 %v2736
    %v2738 = vlaneseq
    %v2739 = vshrl.u32 %v2738, 7
    %v2740 = vsub.s32 %v2737, %v2739
    %v2741 = vrot.slane %v2734, %v2740
    %v2742 = vcombine.low %v2730, %v2731
    %v2744 = vunpack.c.l.s4 1983009808
    %v2745 = vunpack.c.0.s8 %v2744
    %v2746 = vlaneseq
    %v2747 = vshrl.u32 %v2746, 7
    %v2748 = vsub.s32 %v2745, %v2747
    %v2749 = vrot.slane %v2742, %v2748
    %v2750 = vcombine.low %v2722, %v2729
    %v2752 = vunpack.c.l.s4 1983009808
    %v2753 = vunpack.c.0.s8 %v2752
    %v2754 = vlaneseq
    %v2755 = vshrl.u32 %v2754, 7
    %v2756 = vsub.s32 %v2753, %v2755
    %v2757 = vrot.slane %v2750, %v2756
    %v2758 = vcombine.low %v2732, %v2733
    %v2760 = vunpack.c.l.s4 1983009808
    %v2761 = vunpack.c.0.s8 %v2760
    %v2762 = vlaneseq
    %v2763 = vshrl.u32 %v2762, 7
    %v2764 = vsub.s32 %v2761, %v2763
    %v2765 = vrot.slane %v2758, %v2764
    %v2766 = vcombine.low %v2741, %v2749
    %v2767 = vcombine.high %v2741, %v2749
    %v2769 = vunpack.c.l.s4 1934713408
    %v2770 = vunpack.c.0.s8 %v2769
    %v2771 = vlaneseq
    %v2772 = vshrl.u32 %v2771, 7
    %v2773 = vsub.s32 %v2770, %v2772
    %v2774 = vrot.slane %v2766, %v2773
    %v2776 = vunpack.c.l.s4 1934713408
    %v2777 = vunpack.c.0.s8 %v2776
    %v2778 = vlaneseq
    %v2779 = vshrl.u32 %v2778, 7
    %v2780 = vsub.s32 %v2777, %v2779
    %v2781 = vrot.slane %v2767, %v2780
    %v2782 = vcombine.low %v2757, %v2765
    %v2783 = vcombine.high %v2757, %v2765
    %v2785 = vunpack.c.l.s4 1934713408
    %v2786 = vunpack.c.0.s8 %v2785
    %v2787 = vlaneseq
    %v2788 = vshrl.u32 %v2787, 7
    %v2789 = vsub.s32 %v2786, %v2788
    %v2790 = vrot.slane %v2782, %v2789
    %v2792 = vunpack.c.l.s4 1934713408
    %v2793 = vunpack.c.0.s8 %v2792
    %v2794 = vlaneseq
    %v2795 = vshrl.u32 %v2794, 7
    %v2796 = vsub.s32 %v2793, %v2795
    %v2797 = vrot.slane %v2783, %v2796
    %v2798 = vcombine.low %v2774, %v2790
    %v2799 = vcombine.high %v2774, %v2790
    %v2800 = vcombine.low %v2781, %v2797
    %v2801 = vcombine.high %v2781, %v2797
    %2803 = vrot.lane.b32.xlu0 %v2799, 32
    %v2804 = vpop.permute.xlu0 %2803
    %2807 = vrot.lane.b32.xlu0 %v2800, 64
    %v2808 = vpop.permute.xlu0 %2807
    %2811 = vrot.lane.b32.xlu0 %v2801, 96
    %v2812 = vpop.permute.xlu0 %2811
    %v2814 = vsel %vm787, %v2798, %v2804
    %vm2815 = vcmask 523264
    %v2816 = vsel %vm2815, %v2814, %v2808
    %vm2817 = vcmask 785408
    %v2818 = vsel %vm2817, %v2816, %v2812
    %v2820 = vsel %vm787, %v1636, 0
    %v2823 = vsel %vm787, %v1936, 0
    %2825 = vmatprep.subr.bf16.mxu0 0
    %2826 = vmatpush1.bf16.xpose.msra.mxu0 %v2823
    %2827 = vmatprep.subr.bf16.mxu0 0
    %2828 = vmatpush1.bf16.xpose.msra.mxu0 0
    %2829 = vmatprep.subr.bf16.mxu0 0
    %2830 = vmatpush1.bf16.xpose.msra.mxu0 0
    %2831 = vmatprep.subr.bf16.mxu0 0
    %2832 = vmatpush1.bf16.xpose.msra.mxu0 0
    %2833 = vmatprep.subr.bf16.mxu0 0
    %2834 = vmatpush1.bf16.xpose.msra.mxu0 0
    %2835 = vmatprep.subr.bf16.mxu0 0
    %2836 = vmatpush1.bf16.xpose.msra.mxu0 0
    %2837 = vmatprep.subr.bf16.mxu0 0
    %2838 = vmatpush1.bf16.xpose.msra.mxu0 0
    %2839 = vmatprep.subr.bf16.mxu0 0
    %2840 = vmatpush1.bf16.xpose.msra.mxu0 0
    %2841 = vmatprep.subr.bf16.mxu0 0
    %2842 = vmatpush1.bf16.xpose.msra.mxu0 0
    %2843 = vmatprep.subr.bf16.mxu0 0
    %2844 = vmatpush1.bf16.xpose.msra.mxu0 0
    %2845 = vmatprep.subr.bf16.mxu0 0
    %2846 = vmatpush1.bf16.xpose.msra.mxu0 0
    %2847 = vmatprep.subr.bf16.mxu0 0
    %2848 = vmatpush1.bf16.xpose.msra.mxu0 0
    %2849 = vmatprep.subr.bf16.mxu0 0
    %2850 = vmatpush1.bf16.xpose.msra.mxu0 0
    %2851 = vmatprep.subr.bf16.mxu0 0
    %2852 = vmatpush1.bf16.xpose.msra.mxu0 0
    %2853 = vmatprep.subr.bf16.mxu0 0
    %2854 = vmatpush1.bf16.xpose.msra.mxu0 0
    %2855 = vmatprep.subr.bf16.mxu0 0
    %2856 = vmatpush1.bf16.xpose.msra.mxu0 0
    %2857 = vmatprep.mubr.bf16.mxu0 0
    %2858 = vmatmul.mubr.bf16.gmra.mrb[0].mxu0 %v2820
    %v2859 = vpop.f32.mrb[0].mxu0
    %v2860 = vadd.f32 0.0, %v2859
    %v2861 = vpop.f32.mrb[0].mxu0
    %v2862 = vpop.f32.mrb[0].mxu0
    %v2863 = vpop.f32.mrb[0].mxu0
    %2864 = vdwg.mxu0
    %v2866 = vsel %vm787, %v1637, 0
    %v2869 = vsel %vm787, %v1937, 0
    %2871 = vmatprep.subr.bf16.mxu0 0
    %2872 = vmatpush1.bf16.xpose.msra.mxu0 %v2869
    %2873 = vmatprep.subr.bf16.mxu0 0
    %2874 = vmatpush1.bf16.xpose.msra.mxu0 0
    %2875 = vmatprep.subr.bf16.mxu0 0
    %2876 = vmatpush1.bf16.xpose.msra.mxu0 0
    %2877 = vmatprep.subr.bf16.mxu0 0
    %2878 = vmatpush1.bf16.xpose.msra.mxu0 0
    %2879 = vmatprep.subr.bf16.mxu0 0
    %2880 = vmatpush1.bf16.xpose.msra.mxu0 0
    %2881 = vmatprep.subr.bf16.mxu0 0
    %2882 = vmatpush1.bf16.xpose.msra.mxu0 0
    %2883 = vmatprep.subr.bf16.mxu0 0
    %2884 = vmatpush1.bf16.xpose.msra.mxu0 0
    %2885 = vmatprep.subr.bf16.mxu0 0
    %2886 = vmatpush1.bf16.xpose.msra.mxu0 0
    %2887 = vmatprep.subr.bf16.mxu0 0
    %2888 = vmatpush1.bf16.xpose.msra.mxu0 0
    %2889 = vmatprep.subr.bf16.mxu0 0
    %2890 = vmatpush1.bf16.xpose.msra.mxu0 0
    %2891 = vmatprep.subr.bf16.mxu0 0
    %2892 = vmatpush1.bf16.xpose.msra.mxu0 0
    %2893 = vmatprep.subr.bf16.mxu0 0
    %2894 = vmatpush1.bf16.xpose.msra.mxu0 0
    %2895 = vmatprep.subr.bf16.mxu0 0
    %2896 = vmatpush1.bf16.xpose.msra.mxu0 0
    %2897 = vmatprep.subr.bf16.mxu0 0
    %2898 = vmatpush1.bf16.xpose.msra.mxu0 0
    %2899 = vmatprep.subr.bf16.mxu0 0
    %2900 = vmatpush1.bf16.xpose.msra.mxu0 0
    %2901 = vmatprep.subr.bf16.mxu0 0
    %2902 = vmatpush1.bf16.xpose.msra.mxu0 0
    %2903 = vmatprep.mubr.bf16.mxu0 0
    %2904 = vmatmul.mubr.bf16.gmra.mrb[0].mxu0 %v2866
    %v2905 = vpop.f32.mrb[0].mxu0
    %v2906 = vadd.f32 0.0, %v2905
    %v2907 = vpop.f32.mrb[0].mxu0
    %v2908 = vpop.f32.mrb[0].mxu0
    %v2909 = vpop.f32.mrb[0].mxu0
    %2910 = vdwg.mxu0
    %v2912 = vsel %vm787, %v1638, 0
    %v2915 = vsel %vm787, %v1938, 0
    %2917 = vmatprep.subr.bf16.mxu0 0
    %2918 = vmatpush1.bf16.xpose.msra.mxu0 %v2915
    %2919 = vmatprep.subr.bf16.mxu0 0
    %2920 = vmatpush1.bf16.xpose.msra.mxu0 0
    %2921 = vmatprep.subr.bf16.mxu0 0
    %2922 = vmatpush1.bf16.xpose.msra.mxu0 0
    %2923 = vmatprep.subr.bf16.mxu0 0
    %2924 = vmatpush1.bf16.xpose.msra.mxu0 0
    %2925 = vmatprep.subr.bf16.mxu0 0
    %2926 = vmatpush1.bf16.xpose.msra.mxu0 0
    %2927 = vmatprep.subr.bf16.mxu0 0
    %2928 = vmatpush1.bf16.xpose.msra.mxu0 0
    %2929 = vmatprep.subr.bf16.mxu0 0
    %2930 = vmatpush1.bf16.xpose.msra.mxu0 0
    %2931 = vmatprep.subr.bf16.mxu0 0
    %2932 = vmatpush1.bf16.xpose.msra.mxu0 0
    %2933 = vmatprep.subr.bf16.mxu0 0
    %2934 = vmatpush1.bf16.xpose.msra.mxu0 0
    %2935 = vmatprep.subr.bf16.mxu0 0
    %2936 = vmatpush1.bf16.xpose.msra.mxu0 0
    %2937 = vmatprep.subr.bf16.mxu0 0
    %2938 = vmatpush1.bf16.xpose.msra.mxu0 0
    %2939 = vmatprep.subr.bf16.mxu0 0
    %2940 = vmatpush1.bf16.xpose.msra.mxu0 0
    %2941 = vmatprep.subr.bf16.mxu0 0
    %2942 = vmatpush1.bf16.xpose.msra.mxu0 0
    %2943 = vmatprep.subr.bf16.mxu0 0
    %2944 = vmatpush1.bf16.xpose.msra.mxu0 0
    %2945 = vmatprep.subr.bf16.mxu0 0
    %2946 = vmatpush1.bf16.xpose.msra.mxu0 0
    %2947 = vmatprep.subr.bf16.mxu0 0
    %2948 = vmatpush1.bf16.xpose.msra.mxu0 0
    %2949 = vmatprep.mubr.bf16.mxu0 0
    %2950 = vmatmul.mubr.bf16.gmra.mrb[0].mxu0 %v2912
    %v2951 = vpop.f32.mrb[0].mxu0
    %v2952 = vadd.f32 0.0, %v2951
    %v2953 = vpop.f32.mrb[0].mxu0
    %v2954 = vpop.f32.mrb[0].mxu0
    %v2955 = vpop.f32.mrb[0].mxu0
    %2956 = vdwg.mxu0
    %v2958 = vsel %vm787, %v1639, 0
    %v2961 = vsel %vm787, %v1939, 0
    %2963 = vmatprep.subr.bf16.mxu0 0
    %2964 = vmatpush1.bf16.xpose.msra.mxu0 %v2961
    %2965 = vmatprep.subr.bf16.mxu0 0
    %2966 = vmatpush1.bf16.xpose.msra.mxu0 0
    %2967 = vmatprep.subr.bf16.mxu0 0
    %2968 = vmatpush1.bf16.xpose.msra.mxu0 0
    %2969 = vmatprep.subr.bf16.mxu0 0
    %2970 = vmatpush1.bf16.xpose.msra.mxu0 0
    %2971 = vmatprep.subr.bf16.mxu0 0
    %2972 = vmatpush1.bf16.xpose.msra.mxu0 0
    %2973 = vmatprep.subr.bf16.mxu0 0
    %2974 = vmatpush1.bf16.xpose.msra.mxu0 0
    %2975 = vmatprep.subr.bf16.mxu0 0
    %2976 = vmatpush1.bf16.xpose.msra.mxu0 0
    %2977 = vmatprep.subr.bf16.mxu0 0
    %2978 = vmatpush1.bf16.xpose.msra.mxu0 0
    %2979 = vmatprep.subr.bf16.mxu0 0
    %2980 = vmatpush1.bf16.xpose.msra.mxu0 0
    %2981 = vmatprep.subr.bf16.mxu0 0
    %2982 = vmatpush1.bf16.xpose.msra.mxu0 0
    %2983 = vmatprep.subr.bf16.mxu0 0
    %2984 = vmatpush1.bf16.xpose.msra.mxu0 0
    %2985 = vmatprep.subr.bf16.mxu0 0
    %2986 = vmatpush1.bf16.xpose.msra.mxu0 0
    %2987 = vmatprep.subr.bf16.mxu0 0
    %2988 = vmatpush1.bf16.xpose.msra.mxu0 0
    %2989 = vmatprep.subr.bf16.mxu0 0
    %2990 = vmatpush1.bf16.xpose.msra.mxu0 0
    %2991 = vmatprep.subr.bf16.mxu0 0
    %2992 = vmatpush1.bf16.xpose.msra.mxu0 0
    %2993 = vmatprep.subr.bf16.mxu0 0
    %2994 = vmatpush1.bf16.xpose.msra.mxu0 0
    %2995 = vmatprep.mubr.bf16.mxu0 0
    %2996 = vmatmul.mubr.bf16.gmra.mrb[0].mxu0 %v2958
    %v2997 = vpop.f32.mrb[0].mxu0
    %v2998 = vadd.f32 0.0, %v2997
    %v2999 = vpop.f32.mrb[0].mxu0
    %v3000 = vpop.f32.mrb[0].mxu0
    %v3001 = vpop.f32.mrb[0].mxu0
    %3002 = vdwg.mxu0
    %v3003 = vmul.f32 %v2860, 0.17677669
    %v3004 = vmul.f32 %v2906, 0.17677669
    %v3005 = vmul.f32 %v2952, 0.17677669
    %v3006 = vmul.f32 %v2998, 0.17677669
    %v3007 = vadd.f32 %v3003, %v997
    %v3008 = vadd.f32 %v3004, %v998
    %v3009 = vadd.f32 %v3005, %v999
    %v3010 = vadd.f32 %v3006, %v1000
    %v3011 = vsel %vm2432, %v3007, -inf
    %3012 = vmax.xlane.f32.xlu0 %v3011
    %v3013 = vpop.xlane.xlu0 %3012
    %v3014 = vsel %vm2432, %v3008, -inf
    %3015 = vmax.xlane.f32.xlu0 %v3014
    %v3016 = vpop.xlane.xlu0 %3015
    %v3017 = vsel %vm2432, %v3009, -inf
    %3018 = vmax.xlane.f32.xlu0 %v3017
    %v3019 = vpop.xlane.xlu0 %3018
    %v3020 = vsel %vm2432, %v3010, -inf
    %3021 = vmax.xlane.f32.xlu0 %v3020
    %v3022 = vpop.xlane.xlu0 %3021
    %v3023 = vsub.f32 %v3007, %v3013
    %v3024 = vsub.f32 %v3008, %v3016
    %v3025 = vsub.f32 %v3009, %v3019
    %v3026 = vsub.f32 %v3010, %v3022
    %v3027 = vmul.f32 %v3023, 1.442695
    %v3028 = vpow.pop %v3027
    %v3029 = vmul.f32 %v3024, 1.442695
    %v3030 = vpow.pop %v3029
    %v3031 = vmul.f32 %v3025, 1.442695
    %v3032 = vpow.pop %v3031
    %v3033 = vmul.f32 %v3026, 1.442695
    %v3034 = vpow.pop %v3033
    %v3035 = vsel %vm2432, %v3028, 0.0
    %3036 = vadd.xlane.f32.xlu0 %v3035
    %v3037 = vpop.xlane.xlu0 %3036
    %v3038 = vsel %vm2432, %v3030, 0.0
    %3039 = vadd.xlane.f32.xlu0 %v3038
    %v3040 = vpop.xlane.xlu0 %3039
    %v3041 = vsel %vm2432, %v3032, 0.0
    %3042 = vadd.xlane.f32.xlu0 %v3041
    %v3043 = vpop.xlane.xlu0 %3042
    %v3044 = vsel %vm2432, %v3034, 0.0
    %3045 = vadd.xlane.f32.xlu0 %v3044
    %v3046 = vpop.xlane.xlu0 %3045
    %v3047 = vrcp.pop %v3037
    %v3048 = vrcp.pop %v3040
    %v3049 = vrcp.pop %v3043
    %v3050 = vrcp.pop %v3046
    %v3051 = vmul.f32 %v3028, %v3047
    %v3052 = vmul.f32 %v3030, %v3048
    %v3053 = vmul.f32 %v3032, %v3049
    %v3054 = vmul.f32 %v3034, %v3050
    %v3055 = vpack.c.bf16 %v3051, %v3051
    %v3056 = vpack.c.bf16 %v3052, %v3052
    %v3057 = vpack.c.bf16 %v3053, %v3053
    %v3058 = vpack.c.bf16 %v3054, %v3054
    %v3060 = vsel %vm2432, %v3055, 0
    %v3063 = vsel %vm2484, %v2236, 0
    %3065 = vmatprep.subr.bf16.mxu0 0
    %3066 = vmatpush1.bf16.msra.mxu0 %v3063
    %3067 = vmatprep.subr.bf16.mxu0 0
    %3068 = vmatpush1.bf16.msra.mxu0 0
    %3069 = vmatprep.subr.bf16.mxu0 0
    %3070 = vmatpush1.bf16.msra.mxu0 0
    %3071 = vmatprep.subr.bf16.mxu0 0
    %3072 = vmatpush1.bf16.msra.mxu0 0
    %3073 = vmatprep.subr.bf16.mxu0 0
    %3074 = vmatpush1.bf16.msra.mxu0 0
    %3075 = vmatprep.subr.bf16.mxu0 0
    %3076 = vmatpush1.bf16.msra.mxu0 0
    %3077 = vmatprep.subr.bf16.mxu0 0
    %3078 = vmatpush1.bf16.msra.mxu0 0
    %3079 = vmatprep.subr.bf16.mxu0 0
    %3080 = vmatpush1.bf16.msra.mxu0 0
    %3081 = vmatprep.subr.bf16.mxu0 0
    %3082 = vmatpush1.bf16.msra.mxu0 0
    %3083 = vmatprep.subr.bf16.mxu0 0
    %3084 = vmatpush1.bf16.msra.mxu0 0
    %3085 = vmatprep.subr.bf16.mxu0 0
    %3086 = vmatpush1.bf16.msra.mxu0 0
    %3087 = vmatprep.subr.bf16.mxu0 0
    %3088 = vmatpush1.bf16.msra.mxu0 0
    %3089 = vmatprep.subr.bf16.mxu0 0
    %3090 = vmatpush1.bf16.msra.mxu0 0
    %3091 = vmatprep.subr.bf16.mxu0 0
    %3092 = vmatpush1.bf16.msra.mxu0 0
    %3093 = vmatprep.subr.bf16.mxu0 0
    %3094 = vmatpush1.bf16.msra.mxu0 0
    %3095 = vmatprep.subr.bf16.mxu0 0
    %3096 = vmatpush1.bf16.msra.mxu0 0
    %3097 = vmatprep.mubr.bf16.mxu0 0
    %3098 = vmatmul.mubr.bf16.gmra.mrb[0].mxu0 %v3060
    %v3099 = vpop.f32.mrb[0].mxu0
    %v3100 = vadd.f32 0.0, %v3099
    %v3101 = vpop.f32.mrb[0].mxu0
    %v3102 = vpop.f32.mrb[0].mxu0
    %v3103 = vpop.f32.mrb[0].mxu0
    %3104 = vdwg.mxu0
    %v3106 = vsel %vm2432, %v3056, 0
    %v3109 = vsel %vm2484, %v2237, 0
    %3111 = vmatprep.subr.bf16.mxu0 0
    %3112 = vmatpush1.bf16.msra.mxu0 %v3109
    %3113 = vmatprep.subr.bf16.mxu0 0
    %3114 = vmatpush1.bf16.msra.mxu0 0
    %3115 = vmatprep.subr.bf16.mxu0 0
    %3116 = vmatpush1.bf16.msra.mxu0 0
    %3117 = vmatprep.subr.bf16.mxu0 0
    %3118 = vmatpush1.bf16.msra.mxu0 0
    %3119 = vmatprep.subr.bf16.mxu0 0
    %3120 = vmatpush1.bf16.msra.mxu0 0
    %3121 = vmatprep.subr.bf16.mxu0 0
    %3122 = vmatpush1.bf16.msra.mxu0 0
    %3123 = vmatprep.subr.bf16.mxu0 0
    %3124 = vmatpush1.bf16.msra.mxu0 0
    %3125 = vmatprep.subr.bf16.mxu0 0
    %3126 = vmatpush1.bf16.msra.mxu0 0
    %3127 = vmatprep.subr.bf16.mxu0 0
    %3128 = vmatpush1.bf16.msra.mxu0 0
    %3129 = vmatprep.subr.bf16.mxu0 0
    %3130 = vmatpush1.bf16.msra.mxu0 0
    %3131 = vmatprep.subr.bf16.mxu0 0
    %3132 = vmatpush1.bf16.msra.mxu0 0
    %3133 = vmatprep.subr.bf16.mxu0 0
    %3134 = vmatpush1.bf16.msra.mxu0 0
    %3135 = vmatprep.subr.bf16.mxu0 0
    %3136 = vmatpush1.bf16.msra.mxu0 0
    %3137 = vmatprep.subr.bf16.mxu0 0
    %3138 = vmatpush1.bf16.msra.mxu0 0
    %3139 = vmatprep.subr.bf16.mxu0 0
    %3140 = vmatpush1.bf16.msra.mxu0 0
    %3141 = vmatprep.subr.bf16.mxu0 0
    %3142 = vmatpush1.bf16.msra.mxu0 0
    %3143 = vmatprep.mubr.bf16.mxu0 0
    %3144 = vmatmul.mubr.bf16.gmra.mrb[0].mxu0 %v3106
    %v3145 = vpop.f32.mrb[0].mxu0
    %v3146 = vadd.f32 0.0, %v3145
    %v3147 = vpop.f32.mrb[0].mxu0
    %v3148 = vpop.f32.mrb[0].mxu0
    %v3149 = vpop.f32.mrb[0].mxu0
    %3150 = vdwg.mxu0
    %v3152 = vsel %vm2432, %v3057, 0
    %v3155 = vsel %vm2484, %v2238, 0
    %3157 = vmatprep.subr.bf16.mxu0 0
    %3158 = vmatpush1.bf16.msra.mxu0 %v3155
    %3159 = vmatprep.subr.bf16.mxu0 0
    %3160 = vmatpush1.bf16.msra.mxu0 0
    %3161 = vmatprep.subr.bf16.mxu0 0
    %3162 = vmatpush1.bf16.msra.mxu0 0
    %3163 = vmatprep.subr.bf16.mxu0 0
    %3164 = vmatpush1.bf16.msra.mxu0 0
    %3165 = vmatprep.subr.bf16.mxu0 0
    %3166 = vmatpush1.bf16.msra.mxu0 0
    %3167 = vmatprep.subr.bf16.mxu0 0
    %3168 = vmatpush1.bf16.msra.mxu0 0
    %3169 = vmatprep.subr.bf16.mxu0 0
    %3170 = vmatpush1.bf16.msra.mxu0 0
    %3171 = vmatprep.subr.bf16.mxu0 0
    %3172 = vmatpush1.bf16.msra.mxu0 0
    %3173 = vmatprep.subr.bf16.mxu0 0
    %3174 = vmatpush1.bf16.msra.mxu0 0
    %3175 = vmatprep.subr.bf16.mxu0 0
    %3176 = vmatpush1.bf16.msra.mxu0 0
    %3177 = vmatprep.subr.bf16.mxu0 0
    %3178 = vmatpush1.bf16.msra.mxu0 0
    %3179 = vmatprep.subr.bf16.mxu0 0
    %3180 = vmatpush1.bf16.msra.mxu0 0
    %3181 = vmatprep.subr.bf16.mxu0 0
    %3182 = vmatpush1.bf16.msra.mxu0 0
    %3183 = vmatprep.subr.bf16.mxu0 0
    %3184 = vmatpush1.bf16.msra.mxu0 0
    %3185 = vmatprep.subr.bf16.mxu0 0
    %3186 = vmatpush1.bf16.msra.mxu0 0
    %3187 = vmatprep.subr.bf16.mxu0 0
    %3188 = vmatpush1.bf16.msra.mxu0 0
    %3189 = vmatprep.mubr.bf16.mxu0 0
    %3190 = vmatmul.mubr.bf16.gmra.mrb[0].mxu0 %v3152
    %v3191 = vpop.f32.mrb[0].mxu0
    %v3192 = vadd.f32 0.0, %v3191
    %v3193 = vpop.f32.mrb[0].mxu0
    %v3194 = vpop.f32.mrb[0].mxu0
    %v3195 = vpop.f32.mrb[0].mxu0
    %3196 = vdwg.mxu0
    %v3198 = vsel %vm2432, %v3058, 0
    %v3201 = vsel %vm2484, %v2239, 0
    %3203 = vmatprep.subr.bf16.mxu0 0
    %3204 = vmatpush1.bf16.msra.mxu0 %v3201
    %3205 = vmatprep.subr.bf16.mxu0 0
    %3206 = vmatpush1.bf16.msra.mxu0 0
    %3207 = vmatprep.subr.bf16.mxu0 0
    %3208 = vmatpush1.bf16.msra.mxu0 0
    %3209 = vmatprep.subr.bf16.mxu0 0
    %3210 = vmatpush1.bf16.msra.mxu0 0
    %3211 = vmatprep.subr.bf16.mxu0 0
    %3212 = vmatpush1.bf16.msra.mxu0 0
    %3213 = vmatprep.subr.bf16.mxu0 0
    %3214 = vmatpush1.bf16.msra.mxu0 0
    %3215 = vmatprep.subr.bf16.mxu0 0
    %3216 = vmatpush1.bf16.msra.mxu0 0
    %3217 = vmatprep.subr.bf16.mxu0 0
    %3218 = vmatpush1.bf16.msra.mxu0 0
    %3219 = vmatprep.subr.bf16.mxu0 0
    %3220 = vmatpush1.bf16.msra.mxu0 0
    %3221 = vmatprep.subr.bf16.mxu0 0
    %3222 = vmatpush1.bf16.msra.mxu0 0
    %3223 = vmatprep.subr.bf16.mxu0 0
    %3224 = vmatpush1.bf16.msra.mxu0 0
    %3225 = vmatprep.subr.bf16.mxu0 0
    %3226 = vmatpush1.bf16.msra.mxu0 0
    %3227 = vmatprep.subr.bf16.mxu0 0
    %3228 = vmatpush1.bf16.msra.mxu0 0
    %3229 = vmatprep.subr.bf16.mxu0 0
    %3230 = vmatpush1.bf16.msra.mxu0 0
    %3231 = vmatprep.subr.bf16.mxu0 0
    %3232 = vmatpush1.bf16.msra.mxu0 0
    %3233 = vmatprep.subr.bf16.mxu0 0
    %3234 = vmatpush1.bf16.msra.mxu0 0
    %3235 = vmatprep.mubr.bf16.mxu0 0
    %3236 = vmatmul.mubr.bf16.gmra.mrb[0].mxu0 %v3198
    %v3237 = vpop.f32.mrb[0].mxu0
    %v3238 = vadd.f32 0.0, %v3237
    %v3239 = vpop.f32.mrb[0].mxu0
    %v3240 = vpop.f32.mrb[0].mxu0
    %v3241 = vpop.f32.mrb[0].mxu0
    %3242 = vdwg.mxu0
    %v3243 = vcombine.low %v3100, %v3192
    %v3244 = vcombine.high %v3100, %v3192
    %v3246 = vunpack.c.l.s4 1983009808
    %v3247 = vunpack.c.0.s8 %v3246
    %v3248 = vlaneseq
    %v3249 = vshrl.u32 %v3248, 7
    %v3250 = vsub.s32 %v3247, %v3249
    %v3251 = vrot.slane %v3243, %v3250
    %v3253 = vunpack.c.l.s4 1983009808
    %v3254 = vunpack.c.0.s8 %v3253
    %v3255 = vlaneseq
    %v3256 = vshrl.u32 %v3255, 7
    %v3257 = vsub.s32 %v3254, %v3256
    %v3258 = vrot.slane %v3244, %v3257
    %v3259 = vcombine.low %v3146, %v3238
    %v3260 = vcombine.high %v3146, %v3238
    %v3262 = vunpack.c.l.s4 1983009808
    %v3263 = vunpack.c.0.s8 %v3262
    %v3264 = vlaneseq
    %v3265 = vshrl.u32 %v3264, 7
    %v3266 = vsub.s32 %v3263, %v3265
    %v3267 = vrot.slane %v3259, %v3266
    %v3269 = vunpack.c.l.s4 1983009808
    %v3270 = vunpack.c.0.s8 %v3269
    %v3271 = vlaneseq
    %v3272 = vshrl.u32 %v3271, 7
    %v3273 = vsub.s32 %v3270, %v3272
    %v3274 = vrot.slane %v3260, %v3273
    %v3275 = vcombine.low %v3251, %v3267
    %v3276 = vcombine.high %v3251, %v3267
    %v3278 = vunpack.c.l.s4 1934713408
    %v3279 = vunpack.c.0.s8 %v3278
    %v3280 = vlaneseq
    %v3281 = vshrl.u32 %v3280, 7
    %v3282 = vsub.s32 %v3279, %v3281
    %v3283 = vrot.slane %v3275, %v3282
    %v3285 = vunpack.c.l.s4 1934713408
    %v3286 = vunpack.c.0.s8 %v3285
    %v3287 = vlaneseq
    %v3288 = vshrl.u32 %v3287, 7
    %v3289 = vsub.s32 %v3286, %v3288
    %v3290 = vrot.slane %v3276, %v3289
    %v3291 = vcombine.low %v3258, %v3274
    %v3292 = vcombine.high %v3258, %v3274
    %v3294 = vunpack.c.l.s4 1934713408
    %v3295 = vunpack.c.0.s8 %v3294
    %v3296 = vlaneseq
    %v3297 = vshrl.u32 %v3296, 7
    %v3298 = vsub.s32 %v3295, %v3297
    %v3299 = vrot.slane %v3291, %v3298
    %v3301 = vunpack.c.l.s4 1934713408
    %v3302 = vunpack.c.0.s8 %v3301
    %v3303 = vlaneseq
    %v3304 = vshrl.u32 %v3303, 7
    %v3305 = vsub.s32 %v3302, %v3304
    %v3306 = vrot.slane %v3292, %v3305
    %v3307 = vcombine.high %v3283, 0.0
    %v3308 = vcombine.high %v3290, 0.0
    %v3309 = vcombine.high %v3299, 0.0
    %v3310 = vcombine.high %v3306, 0.0
    %v3311 = vcombine.low %v3283, %v3290
    %v3313 = vunpack.c.l.s4 1983009808
    %v3314 = vunpack.c.0.s8 %v3313
    %v3315 = vlaneseq
    %v3316 = vshrl.u32 %v3315, 7
    %v3317 = vsub.s32 %v3314, %v3316
    %v3318 = vrot.slane %v3311, %v3317
    %v3319 = vcombine.low %v3307, %v3308
    %v3321 = vunpack.c.l.s4 1983009808
    %v3322 = vunpack.c.0.s8 %v3321
    %v3323 = vlaneseq
    %v3324 = vshrl.u32 %v3323, 7
    %v3325 = vsub.s32 %v3322, %v3324
    %v3326 = vrot.slane %v3319, %v3325
    %v3327 = vcombine.low %v3299, %v3306
    %v3329 = vunpack.c.l.s4 1983009808
    %v3330 = vunpack.c.0.s8 %v3329
    %v3331 = vlaneseq
    %v3332 = vshrl.u32 %v3331, 7
    %v3333 = vsub.s32 %v3330, %v3332
    %v3334 = vrot.slane %v3327, %v3333
    %v3335 = vcombine.low %v3309, %v3310
    %v3337 = vunpack.c.l.s4 1983009808
    %v3338 = vunpack.c.0.s8 %v3337
    %v3339 = vlaneseq
    %v3340 = vshrl.u32 %v3339, 7
    %v3341 = vsub.s32 %v3338, %v3340
    %v3342 = vrot.slane %v3335, %v3341
    %v3343 = vcombine.low %v3318, %v3326
    %v3344 = vcombine.high %v3318, %v3326
    %v3346 = vunpack.c.l.s4 1934713408
    %v3347 = vunpack.c.0.s8 %v3346
    %v3348 = vlaneseq
    %v3349 = vshrl.u32 %v3348, 7
    %v3350 = vsub.s32 %v3347, %v3349
    %v3351 = vrot.slane %v3343, %v3350
    %v3353 = vunpack.c.l.s4 1934713408
    %v3354 = vunpack.c.0.s8 %v3353
    %v3355 = vlaneseq
    %v3356 = vshrl.u32 %v3355, 7
    %v3357 = vsub.s32 %v3354, %v3356
    %v3358 = vrot.slane %v3344, %v3357
    %v3359 = vcombine.low %v3334, %v3342
    %v3360 = vcombine.high %v3334, %v3342
    %v3362 = vunpack.c.l.s4 1934713408
    %v3363 = vunpack.c.0.s8 %v3362
    %v3364 = vlaneseq
    %v3365 = vshrl.u32 %v3364, 7
    %v3366 = vsub.s32 %v3363, %v3365
    %v3367 = vrot.slane %v3359, %v3366
    %v3369 = vunpack.c.l.s4 1934713408
    %v3370 = vunpack.c.0.s8 %v3369
    %v3371 = vlaneseq
    %v3372 = vshrl.u32 %v3371, 7
    %v3373 = vsub.s32 %v3370, %v3372
    %v3374 = vrot.slane %v3360, %v3373
    %v3375 = vcombine.low %v3351, %v3367
    %v3376 = vcombine.high %v3351, %v3367
    %v3377 = vcombine.low %v3358, %v3374
    %v3378 = vcombine.high %v3358, %v3374
    %3380 = vrot.lane.b32.xlu0 %v3376, 32
    %v3381 = vpop.permute.xlu0 %3380
    %3384 = vrot.lane.b32.xlu0 %v3377, 64
    %v3385 = vpop.permute.xlu0 %3384
    %3388 = vrot.lane.b32.xlu0 %v3378, 96
    %v3389 = vpop.permute.xlu0 %3388
    %v3391 = vsel %vm787, %v3375, %v3381
    %v3392 = vsel %vm2815, %v3391, %v3385
    %v3393 = vsel %vm2817, %v3392, %v3389
    %v3394 = vpack.c.bf16 %v3393, %v2818
    %v3395 = vld [vmem:[#allocation17] sm:$0xf]
    %v3396 = vld [vmem:[#allocation17 + $0x4] sm:$0xf]
    %v3397 = vld [vmem:[#allocation17 + $0x8] sm:$0xf]
    %v3398 = vld [vmem:[#allocation17 + $0xc] sm:$0xf]
    %v3399 = vld [vmem:[#allocation17 + $0x10] sm:$0xf]
    %v3400 = vld [vmem:[#allocation17 + $0x14] sm:$0xf]
    %v3401 = vld [vmem:[#allocation17 + $0x18] sm:$0xf]
    %v3402 = vld [vmem:[#allocation17 + $0x1c] sm:$0xf]
    %v3403 = vld [vmem:[#allocation17 + $0x20] sm:$0xf]
    %v3404 = vld [vmem:[#allocation17 + $0x24] sm:$0xf]
    %v3405 = vld [vmem:[#allocation17 + $0x28] sm:$0xf]
    %v3406 = vld [vmem:[#allocation17 + $0x2c] sm:$0xf]
    %v3407 = vld [vmem:[#allocation17 + $0x30] sm:$0xf]
    %v3408 = vld [vmem:[#allocation17 + $0x34] sm:$0xf]
    %v3409 = vld [vmem:[#allocation17 + $0x38] sm:$0xf]
    %v3410 = vld [vmem:[#allocation17 + $0x3c] sm:$0xf]
    %v3411 = vld [vmem:[%s15] sm:$0x1]
    %v3413 = vlaneseq
    %v3414 = vshrl.u32 %v3413, 7
    %v3415 = vsub.s32 0, %v3414
    %v3416 = vrot.slane %v3411, %v3415
    %v3434 = vunpack.c.l.b16 %v3395
    %v3435 = vunpack.c.l.b16 %v3396
    %v3436 = vunpack.c.l.b16 %v3397
    %v3437 = vunpack.c.l.b16 %v3398
    %v3438 = vunpack.c.l.b16 %v3399
    %v3439 = vunpack.c.l.b16 %v3400
    %v3440 = vunpack.c.l.b16 %v3401
    %v3441 = vunpack.c.l.b16 %v3402
    %v3442 = vunpack.c.l.b16 %v3403
    %v3443 = vunpack.c.l.b16 %v3404
    %v3444 = vunpack.c.l.b16 %v3405
    %v3445 = vunpack.c.l.b16 %v3406
    %v3446 = vunpack.c.l.b16 %v3407
    %v3447 = vunpack.c.l.b16 %v3408
    %v3448 = vunpack.c.l.b16 %v3409
    %v3449 = vunpack.c.l.b16 %v3410
    %v3450 = vpack.c.b16 %v3435, %v3434
    %v3451 = vpack.c.b16 %v3437, %v3436
    %v3452 = vpack.c.b16 %v3439, %v3438
    %v3453 = vpack.c.b16 %v3441, %v3440
    %v3454 = vpack.c.b16 %v3443, %v3442
    %v3455 = vpack.c.b16 %v3445, %v3444
    %v3456 = vpack.c.b16 %v3447, %v3446
    %v3457 = vpack.c.b16 %v3449, %v3448
    %3466 = vmatprep.subr.bf16.mxu0 0
    %3467 = vmatpush1.bf16.msra.mxu0 %v3450
    %3468 = vmatprep.subr.bf16.mxu0 0
    %3469 = vmatpush1.bf16.msra.mxu0 %v3451
    %3470 = vmatprep.subr.bf16.mxu0 0
    %3471 = vmatpush1.bf16.msra.mxu0 %v3452
    %3472 = vmatprep.subr.bf16.mxu0 0
    %3473 = vmatpush1.bf16.msra.mxu0 %v3453
    %3474 = vmatprep.subr.bf16.mxu0 0
    %3475 = vmatpush1.bf16.msra.mxu0 %v3454
    %3476 = vmatprep.subr.bf16.mxu0 0
    %3477 = vmatpush1.bf16.msra.mxu0 %v3455
    %3478 = vmatprep.subr.bf16.mxu0 0
    %3479 = vmatpush1.bf16.msra.mxu0 %v3456
    %3480 = vmatprep.subr.bf16.mxu0 0
    %3481 = vmatpush1.bf16.msra.mxu0 %v3457
    %3482 = vmatprep.subr.bf16.mxu0 0
    %3483 = vmatpush1.bf16.msra.mxu0 0
    %3484 = vmatprep.subr.bf16.mxu0 0
    %3485 = vmatpush1.bf16.msra.mxu0 0
    %3486 = vmatprep.subr.bf16.mxu0 0
    %3487 = vmatpush1.bf16.msra.mxu0 0
    %3488 = vmatprep.subr.bf16.mxu0 0
    %3489 = vmatpush1.bf16.msra.mxu0 0
    %3490 = vmatprep.subr.bf16.mxu0 0
    %3491 = vmatpush1.bf16.msra.mxu0 0
    %3492 = vmatprep.subr.bf16.mxu0 0
    %3493 = vmatpush1.bf16.msra.mxu0 0
    %3494 = vmatprep.subr.bf16.mxu0 0
    %3495 = vmatpush1.bf16.msra.mxu0 0
    %3496 = vmatprep.subr.bf16.mxu0 0
    %3497 = vmatpush1.bf16.msra.mxu0 0
    %3498 = vmatprep.mubr.bf16.mxu0 0
    %3499 = vmatmul.mubr.bf16.gmra.mrb[0].mxu0 %v3394
    %v3500 = vpop.f32.mrb[0].mxu0
    %v3501 = vadd.f32 %v3416, %v3500
    %v3502 = vpop.f32.mrb[0].mxu0
    %v3503 = vpop.f32.mrb[0].mxu0
    %v3504 = vadd.f32 %v3416, %v3503
    %v3505 = vpop.f32.mrb[0].mxu0
    %3506 = vdwg.mxu0
    %v3507 = vadd.f32 %v1001, %v3501
    %v3508 = vadd.f32 %v1002, %v3504
    %v3509 = vld [vmem:[%s16] sm:$0x1]
    %v3510 = vld [vmem:[%s17] sm:$0x1]
    %3511 = vadd.xlane.f32.xlu0 %v3507
    %v3512 = vpop.xlane.xlu0 %3511
    %3513 = vadd.xlane.f32.xlu0 %v3508
    %v3514 = vpop.xlane.xlu0 %3513
    %v3515 = vrcp.pop 128.0
    %v3516 = vmul.f32 %v3512, %v3515
    %v3517 = vmul.f32 %v3514, %v3515
    %v3518 = vsub.f32 %v3507, %v3516
    %v3519 = vsub.f32 %v3508, %v3517
    %v3520 = vmul.f32 %v3518, %v3518
    %v3521 = vmul.f32 %v3519, %v3519
    %3522 = vadd.xlane.f32.xlu0 %v3520
    %v3523 = vpop.xlane.xlu0 %3522
    %3524 = vadd.xlane.f32.xlu0 %v3521
    %v3525 = vpop.xlane.xlu0 %3524
    %v3526 = vmul.f32 %v3523, %v3515
    %v3527 = vmul.f32 %v3525, %v3515
    %v3528 = vadd.f32 %v3526, 1e-05
    %v3529 = vadd.f32 %v3527, 1e-05
    %v3530 = vrsqrt.pop %v3528
    %v3531 = vrsqrt.pop %v3529
    %v3532 = vmul.f32 %v3518, %v3530
    %v3533 = vmul.f32 %v3519, %v3531
    %v3535 = vlaneseq
    %v3536 = vshrl.u32 %v3535, 7
    %v3537 = vsub.s32 0, %v3536
    %v3538 = vrot.slane %v3509, %v3537
    %v3540 = vmul.f32 %v3532, %v3538
    %v3541 = vmul.f32 %v3533, %v3538
    %v3543 = vlaneseq
    %v3544 = vshrl.u32 %v3543, 7
    %v3545 = vsub.s32 0, %v3544
    %v3546 = vrot.slane %v3510, %v3545
    %v3548 = vadd.f32 %v3540, %v3546
    %v3549 = vadd.f32 %v3541, %v3546
    %v3550 = vpack.c.bf16 %v3549, %v3548
    %v3551 = vld [vmem:[#allocation19] sm:$0xff]
    %v3552 = vld [vmem:[#allocation19 + $0x8] sm:$0xff]
    %v3553 = vld [vmem:[#allocation19 + $0x10] sm:$0xff]
    %v3554 = vld [vmem:[#allocation19 + $0x18] sm:$0xff]
    %v3555 = vld [vmem:[#allocation19 + $0x20] sm:$0xff]
    %v3556 = vld [vmem:[#allocation19 + $0x28] sm:$0xff]
    %v3557 = vld [vmem:[#allocation19 + $0x30] sm:$0xff]
    %v3558 = vld [vmem:[#allocation19 + $0x38] sm:$0xff]
    %v3559 = vld [vmem:[#allocation19 + $0x40] sm:$0xff]
    %v3560 = vld [vmem:[#allocation19 + $0x48] sm:$0xff]
    %v3561 = vld [vmem:[#allocation19 + $0x50] sm:$0xff]
    %v3562 = vld [vmem:[#allocation19 + $0x58] sm:$0xff]
    %v3563 = vld [vmem:[#allocation19 + $0x60] sm:$0xff]
    %v3564 = vld [vmem:[#allocation19 + $0x68] sm:$0xff]
    %v3565 = vld [vmem:[#allocation19 + $0x70] sm:$0xff]
    %v3566 = vld [vmem:[#allocation19 + $0x78] sm:$0xff]
    %v3567 = vld [vmem:[%s19] sm:$0x3]
    %v3569 = vlaneseq
    %v3570 = vshrl.u32 %v3569, 7
    %v3571 = vsub.s32 0, %v3570
    %v3572 = vrot.slane %v3567, %v3571
    %v3573 = vlaneseq
    %v3574 = vshrl.u32 %v3573, 7
    %v3575 = vsub.s32 1, %v3574
    %v3576 = vrot.slane %v3567, %v3575
    %v3595 = vunpack.c.l.b16 %v3551
    %v3596 = vunpack.c.h.b16 %v3551
    %v3597 = vunpack.c.l.b16 %v3552
    %v3598 = vunpack.c.h.b16 %v3552
    %v3599 = vunpack.c.l.b16 %v3553
    %v3600 = vunpack.c.h.b16 %v3553
    %v3601 = vunpack.c.l.b16 %v3554
    %v3602 = vunpack.c.h.b16 %v3554
    %v3603 = vunpack.c.l.b16 %v3555
    %v3604 = vunpack.c.h.b16 %v3555
    %v3605 = vunpack.c.l.b16 %v3556
    %v3606 = vunpack.c.h.b16 %v3556
    %v3607 = vunpack.c.l.b16 %v3557
    %v3608 = vunpack.c.h.b16 %v3557
    %v3609 = vunpack.c.l.b16 %v3558
    %v3610 = vunpack.c.h.b16 %v3558
    %v3611 = vunpack.c.l.b16 %v3559
    %v3612 = vunpack.c.h.b16 %v3559
    %v3613 = vunpack.c.l.b16 %v3560
    %v3614 = vunpack.c.h.b16 %v3560
    %v3615 = vunpack.c.l.b16 %v3561
    %v3616 = vunpack.c.h.b16 %v3561
    %v3617 = vunpack.c.l.b16 %v3562
    %v3618 = vunpack.c.h.b16 %v3562
    %v3619 = vunpack.c.l.b16 %v3563
    %v3620 = vunpack.c.h.b16 %v3563
    %v3621 = vunpack.c.l.b16 %v3564
    %v3622 = vunpack.c.h.b16 %v3564
    %v3623 = vunpack.c.l.b16 %v3565
    %v3624 = vunpack.c.h.b16 %v3565
    %v3625 = vunpack.c.l.b16 %v3566
    %v3626 = vunpack.c.h.b16 %v3566
    %v3627 = vpack.c.b16 %v3597, %v3595
    %v3628 = vpack.c.b16 %v3598, %v3596
    %v3629 = vpack.c.b16 %v3601, %v3599
    %v3630 = vpack.c.b16 %v3602, %v3600
    %v3631 = vpack.c.b16 %v3605, %v3603
    %v3632 = vpack.c.b16 %v3606, %v3604
    %v3633 = vpack.c.b16 %v3609, %v3607
    %v3634 = vpack.c.b16 %v3610, %v3608
    %v3635 = vpack.c.b16 %v3613, %v3611
    %v3636 = vpack.c.b16 %v3614, %v3612
    %v3637 = vpack.c.b16 %v3617, %v3615
    %v3638 = vpack.c.b16 %v3618, %v3616
    %v3639 = vpack.c.b16 %v3621, %v3619
    %v3640 = vpack.c.b16 %v3622, %v3620
    %v3641 = vpack.c.b16 %v3625, %v3623
    %v3642 = vpack.c.b16 %v3626, %v3624
    %3659 = vmatprep.subr.bf16.mxu0 %v3628
    %3660 = vmatpush1.bf16.msra.mxu0 %v3627
    %3661 = vmatprep.subr.bf16.mxu0 %v3630
    %3662 = vmatpush1.bf16.msra.mxu0 %v3629
    %3663 = vmatprep.subr.bf16.mxu0 %v3632
    %3664 = vmatpush1.bf16.msra.mxu0 %v3631
    %3665 = vmatprep.subr.bf16.mxu0 %v3634
    %3666 = vmatpush1.bf16.msra.mxu0 %v3633
    %3667 = vmatprep.subr.bf16.mxu0 %v3636
    %3668 = vmatpush1.bf16.msra.mxu0 %v3635
    %3669 = vmatprep.subr.bf16.mxu0 %v3638
    %3670 = vmatpush1.bf16.msra.mxu0 %v3637
    %3671 = vmatprep.subr.bf16.mxu0 %v3640
    %3672 = vmatpush1.bf16.msra.mxu0 %v3639
    %3673 = vmatprep.subr.bf16.mxu0 %v3642
    %3674 = vmatpush1.bf16.msra.mxu0 %v3641
    %3675 = vmatprep.subr.bf16.mxu0 0
    %3676 = vmatpush1.bf16.msra.mxu0 0
    %3677 = vmatprep.subr.bf16.mxu0 0
    %3678 = vmatpush1.bf16.msra.mxu0 0
    %3679 = vmatprep.subr.bf16.mxu0 0
    %3680 = vmatpush1.bf16.msra.mxu0 0
    %3681 = vmatprep.subr.bf16.mxu0 0
    %3682 = vmatpush1.bf16.msra.mxu0 0
    %3683 = vmatprep.subr.bf16.mxu0 0
    %3684 = vmatpush1.bf16.msra.mxu0 0
    %3685 = vmatprep.subr.bf16.mxu0 0
    %3686 = vmatpush1.bf16.msra.mxu0 0
    %3687 = vmatprep.subr.bf16.mxu0 0
    %3688 = vmatpush1.bf16.msra.mxu0 0
    %3689 = vmatprep.subr.bf16.mxu0 0
    %3690 = vmatpush1.bf16.msra.mxu0 0
    %3691 = vmatprep.mubr.bf16.mxu0 0
    %3692 = vmatmul.mubr.bf16.gmra.mrb[0].mxu0 %v3550
    %v3693 = vpop.f32.mrb[0].mxu0
    %v3694 = vadd.f32 %v3572, %v3693
    %v3695 = vpop.f32.mrb[0].mxu0
    %v3696 = vadd.f32 %v3576, %v3695
    %v3697 = vpop.f32.mrb[0].mxu0
    %v3698 = vadd.f32 %v3572, %v3697
    %v3699 = vpop.f32.mrb[0].mxu0
    %v3700 = vadd.f32 %v3576, %v3699
    %3701 = vdwg.mxu0
    %v3702 = vmul.f32 %v3694, %v3694
    %v3703 = vmul.f32 %v3696, %v3696
    %v3704 = vmul.f32 %v3698, %v3698
    %v3705 = vmul.f32 %v3700, %v3700
    %v3706 = vmul.f32 %v3694, %v3702
    %v3707 = vmul.f32 %v3696, %v3703
    %v3708 = vmul.f32 %v3698, %v3704
    %v3709 = vmul.f32 %v3700, %v3705
    %v3710 = vmul.f32 %v3706, 0.044715
    %v3711 = vmul.f32 %v3707, 0.044715
    %v3712 = vmul.f32 %v3708, 0.044715
    %v3713 = vmul.f32 %v3709, 0.044715
    %v3714 = vadd.f32 %v3694, %v3710
    %v3715 = vadd.f32 %v3696, %v3711
    %v3716 = vadd.f32 %v3698, %v3712
    %v3717 = vadd.f32 %v3700, %v3713
    %v3718 = vmul.f32 %v3714, 0.7978846
    %v3719 = vmul.f32 %v3715, 0.7978846
    %v3720 = vmul.f32 %v3716, 0.7978846
    %v3721 = vmul.f32 %v3717, 0.7978846
    %v3722 = vtanh.pop %v3718
    %v3723 = vtanh.pop %v3719
    %v3724 = vtanh.pop %v3720
    %v3725 = vtanh.pop %v3721
    %v3726 = vadd.f32 %v3722, 1.0
    %v3727 = vadd.f32 %v3723, 1.0
    %v3728 = vadd.f32 %v3724, 1.0
    %v3729 = vadd.f32 %v3725, 1.0
    %v3730 = vmul.f32 %v3726, 0.5
    %v3731 = vmul.f32 %v3727, 0.5
    %v3732 = vmul.f32 %v3728, 0.5
    %v3733 = vmul.f32 %v3729, 0.5
    %v3734 = vmul.f32 %v3694, %v3730
    %v3735 = vmul.f32 %v3696, %v3731
    %v3736 = vmul.f32 %v3698, %v3732
    %v3737 = vmul.f32 %v3700, %v3733
    %v3738 = vpack.c.bf16 %v3736, %v3734
    %v3739 = vpack.c.bf16 %v3737, %v3735
    %v3740 = vld [vmem:[#allocation20] sm:$0xf]
    %v3741 = vld [vmem:[#allocation20 + $0x4] sm:$0xf]
    %v3742 = vld [vmem:[#allocation20 + $0x8] sm:$0xf]
    %v3743 = vld [vmem:[#allocation20 + $0xc] sm:$0xf]
    %v3744 = vld [vmem:[#allocation20 + $0x10] sm:$0xf]
    %v3745 = vld [vmem:[#allocation20 + $0x14] sm:$0xf]
    %v3746 = vld [vmem:[#allocation20 + $0x18] sm:$0xf]
    %v3747 = vld [vmem:[#allocation20 + $0x1c] sm:$0xf]
    %v3748 = vld [vmem:[#allocation20 + $0x20] sm:$0xf]
    %v3749 = vld [vmem:[#allocation20 + $0x24] sm:$0xf]
    %v3750 = vld [vmem:[#allocation20 + $0x28] sm:$0xf]
    %v3751 = vld [vmem:[#allocation20 + $0x2c] sm:$0xf]
    %v3752 = vld [vmem:[#allocation20 + $0x30] sm:$0xf]
    %v3753 = vld [vmem:[#allocation20 + $0x34] sm:$0xf]
    %v3754 = vld [vmem:[#allocation20 + $0x38] sm:$0xf]
    %v3755 = vld [vmem:[#allocation20 + $0x3c] sm:$0xf]
    %v3756 = vld [vmem:[#allocation20 + $0x40] sm:$0xf]
    %v3757 = vld [vmem:[#allocation20 + $0x44] sm:$0xf]
    %v3758 = vld [vmem:[#allocation20 + $0x48] sm:$0xf]
    %v3759 = vld [vmem:[#allocation20 + $0x4c] sm:$0xf]
    %v3760 = vld [vmem:[#allocation20 + $0x50] sm:$0xf]
    %v3761 = vld [vmem:[#allocation20 + $0x54] sm:$0xf]
    %v3762 = vld [vmem:[#allocation20 + $0x58] sm:$0xf]
    %v3763 = vld [vmem:[#allocation20 + $0x5c] sm:$0xf]
    %v3764 = vld [vmem:[#allocation20 + $0x60] sm:$0xf]
    %v3765 = vld [vmem:[#allocation20 + $0x64] sm:$0xf]
    %v3766 = vld [vmem:[#allocation20 + $0x68] sm:$0xf]
    %v3767 = vld [vmem:[#allocation20 + $0x6c] sm:$0xf]
    %v3768 = vld [vmem:[#allocation20 + $0x70] sm:$0xf]
    %v3769 = vld [vmem:[#allocation20 + $0x74] sm:$0xf]
    %v3770 = vld [vmem:[#allocation20 + $0x78] sm:$0xf]
    %v3771 = vld [vmem:[#allocation20 + $0x7c] sm:$0xf]
    %v3772 = vld [vmem:[%s21] sm:$0x1]
    %v3774 = vlaneseq
    %v3775 = vshrl.u32 %v3774, 7
    %v3776 = vsub.s32 0, %v3775
    %v3777 = vrot.slane %v3772, %v3776
    %v3811 = vunpack.c.l.b16 %v3740
    %v3812 = vunpack.c.l.b16 %v3741
    %v3813 = vunpack.c.l.b16 %v3742
    %v3814 = vunpack.c.l.b16 %v3743
    %v3815 = vunpack.c.l.b16 %v3744
    %v3816 = vunpack.c.l.b16 %v3745
    %v3817 = vunpack.c.l.b16 %v3746
    %v3818 = vunpack.c.l.b16 %v3747
    %v3819 = vunpack.c.l.b16 %v3748
    %v3820 = vunpack.c.l.b16 %v3749
    %v3821 = vunpack.c.l.b16 %v3750
    %v3822 = vunpack.c.l.b16 %v3751
    %v3823 = vunpack.c.l.b16 %v3752
    %v3824 = vunpack.c.l.b16 %v3753
    %v3825 = vunpack.c.l.b16 %v3754
    %v3826 = vunpack.c.l.b16 %v3755
    %v3827 = vunpack.c.l.b16 %v3756
    %v3828 = vunpack.c.l.b16 %v3757
    %v3829 = vunpack.c.l.b16 %v3758
    %v3830 = vunpack.c.l.b16 %v3759
    %v3831 = vunpack.c.l.b16 %v3760
    %v3832 = vunpack.c.l.b16 %v3761
    %v3833 = vunpack.c.l.b16 %v3762
    %v3834 = vunpack.c.l.b16 %v3763
    %v3835 = vunpack.c.l.b16 %v3764
    %v3836 = vunpack.c.l.b16 %v3765
    %v3837 = vunpack.c.l.b16 %v3766
    %v3838 = vunpack.c.l.b16 %v3767
    %v3839 = vunpack.c.l.b16 %v3768
    %v3840 = vunpack.c.l.b16 %v3769
    %v3841 = vunpack.c.l.b16 %v3770
    %v3842 = vunpack.c.l.b16 %v3771
    %v3843 = vpack.c.b16 %v3812, %v3811
    %v3844 = vpack.c.b16 %v3814, %v3813
    %v3845 = vpack.c.b16 %v3816, %v3815
    %v3846 = vpack.c.b16 %v3818, %v3817
    %v3847 = vpack.c.b16 %v3820, %v3819
    %v3848 = vpack.c.b16 %v3822, %v3821
    %v3849 = vpack.c.b16 %v3824, %v3823
    %v3850 = vpack.c.b16 %v3826, %v3825
    %v3851 = vpack.c.b16 %v3828, %v3827
    %v3852 = vpack.c.b16 %v3830, %v3829
    %v3853 = vpack.c.b16 %v3832, %v3831
    %v3854 = vpack.c.b16 %v3834, %v3833
    %v3855 = vpack.c.b16 %v3836, %v3835
    %v3856 = vpack.c.b16 %v3838, %v3837
    %v3857 = vpack.c.b16 %v3840, %v3839
    %v3858 = vpack.c.b16 %v3842, %v3841
    %3875 = vmatprep.subr.bf16.mxu0 0
    %3876 = vmatpush1.bf16.msra.mxu0 %v3843
    %3877 = vmatprep.subr.bf16.mxu0 0
    %3878 = vmatpush1.bf16.msra.mxu0 %v3844
    %3879 = vmatprep.subr.bf16.mxu0 0
    %3880 = vmatpush1.bf16.msra.mxu0 %v3845
    %3881 = vmatprep.subr.bf16.mxu0 0
    %3882 = vmatpush1.bf16.msra.mxu0 %v3846
    %3883 = vmatprep.subr.bf16.mxu0 0
    %3884 = vmatpush1.bf16.msra.mxu0 %v3847
    %3885 = vmatprep.subr.bf16.mxu0 0
    %3886 = vmatpush1.bf16.msra.mxu0 %v3848
    %3887 = vmatprep.subr.bf16.mxu0 0
    %3888 = vmatpush1.bf16.msra.mxu0 %v3849
    %3889 = vmatprep.subr.bf16.mxu0 0
    %3890 = vmatpush1.bf16.msra.mxu0 %v3850
    %3891 = vmatprep.subr.bf16.mxu0 0
    %3892 = vmatpush1.bf16.msra.mxu0 %v3851
    %3893 = vmatprep.subr.bf16.mxu0 0
    %3894 = vmatpush1.bf16.msra.mxu0 %v3852
    %3895 = vmatprep.subr.bf16.mxu0 0
    %3896 = vmatpush1.bf16.msra.mxu0 %v3853
    %3897 = vmatprep.subr.bf16.mxu0 0
    %3898 = vmatpush1.bf16.msra.mxu0 %v3854
    %3899 = vmatprep.subr.bf16.mxu0 0
    %3900 = vmatpush1.bf16.msra.mxu0 %v3855
    %3901 = vmatprep.subr.bf16.mxu0 0
    %3902 = vmatpush1.bf16.msra.mxu0 %v3856
    %3903 = vmatprep.subr.bf16.mxu0 0
    %3904 = vmatpush1.bf16.msra.mxu0 %v3857
    %3905 = vmatprep.subr.bf16.mxu0 0
    %3906 = vmatpush1.bf16.msra.mxu0 %v3858
    %3907 = vmatprep.mubr.bf16.mxu0 %v3739
    %3908 = vmatmul.mubr.bf16.gmra.mrb[0].mxu0 %v3738
    %v3909 = vpop.f32.mrb[0].mxu0
    %v3910 = vadd.f32 %v3777, %v3909
    %v3911 = vpop.f32.mrb[0].mxu0
    %v3912 = vpop.f32.mrb[0].mxu0
    %v3913 = vadd.f32 %v3777, %v3912
    %v3914 = vpop.f32.mrb[0].mxu0
    %3915 = vdwg.mxu0
    %v3916 = vadd.f32 %v3548, %v3910
    %v3917 = vadd.f32 %v3549, %v3913
    %v3918 = vld [vmem:[%s22] sm:$0x1]
    %v3919 = vld [vmem:[%s23] sm:$0x1]
    %3920 = vadd.xlane.f32.xlu0 %v3916
    %v3921 = vpop.xlane.xlu0 %3920
    %3922 = vadd.xlane.f32.xlu0 %v3917
    %v3923 = vpop.xlane.xlu0 %3922
    %v3924 = vmul.f32 %v3921, %v3515
    %v3925 = vmul.f32 %v3923, %v3515
    %v3926 = vsub.f32 %v3916, %v3924
    %v3927 = vsub.f32 %v3917, %v3925
    %v3928 = vmul.f32 %v3926, %v3926
    %v3929 = vmul.f32 %v3927, %v3927
    %3930 = vadd.xlane.f32.xlu0 %v3928
    %v3931 = vpop.xlane.xlu0 %3930
    %3932 = vadd.xlane.f32.xlu0 %v3929
    %v3933 = vpop.xlane.xlu0 %3932
    %v3934 = vmul.f32 %v3931, %v3515
    %v3935 = vmul.f32 %v3933, %v3515
    %v3936 = vadd.f32 %v3934, 1e-05
    %v3937 = vadd.f32 %v3935, 1e-05
    %v3938 = vrsqrt.pop %v3936
    %v3939 = vrsqrt.pop %v3937
    %v3940 = vmul.f32 %v3926, %v3938
    %v3941 = vmul.f32 %v3927, %v3939
    %v3943 = vlaneseq
    %v3944 = vshrl.u32 %v3943, 7
    %v3945 = vsub.s32 0, %v3944
    %v3946 = vrot.slane %v3918, %v3945
    %v3948 = vmul.f32 %v3940, %v3946
    %v3949 = vmul.f32 %v3941, %v3946
    %v3951 = vlaneseq
    %v3952 = vshrl.u32 %v3951, 7
    %v3953 = vsub.s32 0, %v3952
    %v3954 = vrot.slane %v3919, %v3953
    %v3956 = vadd.f32 %v3948, %v3954
    %v3957 = vadd.f32 %v3949, %v3954
    %v3958 = vpack.c.bf16 %v3957, %v3956
    %s3959 = scalar_lea.vmem [#allocation13], 64
    %v3960 = vld [vmem:[%s3959] sm:$0xf]
    %v3961 = vld [vmem:[%s3959 + $0x4] sm:$0xf]
    %v3962 = vld [vmem:[%s3959 + $0x8] sm:$0xf]
    %v3963 = vld [vmem:[%s3959 + $0xc] sm:$0xf]
    %v3964 = vld [vmem:[%s3959 + $0x10] sm:$0xf]
    %v3965 = vld [vmem:[%s3959 + $0x14] sm:$0xf]
    %v3966 = vld [vmem:[%s3959 + $0x18] sm:$0xf]
    %v3967 = vld [vmem:[%s3959 + $0x1c] sm:$0xf]
    %v3968 = vld [vmem:[%s3959 + $0x20] sm:$0xf]
    %v3969 = vld [vmem:[%s3959 + $0x24] sm:$0xf]
    %v3970 = vld [vmem:[%s3959 + $0x28] sm:$0xf]
    %v3971 = vld [vmem:[%s3959 + $0x2c] sm:$0xf]
    %v3972 = vld [vmem:[%s3959 + $0x30] sm:$0xf]
    %v3973 = vld [vmem:[%s3959 + $0x34] sm:$0xf]
    %v3974 = vld [vmem:[%s3959 + $0x38] sm:$0xf]
    %v3975 = vld [vmem:[%s3959 + $0x3c] sm:$0xf]
    %s3976 = scalar_lea.vmem %s9, 1
    %v3977 = vld [vmem:[%s3976] sm:$0x1]
    %v3979 = vlaneseq
    %v3980 = vshrl.u32 %v3979, 7
    %v3981 = vsub.s32 0, %v3980
    %v3982 = vrot.slane %v3977, %v3981
    %v4000 = vunpack.c.l.b16 %v3960
    %v4001 = vunpack.c.l.b16 %v3961
    %v4002 = vunpack.c.l.b16 %v3962
    %v4003 = vunpack.c.l.b16 %v3963
    %v4004 = vunpack.c.l.b16 %v3964
    %v4005 = vunpack.c.l.b16 %v3965
    %v4006 = vunpack.c.l.b16 %v3966
    %v4007 = vunpack.c.l.b16 %v3967
    %v4008 = vunpack.c.l.b16 %v3968
    %v4009 = vunpack.c.l.b16 %v3969
    %v4010 = vunpack.c.l.b16 %v3970
    %v4011 = vunpack.c.l.b16 %v3971
    %v4012 = vunpack.c.l.b16 %v3972
    %v4013 = vunpack.c.l.b16 %v3973
    %v4014 = vunpack.c.l.b16 %v3974
    %v4015 = vunpack.c.l.b16 %v3975
    %v4016 = vpack.c.b16 %v4001, %v4000
    %v4017 = vpack.c.b16 %v4003, %v4002
    %v4018 = vpack.c.b16 %v4005, %v4004
    %v4019 = vpack.c.b16 %v4007, %v4006
    %v4020 = vpack.c.b16 %v4009, %v4008
    %v4021 = vpack.c.b16 %v4011, %v4010
    %v4022 = vpack.c.b16 %v4013, %v4012
    %v4023 = vpack.c.b16 %v4015, %v4014
    %4032 = vmatprep.subr.bf16.mxu0 0
    %4033 = vmatpush1.bf16.msra.mxu0 %v4016
    %4034 = vmatprep.subr.bf16.mxu0 0
    %4035 = vmatpush1.bf16.msra.mxu0 %v4017
    %4036 = vmatprep.subr.bf16.mxu0 0
    %4037 = vmatpush1.bf16.msra.mxu0 %v4018
    %4038 = vmatprep.subr.bf16.mxu0 0
    %4039 = vmatpush1.bf16.msra.mxu0 %v4019
    %4040 = vmatprep.subr.bf16.mxu0 0
    %4041 = vmatpush1.bf16.msra.mxu0 %v4020
    %4042 = vmatprep.subr.bf16.mxu0 0
    %4043 = vmatpush1.bf16.msra.mxu0 %v4021
    %4044 = vmatprep.subr.bf16.mxu0 0
    %4045 = vmatpush1.bf16.msra.mxu0 %v4022
    %4046 = vmatprep.subr.bf16.mxu0 0
    %4047 = vmatpush1.bf16.msra.mxu0 %v4023
    %4048 = vmatprep.subr.bf16.mxu0 0
    %4049 = vmatpush1.bf16.msra.mxu0 0
    %4050 = vmatprep.subr.bf16.mxu0 0
    %4051 = vmatpush1.bf16.msra.mxu0 0
    %4052 = vmatprep.subr.bf16.mxu0 0
    %4053 = vmatpush1.bf16.msra.mxu0 0
    %4054 = vmatprep.subr.bf16.mxu0 0
    %4055 = vmatpush1.bf16.msra.mxu0 0
    %4056 = vmatprep.subr.bf16.mxu0 0
    %4057 = vmatpush1.bf16.msra.mxu0 0
    %4058 = vmatprep.subr.bf16.mxu0 0
    %4059 = vmatpush1.bf16.msra.mxu0 0
    %4060 = vmatprep.subr.bf16.mxu0 0
    %4061 = vmatpush1.bf16.msra.mxu0 0
    %4062 = vmatprep.subr.bf16.mxu0 0
    %4063 = vmatpush1.bf16.msra.mxu0 0
    %4064 = vmatprep.mubr.bf16.mxu0 0
    %4065 = vmatmul.mubr.bf16.gmra.mrb[0].mxu0 %v3958
    %v4066 = vpop.f32.mrb[0].mxu0
    %v4067 = vadd.f32 %v3982, %v4066
    %v4068 = vpop.f32.mrb[0].mxu0
    %v4069 = vpop.f32.mrb[0].mxu0
    %v4070 = vadd.f32 %v3982, %v4069
    %v4071 = vpop.f32.mrb[0].mxu0
    %4072 = vdwg.mxu0
    %s4073 = scalar_lea.vmem [#allocation14], 64
    %v4074 = vld [vmem:[%s4073] sm:$0xf]
    %v4075 = vld [vmem:[%s4073 + $0x4] sm:$0xf]
    %v4076 = vld [vmem:[%s4073 + $0x8] sm:$0xf]
    %v4077 = vld [vmem:[%s4073 + $0xc] sm:$0xf]
    %v4078 = vld [vmem:[%s4073 + $0x10] sm:$0xf]
    %v4079 = vld [vmem:[%s4073 + $0x14] sm:$0xf]
    %v4080 = vld [vmem:[%s4073 + $0x18] sm:$0xf]
    %v4081 = vld [vmem:[%s4073 + $0x1c] sm:$0xf]
    %v4082 = vld [vmem:[%s4073 + $0x20] sm:$0xf]
    %v4083 = vld [vmem:[%s4073 + $0x24] sm:$0xf]
    %v4084 = vld [vmem:[%s4073 + $0x28] sm:$0xf]
    %v4085 = vld [vmem:[%s4073 + $0x2c] sm:$0xf]
    %v4086 = vld [vmem:[%s4073 + $0x30] sm:$0xf]
    %v4087 = vld [vmem:[%s4073 + $0x34] sm:$0xf]
    %v4088 = vld [vmem:[%s4073 + $0x38] sm:$0xf]
    %v4089 = vld [vmem:[%s4073 + $0x3c] sm:$0xf]
    %s4090 = scalar_lea.vmem %s11, 1
    %v4091 = vld [vmem:[%s4090] sm:$0x1]
    %v4093 = vlaneseq
    %v4094 = vshrl.u32 %v4093, 7
    %v4095 = vsub.s32 0, %v4094
    %v4096 = vrot.slane %v4091, %v4095
    %v4114 = vunpack.c.l.b16 %v4074
    %v4115 = vunpack.c.l.b16 %v4075
    %v4116 = vunpack.c.l.b16 %v4076
    %v4117 = vunpack.c.l.b16 %v4077
    %v4118 = vunpack.c.l.b16 %v4078
    %v4119 = vunpack.c.l.b16 %v4079
    %v4120 = vunpack.c.l.b16 %v4080
    %v4121 = vunpack.c.l.b16 %v4081
    %v4122 = vunpack.c.l.b16 %v4082
    %v4123 = vunpack.c.l.b16 %v4083
    %v4124 = vunpack.c.l.b16 %v4084
    %v4125 = vunpack.c.l.b16 %v4085
    %v4126 = vunpack.c.l.b16 %v4086
    %v4127 = vunpack.c.l.b16 %v4087
    %v4128 = vunpack.c.l.b16 %v4088
    %v4129 = vunpack.c.l.b16 %v4089
    %v4130 = vpack.c.b16 %v4115, %v4114
    %v4131 = vpack.c.b16 %v4117, %v4116
    %v4132 = vpack.c.b16 %v4119, %v4118
    %v4133 = vpack.c.b16 %v4121, %v4120
    %v4134 = vpack.c.b16 %v4123, %v4122
    %v4135 = vpack.c.b16 %v4125, %v4124
    %v4136 = vpack.c.b16 %v4127, %v4126
    %v4137 = vpack.c.b16 %v4129, %v4128
    %4146 = vmatprep.subr.bf16.mxu0 0
    %4147 = vmatpush1.bf16.msra.mxu0 %v4130
    %4148 = vmatprep.subr.bf16.mxu0 0
    %4149 = vmatpush1.bf16.msra.mxu0 %v4131
    %4150 = vmatprep.subr.bf16.mxu0 0
    %4151 = vmatpush1.bf16.msra.mxu0 %v4132
    %4152 = vmatprep.subr.bf16.mxu0 0
    %4153 = vmatpush1.bf16.msra.mxu0 %v4133
    %4154 = vmatprep.subr.bf16.mxu0 0
    %4155 = vmatpush1.bf16.msra.mxu0 %v4134
    %4156 = vmatprep.subr.bf16.mxu0 0
    %4157 = vmatpush1.bf16.msra.mxu0 %v4135
    %4158 = vmatprep.subr.bf16.mxu0 0
    %4159 = vmatpush1.bf16.msra.mxu0 %v4136
    %4160 = vmatprep.subr.bf16.mxu0 0
    %4161 = vmatpush1.bf16.msra.mxu0 %v4137
    %4162 = vmatprep.subr.bf16.mxu0 0
    %4163 = vmatpush1.bf16.msra.mxu0 0
    %4164 = vmatprep.subr.bf16.mxu0 0
    %4165 = vmatpush1.bf16.msra.mxu0 0
    %4166 = vmatprep.subr.bf16.mxu0 0
    %4167 = vmatpush1.bf16.msra.mxu0 0
    %4168 = vmatprep.subr.bf16.mxu0 0
    %4169 = vmatpush1.bf16.msra.mxu0 0
    %4170 = vmatprep.subr.bf16.mxu0 0
    %4171 = vmatpush1.bf16.msra.mxu0 0
    %4172 = vmatprep.subr.bf16.mxu0 0
    %4173 = vmatpush1.bf16.msra.mxu0 0
    %4174 = vmatprep.subr.bf16.mxu0 0
    %4175 = vmatpush1.bf16.msra.mxu0 0
    %4176 = vmatprep.subr.bf16.mxu0 0
    %4177 = vmatpush1.bf16.msra.mxu0 0
    %4178 = vmatprep.mubr.bf16.mxu0 0
    %4179 = vmatmul.mubr.bf16.gmra.mrb[0].mxu0 %v3958
    %v4180 = vpop.f32.mrb[0].mxu0
    %v4181 = vadd.f32 %v4096, %v4180
    %v4182 = vpop.f32.mrb[0].mxu0
    %v4183 = vpop.f32.mrb[0].mxu0
    %v4184 = vadd.f32 %v4096, %v4183
    %v4185 = vpop.f32.mrb[0].mxu0
    %4186 = vdwg.mxu0
    %s4187 = scalar_lea.vmem [#allocation16], 64
    %v4188 = vld [vmem:[%s4187] sm:$0xf]
    %v4189 = vld [vmem:[%s4187 + $0x4] sm:$0xf]
    %v4190 = vld [vmem:[%s4187 + $0x8] sm:$0xf]
    %v4191 = vld [vmem:[%s4187 + $0xc] sm:$0xf]
    %v4192 = vld [vmem:[%s4187 + $0x10] sm:$0xf]
    %v4193 = vld [vmem:[%s4187 + $0x14] sm:$0xf]
    %v4194 = vld [vmem:[%s4187 + $0x18] sm:$0xf]
    %v4195 = vld [vmem:[%s4187 + $0x1c] sm:$0xf]
    %v4196 = vld [vmem:[%s4187 + $0x20] sm:$0xf]
    %v4197 = vld [vmem:[%s4187 + $0x24] sm:$0xf]
    %v4198 = vld [vmem:[%s4187 + $0x28] sm:$0xf]
    %v4199 = vld [vmem:[%s4187 + $0x2c] sm:$0xf]
    %v4200 = vld [vmem:[%s4187 + $0x30] sm:$0xf]
    %v4201 = vld [vmem:[%s4187 + $0x34] sm:$0xf]
    %v4202 = vld [vmem:[%s4187 + $0x38] sm:$0xf]
    %v4203 = vld [vmem:[%s4187 + $0x3c] sm:$0xf]
    %s4204 = scalar_lea.vmem %s13, 1
    %v4205 = vld [vmem:[%s4204] sm:$0x1]
    %v4207 = vlaneseq
    %v4208 = vshrl.u32 %v4207, 7
    %v4209 = vsub.s32 0, %v4208
    %v4210 = vrot.slane %v4205, %v4209
    %v4228 = vunpack.c.l.b16 %v4188
    %v4229 = vunpack.c.l.b16 %v4189
    %v4230 = vunpack.c.l.b16 %v4190
    %v4231 = vunpack.c.l.b16 %v4191
    %v4232 = vunpack.c.l.b16 %v4192
    %v4233 = vunpack.c.l.b16 %v4193
    %v4234 = vunpack.c.l.b16 %v4194
    %v4235 = vunpack.c.l.b16 %v4195
    %v4236 = vunpack.c.l.b16 %v4196
    %v4237 = vunpack.c.l.b16 %v4197
    %v4238 = vunpack.c.l.b16 %v4198
    %v4239 = vunpack.c.l.b16 %v4199
    %v4240 = vunpack.c.l.b16 %v4200
    %v4241 = vunpack.c.l.b16 %v4201
    %v4242 = vunpack.c.l.b16 %v4202
    %v4243 = vunpack.c.l.b16 %v4203
    %v4244 = vpack.c.b16 %v4229, %v4228
    %v4245 = vpack.c.b16 %v4231, %v4230
    %v4246 = vpack.c.b16 %v4233, %v4232
    %v4247 = vpack.c.b16 %v4235, %v4234
    %v4248 = vpack.c.b16 %v4237, %v4236
    %v4249 = vpack.c.b16 %v4239, %v4238
    %v4250 = vpack.c.b16 %v4241, %v4240
    %v4251 = vpack.c.b16 %v4243, %v4242
    %4260 = vmatprep.subr.bf16.mxu0 0
    %4261 = vmatpush1.bf16.msra.mxu0 %v4244
    %4262 = vmatprep.subr.bf16.mxu0 0
    %4263 = vmatpush1.bf16.msra.mxu0 %v4245
    %4264 = vmatprep.subr.bf16.mxu0 0
    %4265 = vmatpush1.bf16.msra.mxu0 %v4246
    %4266 = vmatprep.subr.bf16.mxu0 0
    %4267 = vmatpush1.bf16.msra.mxu0 %v4247
    %4268 = vmatprep.subr.bf16.mxu0 0
    %4269 = vmatpush1.bf16.msra.mxu0 %v4248
    %4270 = vmatprep.subr.bf16.mxu0 0
    %4271 = vmatpush1.bf16.msra.mxu0 %v4249
    %4272 = vmatprep.subr.bf16.mxu0 0
    %4273 = vmatpush1.bf16.msra.mxu0 %v4250
    %4274 = vmatprep.subr.bf16.mxu0 0
    %4275 = vmatpush1.bf16.msra.mxu0 %v4251
    %4276 = vmatprep.subr.bf16.mxu0 0
    %4277 = vmatpush1.bf16.msra.mxu0 0
    %4278 = vmatprep.subr.bf16.mxu0 0
    %4279 = vmatpush1.bf16.msra.mxu0 0
    %4280 = vmatprep.subr.bf16.mxu0 0
    %4281 = vmatpush1.bf16.msra.mxu0 0
    %4282 = vmatprep.subr.bf16.mxu0 0
    %4283 = vmatpush1.bf16.msra.mxu0 0
    %4284 = vmatprep.subr.bf16.mxu0 0
    %4285 = vmatpush1.bf16.msra.mxu0 0
    %4286 = vmatprep.subr.bf16.mxu0 0
    %4287 = vmatpush1.bf16.msra.mxu0 0
    %4288 = vmatprep.subr.bf16.mxu0 0
    %4289 = vmatpush1.bf16.msra.mxu0 0
    %4290 = vmatprep.subr.bf16.mxu0 0
    %4291 = vmatpush1.bf16.msra.mxu0 0
    %4292 = vmatprep.mubr.bf16.mxu0 0
    %4293 = vmatmul.mubr.bf16.gmra.mrb[0].mxu0 %v3958
    %v4294 = vpop.f32.mrb[0].mxu0
    %v4295 = vadd.f32 %v4210, %v4294
    %v4296 = vpop.f32.mrb[0].mxu0
    %v4297 = vpop.f32.mrb[0].mxu0
    %v4298 = vadd.f32 %v4210, %v4297
    %v4299 = vpop.f32.mrb[0].mxu0
    %4300 = vdwg.mxu0
    %4303 = vrot.lane.b32.xlu0 %v4067, 96
    %v4304 = vpop.permute.xlu0 %4303
    %4305 = vrot.lane.b32.xlu0 %v4070, 96
    %v4306 = vpop.permute.xlu0 %4305
    %4309 = vrot.lane.b32.xlu0 %v4067, 64
    %v4310 = vpop.permute.xlu0 %4309
    %4311 = vrot.lane.b32.xlu0 %v4070, 64
    %v4312 = vpop.permute.xlu0 %4311
    %4315 = vrot.lane.b32.xlu0 %v4067, 32
    %v4316 = vpop.permute.xlu0 %4315
    %4317 = vrot.lane.b32.xlu0 %v4070, 32
    %v4318 = vpop.permute.xlu0 %4317
    %v4321 = vcombine.low %v4067, %v4310
    %v4322 = vcombine.high %v4067, %v4310
    %v4324 = vunpack.c.l.s4 1983009808
    %v4325 = vunpack.c.0.s8 %v4324
    %v4326 = vlaneseq
    %v4327 = vshrl.u32 %v4326, 7
    %v4328 = vsub.s32 %v4325, %v4327
    %v4329 = vrot.slane %v4321, %v4328
    %v4331 = vunpack.c.l.s4 1983009808
    %v4332 = vunpack.c.0.s8 %v4331
    %v4333 = vlaneseq
    %v4334 = vshrl.u32 %v4333, 7
    %v4335 = vsub.s32 %v4332, %v4334
    %v4336 = vrot.slane %v4322, %v4335
    %v4337 = vcombine.low %v4304, %v4316
    %v4338 = vcombine.high %v4304, %v4316
    %v4340 = vunpack.c.l.s4 1983009808
    %v4341 = vunpack.c.0.s8 %v4340
    %v4342 = vlaneseq
    %v4343 = vshrl.u32 %v4342, 7
    %v4344 = vsub.s32 %v4341, %v4343
    %v4345 = vrot.slane %v4337, %v4344
    %v4347 = vunpack.c.l.s4 1983009808
    %v4348 = vunpack.c.0.s8 %v4347
    %v4349 = vlaneseq
    %v4350 = vshrl.u32 %v4349, 7
    %v4351 = vsub.s32 %v4348, %v4350
    %v4352 = vrot.slane %v4338, %v4351
    %v4353 = vcombine.low %v4329, %v4345
    %v4354 = vcombine.high %v4329, %v4345
    %v4356 = vunpack.c.l.s4 1934713408
    %v4357 = vunpack.c.0.s8 %v4356
    %v4358 = vlaneseq
    %v4359 = vshrl.u32 %v4358, 7
    %v4360 = vsub.s32 %v4357, %v4359
    %v4361 = vrot.slane %v4353, %v4360
    %v4363 = vunpack.c.l.s4 1934713408
    %v4364 = vunpack.c.0.s8 %v4363
    %v4365 = vlaneseq
    %v4366 = vshrl.u32 %v4365, 7
    %v4367 = vsub.s32 %v4364, %v4366
    %v4368 = vrot.slane %v4354, %v4367
    %v4369 = vcombine.low %v4336, %v4352
    %v4370 = vcombine.high %v4336, %v4352
    %v4372 = vunpack.c.l.s4 1934713408
    %v4373 = vunpack.c.0.s8 %v4372
    %v4374 = vlaneseq
    %v4375 = vshrl.u32 %v4374, 7
    %v4376 = vsub.s32 %v4373, %v4375
    %v4377 = vrot.slane %v4369, %v4376
    %v4379 = vunpack.c.l.s4 1934713408
    %v4380 = vunpack.c.0.s8 %v4379
    %v4381 = vlaneseq
    %v4382 = vshrl.u32 %v4381, 7
    %v4383 = vsub.s32 %v4380, %v4382
    %v4384 = vrot.slane %v4370, %v4383
    %v4385 = vcombine.high %v4361, 0.0
    %v4386 = vcombine.high %v4368, 0.0
    %v4387 = vcombine.high %v4377, 0.0
    %v4388 = vcombine.high %v4384, 0.0
    %v4389 = vcombine.low %v4070, %v4312
    %v4390 = vcombine.high %v4070, %v4312
    %v4392 = vunpack.c.l.s4 1983009808
    %v4393 = vunpack.c.0.s8 %v4392
    %v4394 = vlaneseq
    %v4395 = vshrl.u32 %v4394, 7
    %v4396 = vsub.s32 %v4393, %v4395
    %v4397 = vrot.slane %v4389, %v4396
    %v4399 = vunpack.c.l.s4 1983009808
    %v4400 = vunpack.c.0.s8 %v4399
    %v4401 = vlaneseq
    %v4402 = vshrl.u32 %v4401, 7
    %v4403 = vsub.s32 %v4400, %v4402
    %v4404 = vrot.slane %v4390, %v4403
    %v4405 = vcombine.low %v4306, %v4318
    %v4406 = vcombine.high %v4306, %v4318
    %v4408 = vunpack.c.l.s4 1983009808
    %v4409 = vunpack.c.0.s8 %v4408
    %v4410 = vlaneseq
    %v4411 = vshrl.u32 %v4410, 7
    %v4412 = vsub.s32 %v4409, %v4411
    %v4413 = vrot.slane %v4405, %v4412
    %v4415 = vunpack.c.l.s4 1983009808
    %v4416 = vunpack.c.0.s8 %v4415
    %v4417 = vlaneseq
    %v4418 = vshrl.u32 %v4417, 7
    %v4419 = vsub.s32 %v4416, %v4418
    %v4420 = vrot.slane %v4406, %v4419
    %v4421 = vcombine.low %v4397, %v4413
    %v4422 = vcombine.high %v4397, %v4413
    %v4424 = vunpack.c.l.s4 1934713408
    %v4425 = vunpack.c.0.s8 %v4424
    %v4426 = vlaneseq
    %v4427 = vshrl.u32 %v4426, 7
    %v4428 = vsub.s32 %v4425, %v4427
    %v4429 = vrot.slane %v4421, %v4428
    %v4431 = vunpack.c.l.s4 1934713408
    %v4432 = vunpack.c.0.s8 %v4431
    %v4433 = vlaneseq
    %v4434 = vshrl.u32 %v4433, 7
    %v4435 = vsub.s32 %v4432, %v4434
    %v4436 = vrot.slane %v4422, %v4435
    %v4437 = vcombine.low %v4404, %v4420
    %v4438 = vcombine.high %v4404, %v4420
    %v4440 = vunpack.c.l.s4 1934713408
    %v4441 = vunpack.c.0.s8 %v4440
    %v4442 = vlaneseq
    %v4443 = vshrl.u32 %v4442, 7
    %v4444 = vsub.s32 %v4441, %v4443
    %v4445 = vrot.slane %v4437, %v4444
    %v4447 = vunpack.c.l.s4 1934713408
    %v4448 = vunpack.c.0.s8 %v4447
    %v4449 = vlaneseq
    %v4450 = vshrl.u32 %v4449, 7
    %v4451 = vsub.s32 %v4448, %v4450
    %v4452 = vrot.slane %v4438, %v4451
    %v4453 = vcombine.high %v4429, 0.0
    %v4454 = vcombine.high %v4436, 0.0
    %v4455 = vcombine.high %v4445, 0.0
    %v4456 = vcombine.high %v4452, 0.0
    %v4457 = vcombine.low %v4361, %v4368
    %v4459 = vunpack.c.l.s4 1983009808
    %v4460 = vunpack.c.0.s8 %v4459
    %v4461 = vlaneseq
    %v4462 = vshrl.u32 %v4461, 7
    %v4463 = vsub.s32 %v4460, %v4462
    %v4464 = vrot.slane %v4457, %v4463
    %v4465 = vcombine.low %v4385, %v4386
    %v4467 = vunpack.c.l.s4 1983009808
    %v4468 = vunpack.c.0.s8 %v4467
    %v4469 = vlaneseq
    %v4470 = vshrl.u32 %v4469, 7
    %v4471 = vsub.s32 %v4468, %v4470
    %v4472 = vrot.slane %v4465, %v4471
    %v4473 = vcombine.low %v4377, %v4384
    %v4475 = vunpack.c.l.s4 1983009808
    %v4476 = vunpack.c.0.s8 %v4475
    %v4477 = vlaneseq
    %v4478 = vshrl.u32 %v4477, 7
    %v4479 = vsub.s32 %v4476, %v4478
    %v4480 = vrot.slane %v4473, %v4479
    %v4481 = vcombine.low %v4387, %v4388
    %v4483 = vunpack.c.l.s4 1983009808
    %v4484 = vunpack.c.0.s8 %v4483
    %v4485 = vlaneseq
    %v4486 = vshrl.u32 %v4485, 7
    %v4487 = vsub.s32 %v4484, %v4486
    %v4488 = vrot.slane %v4481, %v4487
    %v4489 = vcombine.low %v4464, %v4472
    %v4490 = vcombine.high %v4464, %v4472
    %v4492 = vunpack.c.l.s4 1934713408
    %v4493 = vunpack.c.0.s8 %v4492
    %v4494 = vlaneseq
    %v4495 = vshrl.u32 %v4494, 7
    %v4496 = vsub.s32 %v4493, %v4495
    %v4497 = vrot.slane %v4489, %v4496
    %v4499 = vunpack.c.l.s4 1934713408
    %v4500 = vunpack.c.0.s8 %v4499
    %v4501 = vlaneseq
    %v4502 = vshrl.u32 %v4501, 7
    %v4503 = vsub.s32 %v4500, %v4502
    %v4504 = vrot.slane %v4490, %v4503
    %v4505 = vcombine.low %v4480, %v4488
    %v4506 = vcombine.high %v4480, %v4488
    %v4508 = vunpack.c.l.s4 1934713408
    %v4509 = vunpack.c.0.s8 %v4508
    %v4510 = vlaneseq
    %v4511 = vshrl.u32 %v4510, 7
    %v4512 = vsub.s32 %v4509, %v4511
    %v4513 = vrot.slane %v4505, %v4512
    %v4515 = vunpack.c.l.s4 1934713408
    %v4516 = vunpack.c.0.s8 %v4515
    %v4517 = vlaneseq
    %v4518 = vshrl.u32 %v4517, 7
    %v4519 = vsub.s32 %v4516, %v4518
    %v4520 = vrot.slane %v4506, %v4519
    %v4521 = vcombine.low %v4497, %v4513
    %v4522 = vcombine.high %v4497, %v4513
    %v4523 = vcombine.low %v4504, %v4520
    %v4524 = vcombine.high %v4504, %v4520
    %v4525 = vcombine.low %v4429, %v4436
    %v4527 = vunpack.c.l.s4 1983009808
    %v4528 = vunpack.c.0.s8 %v4527
    %v4529 = vlaneseq
    %v4530 = vshrl.u32 %v4529, 7
    %v4531 = vsub.s32 %v4528, %v4530
    %v4532 = vrot.slane %v4525, %v4531
    %v4533 = vcombine.low %v4453, %v4454
    %v4535 = vunpack.c.l.s4 1983009808
    %v4536 = vunpack.c.0.s8 %v4535
    %v4537 = vlaneseq
    %v4538 = vshrl.u32 %v4537, 7
    %v4539 = vsub.s32 %v4536, %v4538
    %v4540 = vrot.slane %v4533, %v4539
    %v4541 = vcombine.low %v4445, %v4452
    %v4543 = vunpack.c.l.s4 1983009808
    %v4544 = vunpack.c.0.s8 %v4543
    %v4545 = vlaneseq
    %v4546 = vshrl.u32 %v4545, 7
    %v4547 = vsub.s32 %v4544, %v4546
    %v4548 = vrot.slane %v4541, %v4547
    %v4549 = vcombine.low %v4455, %v4456
    %v4551 = vunpack.c.l.s4 1983009808
    %v4552 = vunpack.c.0.s8 %v4551
    %v4553 = vlaneseq
    %v4554 = vshrl.u32 %v4553, 7
    %v4555 = vsub.s32 %v4552, %v4554
    %v4556 = vrot.slane %v4549, %v4555
    %v4557 = vcombine.low %v4532, %v4540
    %v4558 = vcombine.high %v4532, %v4540
    %v4560 = vunpack.c.l.s4 1934713408
    %v4561 = vunpack.c.0.s8 %v4560
    %v4562 = vlaneseq
    %v4563 = vshrl.u32 %v4562, 7
    %v4564 = vsub.s32 %v4561, %v4563
    %v4565 = vrot.slane %v4557, %v4564
    %v4567 = vunpack.c.l.s4 1934713408
    %v4568 = vunpack.c.0.s8 %v4567
    %v4569 = vlaneseq
    %v4570 = vshrl.u32 %v4569, 7
    %v4571 = vsub.s32 %v4568, %v4570
    %v4572 = vrot.slane %v4558, %v4571
    %v4573 = vcombine.low %v4548, %v4556
    %v4574 = vcombine.high %v4548, %v4556
    %v4576 = vunpack.c.l.s4 1934713408
    %v4577 = vunpack.c.0.s8 %v4576
    %v4578 = vlaneseq
    %v4579 = vshrl.u32 %v4578, 7
    %v4580 = vsub.s32 %v4577, %v4579
    %v4581 = vrot.slane %v4573, %v4580
    %v4583 = vunpack.c.l.s4 1934713408
    %v4584 = vunpack.c.0.s8 %v4583
    %v4585 = vlaneseq
    %v4586 = vshrl.u32 %v4585, 7
    %v4587 = vsub.s32 %v4584, %v4586
    %v4588 = vrot.slane %v4574, %v4587
    %v4589 = vcombine.low %v4565, %v4581
    %v4590 = vcombine.high %v4565, %v4581
    %v4591 = vcombine.low %v4572, %v4588
    %v4592 = vcombine.high %v4572, %v4588
    %v4593 = vpack.c.bf16 %v4521, %v4521
    %v4594 = vpack.c.bf16 %v4522, %v4522
    %v4595 = vpack.c.bf16 %v4523, %v4523
    %v4596 = vpack.c.bf16 %v4524, %v4524
    %v4597 = vpack.c.bf16 %v4589, %v4589
    %v4598 = vpack.c.bf16 %v4590, %v4590
    %v4599 = vpack.c.bf16 %v4591, %v4591
    %v4600 = vpack.c.bf16 %v4592, %v4592
    %4603 = vrot.lane.b32.xlu0 %v4181, 96
    %v4604 = vpop.permute.xlu0 %4603
    %4605 = vrot.lane.b32.xlu0 %v4184, 96
    %v4606 = vpop.permute.xlu0 %4605
    %4609 = vrot.lane.b32.xlu0 %v4181, 64
    %v4610 = vpop.permute.xlu0 %4609
    %4611 = vrot.lane.b32.xlu0 %v4184, 64
    %v4612 = vpop.permute.xlu0 %4611
    %4615 = vrot.lane.b32.xlu0 %v4181, 32
    %v4616 = vpop.permute.xlu0 %4615
    %4617 = vrot.lane.b32.xlu0 %v4184, 32
    %v4618 = vpop.permute.xlu0 %4617
    %v4621 = vcombine.low %v4181, %v4610
    %v4622 = vcombine.high %v4181, %v4610
    %v4624 = vunpack.c.l.s4 1983009808
    %v4625 = vunpack.c.0.s8 %v4624
    %v4626 = vlaneseq
    %v4627 = vshrl.u32 %v4626, 7
    %v4628 = vsub.s32 %v4625, %v4627
    %v4629 = vrot.slane %v4621, %v4628
    %v4631 = vunpack.c.l.s4 1983009808
    %v4632 = vunpack.c.0.s8 %v4631
    %v4633 = vlaneseq
    %v4634 = vshrl.u32 %v4633, 7
    %v4635 = vsub.s32 %v4632, %v4634
    %v4636 = vrot.slane %v4622, %v4635
    %v4637 = vcombine.low %v4604, %v4616
    %v4638 = vcombine.high %v4604, %v4616
    %v4640 = vunpack.c.l.s4 1983009808
    %v4641 = vunpack.c.0.s8 %v4640
    %v4642 = vlaneseq
    %v4643 = vshrl.u32 %v4642, 7
    %v4644 = vsub.s32 %v4641, %v4643
    %v4645 = vrot.slane %v4637, %v4644
    %v4647 = vunpack.c.l.s4 1983009808
    %v4648 = vunpack.c.0.s8 %v4647
    %v4649 = vlaneseq
    %v4650 = vshrl.u32 %v4649, 7
    %v4651 = vsub.s32 %v4648, %v4650
    %v4652 = vrot.slane %v4638, %v4651
    %v4653 = vcombine.low %v4629, %v4645
    %v4654 = vcombine.high %v4629, %v4645
    %v4656 = vunpack.c.l.s4 1934713408
    %v4657 = vunpack.c.0.s8 %v4656
    %v4658 = vlaneseq
    %v4659 = vshrl.u32 %v4658, 7
    %v4660 = vsub.s32 %v4657, %v4659
    %v4661 = vrot.slane %v4653, %v4660
    %v4663 = vunpack.c.l.s4 1934713408
    %v4664 = vunpack.c.0.s8 %v4663
    %v4665 = vlaneseq
    %v4666 = vshrl.u32 %v4665, 7
    %v4667 = vsub.s32 %v4664, %v4666
    %v4668 = vrot.slane %v4654, %v4667
    %v4669 = vcombine.low %v4636, %v4652
    %v4670 = vcombine.high %v4636, %v4652
    %v4672 = vunpack.c.l.s4 1934713408
    %v4673 = vunpack.c.0.s8 %v4672
    %v4674 = vlaneseq
    %v4675 = vshrl.u32 %v4674, 7
    %v4676 = vsub.s32 %v4673, %v4675
    %v4677 = vrot.slane %v4669, %v4676
    %v4679 = vunpack.c.l.s4 1934713408
    %v4680 = vunpack.c.0.s8 %v4679
    %v4681 = vlaneseq
    %v4682 = vshrl.u32 %v4681, 7
    %v4683 = vsub.s32 %v4680, %v4682
    %v4684 = vrot.slane %v4670, %v4683
    %v4685 = vcombine.high %v4661, 0.0
    %v4686 = vcombine.high %v4668, 0.0
    %v4687 = vcombine.high %v4677, 0.0
    %v4688 = vcombine.high %v4684, 0.0
    %v4689 = vcombine.low %v4184, %v4612
    %v4690 = vcombine.high %v4184, %v4612
    %v4692 = vunpack.c.l.s4 1983009808
    %v4693 = vunpack.c.0.s8 %v4692
    %v4694 = vlaneseq
    %v4695 = vshrl.u32 %v4694, 7
    %v4696 = vsub.s32 %v4693, %v4695
    %v4697 = vrot.slane %v4689, %v4696
    %v4699 = vunpack.c.l.s4 1983009808
    %v4700 = vunpack.c.0.s8 %v4699
    %v4701 = vlaneseq
    %v4702 = vshrl.u32 %v4701, 7
    %v4703 = vsub.s32 %v4700, %v4702
    %v4704 = vrot.slane %v4690, %v4703
    %v4705 = vcombine.low %v4606, %v4618
    %v4706 = vcombine.high %v4606, %v4618
    %v4708 = vunpack.c.l.s4 1983009808
    %v4709 = vunpack.c.0.s8 %v4708
    %v4710 = vlaneseq
    %v4711 = vshrl.u32 %v4710, 7
    %v4712 = vsub.s32 %v4709, %v4711
    %v4713 = vrot.slane %v4705, %v4712
    %v4715 = vunpack.c.l.s4 1983009808
    %v4716 = vunpack.c.0.s8 %v4715
    %v4717 = vlaneseq
    %v4718 = vshrl.u32 %v4717, 7
    %v4719 = vsub.s32 %v4716, %v4718
    %v4720 = vrot.slane %v4706, %v4719
    %v4721 = vcombine.low %v4697, %v4713
    %v4722 = vcombine.high %v4697, %v4713
    %v4724 = vunpack.c.l.s4 1934713408
    %v4725 = vunpack.c.0.s8 %v4724
    %v4726 = vlaneseq
    %v4727 = vshrl.u32 %v4726, 7
    %v4728 = vsub.s32 %v4725, %v4727
    %v4729 = vrot.slane %v4721, %v4728
    %v4731 = vunpack.c.l.s4 1934713408
    %v4732 = vunpack.c.0.s8 %v4731
    %v4733 = vlaneseq
    %v4734 = vshrl.u32 %v4733, 7
    %v4735 = vsub.s32 %v4732, %v4734
    %v4736 = vrot.slane %v4722, %v4735
    %v4737 = vcombine.low %v4704, %v4720
    %v4738 = vcombine.high %v4704, %v4720
    %v4740 = vunpack.c.l.s4 1934713408
    %v4741 = vunpack.c.0.s8 %v4740
    %v4742 = vlaneseq
    %v4743 = vshrl.u32 %v4742, 7
    %v4744 = vsub.s32 %v4741, %v4743
    %v4745 = vrot.slane %v4737, %v4744
    %v4747 = vunpack.c.l.s4 1934713408
    %v4748 = vunpack.c.0.s8 %v4747
    %v4749 = vlaneseq
    %v4750 = vshrl.u32 %v4749, 7
    %v4751 = vsub.s32 %v4748, %v4750
    %v4752 = vrot.slane %v4738, %v4751
    %v4753 = vcombine.high %v4729, 0.0
    %v4754 = vcombine.high %v4736, 0.0
    %v4755 = vcombine.high %v4745, 0.0
    %v4756 = vcombine.high %v4752, 0.0
    %v4757 = vcombine.low %v4661, %v4668
    %v4759 = vunpack.c.l.s4 1983009808
    %v4760 = vunpack.c.0.s8 %v4759
    %v4761 = vlaneseq
    %v4762 = vshrl.u32 %v4761, 7
    %v4763 = vsub.s32 %v4760, %v4762
    %v4764 = vrot.slane %v4757, %v4763
    %v4765 = vcombine.low %v4685, %v4686
    %v4767 = vunpack.c.l.s4 1983009808
    %v4768 = vunpack.c.0.s8 %v4767
    %v4769 = vlaneseq
    %v4770 = vshrl.u32 %v4769, 7
    %v4771 = vsub.s32 %v4768, %v4770
    %v4772 = vrot.slane %v4765, %v4771
    %v4773 = vcombine.low %v4677, %v4684
    %v4775 = vunpack.c.l.s4 1983009808
    %v4776 = vunpack.c.0.s8 %v4775
    %v4777 = vlaneseq
    %v4778 = vshrl.u32 %v4777, 7
    %v4779 = vsub.s32 %v4776, %v4778
    %v4780 = vrot.slane %v4773, %v4779
    %v4781 = vcombine.low %v4687, %v4688
    %v4783 = vunpack.c.l.s4 1983009808
    %v4784 = vunpack.c.0.s8 %v4783
    %v4785 = vlaneseq
    %v4786 = vshrl.u32 %v4785, 7
    %v4787 = vsub.s32 %v4784, %v4786
    %v4788 = vrot.slane %v4781, %v4787
    %v4789 = vcombine.low %v4764, %v4772
    %v4790 = vcombine.high %v4764, %v4772
    %v4792 = vunpack.c.l.s4 1934713408
    %v4793 = vunpack.c.0.s8 %v4792
    %v4794 = vlaneseq
    %v4795 = vshrl.u32 %v4794, 7
    %v4796 = vsub.s32 %v4793, %v4795
    %v4797 = vrot.slane %v4789, %v4796
    %v4799 = vunpack.c.l.s4 1934713408
    %v4800 = vunpack.c.0.s8 %v4799
    %v4801 = vlaneseq
    %v4802 = vshrl.u32 %v4801, 7
    %v4803 = vsub.s32 %v4800, %v4802
    %v4804 = vrot.slane %v4790, %v4803
    %v4805 = vcombine.low %v4780, %v4788
    %v4806 = vcombine.high %v4780, %v4788
    %v4808 = vunpack.c.l.s4 1934713408
    %v4809 = vunpack.c.0.s8 %v4808
    %v4810 = vlaneseq
    %v4811 = vshrl.u32 %v4810, 7
    %v4812 = vsub.s32 %v4809, %v4811
    %v4813 = vrot.slane %v4805, %v4812
    %v4815 = vunpack.c.l.s4 1934713408
    %v4816 = vunpack.c.0.s8 %v4815
    %v4817 = vlaneseq
    %v4818 = vshrl.u32 %v4817, 7
    %v4819 = vsub.s32 %v4816, %v4818
    %v4820 = vrot.slane %v4806, %v4819
    %v4821 = vcombine.low %v4797, %v4813
    %v4822 = vcombine.high %v4797, %v4813
    %v4823 = vcombine.low %v4804, %v4820
    %v4824 = vcombine.high %v4804, %v4820
    %v4825 = vcombine.low %v4729, %v4736
    %v4827 = vunpack.c.l.s4 1983009808
    %v4828 = vunpack.c.0.s8 %v4827
    %v4829 = vlaneseq
    %v4830 = vshrl.u32 %v4829, 7
    %v4831 = vsub.s32 %v4828, %v4830
    %v4832 = vrot.slane %v4825, %v4831
    %v4833 = vcombine.low %v4753, %v4754
    %v4835 = vunpack.c.l.s4 1983009808
    %v4836 = vunpack.c.0.s8 %v4835
    %v4837 = vlaneseq
    %v4838 = vshrl.u32 %v4837, 7
    %v4839 = vsub.s32 %v4836, %v4838
    %v4840 = vrot.slane %v4833, %v4839
    %v4841 = vcombine.low %v4745, %v4752
    %v4843 = vunpack.c.l.s4 1983009808
    %v4844 = vunpack.c.0.s8 %v4843
    %v4845 = vlaneseq
    %v4846 = vshrl.u32 %v4845, 7
    %v4847 = vsub.s32 %v4844, %v4846
    %v4848 = vrot.slane %v4841, %v4847
    %v4849 = vcombine.low %v4755, %v4756
    %v4851 = vunpack.c.l.s4 1983009808
    %v4852 = vunpack.c.0.s8 %v4851
    %v4853 = vlaneseq
    %v4854 = vshrl.u32 %v4853, 7
    %v4855 = vsub.s32 %v4852, %v4854
    %v4856 = vrot.slane %v4849, %v4855
    %v4857 = vcombine.low %v4832, %v4840
    %v4858 = vcombine.high %v4832, %v4840
    %v4860 = vunpack.c.l.s4 1934713408
    %v4861 = vunpack.c.0.s8 %v4860
    %v4862 = vlaneseq
    %v4863 = vshrl.u32 %v4862, 7
    %v4864 = vsub.s32 %v4861, %v4863
    %v4865 = vrot.slane %v4857, %v4864
    %v4867 = vunpack.c.l.s4 1934713408
    %v4868 = vunpack.c.0.s8 %v4867
    %v4869 = vlaneseq
    %v4870 = vshrl.u32 %v4869, 7
    %v4871 = vsub.s32 %v4868, %v4870
    %v4872 = vrot.slane %v4858, %v4871
    %v4873 = vcombine.low %v4848, %v4856
    %v4874 = vcombine.high %v4848, %v4856
    %v4876 = vunpack.c.l.s4 1934713408
    %v4877 = vunpack.c.0.s8 %v4876
    %v4878 = vlaneseq
    %v4879 = vshrl.u32 %v4878, 7
    %v4880 = vsub.s32 %v4877, %v4879
    %v4881 = vrot.slane %v4873, %v4880
    %v4883 = vunpack.c.l.s4 1934713408
    %v4884 = vunpack.c.0.s8 %v4883
    %v4885 = vlaneseq
    %v4886 = vshrl.u32 %v4885, 7
    %v4887 = vsub.s32 %v4884, %v4886
    %v4888 = vrot.slane %v4874, %v4887
    %v4889 = vcombine.low %v4865, %v4881
    %v4890 = vcombine.high %v4865, %v4881
    %v4891 = vcombine.low %v4872, %v4888
    %v4892 = vcombine.high %v4872, %v4888
    %v4893 = vpack.c.bf16 %v4821, %v4821
    %v4894 = vpack.c.bf16 %v4822, %v4822
    %v4895 = vpack.c.bf16 %v4823, %v4823
    %v4896 = vpack.c.bf16 %v4824, %v4824
    %v4897 = vpack.c.bf16 %v4889, %v4889
    %v4898 = vpack.c.bf16 %v4890, %v4890
    %v4899 = vpack.c.bf16 %v4891, %v4891
    %v4900 = vpack.c.bf16 %v4892, %v4892
    %4903 = vrot.lane.b32.xlu0 %v4295, 96
    %v4904 = vpop.permute.xlu0 %4903
    %4905 = vrot.lane.b32.xlu0 %v4298, 96
    %v4906 = vpop.permute.xlu0 %4905
    %4909 = vrot.lane.b32.xlu0 %v4295, 64
    %v4910 = vpop.permute.xlu0 %4909
    %4911 = vrot.lane.b32.xlu0 %v4298, 64
    %v4912 = vpop.permute.xlu0 %4911
    %4915 = vrot.lane.b32.xlu0 %v4295, 32
    %v4916 = vpop.permute.xlu0 %4915
    %4917 = vrot.lane.b32.xlu0 %v4298, 32
    %v4918 = vpop.permute.xlu0 %4917
    %v4921 = vcombine.low %v4295, %v4910
    %v4922 = vcombine.high %v4295, %v4910
    %v4924 = vunpack.c.l.s4 1983009808
    %v4925 = vunpack.c.0.s8 %v4924
    %v4926 = vlaneseq
    %v4927 = vshrl.u32 %v4926, 7
    %v4928 = vsub.s32 %v4925, %v4927
    %v4929 = vrot.slane %v4921, %v4928
    %v4931 = vunpack.c.l.s4 1983009808
    %v4932 = vunpack.c.0.s8 %v4931
    %v4933 = vlaneseq
    %v4934 = vshrl.u32 %v4933, 7
    %v4935 = vsub.s32 %v4932, %v4934
    %v4936 = vrot.slane %v4922, %v4935
    %v4937 = vcombine.low %v4904, %v4916
    %v4938 = vcombine.high %v4904, %v4916
    %v4940 = vunpack.c.l.s4 1983009808
    %v4941 = vunpack.c.0.s8 %v4940
    %v4942 = vlaneseq
    %v4943 = vshrl.u32 %v4942, 7
    %v4944 = vsub.s32 %v4941, %v4943
    %v4945 = vrot.slane %v4937, %v4944
    %v4947 = vunpack.c.l.s4 1983009808
    %v4948 = vunpack.c.0.s8 %v4947
    %v4949 = vlaneseq
    %v4950 = vshrl.u32 %v4949, 7
    %v4951 = vsub.s32 %v4948, %v4950
    %v4952 = vrot.slane %v4938, %v4951
    %v4953 = vcombine.low %v4929, %v4945
    %v4954 = vcombine.high %v4929, %v4945
    %v4956 = vunpack.c.l.s4 1934713408
    %v4957 = vunpack.c.0.s8 %v4956
    %v4958 = vlaneseq
    %v4959 = vshrl.u32 %v4958, 7
    %v4960 = vsub.s32 %v4957, %v4959
    %v4961 = vrot.slane %v4953, %v4960
    %v4963 = vunpack.c.l.s4 1934713408
    %v4964 = vunpack.c.0.s8 %v4963
    %v4965 = vlaneseq
    %v4966 = vshrl.u32 %v4965, 7
    %v4967 = vsub.s32 %v4964, %v4966
    %v4968 = vrot.slane %v4954, %v4967
    %v4969 = vcombine.low %v4936, %v4952
    %v4970 = vcombine.high %v4936, %v4952
    %v4972 = vunpack.c.l.s4 1934713408
    %v4973 = vunpack.c.0.s8 %v4972
    %v4974 = vlaneseq
    %v4975 = vshrl.u32 %v4974, 7
    %v4976 = vsub.s32 %v4973, %v4975
    %v4977 = vrot.slane %v4969, %v4976
    %v4979 = vunpack.c.l.s4 1934713408
    %v4980 = vunpack.c.0.s8 %v4979
    %v4981 = vlaneseq
    %v4982 = vshrl.u32 %v4981, 7
    %v4983 = vsub.s32 %v4980, %v4982
    %v4984 = vrot.slane %v4970, %v4983
    %v4985 = vcombine.high %v4961, 0.0
    %v4986 = vcombine.high %v4968, 0.0
    %v4987 = vcombine.high %v4977, 0.0
    %v4988 = vcombine.high %v4984, 0.0
    %v4989 = vcombine.low %v4298, %v4912
    %v4990 = vcombine.high %v4298, %v4912
    %v4992 = vunpack.c.l.s4 1983009808
    %v4993 = vunpack.c.0.s8 %v4992
    %v4994 = vlaneseq
    %v4995 = vshrl.u32 %v4994, 7
    %v4996 = vsub.s32 %v4993, %v4995
    %v4997 = vrot.slane %v4989, %v4996
    %v4999 = vunpack.c.l.s4 1983009808
    %v5000 = vunpack.c.0.s8 %v4999
    %v5001 = vlaneseq
    %v5002 = vshrl.u32 %v5001, 7
    %v5003 = vsub.s32 %v5000, %v5002
    %v5004 = vrot.slane %v4990, %v5003
    %v5005 = vcombine.low %v4906, %v4918
    %v5006 = vcombine.high %v4906, %v4918
    %v5008 = vunpack.c.l.s4 1983009808
    %v5009 = vunpack.c.0.s8 %v5008
    %v5010 = vlaneseq
    %v5011 = vshrl.u32 %v5010, 7
    %v5012 = vsub.s32 %v5009, %v5011
    %v5013 = vrot.slane %v5005, %v5012
    %v5015 = vunpack.c.l.s4 1983009808
    %v5016 = vunpack.c.0.s8 %v5015
    %v5017 = vlaneseq
    %v5018 = vshrl.u32 %v5017, 7
    %v5019 = vsub.s32 %v5016, %v5018
    %v5020 = vrot.slane %v5006, %v5019
    %v5021 = vcombine.low %v4997, %v5013
    %v5022 = vcombine.high %v4997, %v5013
    %v5024 = vunpack.c.l.s4 1934713408
    %v5025 = vunpack.c.0.s8 %v5024
    %v5026 = vlaneseq
    %v5027 = vshrl.u32 %v5026, 7
    %v5028 = vsub.s32 %v5025, %v5027
    %v5029 = vrot.slane %v5021, %v5028
    %v5031 = vunpack.c.l.s4 1934713408
    %v5032 = vunpack.c.0.s8 %v5031
    %v5033 = vlaneseq
    %v5034 = vshrl.u32 %v5033, 7
    %v5035 = vsub.s32 %v5032, %v5034
    %v5036 = vrot.slane %v5022, %v5035
    %v5037 = vcombine.low %v5004, %v5020
    %v5038 = vcombine.high %v5004, %v5020
    %v5040 = vunpack.c.l.s4 1934713408
    %v5041 = vunpack.c.0.s8 %v5040
    %v5042 = vlaneseq
    %v5043 = vshrl.u32 %v5042, 7
    %v5044 = vsub.s32 %v5041, %v5043
    %v5045 = vrot.slane %v5037, %v5044
    %v5047 = vunpack.c.l.s4 1934713408
    %v5048 = vunpack.c.0.s8 %v5047
    %v5049 = vlaneseq
    %v5050 = vshrl.u32 %v5049, 7
    %v5051 = vsub.s32 %v5048, %v5050
    %v5052 = vrot.slane %v5038, %v5051
    %v5053 = vcombine.high %v5029, 0.0
    %v5054 = vcombine.high %v5036, 0.0
    %v5055 = vcombine.high %v5045, 0.0
    %v5056 = vcombine.high %v5052, 0.0
    %v5057 = vcombine.low %v4961, %v4968
    %v5059 = vunpack.c.l.s4 1983009808
    %v5060 = vunpack.c.0.s8 %v5059
    %v5061 = vlaneseq
    %v5062 = vshrl.u32 %v5061, 7
    %v5063 = vsub.s32 %v5060, %v5062
    %v5064 = vrot.slane %v5057, %v5063
    %v5065 = vcombine.low %v4985, %v4986
    %v5067 = vunpack.c.l.s4 1983009808
    %v5068 = vunpack.c.0.s8 %v5067
    %v5069 = vlaneseq
    %v5070 = vshrl.u32 %v5069, 7
    %v5071 = vsub.s32 %v5068, %v5070
    %v5072 = vrot.slane %v5065, %v5071
    %v5073 = vcombine.low %v4977, %v4984
    %v5075 = vunpack.c.l.s4 1983009808
    %v5076 = vunpack.c.0.s8 %v5075
    %v5077 = vlaneseq
    %v5078 = vshrl.u32 %v5077, 7
    %v5079 = vsub.s32 %v5076, %v5078
    %v5080 = vrot.slane %v5073, %v5079
    %v5081 = vcombine.low %v4987, %v4988
    %v5083 = vunpack.c.l.s4 1983009808
    %v5084 = vunpack.c.0.s8 %v5083
    %v5085 = vlaneseq
    %v5086 = vshrl.u32 %v5085, 7
    %v5087 = vsub.s32 %v5084, %v5086
    %v5088 = vrot.slane %v5081, %v5087
    %v5089 = vcombine.low %v5064, %v5072
    %v5090 = vcombine.high %v5064, %v5072
    %v5092 = vunpack.c.l.s4 1934713408
    %v5093 = vunpack.c.0.s8 %v5092
    %v5094 = vlaneseq
    %v5095 = vshrl.u32 %v5094, 7
    %v5096 = vsub.s32 %v5093, %v5095
    %v5097 = vrot.slane %v5089, %v5096
    %v5099 = vunpack.c.l.s4 1934713408
    %v5100 = vunpack.c.0.s8 %v5099
    %v5101 = vlaneseq
    %v5102 = vshrl.u32 %v5101, 7
    %v5103 = vsub.s32 %v5100, %v5102
    %v5104 = vrot.slane %v5090, %v5103
    %v5105 = vcombine.low %v5080, %v5088
    %v5106 = vcombine.high %v5080, %v5088
    %v5108 = vunpack.c.l.s4 1934713408
    %v5109 = vunpack.c.0.s8 %v5108
    %v5110 = vlaneseq
    %v5111 = vshrl.u32 %v5110, 7
    %v5112 = vsub.s32 %v5109, %v5111
    %v5113 = vrot.slane %v5105, %v5112
    %v5115 = vunpack.c.l.s4 1934713408
    %v5116 = vunpack.c.0.s8 %v5115
    %v5117 = vlaneseq
    %v5118 = vshrl.u32 %v5117, 7
    %v5119 = vsub.s32 %v5116, %v5118
    %v5120 = vrot.slane %v5106, %v5119
    %v5121 = vcombine.low %v5097, %v5113
    %v5122 = vcombine.high %v5097, %v5113
    %v5123 = vcombine.low %v5104, %v5120
    %v5124 = vcombine.high %v5104, %v5120
    %v5125 = vcombine.low %v5029, %v5036
    %v5127 = vunpack.c.l.s4 1983009808
    %v5128 = vunpack.c.0.s8 %v5127
    %v5129 = vlaneseq
    %v5130 = vshrl.u32 %v5129, 7
    %v5131 = vsub.s32 %v5128, %v5130
    %v5132 = vrot.slane %v5125, %v5131
    %v5133 = vcombine.low %v5053, %v5054
    %v5135 = vunpack.c.l.s4 1983009808
    %v5136 = vunpack.c.0.s8 %v5135
    %v5137 = vlaneseq
    %v5138 = vshrl.u32 %v5137, 7
    %v5139 = vsub.s32 %v5136, %v5138
    %v5140 = vrot.slane %v5133, %v5139
    %v5141 = vcombine.low %v5045, %v5052
    %v5143 = vunpack.c.l.s4 1983009808
    %v5144 = vunpack.c.0.s8 %v5143
    %v5145 = vlaneseq
    %v5146 = vshrl.u32 %v5145, 7
    %v5147 = vsub.s32 %v5144, %v5146
    %v5148 = vrot.slane %v5141, %v5147
    %v5149 = vcombine.low %v5055, %v5056
    %v5151 = vunpack.c.l.s4 1983009808
    %v5152 = vunpack.c.0.s8 %v5151
    %v5153 = vlaneseq
    %v5154 = vshrl.u32 %v5153, 7
    %v5155 = vsub.s32 %v5152, %v5154
    %v5156 = vrot.slane %v5149, %v5155
    %v5157 = vcombine.low %v5132, %v5140
    %v5158 = vcombine.high %v5132, %v5140
    %v5160 = vunpack.c.l.s4 1934713408
    %v5161 = vunpack.c.0.s8 %v5160
    %v5162 = vlaneseq
    %v5163 = vshrl.u32 %v5162, 7
    %v5164 = vsub.s32 %v5161, %v5163
    %v5165 = vrot.slane %v5157, %v5164
    %v5167 = vunpack.c.l.s4 1934713408
    %v5168 = vunpack.c.0.s8 %v5167
    %v5169 = vlaneseq
    %v5170 = vshrl.u32 %v5169, 7
    %v5171 = vsub.s32 %v5168, %v5170
    %v5172 = vrot.slane %v5158, %v5171
    %v5173 = vcombine.low %v5148, %v5156
    %v5174 = vcombine.high %v5148, %v5156
    %v5176 = vunpack.c.l.s4 1934713408
    %v5177 = vunpack.c.0.s8 %v5176
    %v5178 = vlaneseq
    %v5179 = vshrl.u32 %v5178, 7
    %v5180 = vsub.s32 %v5177, %v5179
    %v5181 = vrot.slane %v5173, %v5180
    %v5183 = vunpack.c.l.s4 1934713408
    %v5184 = vunpack.c.0.s8 %v5183
    %v5185 = vlaneseq
    %v5186 = vshrl.u32 %v5185, 7
    %v5187 = vsub.s32 %v5184, %v5186
    %v5188 = vrot.slane %v5174, %v5187
    %v5189 = vcombine.low %v5165, %v5181
    %v5190 = vcombine.high %v5165, %v5181
    %v5191 = vcombine.low %v5172, %v5188
    %v5192 = vcombine.high %v5172, %v5188
    %v5193 = vpack.c.bf16 %v5121, %v5121
    %v5194 = vpack.c.bf16 %v5122, %v5122
    %v5195 = vpack.c.bf16 %v5123, %v5123
    %v5196 = vpack.c.bf16 %v5124, %v5124
    %v5197 = vpack.c.bf16 %v5189, %v5189
    %v5198 = vpack.c.bf16 %v5190, %v5190
    %v5199 = vpack.c.bf16 %v5191, %v5191
    %v5200 = vpack.c.bf16 %v5192, %v5192
    %v5202 = vsel %vm787, %v4593, 0
    %v5205 = vsel %vm787, %v4893, 0
    %5207 = vmatprep.subr.bf16.mxu0 0
    %5208 = vmatpush1.bf16.xpose.msra.mxu0 %v5205
    %5209 = vmatprep.subr.bf16.mxu0 0
    %5210 = vmatpush1.bf16.xpose.msra.mxu0 0
    %5211 = vmatprep.subr.bf16.mxu0 0
    %5212 = vmatpush1.bf16.xpose.msra.mxu0 0
    %5213 = vmatprep.subr.bf16.mxu0 0
    %5214 = vmatpush1.bf16.xpose.msra.mxu0 0
    %5215 = vmatprep.subr.bf16.mxu0 0
    %5216 = vmatpush1.bf16.xpose.msra.mxu0 0
    %5217 = vmatprep.subr.bf16.mxu0 0
    %5218 = vmatpush1.bf16.xpose.msra.mxu0 0
    %5219 = vmatprep.subr.bf16.mxu0 0
    %5220 = vmatpush1.bf16.xpose.msra.mxu0 0
    %5221 = vmatprep.subr.bf16.mxu0 0
    %5222 = vmatpush1.bf16.xpose.msra.mxu0 0
    %5223 = vmatprep.subr.bf16.mxu0 0
    %5224 = vmatpush1.bf16.xpose.msra.mxu0 0
    %5225 = vmatprep.subr.bf16.mxu0 0
    %5226 = vmatpush1.bf16.xpose.msra.mxu0 0
    %5227 = vmatprep.subr.bf16.mxu0 0
    %5228 = vmatpush1.bf16.xpose.msra.mxu0 0
    %5229 = vmatprep.subr.bf16.mxu0 0
    %5230 = vmatpush1.bf16.xpose.msra.mxu0 0
    %5231 = vmatprep.subr.bf16.mxu0 0
    %5232 = vmatpush1.bf16.xpose.msra.mxu0 0
    %5233 = vmatprep.subr.bf16.mxu0 0
    %5234 = vmatpush1.bf16.xpose.msra.mxu0 0
    %5235 = vmatprep.subr.bf16.mxu0 0
    %5236 = vmatpush1.bf16.xpose.msra.mxu0 0
    %5237 = vmatprep.subr.bf16.mxu0 0
    %5238 = vmatpush1.bf16.xpose.msra.mxu0 0
    %5239 = vmatprep.mubr.bf16.mxu0 0
    %5240 = vmatmul.mubr.bf16.gmra.mrb[0].mxu0 %v5202
    %v5241 = vpop.f32.mrb[0].mxu0
    %v5242 = vadd.f32 0.0, %v5241
    %v5243 = vpop.f32.mrb[0].mxu0
    %v5244 = vpop.f32.mrb[0].mxu0
    %v5245 = vpop.f32.mrb[0].mxu0
    %5246 = vdwg.mxu0
    %v5248 = vsel %vm787, %v4594, 0
    %v5251 = vsel %vm787, %v4894, 0
    %5253 = vmatprep.subr.bf16.mxu0 0
    %5254 = vmatpush1.bf16.xpose.msra.mxu0 %v5251
    %5255 = vmatprep.subr.bf16.mxu0 0
    %5256 = vmatpush1.bf16.xpose.msra.mxu0 0
    %5257 = vmatprep.subr.bf16.mxu0 0
    %5258 = vmatpush1.bf16.xpose.msra.mxu0 0
    %5259 = vmatprep.subr.bf16.mxu0 0
    %5260 = vmatpush1.bf16.xpose.msra.mxu0 0
    %5261 = vmatprep.subr.bf16.mxu0 0
    %5262 = vmatpush1.bf16.xpose.msra.mxu0 0
    %5263 = vmatprep.subr.bf16.mxu0 0
    %5264 = vmatpush1.bf16.xpose.msra.mxu0 0
    %5265 = vmatprep.subr.bf16.mxu0 0
    %5266 = vmatpush1.bf16.xpose.msra.mxu0 0
    %5267 = vmatprep.subr.bf16.mxu0 0
    %5268 = vmatpush1.bf16.xpose.msra.mxu0 0
    %5269 = vmatprep.subr.bf16.mxu0 0
    %5270 = vmatpush1.bf16.xpose.msra.mxu0 0
    %5271 = vmatprep.subr.bf16.mxu0 0
    %5272 = vmatpush1.bf16.xpose.msra.mxu0 0
    %5273 = vmatprep.subr.bf16.mxu0 0
    %5274 = vmatpush1.bf16.xpose.msra.mxu0 0
    %5275 = vmatprep.subr.bf16.mxu0 0
    %5276 = vmatpush1.bf16.xpose.msra.mxu0 0
    %5277 = vmatprep.subr.bf16.mxu0 0
    %5278 = vmatpush1.bf16.xpose.msra.mxu0 0
    %5279 = vmatprep.subr.bf16.mxu0 0
    %5280 = vmatpush1.bf16.xpose.msra.mxu0 0
    %5281 = vmatprep.subr.bf16.mxu0 0
    %5282 = vmatpush1.bf16.xpose.msra.mxu0 0
    %5283 = vmatprep.subr.bf16.mxu0 0
    %5284 = vmatpush1.bf16.xpose.msra.mxu0 0
    %5285 = vmatprep.mubr.bf16.mxu0 0
    %5286 = vmatmul.mubr.bf16.gmra.mrb[0].mxu0 %v5248
    %v5287 = vpop.f32.mrb[0].mxu0
    %v5288 = vadd.f32 0.0, %v5287
    %v5289 = vpop.f32.mrb[0].mxu0
    %v5290 = vpop.f32.mrb[0].mxu0
    %v5291 = vpop.f32.mrb[0].mxu0
    %5292 = vdwg.mxu0
    %v5294 = vsel %vm787, %v4595, 0
    %v5297 = vsel %vm787, %v4895, 0
    %5299 = vmatprep.subr.bf16.mxu0 0
    %5300 = vmatpush1.bf16.xpose.msra.mxu0 %v5297
    %5301 = vmatprep.subr.bf16.mxu0 0
    %5302 = vmatpush1.bf16.xpose.msra.mxu0 0
    %5303 = vmatprep.subr.bf16.mxu0 0
    %5304 = vmatpush1.bf16.xpose.msra.mxu0 0
    %5305 = vmatprep.subr.bf16.mxu0 0
    %5306 = vmatpush1.bf16.xpose.msra.mxu0 0
    %5307 = vmatprep.subr.bf16.mxu0 0
    %5308 = vmatpush1.bf16.xpose.msra.mxu0 0
    %5309 = vmatprep.subr.bf16.mxu0 0
    %5310 = vmatpush1.bf16.xpose.msra.mxu0 0
    %5311 = vmatprep.subr.bf16.mxu0 0
    %5312 = vmatpush1.bf16.xpose.msra.mxu0 0
    %5313 = vmatprep.subr.bf16.mxu0 0
    %5314 = vmatpush1.bf16.xpose.msra.mxu0 0
    %5315 = vmatprep.subr.bf16.mxu0 0
    %5316 = vmatpush1.bf16.xpose.msra.mxu0 0
    %5317 = vmatprep.subr.bf16.mxu0 0
    %5318 = vmatpush1.bf16.xpose.msra.mxu0 0
    %5319 = vmatprep.subr.bf16.mxu0 0
    %5320 = vmatpush1.bf16.xpose.msra.mxu0 0
    %5321 = vmatprep.subr.bf16.mxu0 0
    %5322 = vmatpush1.bf16.xpose.msra.mxu0 0
    %5323 = vmatprep.subr.bf16.mxu0 0
    %5324 = vmatpush1.bf16.xpose.msra.mxu0 0
    %5325 = vmatprep.subr.bf16.mxu0 0
    %5326 = vmatpush1.bf16.xpose.msra.mxu0 0
    %5327 = vmatprep.subr.bf16.mxu0 0
    %5328 = vmatpush1.bf16.xpose.msra.mxu0 0
    %5329 = vmatprep.subr.bf16.mxu0 0
    %5330 = vmatpush1.bf16.xpose.msra.mxu0 0
    %5331 = vmatprep.mubr.bf16.mxu0 0
    %5332 = vmatmul.mubr.bf16.gmra.mrb[0].mxu0 %v5294
    %v5333 = vpop.f32.mrb[0].mxu0
    %v5334 = vadd.f32 0.0, %v5333
    %v5335 = vpop.f32.mrb[0].mxu0
    %v5336 = vpop.f32.mrb[0].mxu0
    %v5337 = vpop.f32.mrb[0].mxu0
    %5338 = vdwg.mxu0
    %v5340 = vsel %vm787, %v4596, 0
    %v5343 = vsel %vm787, %v4896, 0
    %5345 = vmatprep.subr.bf16.mxu0 0
    %5346 = vmatpush1.bf16.xpose.msra.mxu0 %v5343
    %5347 = vmatprep.subr.bf16.mxu0 0
    %5348 = vmatpush1.bf16.xpose.msra.mxu0 0
    %5349 = vmatprep.subr.bf16.mxu0 0
    %5350 = vmatpush1.bf16.xpose.msra.mxu0 0
    %5351 = vmatprep.subr.bf16.mxu0 0
    %5352 = vmatpush1.bf16.xpose.msra.mxu0 0
    %5353 = vmatprep.subr.bf16.mxu0 0
    %5354 = vmatpush1.bf16.xpose.msra.mxu0 0
    %5355 = vmatprep.subr.bf16.mxu0 0
    %5356 = vmatpush1.bf16.xpose.msra.mxu0 0
    %5357 = vmatprep.subr.bf16.mxu0 0
    %5358 = vmatpush1.bf16.xpose.msra.mxu0 0
    %5359 = vmatprep.subr.bf16.mxu0 0
    %5360 = vmatpush1.bf16.xpose.msra.mxu0 0
    %5361 = vmatprep.subr.bf16.mxu0 0
    %5362 = vmatpush1.bf16.xpose.msra.mxu0 0
    %5363 = vmatprep.subr.bf16.mxu0 0
    %5364 = vmatpush1.bf16.xpose.msra.mxu0 0
    %5365 = vmatprep.subr.bf16.mxu0 0
    %5366 = vmatpush1.bf16.xpose.msra.mxu0 0
    %5367 = vmatprep.subr.bf16.mxu0 0
    %5368 = vmatpush1.bf16.xpose.msra.mxu0 0
    %5369 = vmatprep.subr.bf16.mxu0 0
    %5370 = vmatpush1.bf16.xpose.msra.mxu0 0
    %5371 = vmatprep.subr.bf16.mxu0 0
    %5372 = vmatpush1.bf16.xpose.msra.mxu0 0
    %5373 = vmatprep.subr.bf16.mxu0 0
    %5374 = vmatpush1.bf16.xpose.msra.mxu0 0
    %5375 = vmatprep.subr.bf16.mxu0 0
    %5376 = vmatpush1.bf16.xpose.msra.mxu0 0
    %5377 = vmatprep.mubr.bf16.mxu0 0
    %5378 = vmatmul.mubr.bf16.gmra.mrb[0].mxu0 %v5340
    %v5379 = vpop.f32.mrb[0].mxu0
    %v5380 = vadd.f32 0.0, %v5379
    %v5381 = vpop.f32.mrb[0].mxu0
    %v5382 = vpop.f32.mrb[0].mxu0
    %v5383 = vpop.f32.mrb[0].mxu0
    %5384 = vdwg.mxu0
    %v5385 = vmul.f32 %v5242, 0.17677669
    %v5386 = vmul.f32 %v5288, 0.17677669
    %v5387 = vmul.f32 %v5334, 0.17677669
    %v5388 = vmul.f32 %v5380, 0.17677669
    %v5389 = vadd.f32 %v5385, %v989
    %v5390 = vadd.f32 %v5386, %v990
    %v5391 = vadd.f32 %v5387, %v991
    %v5392 = vadd.f32 %v5388, %v992
    %v5393 = vsel %vm2432, %v5389, -inf
    %5394 = vmax.xlane.f32.xlu0 %v5393
    %v5395 = vpop.xlane.xlu0 %5394
    %v5396 = vsel %vm2432, %v5390, -inf
    %5397 = vmax.xlane.f32.xlu0 %v5396
    %v5398 = vpop.xlane.xlu0 %5397
    %v5399 = vsel %vm2432, %v5391, -inf
    %5400 = vmax.xlane.f32.xlu0 %v5399
    %v5401 = vpop.xlane.xlu0 %5400
    %v5402 = vsel %vm2432, %v5392, -inf
    %5403 = vmax.xlane.f32.xlu0 %v5402
    %v5404 = vpop.xlane.xlu0 %5403
    %v5405 = vsub.f32 %v5389, %v5395
    %v5406 = vsub.f32 %v5390, %v5398
    %v5407 = vsub.f32 %v5391, %v5401
    %v5408 = vsub.f32 %v5392, %v5404
    %v5409 = vmul.f32 %v5405, 1.442695
    %v5410 = vpow.pop %v5409
    %v5411 = vmul.f32 %v5406, 1.442695
    %v5412 = vpow.pop %v5411
    %v5413 = vmul.f32 %v5407, 1.442695
    %v5414 = vpow.pop %v5413
    %v5415 = vmul.f32 %v5408, 1.442695
    %v5416 = vpow.pop %v5415
    %v5417 = vsel %vm2432, %v5410, 0.0
    %5418 = vadd.xlane.f32.xlu0 %v5417
    %v5419 = vpop.xlane.xlu0 %5418
    %v5420 = vsel %vm2432, %v5412, 0.0
    %5421 = vadd.xlane.f32.xlu0 %v5420
    %v5422 = vpop.xlane.xlu0 %5421
    %v5423 = vsel %vm2432, %v5414, 0.0
    %5424 = vadd.xlane.f32.xlu0 %v5423
    %v5425 = vpop.xlane.xlu0 %5424
    %v5426 = vsel %vm2432, %v5416, 0.0
    %5427 = vadd.xlane.f32.xlu0 %v5426
    %v5428 = vpop.xlane.xlu0 %5427
    %v5429 = vrcp.pop %v5419
    %v5430 = vrcp.pop %v5422
    %v5431 = vrcp.pop %v5425
    %v5432 = vrcp.pop %v5428
    %v5433 = vmul.f32 %v5410, %v5429
    %v5434 = vmul.f32 %v5412, %v5430
    %v5435 = vmul.f32 %v5414, %v5431
    %v5436 = vmul.f32 %v5416, %v5432
    %v5437 = vpack.c.bf16 %v5433, %v5433
    %v5438 = vpack.c.bf16 %v5434, %v5434
    %v5439 = vpack.c.bf16 %v5435, %v5435
    %v5440 = vpack.c.bf16 %v5436, %v5436
    %v5442 = vsel %vm2432, %v5437, 0
    %v5445 = vsel %vm2484, %v5193, 0
    %5447 = vmatprep.subr.bf16.mxu0 0
    %5448 = vmatpush1.bf16.msra.mxu0 %v5445
    %5449 = vmatprep.subr.bf16.mxu0 0
    %5450 = vmatpush1.bf16.msra.mxu0 0
    %5451 = vmatprep.subr.bf16.mxu0 0
    %5452 = vmatpush1.bf16.msra.mxu0 0
    %5453 = vmatprep.subr.bf16.mxu0 0
    %5454 = vmatpush1.bf16.msra.mxu0 0
    %5455 = vmatprep.subr.bf16.mxu0 0
    %5456 = vmatpush1.bf16.msra.mxu0 0
    %5457 = vmatprep.subr.bf16.mxu0 0
    %5458 = vmatpush1.bf16.msra.mxu0 0
    %5459 = vmatprep.subr.bf16.mxu0 0
    %5460 = vmatpush1.bf16.msra.mxu0 0
    %5461 = vmatprep.subr.bf16.mxu0 0
    %5462 = vmatpush1.bf16.msra.mxu0 0
    %5463 = vmatprep.subr.bf16.mxu0 0
    %5464 = vmatpush1.bf16.msra.mxu0 0
    %5465 = vmatprep.subr.bf16.mxu0 0
    %5466 = vmatpush1.bf16.msra.mxu0 0
    %5467 = vmatprep.subr.bf16.mxu0 0
    %5468 = vmatpush1.bf16.msra.mxu0 0
    %5469 = vmatprep.subr.bf16.mxu0 0
    %5470 = vmatpush1.bf16.msra.mxu0 0
    %5471 = vmatprep.subr.bf16.mxu0 0
    %5472 = vmatpush1.bf16.msra.mxu0 0
    %5473 = vmatprep.subr.bf16.mxu0 0
    %5474 = vmatpush1.bf16.msra.mxu0 0
    %5475 = vmatprep.subr.bf16.mxu0 0
    %5476 = vmatpush1.bf16.msra.mxu0 0
    %5477 = vmatprep.subr.bf16.mxu0 0
    %5478 = vmatpush1.bf16.msra.mxu0 0
    %5479 = vmatprep.mubr.bf16.mxu0 0
    %5480 = vmatmul.mubr.bf16.gmra.mrb[0].mxu0 %v5442
    %v5481 = vpop.f32.mrb[0].mxu0
    %v5482 = vadd.f32 0.0, %v5481
    %v5483 = vpop.f32.mrb[0].mxu0
    %v5484 = vpop.f32.mrb[0].mxu0
    %v5485 = vpop.f32.mrb[0].mxu0
    %5486 = vdwg.mxu0
    %v5488 = vsel %vm2432, %v5438, 0
    %v5491 = vsel %vm2484, %v5194, 0
    %5493 = vmatprep.subr.bf16.mxu0 0
    %5494 = vmatpush1.bf16.msra.mxu0 %v5491
    %5495 = vmatprep.subr.bf16.mxu0 0
    %5496 = vmatpush1.bf16.msra.mxu0 0
    %5497 = vmatprep.subr.bf16.mxu0 0
    %5498 = vmatpush1.bf16.msra.mxu0 0
    %5499 = vmatprep.subr.bf16.mxu0 0
    %5500 = vmatpush1.bf16.msra.mxu0 0
    %5501 = vmatprep.subr.bf16.mxu0 0
    %5502 = vmatpush1.bf16.msra.mxu0 0
    %5503 = vmatprep.subr.bf16.mxu0 0
    %5504 = vmatpush1.bf16.msra.mxu0 0
    %5505 = vmatprep.subr.bf16.mxu0 0
    %5506 = vmatpush1.bf16.msra.mxu0 0
    %5507 = vmatprep.subr.bf16.mxu0 0
    %5508 = vmatpush1.bf16.msra.mxu0 0
    %5509 = vmatprep.subr.bf16.mxu0 0
    %5510 = vmatpush1.bf16.msra.mxu0 0
    %5511 = vmatprep.subr.bf16.mxu0 0
    %5512 = vmatpush1.bf16.msra.mxu0 0
    %5513 = vmatprep.subr.bf16.mxu0 0
    %5514 = vmatpush1.bf16.msra.mxu0 0
    %5515 = vmatprep.subr.bf16.mxu0 0
    %5516 = vmatpush1.bf16.msra.mxu0 0
    %5517 = vmatprep.subr.bf16.mxu0 0
    %5518 = vmatpush1.bf16.msra.mxu0 0
    %5519 = vmatprep.subr.bf16.mxu0 0
    %5520 = vmatpush1.bf16.msra.mxu0 0
    %5521 = vmatprep.subr.bf16.mxu0 0
    %5522 = vmatpush1.bf16.msra.mxu0 0
    %5523 = vmatprep.subr.bf16.mxu0 0
    %5524 = vmatpush1.bf16.msra.mxu0 0
    %5525 = vmatprep.mubr.bf16.mxu0 0
    %5526 = vmatmul.mubr.bf16.gmra.mrb[0].mxu0 %v5488
    %v5527 = vpop.f32.mrb[0].mxu0
    %v5528 = vadd.f32 0.0, %v5527
    %v5529 = vpop.f32.mrb[0].mxu0
    %v5530 = vpop.f32.mrb[0].mxu0
    %v5531 = vpop.f32.mrb[0].mxu0
    %5532 = vdwg.mxu0
    %v5534 = vsel %vm2432, %v5439, 0
    %v5537 = vsel %vm2484, %v5195, 0
    %5539 = vmatprep.subr.bf16.mxu0 0
    %5540 = vmatpush1.bf16.msra.mxu0 %v5537
    %5541 = vmatprep.subr.bf16.mxu0 0
    %5542 = vmatpush1.bf16.msra.mxu0 0
    %5543 = vmatprep.subr.bf16.mxu0 0
    %5544 = vmatpush1.bf16.msra.mxu0 0
    %5545 = vmatprep.subr.bf16.mxu0 0
    %5546 = vmatpush1.bf16.msra.mxu0 0
    %5547 = vmatprep.subr.bf16.mxu0 0
    %5548 = vmatpush1.bf16.msra.mxu0 0
    %5549 = vmatprep.subr.bf16.mxu0 0
    %5550 = vmatpush1.bf16.msra.mxu0 0
    %5551 = vmatprep.subr.bf16.mxu0 0
    %5552 = vmatpush1.bf16.msra.mxu0 0
    %5553 = vmatprep.subr.bf16.mxu0 0
    %5554 = vmatpush1.bf16.msra.mxu0 0
    %5555 = vmatprep.subr.bf16.mxu0 0
    %5556 = vmatpush1.bf16.msra.mxu0 0
    %5557 = vmatprep.subr.bf16.mxu0 0
    %5558 = vmatpush1.bf16.msra.mxu0 0
    %5559 = vmatprep.subr.bf16.mxu0 0
    %5560 = vmatpush1.bf16.msra.mxu0 0
    %5561 = vmatprep.subr.bf16.mxu0 0
    %5562 = vmatpush1.bf16.msra.mxu0 0
    %5563 = vmatprep.subr.bf16.mxu0 0
    %5564 = vmatpush1.bf16.msra.mxu0 0
    %5565 = vmatprep.subr.bf16.mxu0 0
    %5566 = vmatpush1.bf16.msra.mxu0 0
    %5567 = vmatprep.subr.bf16.mxu0 0
    %5568 = vmatpush1.bf16.msra.mxu0 0
    %5569 = vmatprep.subr.bf16.mxu0 0
    %5570 = vmatpush1.bf16.msra.mxu0 0
    %5571 = vmatprep.mubr.bf16.mxu0 0
    %5572 = vmatmul.mubr.bf16.gmra.mrb[0].mxu0 %v5534
    %v5573 = vpop.f32.mrb[0].mxu0
    %v5574 = vadd.f32 0.0, %v5573
    %v5575 = vpop.f32.mrb[0].mxu0
    %v5576 = vpop.f32.mrb[0].mxu0
    %v5577 = vpop.f32.mrb[0].mxu0
    %5578 = vdwg.mxu0
    %v5580 = vsel %vm2432, %v5440, 0
    %v5583 = vsel %vm2484, %v5196, 0
    %5585 = vmatprep.subr.bf16.mxu0 0
    %5586 = vmatpush1.bf16.msra.mxu0 %v5583
    %5587 = vmatprep.subr.bf16.mxu0 0
    %5588 = vmatpush1.bf16.msra.mxu0 0
    %5589 = vmatprep.subr.bf16.mxu0 0
    %5590 = vmatpush1.bf16.msra.mxu0 0
    %5591 = vmatprep.subr.bf16.mxu0 0
    %5592 = vmatpush1.bf16.msra.mxu0 0
    %5593 = vmatprep.subr.bf16.mxu0 0
    %5594 = vmatpush1.bf16.msra.mxu0 0
    %5595 = vmatprep.subr.bf16.mxu0 0
    %5596 = vmatpush1.bf16.msra.mxu0 0
    %5597 = vmatprep.subr.bf16.mxu0 0
    %5598 = vmatpush1.bf16.msra.mxu0 0
    %5599 = vmatprep.subr.bf16.mxu0 0
    %5600 = vmatpush1.bf16.msra.mxu0 0
    %5601 = vmatprep.subr.bf16.mxu0 0
    %5602 = vmatpush1.bf16.msra.mxu0 0
    %5603 = vmatprep.subr.bf16.mxu0 0
    %5604 = vmatpush1.bf16.msra.mxu0 0
    %5605 = vmatprep.subr.bf16.mxu0 0
    %5606 = vmatpush1.bf16.msra.mxu0 0
    %5607 = vmatprep.subr.bf16.mxu0 0
    %5608 = vmatpush1.bf16.msra.mxu0 0
    %5609 = vmatprep.subr.bf16.mxu0 0
    %5610 = vmatpush1.bf16.msra.mxu0 0
    %5611 = vmatprep.subr.bf16.mxu0 0
    %5612 = vmatpush1.bf16.msra.mxu0 0
    %5613 = vmatprep.subr.bf16.mxu0 0
    %5614 = vmatpush1.bf16.msra.mxu0 0
    %5615 = vmatprep.subr.bf16.mxu0 0
    %5616 = vmatpush1.bf16.msra.mxu0 0
    %5617 = vmatprep.mubr.bf16.mxu0 0
    %5618 = vmatmul.mubr.bf16.gmra.mrb[0].mxu0 %v5580
    %v5619 = vpop.f32.mrb[0].mxu0
    %v5620 = vadd.f32 0.0, %v5619
    %v5621 = vpop.f32.mrb[0].mxu0
    %v5622 = vpop.f32.mrb[0].mxu0
    %v5623 = vpop.f32.mrb[0].mxu0
    %5624 = vdwg.mxu0
    %v5625 = vcombine.low %v5482, %v5574
    %v5626 = vcombine.high %v5482, %v5574
    %v5628 = vunpack.c.l.s4 1983009808
    %v5629 = vunpack.c.0.s8 %v5628
    %v5630 = vlaneseq
    %v5631 = vshrl.u32 %v5630, 7
    %v5632 = vsub.s32 %v5629, %v5631
    %v5633 = vrot.slane %v5625, %v5632
    %v5635 = vunpack.c.l.s4 1983009808
    %v5636 = vunpack.c.0.s8 %v5635
    %v5637 = vlaneseq
    %v5638 = vshrl.u32 %v5637, 7
    %v5639 = vsub.s32 %v5636, %v5638
    %v5640 = vrot.slane %v5626, %v5639
    %v5641 = vcombine.low %v5528, %v5620
    %v5642 = vcombine.high %v5528, %v5620
    %v5644 = vunpack.c.l.s4 1983009808
    %v5645 = vunpack.c.0.s8 %v5644
    %v5646 = vlaneseq
    %v5647 = vshrl.u32 %v5646, 7
    %v5648 = vsub.s32 %v5645, %v5647
    %v5649 = vrot.slane %v5641, %v5648
    %v5651 = vunpack.c.l.s4 1983009808
    %v5652 = vunpack.c.0.s8 %v5651
    %v5653 = vlaneseq
    %v5654 = vshrl.u32 %v5653, 7
    %v5655 = vsub.s32 %v5652, %v5654
    %v5656 = vrot.slane %v5642, %v5655
    %v5657 = vcombine.low %v5633, %v5649
    %v5658 = vcombine.high %v5633, %v5649
    %v5660 = vunpack.c.l.s4 1934713408
    %v5661 = vunpack.c.0.s8 %v5660
    %v5662 = vlaneseq
    %v5663 = vshrl.u32 %v5662, 7
    %v5664 = vsub.s32 %v5661, %v5663
    %v5665 = vrot.slane %v5657, %v5664
    %v5667 = vunpack.c.l.s4 1934713408
    %v5668 = vunpack.c.0.s8 %v5667
    %v5669 = vlaneseq
    %v5670 = vshrl.u32 %v5669, 7
    %v5671 = vsub.s32 %v5668, %v5670
    %v5672 = vrot.slane %v5658, %v5671
    %v5673 = vcombine.low %v5640, %v5656
    %v5674 = vcombine.high %v5640, %v5656
    %v5676 = vunpack.c.l.s4 1934713408
    %v5677 = vunpack.c.0.s8 %v5676
    %v5678 = vlaneseq
    %v5679 = vshrl.u32 %v5678, 7
    %v5680 = vsub.s32 %v5677, %v5679
    %v5681 = vrot.slane %v5673, %v5680
    %v5683 = vunpack.c.l.s4 1934713408
    %v5684 = vunpack.c.0.s8 %v5683
    %v5685 = vlaneseq
    %v5686 = vshrl.u32 %v5685, 7
    %v5687 = vsub.s32 %v5684, %v5686
    %v5688 = vrot.slane %v5674, %v5687
    %v5689 = vcombine.high %v5665, 0.0
    %v5690 = vcombine.high %v5672, 0.0
    %v5691 = vcombine.high %v5681, 0.0
    %v5692 = vcombine.high %v5688, 0.0
    %v5693 = vcombine.low %v5665, %v5672
    %v5695 = vunpack.c.l.s4 1983009808
    %v5696 = vunpack.c.0.s8 %v5695
    %v5697 = vlaneseq
    %v5698 = vshrl.u32 %v5697, 7
    %v5699 = vsub.s32 %v5696, %v5698
    %v5700 = vrot.slane %v5693, %v5699
    %v5701 = vcombine.low %v5689, %v5690
    %v5703 = vunpack.c.l.s4 1983009808
    %v5704 = vunpack.c.0.s8 %v5703
    %v5705 = vlaneseq
    %v5706 = vshrl.u32 %v5705, 7
    %v5707 = vsub.s32 %v5704, %v5706
    %v5708 = vrot.slane %v5701, %v5707
    %v5709 = vcombine.low %v5681, %v5688
    %v5711 = vunpack.c.l.s4 1983009808
    %v5712 = vunpack.c.0.s8 %v5711
    %v5713 = vlaneseq
    %v5714 = vshrl.u32 %v5713, 7
    %v5715 = vsub.s32 %v5712, %v5714
    %v5716 = vrot.slane %v5709, %v5715
    %v5717 = vcombine.low %v5691, %v5692
    %v5719 = vunpack.c.l.s4 1983009808
    %v5720 = vunpack.c.0.s8 %v5719
    %v5721 = vlaneseq
    %v5722 = vshrl.u32 %v5721, 7
    %v5723 = vsub.s32 %v5720, %v5722
    %v5724 = vrot.slane %v5717, %v5723
    %v5725 = vcombine.low %v5700, %v5708
    %v5726 = vcombine.high %v5700, %v5708
    %v5728 = vunpack.c.l.s4 1934713408
    %v5729 = vunpack.c.0.s8 %v5728
    %v5730 = vlaneseq
    %v5731 = vshrl.u32 %v5730, 7
    %v5732 = vsub.s32 %v5729, %v5731
    %v5733 = vrot.slane %v5725, %v5732
    %v5735 = vunpack.c.l.s4 1934713408
    %v5736 = vunpack.c.0.s8 %v5735
    %v5737 = vlaneseq
    %v5738 = vshrl.u32 %v5737, 7
    %v5739 = vsub.s32 %v5736, %v5738
    %v5740 = vrot.slane %v5726, %v5739
    %v5741 = vcombine.low %v5716, %v5724
    %v5742 = vcombine.high %v5716, %v5724
    %v5744 = vunpack.c.l.s4 1934713408
    %v5745 = vunpack.c.0.s8 %v5744
    %v5746 = vlaneseq
    %v5747 = vshrl.u32 %v5746, 7
    %v5748 = vsub.s32 %v5745, %v5747
    %v5749 = vrot.slane %v5741, %v5748
    %v5751 = vunpack.c.l.s4 1934713408
    %v5752 = vunpack.c.0.s8 %v5751
    %v5753 = vlaneseq
    %v5754 = vshrl.u32 %v5753, 7
    %v5755 = vsub.s32 %v5752, %v5754
    %v5756 = vrot.slane %v5742, %v5755
    %v5757 = vcombine.low %v5733, %v5749
    %v5758 = vcombine.high %v5733, %v5749
    %v5759 = vcombine.low %v5740, %v5756
    %v5760 = vcombine.high %v5740, %v5756
    %5762 = vrot.lane.b32.xlu0 %v5758, 32
    %v5763 = vpop.permute.xlu0 %5762
    %5766 = vrot.lane.b32.xlu0 %v5759, 64
    %v5767 = vpop.permute.xlu0 %5766
    %5770 = vrot.lane.b32.xlu0 %v5760, 96
    %v5771 = vpop.permute.xlu0 %5770
    %v5773 = vsel %vm787, %v5757, %v5763
    %v5774 = vsel %vm2815, %v5773, %v5767
    %v5775 = vsel %vm2817, %v5774, %v5771
    %v5777 = vsel %vm787, %v4597, 0
    %v5780 = vsel %vm787, %v4897, 0
    %5782 = vmatprep.subr.bf16.mxu0 0
    %5783 = vmatpush1.bf16.xpose.msra.mxu0 %v5780
    %5784 = vmatprep.subr.bf16.mxu0 0
    %5785 = vmatpush1.bf16.xpose.msra.mxu0 0
    %5786 = vmatprep.subr.bf16.mxu0 0
    %5787 = vmatpush1.bf16.xpose.msra.mxu0 0
    %5788 = vmatprep.subr.bf16.mxu0 0
    %5789 = vmatpush1.bf16.xpose.msra.mxu0 0
    %5790 = vmatprep.subr.bf16.mxu0 0
    %5791 = vmatpush1.bf16.xpose.msra.mxu0 0
    %5792 = vmatprep.subr.bf16.mxu0 0
    %5793 = vmatpush1.bf16.xpose.msra.mxu0 0
    %5794 = vmatprep.subr.bf16.mxu0 0
    %5795 = vmatpush1.bf16.xpose.msra.mxu0 0
    %5796 = vmatprep.subr.bf16.mxu0 0
    %5797 = vmatpush1.bf16.xpose.msra.mxu0 0
    %5798 = vmatprep.subr.bf16.mxu0 0
    %5799 = vmatpush1.bf16.xpose.msra.mxu0 0
    %5800 = vmatprep.subr.bf16.mxu0 0
    %5801 = vmatpush1.bf16.xpose.msra.mxu0 0
    %5802 = vmatprep.subr.bf16.mxu0 0
    %5803 = vmatpush1.bf16.xpose.msra.mxu0 0
    %5804 = vmatprep.subr.bf16.mxu0 0
    %5805 = vmatpush1.bf16.xpose.msra.mxu0 0
    %5806 = vmatprep.subr.bf16.mxu0 0
    %5807 = vmatpush1.bf16.xpose.msra.mxu0 0
    %5808 = vmatprep.subr.bf16.mxu0 0
    %5809 = vmatpush1.bf16.xpose.msra.mxu0 0
    %5810 = vmatprep.subr.bf16.mxu0 0
    %5811 = vmatpush1.bf16.xpose.msra.mxu0 0
    %5812 = vmatprep.subr.bf16.mxu0 0
    %5813 = vmatpush1.bf16.xpose.msra.mxu0 0
    %5814 = vmatprep.mubr.bf16.mxu0 0
    %5815 = vmatmul.mubr.bf16.gmra.mrb[0].mxu0 %v5777
    %v5816 = vpop.f32.mrb[0].mxu0
    %v5817 = vadd.f32 0.0, %v5816
    %v5818 = vpop.f32.mrb[0].mxu0
    %v5819 = vpop.f32.mrb[0].mxu0
    %v5820 = vpop.f32.mrb[0].mxu0
    %5821 = vdwg.mxu0
    %v5823 = vsel %vm787, %v4598, 0
    %v5826 = vsel %vm787, %v4898, 0
    %5828 = vmatprep.subr.bf16.mxu0 0
    %5829 = vmatpush1.bf16.xpose.msra.mxu0 %v5826
    %5830 = vmatprep.subr.bf16.mxu0 0
    %5831 = vmatpush1.bf16.xpose.msra.mxu0 0
    %5832 = vmatprep.subr.bf16.mxu0 0
    %5833 = vmatpush1.bf16.xpose.msra.mxu0 0
    %5834 = vmatprep.subr.bf16.mxu0 0
    %5835 = vmatpush1.bf16.xpose.msra.mxu0 0
    %5836 = vmatprep.subr.bf16.mxu0 0
    %5837 = vmatpush1.bf16.xpose.msra.mxu0 0
    %5838 = vmatprep.subr.bf16.mxu0 0
    %5839 = vmatpush1.bf16.xpose.msra.mxu0 0
    %5840 = vmatprep.subr.bf16.mxu0 0
    %5841 = vmatpush1.bf16.xpose.msra.mxu0 0
    %5842 = vmatprep.subr.bf16.mxu0 0
    %5843 = vmatpush1.bf16.xpose.msra.mxu0 0
    %5844 = vmatprep.subr.bf16.mxu0 0
    %5845 = vmatpush1.bf16.xpose.msra.mxu0 0
    %5846 = vmatprep.subr.bf16.mxu0 0
    %5847 = vmatpush1.bf16.xpose.msra.mxu0 0
    %5848 = vmatprep.subr.bf16.mxu0 0
    %5849 = vmatpush1.bf16.xpose.msra.mxu0 0
    %5850 = vmatprep.subr.bf16.mxu0 0
    %5851 = vmatpush1.bf16.xpose.msra.mxu0 0
    %5852 = vmatprep.subr.bf16.mxu0 0
    %5853 = vmatpush1.bf16.xpose.msra.mxu0 0
    %5854 = vmatprep.subr.bf16.mxu0 0
    %5855 = vmatpush1.bf16.xpose.msra.mxu0 0
    %5856 = vmatprep.subr.bf16.mxu0 0
    %5857 = vmatpush1.bf16.xpose.msra.mxu0 0
    %5858 = vmatprep.subr.bf16.mxu0 0
    %5859 = vmatpush1.bf16.xpose.msra.mxu0 0
    %5860 = vmatprep.mubr.bf16.mxu0 0
    %5861 = vmatmul.mubr.bf16.gmra.mrb[0].mxu0 %v5823
    %v5862 = vpop.f32.mrb[0].mxu0
    %v5863 = vadd.f32 0.0, %v5862
    %v5864 = vpop.f32.mrb[0].mxu0
    %v5865 = vpop.f32.mrb[0].mxu0
    %v5866 = vpop.f32.mrb[0].mxu0
    %5867 = vdwg.mxu0
    %v5869 = vsel %vm787, %v4599, 0
    %v5872 = vsel %vm787, %v4899, 0
    %5874 = vmatprep.subr.bf16.mxu0 0
    %5875 = vmatpush1.bf16.xpose.msra.mxu0 %v5872
    %5876 = vmatprep.subr.bf16.mxu0 0
    %5877 = vmatpush1.bf16.xpose.msra.mxu0 0
    %5878 = vmatprep.subr.bf16.mxu0 0
    %5879 = vmatpush1.bf16.xpose.msra.mxu0 0
    %5880 = vmatprep.subr.bf16.mxu0 0
    %5881 = vmatpush1.bf16.xpose.msra.mxu0 0
    %5882 = vmatprep.subr.bf16.mxu0 0
    %5883 = vmatpush1.bf16.xpose.msra.mxu0 0
    %5884 = vmatprep.subr.bf16.mxu0 0
    %5885 = vmatpush1.bf16.xpose.msra.mxu0 0
    %5886 = vmatprep.subr.bf16.mxu0 0
    %5887 = vmatpush1.bf16.xpose.msra.mxu0 0
    %5888 = vmatprep.subr.bf16.mxu0 0
    %5889 = vmatpush1.bf16.xpose.msra.mxu0 0
    %5890 = vmatprep.subr.bf16.mxu0 0
    %5891 = vmatpush1.bf16.xpose.msra.mxu0 0
    %5892 = vmatprep.subr.bf16.mxu0 0
    %5893 = vmatpush1.bf16.xpose.msra.mxu0 0
    %5894 = vmatprep.subr.bf16.mxu0 0
    %5895 = vmatpush1.bf16.xpose.msra.mxu0 0
    %5896 = vmatprep.subr.bf16.mxu0 0
    %5897 = vmatpush1.bf16.xpose.msra.mxu0 0
    %5898 = vmatprep.subr.bf16.mxu0 0
    %5899 = vmatpush1.bf16.xpose.msra.mxu0 0
    %5900 = vmatprep.subr.bf16.mxu0 0
    %5901 = vmatpush1.bf16.xpose.msra.mxu0 0
    %5902 = vmatprep.subr.bf16.mxu0 0
    %5903 = vmatpush1.bf16.xpose.msra.mxu0 0
    %5904 = vmatprep.subr.bf16.mxu0 0
    %5905 = vmatpush1.bf16.xpose.msra.mxu0 0
    %5906 = vmatprep.mubr.bf16.mxu0 0
    %5907 = vmatmul.mubr.bf16.gmra.mrb[0].mxu0 %v5869
    %v5908 = vpop.f32.mrb[0].mxu0
    %v5909 = vadd.f32 0.0, %v5908
    %v5910 = vpop.f32.mrb[0].mxu0
    %v5911 = vpop.f32.mrb[0].mxu0
    %v5912 = vpop.f32.mrb[0].mxu0
    %5913 = vdwg.mxu0
    %v5915 = vsel %vm787, %v4600, 0
    %v5918 = vsel %vm787, %v4900, 0
    %5920 = vmatprep.subr.bf16.mxu0 0
    %5921 = vmatpush1.bf16.xpose.msra.mxu0 %v5918
    %5922 = vmatprep.subr.bf16.mxu0 0
    %5923 = vmatpush1.bf16.xpose.msra.mxu0 0
    %5924 = vmatprep.subr.bf16.mxu0 0
    %5925 = vmatpush1.bf16.xpose.msra.mxu0 0
    %5926 = vmatprep.subr.bf16.mxu0 0
    %5927 = vmatpush1.bf16.xpose.msra.mxu0 0
    %5928 = vmatprep.subr.bf16.mxu0 0
    %5929 = vmatpush1.bf16.xpose.msra.mxu0 0
    %5930 = vmatprep.subr.bf16.mxu0 0
    %5931 = vmatpush1.bf16.xpose.msra.mxu0 0
    %5932 = vmatprep.subr.bf16.mxu0 0
    %5933 = vmatpush1.bf16.xpose.msra.mxu0 0
    %5934 = vmatprep.subr.bf16.mxu0 0
    %5935 = vmatpush1.bf16.xpose.msra.mxu0 0
    %5936 = vmatprep.subr.bf16.mxu0 0
    %5937 = vmatpush1.bf16.xpose.msra.mxu0 0
    %5938 = vmatprep.subr.bf16.mxu0 0
    %5939 = vmatpush1.bf16.xpose.msra.mxu0 0
    %5940 = vmatprep.subr.bf16.mxu0 0
    %5941 = vmatpush1.bf16.xpose.msra.mxu0 0
    %5942 = vmatprep.subr.bf16.mxu0 0
    %5943 = vmatpush1.bf16.xpose.msra.mxu0 0
    %5944 = vmatprep.subr.bf16.mxu0 0
    %5945 = vmatpush1.bf16.xpose.msra.mxu0 0
    %5946 = vmatprep.subr.bf16.mxu0 0
    %5947 = vmatpush1.bf16.xpose.msra.mxu0 0
    %5948 = vmatprep.subr.bf16.mxu0 0
    %5949 = vmatpush1.bf16.xpose.msra.mxu0 0
    %5950 = vmatprep.subr.bf16.mxu0 0
    %5951 = vmatpush1.bf16.xpose.msra.mxu0 0
    %5952 = vmatprep.mubr.bf16.mxu0 0
    %5953 = vmatmul.mubr.bf16.gmra.mrb[0].mxu0 %v5915
    %v5954 = vpop.f32.mrb[0].mxu0
    %v5955 = vadd.f32 0.0, %v5954
    %v5956 = vpop.f32.mrb[0].mxu0
    %v5957 = vpop.f32.mrb[0].mxu0
    %v5958 = vpop.f32.mrb[0].mxu0
    %5959 = vdwg.mxu0
    %v5960 = vmul.f32 %v5817, 0.17677669
    %v5961 = vmul.f32 %v5863, 0.17677669
    %v5962 = vmul.f32 %v5909, 0.17677669
    %v5963 = vmul.f32 %v5955, 0.17677669
    %v5964 = vadd.f32 %v5960, %v997
    %v5965 = vadd.f32 %v5961, %v998
    %v5966 = vadd.f32 %v5962, %v999
    %v5967 = vadd.f32 %v5963, %v1000
    %v5968 = vsel %vm2432, %v5964, -inf
    %5969 = vmax.xlane.f32.xlu0 %v5968
    %v5970 = vpop.xlane.xlu0 %5969
    %v5971 = vsel %vm2432, %v5965, -inf
    %5972 = vmax.xlane.f32.xlu0 %v5971
    %v5973 = vpop.xlane.xlu0 %5972
    %v5974 = vsel %vm2432, %v5966, -inf
    %5975 = vmax.xlane.f32.xlu0 %v5974
    %v5976 = vpop.xlane.xlu0 %5975
    %v5977 = vsel %vm2432, %v5967, -inf
    %5978 = vmax.xlane.f32.xlu0 %v5977
    %v5979 = vpop.xlane.xlu0 %5978
    %v5980 = vsub.f32 %v5964, %v5970
    %v5981 = vsub.f32 %v5965, %v5973
    %v5982 = vsub.f32 %v5966, %v5976
    %v5983 = vsub.f32 %v5967, %v5979
    %v5984 = vmul.f32 %v5980, 1.442695
    %v5985 = vpow.pop %v5984
    %v5986 = vmul.f32 %v5981, 1.442695
    %v5987 = vpow.pop %v5986
    %v5988 = vmul.f32 %v5982, 1.442695
    %v5989 = vpow.pop %v5988
    %v5990 = vmul.f32 %v5983, 1.442695
    %v5991 = vpow.pop %v5990
    %v5992 = vsel %vm2432, %v5985, 0.0
    %5993 = vadd.xlane.f32.xlu0 %v5992
    %v5994 = vpop.xlane.xlu0 %5993
    %v5995 = vsel %vm2432, %v5987, 0.0
    %5996 = vadd.xlane.f32.xlu0 %v5995
    %v5997 = vpop.xlane.xlu0 %5996
    %v5998 = vsel %vm2432, %v5989, 0.0
    %5999 = vadd.xlane.f32.xlu0 %v5998
    %v6000 = vpop.xlane.xlu0 %5999
    %v6001 = vsel %vm2432, %v5991, 0.0
    %6002 = vadd.xlane.f32.xlu0 %v6001
    %v6003 = vpop.xlane.xlu0 %6002
    %v6004 = vrcp.pop %v5994
    %v6005 = vrcp.pop %v5997
    %v6006 = vrcp.pop %v6000
    %v6007 = vrcp.pop %v6003
    %v6008 = vmul.f32 %v5985, %v6004
    %v6009 = vmul.f32 %v5987, %v6005
    %v6010 = vmul.f32 %v5989, %v6006
    %v6011 = vmul.f32 %v5991, %v6007
    %v6012 = vpack.c.bf16 %v6008, %v6008
    %v6013 = vpack.c.bf16 %v6009, %v6009
    %v6014 = vpack.c.bf16 %v6010, %v6010
    %v6015 = vpack.c.bf16 %v6011, %v6011
    %v6017 = vsel %vm2432, %v6012, 0
    %v6020 = vsel %vm2484, %v5197, 0
    %6022 = vmatprep.subr.bf16.mxu0 0
    %6023 = vmatpush1.bf16.msra.mxu0 %v6020
    %6024 = vmatprep.subr.bf16.mxu0 0
    %6025 = vmatpush1.bf16.msra.mxu0 0
    %6026 = vmatprep.subr.bf16.mxu0 0
    %6027 = vmatpush1.bf16.msra.mxu0 0
    %6028 = vmatprep.subr.bf16.mxu0 0
    %6029 = vmatpush1.bf16.msra.mxu0 0
    %6030 = vmatprep.subr.bf16.mxu0 0
    %6031 = vmatpush1.bf16.msra.mxu0 0
    %6032 = vmatprep.subr.bf16.mxu0 0
    %6033 = vmatpush1.bf16.msra.mxu0 0
    %6034 = vmatprep.subr.bf16.mxu0 0
    %6035 = vmatpush1.bf16.msra.mxu0 0
    %6036 = vmatprep.subr.bf16.mxu0 0
    %6037 = vmatpush1.bf16.msra.mxu0 0
    %6038 = vmatprep.subr.bf16.mxu0 0
    %6039 = vmatpush1.bf16.msra.mxu0 0
    %6040 = vmatprep.subr.bf16.mxu0 0
    %6041 = vmatpush1.bf16.msra.mxu0 0
    %6042 = vmatprep.subr.bf16.mxu0 0
    %6043 = vmatpush1.bf16.msra.mxu0 0
    %6044 = vmatprep.subr.bf16.mxu0 0
    %6045 = vmatpush1.bf16.msra.mxu0 0
    %6046 = vmatprep.subr.bf16.mxu0 0
    %6047 = vmatpush1.bf16.msra.mxu0 0
    %6048 = vmatprep.subr.bf16.mxu0 0
    %6049 = vmatpush1.bf16.msra.mxu0 0
    %6050 = vmatprep.subr.bf16.mxu0 0
    %6051 = vmatpush1.bf16.msra.mxu0 0
    %6052 = vmatprep.subr.bf16.mxu0 0
    %6053 = vmatpush1.bf16.msra.mxu0 0
    %6054 = vmatprep.mubr.bf16.mxu0 0
    %6055 = vmatmul.mubr.bf16.gmra.mrb[0].mxu0 %v6017
    %v6056 = vpop.f32.mrb[0].mxu0
    %v6057 = vadd.f32 0.0, %v6056
    %v6058 = vpop.f32.mrb[0].mxu0
    %v6059 = vpop.f32.mrb[0].mxu0
    %v6060 = vpop.f32.mrb[0].mxu0
    %6061 = vdwg.mxu0
    %v6063 = vsel %vm2432, %v6013, 0
    %v6066 = vsel %vm2484, %v5198, 0
    %6068 = vmatprep.subr.bf16.mxu0 0
    %6069 = vmatpush1.bf16.msra.mxu0 %v6066
    %6070 = vmatprep.subr.bf16.mxu0 0
    %6071 = vmatpush1.bf16.msra.mxu0 0
    %6072 = vmatprep.subr.bf16.mxu0 0
    %6073 = vmatpush1.bf16.msra.mxu0 0
    %6074 = vmatprep.subr.bf16.mxu0 0
    %6075 = vmatpush1.bf16.msra.mxu0 0
    %6076 = vmatprep.subr.bf16.mxu0 0
    %6077 = vmatpush1.bf16.msra.mxu0 0
    %6078 = vmatprep.subr.bf16.mxu0 0
    %6079 = vmatpush1.bf16.msra.mxu0 0
    %6080 = vmatprep.subr.bf16.mxu0 0
    %6081 = vmatpush1.bf16.msra.mxu0 0
    %6082 = vmatprep.subr.bf16.mxu0 0
    %6083 = vmatpush1.bf16.msra.mxu0 0
    %6084 = vmatprep.subr.bf16.mxu0 0
    %6085 = vmatpush1.bf16.msra.mxu0 0
    %6086 = vmatprep.subr.bf16.mxu0 0
    %6087 = vmatpush1.bf16.msra.mxu0 0
    %6088 = vmatprep.subr.bf16.mxu0 0
    %6089 = vmatpush1.bf16.msra.mxu0 0
    %6090 = vmatprep.subr.bf16.mxu0 0
    %6091 = vmatpush1.bf16.msra.mxu0 0
    %6092 = vmatprep.subr.bf16.mxu0 0
    %6093 = vmatpush1.bf16.msra.mxu0 0
    %6094 = vmatprep.subr.bf16.mxu0 0
    %6095 = vmatpush1.bf16.msra.mxu0 0
    %6096 = vmatprep.subr.bf16.mxu0 0
    %6097 = vmatpush1.bf16.msra.mxu0 0
    %6098 = vmatprep.subr.bf16.mxu0 0
    %6099 = vmatpush1.bf16.msra.mxu0 0
    %6100 = vmatprep.mubr.bf16.mxu0 0
    %6101 = vmatmul.mubr.bf16.gmra.mrb[0].mxu0 %v6063
    %v6102 = vpop.f32.mrb[0].mxu0
    %v6103 = vadd.f32 0.0, %v6102
    %v6104 = vpop.f32.mrb[0].mxu0
    %v6105 = vpop.f32.mrb[0].mxu0
    %v6106 = vpop.f32.mrb[0].mxu0
    %6107 = vdwg.mxu0
    %v6109 = vsel %vm2432, %v6014, 0
    %v6112 = vsel %vm2484, %v5199, 0
    %6114 = vmatprep.subr.bf16.mxu0 0
    %6115 = vmatpush1.bf16.msra.mxu0 %v6112
    %6116 = vmatprep.subr.bf16.mxu0 0
    %6117 = vmatpush1.bf16.msra.mxu0 0
    %6118 = vmatprep.subr.bf16.mxu0 0
    %6119 = vmatpush1.bf16.msra.mxu0 0
    %6120 = vmatprep.subr.bf16.mxu0 0
    %6121 = vmatpush1.bf16.msra.mxu0 0
    %6122 = vmatprep.subr.bf16.mxu0 0
    %6123 = vmatpush1.bf16.msra.mxu0 0
    %6124 = vmatprep.subr.bf16.mxu0 0
    %6125 = vmatpush1.bf16.msra.mxu0 0
    %6126 = vmatprep.subr.bf16.mxu0 0
    %6127 = vmatpush1.bf16.msra.mxu0 0
    %6128 = vmatprep.subr.bf16.mxu0 0
    %6129 = vmatpush1.bf16.msra.mxu0 0
    %6130 = vmatprep.subr.bf16.mxu0 0
    %6131 = vmatpush1.bf16.msra.mxu0 0
    %6132 = vmatprep.subr.bf16.mxu0 0
    %6133 = vmatpush1.bf16.msra.mxu0 0
    %6134 = vmatprep.subr.bf16.mxu0 0
    %6135 = vmatpush1.bf16.msra.mxu0 0
    %6136 = vmatprep.subr.bf16.mxu0 0
    %6137 = vmatpush1.bf16.msra.mxu0 0
    %6138 = vmatprep.subr.bf16.mxu0 0
    %6139 = vmatpush1.bf16.msra.mxu0 0
    %6140 = vmatprep.subr.bf16.mxu0 0
    %6141 = vmatpush1.bf16.msra.mxu0 0
    %6142 = vmatprep.subr.bf16.mxu0 0
    %6143 = vmatpush1.bf16.msra.mxu0 0
    %6144 = vmatprep.subr.bf16.mxu0 0
    %6145 = vmatpush1.bf16.msra.mxu0 0
    %6146 = vmatprep.mubr.bf16.mxu0 0
    %6147 = vmatmul.mubr.bf16.gmra.mrb[0].mxu0 %v6109
    %v6148 = vpop.f32.mrb[0].mxu0
    %v6149 = vadd.f32 0.0, %v6148
    %v6150 = vpop.f32.mrb[0].mxu0
    %v6151 = vpop.f32.mrb[0].mxu0
    %v6152 = vpop.f32.mrb[0].mxu0
    %6153 = vdwg.mxu0
    %v6155 = vsel %vm2432, %v6015, 0
    %v6158 = vsel %vm2484, %v5200, 0
    %6160 = vmatprep.subr.bf16.mxu0 0
    %6161 = vmatpush1.bf16.msra.mxu0 %v6158
    %6162 = vmatprep.subr.bf16.mxu0 0
    %6163 = vmatpush1.bf16.msra.mxu0 0
    %6164 = vmatprep.subr.bf16.mxu0 0
    %6165 = vmatpush1.bf16.msra.mxu0 0
    %6166 = vmatprep.subr.bf16.mxu0 0
    %6167 = vmatpush1.bf16.msra.mxu0 0
    %6168 = vmatprep.subr.bf16.mxu0 0
    %6169 = vmatpush1.bf16.msra.mxu0 0
    %6170 = vmatprep.subr.bf16.mxu0 0
    %6171 = vmatpush1.bf16.msra.mxu0 0
    %6172 = vmatprep.subr.bf16.mxu0 0
    %6173 = vmatpush1.bf16.msra.mxu0 0
    %6174 = vmatprep.subr.bf16.mxu0 0
    %6175 = vmatpush1.bf16.msra.mxu0 0
    %6176 = vmatprep.subr.bf16.mxu0 0
    %6177 = vmatpush1.bf16.msra.mxu0 0
    %6178 = vmatprep.subr.bf16.mxu0 0
    %6179 = vmatpush1.bf16.msra.mxu0 0
    %6180 = vmatprep.subr.bf16.mxu0 0
    %6181 = vmatpush1.bf16.msra.mxu0 0
    %6182 = vmatprep.subr.bf16.mxu0 0
    %6183 = vmatpush1.bf16.msra.mxu0 0
    %6184 = vmatprep.subr.bf16.mxu0 0
    %6185 = vmatpush1.bf16.msra.mxu0 0
    %6186 = vmatprep.subr.bf16.mxu0 0
    %6187 = vmatpush1.bf16.msra.mxu0 0
    %6188 = vmatprep.subr.bf16.mxu0 0
    %6189 = vmatpush1.bf16.msra.mxu0 0
    %6190 = vmatprep.subr.bf16.mxu0 0
    %6191 = vmatpush1.bf16.msra.mxu0 0
    %6192 = vmatprep.mubr.bf16.mxu0 0
    %6193 = vmatmul.mubr.bf16.gmra.mrb[0].mxu0 %v6155
    %v6194 = vpop.f32.mrb[0].mxu0
    %v6195 = vadd.f32 0.0, %v6194
    %v6196 = vpop.f32.mrb[0].mxu0
    %v6197 = vpop.f32.mrb[0].mxu0
    %v6198 = vpop.f32.mrb[0].mxu0
    %6199 = vdwg.mxu0
    %v6200 = vcombine.low %v6057, %v6149
    %v6201 = vcombine.high %v6057, %v6149
    %v6203 = vunpack.c.l.s4 1983009808
    %v6204 = vunpack.c.0.s8 %v6203
    %v6205 = vlaneseq
    %v6206 = vshrl.u32 %v6205, 7
    %v6207 = vsub.s32 %v6204, %v6206
    %v6208 = vrot.slane %v6200, %v6207
    %v6210 = vunpack.c.l.s4 1983009808
    %v6211 = vunpack.c.0.s8 %v6210
    %v6212 = vlaneseq
    %v6213 = vshrl.u32 %v6212, 7
    %v6214 = vsub.s32 %v6211, %v6213
    %v6215 = vrot.slane %v6201, %v6214
    %v6216 = vcombine.low %v6103, %v6195
    %v6217 = vcombine.high %v6103, %v6195
    %v6219 = vunpack.c.l.s4 1983009808
    %v6220 = vunpack.c.0.s8 %v6219
    %v6221 = vlaneseq
    %v6222 = vshrl.u32 %v6221, 7
    %v6223 = vsub.s32 %v6220, %v6222
    %v6224 = vrot.slane %v6216, %v6223
    %v6226 = vunpack.c.l.s4 1983009808
    %v6227 = vunpack.c.0.s8 %v6226
    %v6228 = vlaneseq
    %v6229 = vshrl.u32 %v6228, 7
    %v6230 = vsub.s32 %v6227, %v6229
    %v6231 = vrot.slane %v6217, %v6230
    %v6232 = vcombine.low %v6208, %v6224
    %v6233 = vcombine.high %v6208, %v6224
    %v6235 = vunpack.c.l.s4 1934713408
    %v6236 = vunpack.c.0.s8 %v6235
    %v6237 = vlaneseq
    %v6238 = vshrl.u32 %v6237, 7
    %v6239 = vsub.s32 %v6236, %v6238
    %v6240 = vrot.slane %v6232, %v6239
    %v6242 = vunpack.c.l.s4 1934713408
    %v6243 = vunpack.c.0.s8 %v6242
    %v6244 = vlaneseq
    %v6245 = vshrl.u32 %v6244, 7
    %v6246 = vsub.s32 %v6243, %v6245
    %v6247 = vrot.slane %v6233, %v6246
    %v6248 = vcombine.low %v6215, %v6231
    %v6249 = vcombine.high %v6215, %v6231
    %v6251 = vunpack.c.l.s4 1934713408
    %v6252 = vunpack.c.0.s8 %v6251
    %v6253 = vlaneseq
    %v6254 = vshrl.u32 %v6253, 7
    %v6255 = vsub.s32 %v6252, %v6254
    %v6256 = vrot.slane %v6248, %v6255
    %v6258 = vunpack.c.l.s4 1934713408
    %v6259 = vunpack.c.0.s8 %v6258
    %v6260 = vlaneseq
    %v6261 = vshrl.u32 %v6260, 7
    %v6262 = vsub.s32 %v6259, %v6261
    %v6263 = vrot.slane %v6249, %v6262
    %v6264 = vcombine.high %v6240, 0.0
    %v6265 = vcombine.high %v6247, 0.0
    %v6266 = vcombine.high %v6256, 0.0
    %v6267 = vcombine.high %v6263, 0.0
    %v6268 = vcombine.low %v6240, %v6247
    %v6270 = vunpack.c.l.s4 1983009808
    %v6271 = vunpack.c.0.s8 %v6270
    %v6272 = vlaneseq
    %v6273 = vshrl.u32 %v6272, 7
    %v6274 = vsub.s32 %v6271, %v6273
    %v6275 = vrot.slane %v6268, %v6274
    %v6276 = vcombine.low %v6264, %v6265
    %v6278 = vunpack.c.l.s4 1983009808
    %v6279 = vunpack.c.0.s8 %v6278
    %v6280 = vlaneseq
    %v6281 = vshrl.u32 %v6280, 7
    %v6282 = vsub.s32 %v6279, %v6281
    %v6283 = vrot.slane %v6276, %v6282
    %v6284 = vcombine.low %v6256, %v6263
    %v6286 = vunpack.c.l.s4 1983009808
    %v6287 = vunpack.c.0.s8 %v6286
    %v6288 = vlaneseq
    %v6289 = vshrl.u32 %v6288, 7
    %v6290 = vsub.s32 %v6287, %v6289
    %v6291 = vrot.slane %v6284, %v6290
    %v6292 = vcombine.low %v6266, %v6267
    %v6294 = vunpack.c.l.s4 1983009808
    %v6295 = vunpack.c.0.s8 %v6294
    %v6296 = vlaneseq
    %v6297 = vshrl.u32 %v6296, 7
    %v6298 = vsub.s32 %v6295, %v6297
    %v6299 = vrot.slane %v6292, %v6298
    %v6300 = vcombine.low %v6275, %v6283
    %v6301 = vcombine.high %v6275, %v6283
    %v6303 = vunpack.c.l.s4 1934713408
    %v6304 = vunpack.c.0.s8 %v6303
    %v6305 = vlaneseq
    %v6306 = vshrl.u32 %v6305, 7
    %v6307 = vsub.s32 %v6304, %v6306
    %v6308 = vrot.slane %v6300, %v6307
    %v6310 = vunpack.c.l.s4 1934713408
    %v6311 = vunpack.c.0.s8 %v6310
    %v6312 = vlaneseq
    %v6313 = vshrl.u32 %v6312, 7
    %v6314 = vsub.s32 %v6311, %v6313
    %v6315 = vrot.slane %v6301, %v6314
    %v6316 = vcombine.low %v6291, %v6299
    %v6317 = vcombine.high %v6291, %v6299
    %v6319 = vunpack.c.l.s4 1934713408
    %v6320 = vunpack.c.0.s8 %v6319
    %v6321 = vlaneseq
    %v6322 = vshrl.u32 %v6321, 7
    %v6323 = vsub.s32 %v6320, %v6322
    %v6324 = vrot.slane %v6316, %v6323
    %v6326 = vunpack.c.l.s4 1934713408
    %v6327 = vunpack.c.0.s8 %v6326
    %v6328 = vlaneseq
    %v6329 = vshrl.u32 %v6328, 7
    %v6330 = vsub.s32 %v6327, %v6329
    %v6331 = vrot.slane %v6317, %v6330
    %v6332 = vcombine.low %v6308, %v6324
    %v6333 = vcombine.high %v6308, %v6324
    %v6334 = vcombine.low %v6315, %v6331
    %v6335 = vcombine.high %v6315, %v6331
    %6337 = vrot.lane.b32.xlu0 %v6333, 32
    %v6338 = vpop.permute.xlu0 %6337
    %6341 = vrot.lane.b32.xlu0 %v6334, 64
    %v6342 = vpop.permute.xlu0 %6341
    %6345 = vrot.lane.b32.xlu0 %v6335, 96
    %v6346 = vpop.permute.xlu0 %6345
    %v6348 = vsel %vm787, %v6332, %v6338
    %v6349 = vsel %vm2815, %v6348, %v6342
    %v6350 = vsel %vm2817, %v6349, %v6346
    %v6351 = vpack.c.bf16 %v6350, %v5775
    %s6352 = scalar_lea.vmem [#allocation17], 64
    %v6353 = vld [vmem:[%s6352] sm:$0xf]
    %v6354 = vld [vmem:[%s6352 + $0x4] sm:$0xf]
    %v6355 = vld [vmem:[%s6352 + $0x8] sm:$0xf]
    %v6356 = vld [vmem:[%s6352 + $0xc] sm:$0xf]
    %v6357 = vld [vmem:[%s6352 + $0x10] sm:$0xf]
    %v6358 = vld [vmem:[%s6352 + $0x14] sm:$0xf]
    %v6359 = vld [vmem:[%s6352 + $0x18] sm:$0xf]
    %v6360 = vld [vmem:[%s6352 + $0x1c] sm:$0xf]
    %v6361 = vld [vmem:[%s6352 + $0x20] sm:$0xf]
    %v6362 = vld [vmem:[%s6352 + $0x24] sm:$0xf]
    %v6363 = vld [vmem:[%s6352 + $0x28] sm:$0xf]
    %v6364 = vld [vmem:[%s6352 + $0x2c] sm:$0xf]
    %v6365 = vld [vmem:[%s6352 + $0x30] sm:$0xf]
    %v6366 = vld [vmem:[%s6352 + $0x34] sm:$0xf]
    %v6367 = vld [vmem:[%s6352 + $0x38] sm:$0xf]
    %v6368 = vld [vmem:[%s6352 + $0x3c] sm:$0xf]
    %s6369 = scalar_lea.vmem %s15, 1
    %v6370 = vld [vmem:[%s6369] sm:$0x1]
    %v6372 = vlaneseq
    %v6373 = vshrl.u32 %v6372, 7
    %v6374 = vsub.s32 0, %v6373
    %v6375 = vrot.slane %v6370, %v6374
    %v6393 = vunpack.c.l.b16 %v6353
    %v6394 = vunpack.c.l.b16 %v6354
    %v6395 = vunpack.c.l.b16 %v6355
    %v6396 = vunpack.c.l.b16 %v6356
    %v6397 = vunpack.c.l.b16 %v6357
    %v6398 = vunpack.c.l.b16 %v6358
    %v6399 = vunpack.c.l.b16 %v6359
    %v6400 = vunpack.c.l.b16 %v6360
    %v6401 = vunpack.c.l.b16 %v6361
    %v6402 = vunpack.c.l.b16 %v6362
    %v6403 = vunpack.c.l.b16 %v6363
    %v6404 = vunpack.c.l.b16 %v6364
    %v6405 = vunpack.c.l.b16 %v6365
    %v6406 = vunpack.c.l.b16 %v6366
    %v6407 = vunpack.c.l.b16 %v6367
    %v6408 = vunpack.c.l.b16 %v6368
    %v6409 = vpack.c.b16 %v6394, %v6393
    %v6410 = vpack.c.b16 %v6396, %v6395
    %v6411 = vpack.c.b16 %v6398, %v6397
    %v6412 = vpack.c.b16 %v6400, %v6399
    %v6413 = vpack.c.b16 %v6402, %v6401
    %v6414 = vpack.c.b16 %v6404, %v6403
    %v6415 = vpack.c.b16 %v6406, %v6405
    %v6416 = vpack.c.b16 %v6408, %v6407
    %6425 = vmatprep.subr.bf16.mxu0 0
    %6426 = vmatpush1.bf16.msra.mxu0 %v6409
    %6427 = vmatprep.subr.bf16.mxu0 0
    %6428 = vmatpush1.bf16.msra.mxu0 %v6410
    %6429 = vmatprep.subr.bf16.mxu0 0
    %6430 = vmatpush1.bf16.msra.mxu0 %v6411
    %6431 = vmatprep.subr.bf16.mxu0 0
    %6432 = vmatpush1.bf16.msra.mxu0 %v6412
    %6433 = vmatprep.subr.bf16.mxu0 0
    %6434 = vmatpush1.bf16.msra.mxu0 %v6413
    %6435 = vmatprep.subr.bf16.mxu0 0
    %6436 = vmatpush1.bf16.msra.mxu0 %v6414
    %6437 = vmatprep.subr.bf16.mxu0 0
    %6438 = vmatpush1.bf16.msra.mxu0 %v6415
    %6439 = vmatprep.subr.bf16.mxu0 0
    %6440 = vmatpush1.bf16.msra.mxu0 %v6416
    %6441 = vmatprep.subr.bf16.mxu0 0
    %6442 = vmatpush1.bf16.msra.mxu0 0
    %6443 = vmatprep.subr.bf16.mxu0 0
    %6444 = vmatpush1.bf16.msra.mxu0 0
    %6445 = vmatprep.subr.bf16.mxu0 0
    %6446 = vmatpush1.bf16.msra.mxu0 0
    %6447 = vmatprep.subr.bf16.mxu0 0
    %6448 = vmatpush1.bf16.msra.mxu0 0
    %6449 = vmatprep.subr.bf16.mxu0 0
    %6450 = vmatpush1.bf16.msra.mxu0 0
    %6451 = vmatprep.subr.bf16.mxu0 0
    %6452 = vmatpush1.bf16.msra.mxu0 0
    %6453 = vmatprep.subr.bf16.mxu0 0
    %6454 = vmatpush1.bf16.msra.mxu0 0
    %6455 = vmatprep.subr.bf16.mxu0 0
    %6456 = vmatpush1.bf16.msra.mxu0 0
    %6457 = vmatprep.mubr.bf16.mxu0 0
    %6458 = vmatmul.mubr.bf16.gmra.mrb[0].mxu0 %v6351
    %v6459 = vpop.f32.mrb[0].mxu0
    %v6460 = vadd.f32 %v6375, %v6459
    %v6461 = vpop.f32.mrb[0].mxu0
    %v6462 = vpop.f32.mrb[0].mxu0
    %v6463 = vadd.f32 %v6375, %v6462
    %v6464 = vpop.f32.mrb[0].mxu0
    %6465 = vdwg.mxu0
    %v6466 = vadd.f32 %v3956, %v6460
    %v6467 = vadd.f32 %v3957, %v6463
    %s6468 = scalar_lea.vmem %s16, 1
    %v6469 = vld [vmem:[%s6468] sm:$0x1]
    %s6470 = scalar_lea.vmem %s17, 1
    %v6471 = vld [vmem:[%s6470] sm:$0x1]
    %6472 = vadd.xlane.f32.xlu0 %v6466
    %v6473 = vpop.xlane.xlu0 %6472
    %6474 = vadd.xlane.f32.xlu0 %v6467
    %v6475 = vpop.xlane.xlu0 %6474
    %v6476 = vmul.f32 %v6473, %v3515
    %v6477 = vmul.f32 %v6475, %v3515
    %v6478 = vsub.f32 %v6466, %v6476
    %v6479 = vsub.f32 %v6467, %v6477
    %v6480 = vmul.f32 %v6478, %v6478
    %v6481 = vmul.f32 %v6479, %v6479
    %6482 = vadd.xlane.f32.xlu0 %v6480
    %v6483 = vpop.xlane.xlu0 %6482
    %6484 = vadd.xlane.f32.xlu0 %v6481
    %v6485 = vpop.xlane.xlu0 %6484
    %v6486 = vmul.f32 %v6483, %v3515
    %v6487 = vmul.f32 %v6485, %v3515
    %v6488 = vadd.f32 %v6486, 1e-05
    %v6489 = vadd.f32 %v6487, 1e-05
    %v6490 = vrsqrt.pop %v6488
    %v6491 = vrsqrt.pop %v6489
    %v6492 = vmul.f32 %v6478, %v6490
    %v6493 = vmul.f32 %v6479, %v6491
    %v6495 = vlaneseq
    %v6496 = vshrl.u32 %v6495, 7
    %v6497 = vsub.s32 0, %v6496
    %v6498 = vrot.slane %v6469, %v6497
    %v6500 = vmul.f32 %v6492, %v6498
    %v6501 = vmul.f32 %v6493, %v6498
    %v6503 = vlaneseq
    %v6504 = vshrl.u32 %v6503, 7
    %v6505 = vsub.s32 0, %v6504
    %v6506 = vrot.slane %v6471, %v6505
    %v6508 = vadd.f32 %v6500, %v6506
    %v6509 = vadd.f32 %v6501, %v6506
    %v6510 = vpack.c.bf16 %v6509, %v6508
    %s6511 = scalar_lea.vmem [#allocation19], 128
    %v6512 = vld [vmem:[%s6511] sm:$0xff]
    %v6513 = vld [vmem:[%s6511 + $0x8] sm:$0xff]
    %v6514 = vld [vmem:[%s6511 + $0x10] sm:$0xff]
    %v6515 = vld [vmem:[%s6511 + $0x18] sm:$0xff]
    %v6516 = vld [vmem:[%s6511 + $0x20] sm:$0xff]
    %v6517 = vld [vmem:[%s6511 + $0x28] sm:$0xff]
    %v6518 = vld [vmem:[%s6511 + $0x30] sm:$0xff]
    %v6519 = vld [vmem:[%s6511 + $0x38] sm:$0xff]
    %v6520 = vld [vmem:[%s6511 + $0x40] sm:$0xff]
    %v6521 = vld [vmem:[%s6511 + $0x48] sm:$0xff]
    %v6522 = vld [vmem:[%s6511 + $0x50] sm:$0xff]
    %v6523 = vld [vmem:[%s6511 + $0x58] sm:$0xff]
    %v6524 = vld [vmem:[%s6511 + $0x60] sm:$0xff]
    %v6525 = vld [vmem:[%s6511 + $0x68] sm:$0xff]
    %v6526 = vld [vmem:[%s6511 + $0x70] sm:$0xff]
    %v6527 = vld [vmem:[%s6511 + $0x78] sm:$0xff]
    %s6528 = scalar_lea.vmem %s19, 2
    %v6529 = vld [vmem:[%s6528] sm:$0x3]
    %v6531 = vlaneseq
    %v6532 = vshrl.u32 %v6531, 7
    %v6533 = vsub.s32 0, %v6532
    %v6534 = vrot.slane %v6529, %v6533
    %v6535 = vlaneseq
    %v6536 = vshrl.u32 %v6535, 7
    %v6537 = vsub.s32 1, %v6536
    %v6538 = vrot.slane %v6529, %v6537
    %v6557 = vunpack.c.l.b16 %v6512
    %v6558 = vunpack.c.h.b16 %v6512
    %v6559 = vunpack.c.l.b16 %v6513
    %v6560 = vunpack.c.h.b16 %v6513
    %v6561 = vunpack.c.l.b16 %v6514
    %v6562 = vunpack.c.h.b16 %v6514
    %v6563 = vunpack.c.l.b16 %v6515
    %v6564 = vunpack.c.h.b16 %v6515
    %v6565 = vunpack.c.l.b16 %v6516
    %v6566 = vunpack.c.h.b16 %v6516
    %v6567 = vunpack.c.l.b16 %v6517
    %v6568 = vunpack.c.h.b16 %v6517
    %v6569 = vunpack.c.l.b16 %v6518
    %v6570 = vunpack.c.h.b16 %v6518
    %v6571 = vunpack.c.l.b16 %v6519
    %v6572 = vunpack.c.h.b16 %v6519
    %v6573 = vunpack.c.l.b16 %v6520
    %v6574 = vunpack.c.h.b16 %v6520
    %v6575 = vunpack.c.l.b16 %v6521
    %v6576 = vunpack.c.h.b16 %v6521
    %v6577 = vunpack.c.l.b16 %v6522
    %v6578 = vunpack.c.h.b16 %v6522
    %v6579 = vunpack.c.l.b16 %v6523
    %v6580 = vunpack.c.h.b16 %v6523
    %v6581 = vunpack.c.l.b16 %v6524
    %v6582 = vunpack.c.h.b16 %v6524
    %v6583 = vunpack.c.l.b16 %v6525
    %v6584 = vunpack.c.h.b16 %v6525
    %v6585 = vunpack.c.l.b16 %v6526
    %v6586 = vunpack.c.h.b16 %v6526
    %v6587 = vunpack.c.l.b16 %v6527
    %v6588 = vunpack.c.h.b16 %v6527
    %v6589 = vpack.c.b16 %v6559, %v6557
    %v6590 = vpack.c.b16 %v6560, %v6558
    %v6591 = vpack.c.b16 %v6563, %v6561
    %v6592 = vpack.c.b16 %v6564, %v6562
    %v6593 = vpack.c.b16 %v6567, %v6565
    %v6594 = vpack.c.b16 %v6568, %v6566
    %v6595 = vpack.c.b16 %v6571, %v6569
    %v6596 = vpack.c.b16 %v6572, %v6570
    %v6597 = vpack.c.b16 %v6575, %v6573
    %v6598 = vpack.c.b16 %v6576, %v6574
    %v6599 = vpack.c.b16 %v6579, %v6577
    %v6600 = vpack.c.b16 %v6580, %v6578
    %v6601 = vpack.c.b16 %v6583, %v6581
    %v6602 = vpack.c.b16 %v6584, %v6582
    %v6603 = vpack.c.b16 %v6587, %v6585
    %v6604 = vpack.c.b16 %v6588, %v6586
    %6621 = vmatprep.subr.bf16.mxu0 %v6590
    %6622 = vmatpush1.bf16.msra.mxu0 %v6589
    %6623 = vmatprep.subr.bf16.mxu0 %v6592
    %6624 = vmatpush1.bf16.msra.mxu0 %v6591
    %6625 = vmatprep.subr.bf16.mxu0 %v6594
    %6626 = vmatpush1.bf16.msra.mxu0 %v6593
    %6627 = vmatprep.subr.bf16.mxu0 %v6596
    %6628 = vmatpush1.bf16.msra.mxu0 %v6595
    %6629 = vmatprep.subr.bf16.mxu0 %v6598
    %6630 = vmatpush1.bf16.msra.mxu0 %v6597
    %6631 = vmatprep.subr.bf16.mxu0 %v6600
    %6632 = vmatpush1.bf16.msra.mxu0 %v6599
    %6633 = vmatprep.subr.bf16.mxu0 %v6602
    %6634 = vmatpush1.bf16.msra.mxu0 %v6601
    %6635 = vmatprep.subr.bf16.mxu0 %v6604
    %6636 = vmatpush1.bf16.msra.mxu0 %v6603
    %6637 = vmatprep.subr.bf16.mxu0 0
    %6638 = vmatpush1.bf16.msra.mxu0 0
    %6639 = vmatprep.subr.bf16.mxu0 0
    %6640 = vmatpush1.bf16.msra.mxu0 0
    %6641 = vmatprep.subr.bf16.mxu0 0
    %6642 = vmatpush1.bf16.msra.mxu0 0
    %6643 = vmatprep.subr.bf16.mxu0 0
    %6644 = vmatpush1.bf16.msra.mxu0 0
    %6645 = vmatprep.subr.bf16.mxu0 0
    %6646 = vmatpush1.bf16.msra.mxu0 0
    %6647 = vmatprep.subr.bf16.mxu0 0
    %6648 = vmatpush1.bf16.msra.mxu0 0
    %6649 = vmatprep.subr.bf16.mxu0 0
    %6650 = vmatpush1.bf16.msra.mxu0 0
    %6651 = vmatprep.subr.bf16.mxu0 0
    %6652 = vmatpush1.bf16.msra.mxu0 0
    %6653 = vmatprep.mubr.bf16.mxu0 0
    %6654 = vmatmul.mubr.bf16.gmra.mrb[0].mxu0 %v6510
    %v6655 = vpop.f32.mrb[0].mxu0
    %v6656 = vadd.f32 %v6534, %v6655
    %v6657 = vpop.f32.mrb[0].mxu0
    %v6658 = vadd.f32 %v6538, %v6657
    %v6659 = vpop.f32.mrb[0].mxu0
    %v6660 = vadd.f32 %v6534, %v6659
    %v6661 = vpop.f32.mrb[0].mxu0
    %v6662 = vadd.f32 %v6538, %v6661
    %6663 = vdwg.mxu0
    %v6664 = vmul.f32 %v6656, %v6656
    %v6665 = vmul.f32 %v6658, %v6658
    %v6666 = vmul.f32 %v6660, %v6660
    %v6667 = vmul.f32 %v6662, %v6662
    %v6668 = vmul.f32 %v6656, %v6664
    %v6669 = vmul.f32 %v6658, %v6665
    %v6670 = vmul.f32 %v6660, %v6666
    %v6671 = vmul.f32 %v6662, %v6667
    %v6672 = vmul.f32 %v6668, 0.044715
    %v6673 = vmul.f32 %v6669, 0.044715
    %v6674 = vmul.f32 %v6670, 0.044715
    %v6675 = vmul.f32 %v6671, 0.044715
    %v6676 = vadd.f32 %v6656, %v6672
    %v6677 = vadd.f32 %v6658, %v6673
    %v6678 = vadd.f32 %v6660, %v6674
    %v6679 = vadd.f32 %v6662, %v6675
    %v6680 = vmul.f32 %v6676, 0.7978846
    %v6681 = vmul.f32 %v6677, 0.7978846
    %v6682 = vmul.f32 %v6678, 0.7978846
    %v6683 = vmul.f32 %v6679, 0.7978846
    %v6684 = vtanh.pop %v6680
    %v6685 = vtanh.pop %v6681
    %v6686 = vtanh.pop %v6682
    %v6687 = vtanh.pop %v6683
    %v6688 = vadd.f32 %v6684, 1.0
    %v6689 = vadd.f32 %v6685, 1.0
    %v6690 = vadd.f32 %v6686, 1.0
    %v6691 = vadd.f32 %v6687, 1.0
    %v6692 = vmul.f32 %v6688, 0.5
    %v6693 = vmul.f32 %v6689, 0.5
    %v6694 = vmul.f32 %v6690, 0.5
    %v6695 = vmul.f32 %v6691, 0.5
    %v6696 = vmul.f32 %v6656, %v6692
    %v6697 = vmul.f32 %v6658, %v6693
    %v6698 = vmul.f32 %v6660, %v6694
    %v6699 = vmul.f32 %v6662, %v6695
    %v6700 = vpack.c.bf16 %v6698, %v6696
    %v6701 = vpack.c.bf16 %v6699, %v6697
    %s6702 = scalar_lea.vmem [#allocation20], 128
    %v6703 = vld [vmem:[%s6702] sm:$0xf]
    %v6704 = vld [vmem:[%s6702 + $0x4] sm:$0xf]
    %v6705 = vld [vmem:[%s6702 + $0x8] sm:$0xf]
    %v6706 = vld [vmem:[%s6702 + $0xc] sm:$0xf]
    %v6707 = vld [vmem:[%s6702 + $0x10] sm:$0xf]
    %v6708 = vld [vmem:[%s6702 + $0x14] sm:$0xf]
    %v6709 = vld [vmem:[%s6702 + $0x18] sm:$0xf]
    %v6710 = vld [vmem:[%s6702 + $0x1c] sm:$0xf]
    %v6711 = vld [vmem:[%s6702 + $0x20] sm:$0xf]
    %v6712 = vld [vmem:[%s6702 + $0x24] sm:$0xf]
    %v6713 = vld [vmem:[%s6702 + $0x28] sm:$0xf]
    %v6714 = vld [vmem:[%s6702 + $0x2c] sm:$0xf]
    %v6715 = vld [vmem:[%s6702 + $0x30] sm:$0xf]
    %v6716 = vld [vmem:[%s6702 + $0x34] sm:$0xf]
    %v6717 = vld [vmem:[%s6702 + $0x38] sm:$0xf]
    %v6718 = vld [vmem:[%s6702 + $0x3c] sm:$0xf]
    %v6719 = vld [vmem:[%s6702 + $0x40] sm:$0xf]
    %v6720 = vld [vmem:[%s6702 + $0x44] sm:$0xf]
    %v6721 = vld [vmem:[%s6702 + $0x48] sm:$0xf]
    %v6722 = vld [vmem:[%s6702 + $0x4c] sm:$0xf]
    %v6723 = vld [vmem:[%s6702 + $0x50] sm:$0xf]
    %v6724 = vld [vmem:[%s6702 + $0x54] sm:$0xf]
    %v6725 = vld [vmem:[%s6702 + $0x58] sm:$0xf]
    %v6726 = vld [vmem:[%s6702 + $0x5c] sm:$0xf]
    %v6727 = vld [vmem:[%s6702 + $0x60] sm:$0xf]
    %v6728 = vld [vmem:[%s6702 + $0x64] sm:$0xf]
    %v6729 = vld [vmem:[%s6702 + $0x68] sm:$0xf]
    %v6730 = vld [vmem:[%s6702 + $0x6c] sm:$0xf]
    %v6731 = vld [vmem:[%s6702 + $0x70] sm:$0xf]
    %v6732 = vld [vmem:[%s6702 + $0x74] sm:$0xf]
    %v6733 = vld [vmem:[%s6702 + $0x78] sm:$0xf]
    %v6734 = vld [vmem:[%s6702 + $0x7c] sm:$0xf]
    %s6735 = scalar_lea.vmem %s21, 1
    %v6736 = vld [vmem:[%s6735] sm:$0x1]
    %v6738 = vlaneseq
    %v6739 = vshrl.u32 %v6738, 7
    %v6740 = vsub.s32 0, %v6739
    %v6741 = vrot.slane %v6736, %v6740
    %v6775 = vunpack.c.l.b16 %v6703
    %v6776 = vunpack.c.l.b16 %v6704
    %v6777 = vunpack.c.l.b16 %v6705
    %v6778 = vunpack.c.l.b16 %v6706
    %v6779 = vunpack.c.l.b16 %v6707
    %v6780 = vunpack.c.l.b16 %v6708
    %v6781 = vunpack.c.l.b16 %v6709
    %v6782 = vunpack.c.l.b16 %v6710
    %v6783 = vunpack.c.l.b16 %v6711
    %v6784 = vunpack.c.l.b16 %v6712
    %v6785 = vunpack.c.l.b16 %v6713
    %v6786 = vunpack.c.l.b16 %v6714
    %v6787 = vunpack.c.l.b16 %v6715
    %v6788 = vunpack.c.l.b16 %v6716
    %v6789 = vunpack.c.l.b16 %v6717
    %v6790 = vunpack.c.l.b16 %v6718
    %v6791 = vunpack.c.l.b16 %v6719
    %v6792 = vunpack.c.l.b16 %v6720
    %v6793 = vunpack.c.l.b16 %v6721
    %v6794 = vunpack.c.l.b16 %v6722
    %v6795 = vunpack.c.l.b16 %v6723
    %v6796 = vunpack.c.l.b16 %v6724
    %v6797 = vunpack.c.l.b16 %v6725
    %v6798 = vunpack.c.l.b16 %v6726
    %v6799 = vunpack.c.l.b16 %v6727
    %v6800 = vunpack.c.l.b16 %v6728
    %v6801 = vunpack.c.l.b16 %v6729
    %v6802 = vunpack.c.l.b16 %v6730
    %v6803 = vunpack.c.l.b16 %v6731
    %v6804 = vunpack.c.l.b16 %v6732
    %v6805 = vunpack.c.l.b16 %v6733
    %v6806 = vunpack.c.l.b16 %v6734
    %v6807 = vpack.c.b16 %v6776, %v6775
    %v6808 = vpack.c.b16 %v6778, %v6777
    %v6809 = vpack.c.b16 %v6780, %v6779
    %v6810 = vpack.c.b16 %v6782, %v6781
    %v6811 = vpack.c.b16 %v6784, %v6783
    %v6812 = vpack.c.b16 %v6786, %v6785
    %v6813 = vpack.c.b16 %v6788, %v6787
    %v6814 = vpack.c.b16 %v6790, %v6789
    %v6815 = vpack.c.b16 %v6792, %v6791
    %v6816 = vpack.c.b16 %v6794, %v6793
    %v6817 = vpack.c.b16 %v6796, %v6795
    %v6818 = vpack.c.b16 %v6798, %v6797
    %v6819 = vpack.c.b16 %v6800, %v6799
    %v6820 = vpack.c.b16 %v6802, %v6801
    %v6821 = vpack.c.b16 %v6804, %v6803
    %v6822 = vpack.c.b16 %v6806, %v6805
    %6839 = vmatprep.subr.bf16.mxu0 0
    %6840 = vmatpush1.bf16.msra.mxu0 %v6807
    %6841 = vmatprep.subr.bf16.mxu0 0
    %6842 = vmatpush1.bf16.msra.mxu0 %v6808
    %6843 = vmatprep.subr.bf16.mxu0 0
    %6844 = vmatpush1.bf16.msra.mxu0 %v6809
    %6845 = vmatprep.subr.bf16.mxu0 0
    %6846 = vmatpush1.bf16.msra.mxu0 %v6810
    %6847 = vmatprep.subr.bf16.mxu0 0
    %6848 = vmatpush1.bf16.msra.mxu0 %v6811
    %6849 = vmatprep.subr.bf16.mxu0 0
    %6850 = vmatpush1.bf16.msra.mxu0 %v6812
    %6851 = vmatprep.subr.bf16.mxu0 0
    %6852 = vmatpush1.bf16.msra.mxu0 %v6813
    %6853 = vmatprep.subr.bf16.mxu0 0
    %6854 = vmatpush1.bf16.msra.mxu0 %v6814
    %6855 = vmatprep.subr.bf16.mxu0 0
    %6856 = vmatpush1.bf16.msra.mxu0 %v6815
    %6857 = vmatprep.subr.bf16.mxu0 0
    %6858 = vmatpush1.bf16.msra.mxu0 %v6816
    %6859 = vmatprep.subr.bf16.mxu0 0
    %6860 = vmatpush1.bf16.msra.mxu0 %v6817
    %6861 = vmatprep.subr.bf16.mxu0 0
    %6862 = vmatpush1.bf16.msra.mxu0 %v6818
    %6863 = vmatprep.subr.bf16.mxu0 0
    %6864 = vmatpush1.bf16.msra.mxu0 %v6819
    %6865 = vmatprep.subr.bf16.mxu0 0
    %6866 = vmatpush1.bf16.msra.mxu0 %v6820
    %6867 = vmatprep.subr.bf16.mxu0 0
    %6868 = vmatpush1.bf16.msra.mxu0 %v6821
    %6869 = vmatprep.subr.bf16.mxu0 0
    %6870 = vmatpush1.bf16.msra.mxu0 %v6822
    %6871 = vmatprep.mubr.bf16.mxu0 %v6701
    %6872 = vmatmul.mubr.bf16.gmra.mrb[0].mxu0 %v6700
    %v6873 = vpop.f32.mrb[0].mxu0
    %v6874 = vadd.f32 %v6741, %v6873
    %v6875 = vpop.f32.mrb[0].mxu0
    %v6876 = vpop.f32.mrb[0].mxu0
    %v6877 = vadd.f32 %v6741, %v6876
    %v6878 = vpop.f32.mrb[0].mxu0
    %6879 = vdwg.mxu0
    %v6880 = vadd.f32 %v6508, %v6874
    %v6881 = vadd.f32 %v6509, %v6877
    %s6882 = scalar_lea.vmem %s22, 1
    %v6883 = vld [vmem:[%s6882] sm:$0x1]
    %s6884 = scalar_lea.vmem %s23, 1
    %v6885 = vld [vmem:[%s6884] sm:$0x1]
    %6886 = vadd.xlane.f32.xlu0 %v6880
    %v6887 = vpop.xlane.xlu0 %6886
    %6888 = vadd.xlane.f32.xlu0 %v6881
    %v6889 = vpop.xlane.xlu0 %6888
    %v6890 = vmul.f32 %v6887, %v3515
    %v6891 = vmul.f32 %v6889, %v3515
    %v6892 = vsub.f32 %v6880, %v6890
    %v6893 = vsub.f32 %v6881, %v6891
    %v6894 = vmul.f32 %v6892, %v6892
    %v6895 = vmul.f32 %v6893, %v6893
    %6896 = vadd.xlane.f32.xlu0 %v6894
    %v6897 = vpop.xlane.xlu0 %6896
    %6898 = vadd.xlane.f32.xlu0 %v6895
    %v6899 = vpop.xlane.xlu0 %6898
    %v6900 = vmul.f32 %v6897, %v3515
    %v6901 = vmul.f32 %v6899, %v3515
    %v6902 = vadd.f32 %v6900, 1e-05
    %v6903 = vadd.f32 %v6901, 1e-05
    %v6904 = vrsqrt.pop %v6902
    %v6905 = vrsqrt.pop %v6903
    %v6906 = vmul.f32 %v6892, %v6904
    %v6907 = vmul.f32 %v6893, %v6905
    %v6909 = vlaneseq
    %v6910 = vshrl.u32 %v6909, 7
    %v6911 = vsub.s32 0, %v6910
    %v6912 = vrot.slane %v6883, %v6911
    %v6914 = vmul.f32 %v6906, %v6912
    %v6915 = vmul.f32 %v6907, %v6912
    %v6917 = vlaneseq
    %v6918 = vshrl.u32 %v6917, 7
    %v6919 = vsub.s32 0, %v6918
    %v6920 = vrot.slane %v6885, %v6919
    %v6922 = vadd.f32 %v6914, %v6920
    %v6923 = vadd.f32 %v6915, %v6920
    %v6924 = vpack.c.bf16 %v6922, %v6922
    %v6925 = vpack.c.bf16 %v6923, %v6923
    %v6926 = vld [vmem:[%s24] sm:$0xf]
    %v6927 = vld [vmem:[%s24 + $0x4] sm:$0xf]
    %v6928 = vld [vmem:[%s24 + $0x8] sm:$0xf]
    %v6929 = vld [vmem:[%s24 + $0xc] sm:$0xf]
    %v6930 = vld [vmem:[%s24 + $0x10] sm:$0xf]
    %v6931 = vld [vmem:[%s24 + $0x14] sm:$0xf]
    %v6932 = vld [vmem:[%s24 + $0x18] sm:$0xf]
    %v6933 = vld [vmem:[%s24 + $0x1c] sm:$0xf]
    %v6934 = vld [vmem:[%s24 + $0x20] sm:$0xf]
    %v6935 = vld [vmem:[%s24 + $0x24] sm:$0xf]
    %v6936 = vld [vmem:[%s24 + $0x28] sm:$0xf]
    %v6937 = vld [vmem:[%s24 + $0x2c] sm:$0xf]
    %v6938 = vld [vmem:[%s24 + $0x30] sm:$0xf]
    %v6939 = vld [vmem:[%s24 + $0x34] sm:$0xf]
    %v6940 = vld [vmem:[%s24 + $0x38] sm:$0xf]
    %v6941 = vld [vmem:[%s24 + $0x3c] sm:$0xf]
    %v6942 = vld [vmem:[%s25] sm:$0x1]
    %v6944 = vlaneseq
    %v6945 = vshrl.u32 %v6944, 7
    %v6946 = vsub.s32 0, %v6945
    %v6947 = vrot.slane %v6942, %v6946
    %v6951 = vunpack.c.l.b16 %v6924
    %v6952 = vunpack.c.l.b16 %v6925
    %v6953 = vrot.slane %v6952, 7
    %vm6954 = vcmask 1041409
    %v6955 = vsel %vm6954, %v6953, %v6951
    %v6956 = vpack.c.b16 %v6955, %v6955
    %v6974 = vunpack.c.l.b16 %v6926
    %v6975 = vunpack.c.l.b16 %v6927
    %v6976 = vunpack.c.l.b16 %v6928
    %v6977 = vunpack.c.l.b16 %v6929
    %v6978 = vunpack.c.l.b16 %v6930
    %v6979 = vunpack.c.l.b16 %v6931
    %v6980 = vunpack.c.l.b16 %v6932
    %v6981 = vunpack.c.l.b16 %v6933
    %v6982 = vunpack.c.l.b16 %v6934
    %v6983 = vunpack.c.l.b16 %v6935
    %v6984 = vunpack.c.l.b16 %v6936
    %v6985 = vunpack.c.l.b16 %v6937
    %v6986 = vunpack.c.l.b16 %v6938
    %v6987 = vunpack.c.l.b16 %v6939
    %v6988 = vunpack.c.l.b16 %v6940
    %v6989 = vunpack.c.l.b16 %v6941
    %v6990 = vpack.c.b16 %v6975, %v6974
    %v6991 = vpack.c.b16 %v6977, %v6976
    %v6992 = vpack.c.b16 %v6979, %v6978
    %v6993 = vpack.c.b16 %v6981, %v6980
    %v6994 = vpack.c.b16 %v6983, %v6982
    %v6995 = vpack.c.b16 %v6985, %v6984
    %v6996 = vpack.c.b16 %v6987, %v6986
    %v6997 = vpack.c.b16 %v6989, %v6988
    %7006 = vmatprep.subr.bf16.mxu0 0
    %7007 = vmatpush1.bf16.msra.mxu0 %v6990
    %7008 = vmatprep.subr.bf16.mxu0 0
    %7009 = vmatpush1.bf16.msra.mxu0 %v6991
    %7010 = vmatprep.subr.bf16.mxu0 0
    %7011 = vmatpush1.bf16.msra.mxu0 %v6992
    %7012 = vmatprep.subr.bf16.mxu0 0
    %7013 = vmatpush1.bf16.msra.mxu0 %v6993
    %7014 = vmatprep.subr.bf16.mxu0 0
    %7015 = vmatpush1.bf16.msra.mxu0 %v6994
    %7016 = vmatprep.subr.bf16.mxu0 0
    %7017 = vmatpush1.bf16.msra.mxu0 %v6995
    %7018 = vmatprep.subr.bf16.mxu0 0
    %7019 = vmatpush1.bf16.msra.mxu0 %v6996
    %7020 = vmatprep.subr.bf16.mxu0 0
    %7021 = vmatpush1.bf16.msra.mxu0 %v6997
    %7022 = vmatprep.subr.bf16.mxu0 0
    %7023 = vmatpush1.bf16.msra.mxu0 0
    %7024 = vmatprep.subr.bf16.mxu0 0
    %7025 = vmatpush1.bf16.msra.mxu0 0
    %7026 = vmatprep.subr.bf16.mxu0 0
    %7027 = vmatpush1.bf16.msra.mxu0 0
    %7028 = vmatprep.subr.bf16.mxu0 0
    %7029 = vmatpush1.bf16.msra.mxu0 0
    %7030 = vmatprep.subr.bf16.mxu0 0
    %7031 = vmatpush1.bf16.msra.mxu0 0
    %7032 = vmatprep.subr.bf16.mxu0 0
    %7033 = vmatpush1.bf16.msra.mxu0 0
    %7034 = vmatprep.subr.bf16.mxu0 0
    %7035 = vmatpush1.bf16.msra.mxu0 0
    %7036 = vmatprep.subr.bf16.mxu0 0
    %7037 = vmatpush1.bf16.msra.mxu0 0
    %7038 = vmatprep.mubr.bf16.mxu0 0
    %7039 = vmatmul.mubr.bf16.gmra.mrb[0].mxu0 %v6956
    %v7040 = vpop.f32.mrb[0].mxu0
    %v7041 = vadd.f32 %v6947, %v7040
    %v7042 = vpop.f32.mrb[0].mxu0
    %v7043 = vpop.f32.mrb[0].mxu0
    %v7044 = vpop.f32.mrb[0].mxu0
    %7045 = vdwg.mxu0
    %v7046 = vtanh.pop %v7041
    %v7047 = vpack.c.bf16 %v7046, %v7046
    %v7048 = vld [vmem:[#allocation22] sm:$0xf]
    %v7049 = vld [vmem:[#allocation22 + $0x4] sm:$0xf]
    %v7050 = vld [vmem:[#allocation22 + $0x8] sm:$0xf]
    %v7051 = vld [vmem:[#allocation22 + $0xc] sm:$0xf]
    %v7052 = vld [vmem:[#allocation22 + $0x10] sm:$0xf]
    %v7053 = vld [vmem:[#allocation22 + $0x14] sm:$0xf]
    %v7054 = vld [vmem:[#allocation22 + $0x18] sm:$0xf]
    %v7055 = vld [vmem:[#allocation22 + $0x1c] sm:$0xf]
    %v7056 = vld [vmem:[#allocation22 + $0x20] sm:$0xf]
    %v7057 = vld [vmem:[#allocation22 + $0x24] sm:$0xf]
    %v7058 = vld [vmem:[#allocation22 + $0x28] sm:$0xf]
    %v7059 = vld [vmem:[#allocation22 + $0x2c] sm:$0xf]
    %v7060 = vld [vmem:[#allocation22 + $0x30] sm:$0xf]
    %v7061 = vld [vmem:[#allocation22 + $0x34] sm:$0xf]
    %v7062 = vld [vmem:[#allocation22 + $0x38] sm:$0xf]
    %v7063 = vld [vmem:[#allocation22 + $0x3c] sm:$0xf]
    %v7064 = vld [vmem:[%s27] sm:$0x1]
    %v7066 = vlaneseq
    %v7067 = vshrl.u32 %v7066, 7
    %v7068 = vsub.s32 0, %v7067
    %v7069 = vrot.slane %v7064, %v7068
    %v7087 = vunpack.c.l.b16 %v7048
    %v7088 = vunpack.c.l.b16 %v7049
    %v7089 = vunpack.c.l.b16 %v7050
    %v7090 = vunpack.c.l.b16 %v7051
    %v7091 = vunpack.c.l.b16 %v7052
    %v7092 = vunpack.c.l.b16 %v7053
    %v7093 = vunpack.c.l.b16 %v7054
    %v7094 = vunpack.c.l.b16 %v7055
    %v7095 = vunpack.c.l.b16 %v7056
    %v7096 = vunpack.c.l.b16 %v7057
    %v7097 = vunpack.c.l.b16 %v7058
    %v7098 = vunpack.c.l.b16 %v7059
    %v7099 = vunpack.c.l.b16 %v7060
    %v7100 = vunpack.c.l.b16 %v7061
    %v7101 = vunpack.c.l.b16 %v7062
    %v7102 = vunpack.c.l.b16 %v7063
    %v7103 = vpack.c.b16 %v7088, %v7087
    %v7104 = vpack.c.b16 %v7090, %v7089
    %v7105 = vpack.c.b16 %v7092, %v7091
    %v7106 = vpack.c.b16 %v7094, %v7093
    %v7107 = vpack.c.b16 %v7096, %v7095
    %v7108 = vpack.c.b16 %v7098, %v7097
    %v7109 = vpack.c.b16 %v7100, %v7099
    %v7110 = vpack.c.b16 %v7102, %v7101
    %7119 = vmatprep.subr.bf16.mxu0 0
    %7120 = vmatpush1.bf16.msra.mxu0 %v7103
    %7121 = vmatprep.subr.bf16.mxu0 0
    %7122 = vmatpush1.bf16.msra.mxu0 %v7104
    %7123 = vmatprep.subr.bf16.mxu0 0
    %7124 = vmatpush1.bf16.msra.mxu0 %v7105
    %7125 = vmatprep.subr.bf16.mxu0 0
    %7126 = vmatpush1.bf16.msra.mxu0 %v7106
    %7127 = vmatprep.subr.bf16.mxu0 0
    %7128 = vmatpush1.bf16.msra.mxu0 %v7107
    %7129 = vmatprep.subr.bf16.mxu0 0
    %7130 = vmatpush1.bf16.msra.mxu0 %v7108
    %7131 = vmatprep.subr.bf16.mxu0 0
    %7132 = vmatpush1.bf16.msra.mxu0 %v7109
    %7133 = vmatprep.subr.bf16.mxu0 0
    %7134 = vmatpush1.bf16.msra.mxu0 %v7110
    %7135 = vmatprep.subr.bf16.mxu0 0
    %7136 = vmatpush1.bf16.msra.mxu0 0
    %7137 = vmatprep.subr.bf16.mxu0 0
    %7138 = vmatpush1.bf16.msra.mxu0 0
    %7139 = vmatprep.subr.bf16.mxu0 0
    %7140 = vmatpush1.bf16.msra.mxu0 0
    %7141 = vmatprep.subr.bf16.mxu0 0
    %7142 = vmatpush1.bf16.msra.mxu0 0
    %7143 = vmatprep.subr.bf16.mxu0 0
    %7144 = vmatpush1.bf16.msra.mxu0 0
    %7145 = vmatprep.subr.bf16.mxu0 0
    %7146 = vmatpush1.bf16.msra.mxu0 0
    %7147 = vmatprep.subr.bf16.mxu0 0
    %7148 = vmatpush1.bf16.msra.mxu0 0
    %7149 = vmatprep.subr.bf16.mxu0 0
    %7150 = vmatpush1.bf16.msra.mxu0 0
    %7151 = vmatprep.mubr.bf16.mxu0 0
    %7152 = vmatmul.mubr.bf16.gmra.mrb[0].mxu0 %v7047
    %v7153 = vpop.f32.mrb[0].mxu0
    %v7154 = vadd.f32 %v7069, %v7153
    %v7155 = vpop.f32.mrb[0].mxu0
    %v7156 = vpop.f32.mrb[0].mxu0
    %v7157 = vpop.f32.mrb[0].mxu0
    %7158 = vdwg.mxu0
    %7159 = vst [vmem:[#allocation23] sm:$0x3] %v7154
    // Predicated region
    $region166: #{tpu_custom_call.1} parent=1 // pred_check
      _
    $region167: #{tpu_custom_call.1} parent=1 // pred_check_branch
      %7161 = sbr.rel (0) target = $region169
    $region168: #{tpu_custom_call.1} parent=1 // pred_region
      %s7163 = ssub.s32 32, 32
      %7164 = vsyncadd [#allocation4], %s7163
      %s7166 = sshll.u32 [#allocation23], 4
      %s7167 = int_to_ptr.vmem [resolvable:$true] %s7166
      %7169 = dma.vmem_to_hbm [thread:$0]  %s7167, 32, %s28, [#allocation4]
    $region169: #{tpu_custom_call.1} parent=1 // pred_fallthru
      _
    // Predicated region
    $region170: #{tpu_custom_call.1} parent=1 // pred_check
      _
    $region171: #{tpu_custom_call.1} parent=1 // pred_check_branch
      %7171 = sbr.rel (0) target = $region173
    $region172: #{tpu_custom_call.1} parent=1 // pred_region
      %7172 = dma.done [#allocation4], 32
    $region173: #{tpu_custom_call.1} parent=1 // pred_fallthru
      _
    %7173 = vsyncpa [#allocation3], 1
    %7174 = vsyncpa [#allocation6], 1
    %7175 = vsyncpa [#allocation9], 1
    %7176 = vsyncpa [#allocation12], 1
    %7177 = vsyncpa [#allocation15], 1
    %7178 = vsyncpa [#allocation18], 1
    %7179 = vsyncpa [#allocation21], 1
    %7180 = vsyncpa [#allocation4], 1

</llo_original>
